<compile_context>
chip_gen: v7x
topology: tpu7x:2x2x1
jax: 0.10.0
libtpu: 0.0.40
codegen_flags: <defaults>
</compile_context>

<pallas_src>
from functools import partial

import jax
import jax.numpy as jnp
from jax.experimental import pallas as pl
from jax.experimental.pallas import tpu as pltpu


# ----------------------------- Pallas kernels ------------------------------

def _mm_fused_kernel(x_ref, w_ref, b_ref, o_ref, *, activation):
    """Single-K-block matmul: y = act(x @ w + b), bf16 operands, f32 accumulate."""
    y = jnp.dot(x_ref[...].astype(jnp.bfloat16), w_ref[...],
                preferred_element_type=jnp.float32)
    y = y + b_ref[...]
    if activation == "relu":
        y = jnp.maximum(y, 0.0)
    o_ref[...] = y.astype(o_ref.dtype)


def _mm_fused_acc_kernel(x_ref, w_ref, b_ref, o_ref, acc_ref, *, activation):
    """K-tiled matmul with f32 VMEM accumulator; bias/activation fused on last K step."""
    @pl.when(pl.program_id(2) == 0)
    def _init():
        acc_ref[...] = jnp.zeros_like(acc_ref)

    acc_ref[...] += jnp.dot(x_ref[...].astype(jnp.bfloat16), w_ref[...],
                            preferred_element_type=jnp.float32)

    @pl.when(pl.program_id(2) == pl.num_programs(2) - 1)
    def _finish():
        y = acc_ref[...] + b_ref[...]
        if activation == "relu":
            y = jnp.maximum(y, 0.0)
        o_ref[...] = y.astype(o_ref.dtype)


def _fit_block(dim, target, align):
    """Largest block <= target that divides `dim` and is `align`-aligned (else full dim)."""
    if dim <= target:
        return dim
    t = (target // align) * align
    while t >= align:
        if dim % t == 0:
            return t
        t -= align
    return dim


def matmul_bias_act(x, w, b, *, activation=None, out_dtype=jnp.float32,
                    bm=1024, bn=512, bk=512):
    """act(x @ w + b).  x: (M, K) f32/bf16, w: (K, N) bf16, b: (N,) f32."""
    M, K = x.shape
    K2, N = w.shape
    assert K == K2 and b.shape == (N,), (x.shape, w.shape, b.shape)
    bm = _fit_block(M, bm, 8)
    bn = _fit_block(N, bn, 128)
    bk = _fit_block(K, bk, 128)
    b2 = b.reshape(1, N).astype(jnp.float32)

    nk = K // bk
    if nk == 1:
        # K fits in one block: no accumulator round-trip needed.
        return pl.pallas_call(
            partial(_mm_fused_kernel, activation=activation),
            out_shape=jax.ShapeDtypeStruct((M, N), out_dtype),
            grid_spec=pltpu.PrefetchScalarGridSpec(
                num_scalar_prefetch=0,
                grid=(M // bm, N // bn),
                in_specs=[
                    pl.BlockSpec((bm, K), lambda i, j: (i, 0)),
                    pl.BlockSpec((K, bn), lambda i, j: (0, j)),
                    pl.BlockSpec((1, bn), lambda i, j: (0, j)),
                ],
                out_specs=pl.BlockSpec((bm, bn), lambda i, j: (i, j)),
            ),
            compiler_params=pltpu.CompilerParams(
                dimension_semantics=("parallel", "parallel")),
        )(x, w, b2)

    return pl.pallas_call(
        partial(_mm_fused_acc_kernel, activation=activation),
        out_shape=jax.ShapeDtypeStruct((M, N), out_dtype),
        grid_spec=pltpu.PrefetchScalarGridSpec(
            num_scalar_prefetch=0,
            grid=(M // bm, N // bn, nk),
            in_specs=[
                pl.BlockSpec((bm, bk), lambda i, j, k: (i, k)),
                pl.BlockSpec((bk, bn), lambda i, j, k: (k, j)),
                pl.BlockSpec((1, bn), lambda i, j, k: (0, j)),
            ],
            out_specs=pl.BlockSpec((bm, bn), lambda i, j, k: (i, j)),
            scratch_shapes=[pltpu.VMEM((bm, bn), jnp.float32)],
        ),
        compiler_params=pltpu.CompilerParams(
            dimension_semantics=("parallel", "parallel", "arbitrary")),
    )(x, w, b2)


# ------------------------ parameter preparation -----------------------------

def init_deconv_params(key, dec_cfg):
    """dec_cfg: tuple of (cin, cout, k).  Weights use the PyTorch ConvTranspose2d
    layout (in_channels, out_channels, kH, kW)."""
    stages = []
    for i, (cin, cout, k) in enumerate(dec_cfg):
        kw = jax.random.fold_in(key, 2 * i)
        kb = jax.random.fold_in(key, 2 * i + 1)
        w = jax.random.normal(kw, (cin, cout, k, k), jnp.float32) / ((cin * k * k) ** 0.5)
        b = 0.1 * jax.random.normal(kb, (cout,), jnp.float32)
        stages.append(dict(w=w, b=b, cin=cin, cout=cout, k=k))
    return stages


def prepare_deconv(stages):
    """Pre-permute / group the ConvTranspose2d weights for the rows-x-channels pipeline."""
    prepared = []
    group = 1            # sub-pixels carried per activation row entering the stage
    n_row_stages = 0     # leading stages whose spatial offsets already live in rows
    n_stages = len(stages)
    for idx, st in enumerate(stages):
        cin, cout, k = st["cin"], st["cout"], st["k"]
        # (cin, cout, k, k) -> columns ordered (di, dj, cout) so the inter-stage
        # (R, k*k*cout) -> (R*k*k, cout) step is a free row-major reshape.
        wp = jnp.transpose(st["w"], (0, 2, 3, 1)).reshape(cin, k * k * cout)
        bp = jnp.tile(st["b"], k * k)
        if group > 1:
            # Block-diagonal weight: apply the same per-pixel map to `group`
            # sub-pixels per row so matmul I/O stays >= 128 lanes dense.
            wp = jnp.kron(jnp.eye(group, dtype=wp.dtype), wp)
            bp = jnp.tile(bp, group)
        # Flatten sub-pixels back into rows only when the per-pixel output width is
        # already lane-dense; otherwise keep them grouped for the next stage.
        flatten_after = (cout >= 128) and (idx < n_stages - 1)
        prepared.append(dict(w=wp.astype(jnp.bfloat16), b=bp.astype(jnp.float32),
                             cout=cout, k=k, flatten_after=flatten_after))
        if flatten_after:
            group = 1
            n_row_stages = idx + 1
        else:
            group = group * k * k
    return prepared, n_row_stages


# ------------------------------ forward pass --------------------------------

def _unscramble(a, B, H, W, row_ks, col_ks, cout):
    """(rows=(b,i,j,row-stage offsets), cols=(col-stage offsets, cout)) -> NCHW."""
    R = a.shape[0]
    pc = 1
    for k in col_ks:
        pc *= k
    nc = len(col_ks)
    if nc:
        a = a.reshape((R,) + tuple(d for k in col_ks for d in (k, k)) + (cout,))
        perm = ((0,) + tuple(1 + 2 * s for s in range(nc))
                + tuple(2 + 2 * s for s in range(nc)) + (1 + 2 * nc,))
        a = jnp.transpose(a, perm)
    a = a.reshape(R, pc, pc, cout)

    pr = 1
    for k in row_ks:
        pr *= k
    nr = len(row_ks)
    a = a.reshape((B, H, W) + tuple(d for k in row_ks for d in (k, k)) + (pc, pc, cout))
    perm = ((0, 3 + 2 * nr + 2, 1) + tuple(3 + 2 * s for s in range(nr)) + (3 + 2 * nr,)
            + (2,) + tuple(4 + 2 * s for s in range(nr)) + (3 + 2 * nr + 1,))
    a = jnp.transpose(a, perm)
    up = pr * pc
    return a.reshape(B, cout, H * up, W * up)


def deconv_forward(x, prepared, n_row_stages):
    """DeConv forward (attn_in_deconv=False).  x: (B, Cin, H, W) NCHW."""
    B, C0, H, W = x.shape
    # Single up-front layout change, done on the smallest tensor of the pipeline.
    a = jnp.transpose(x, (0, 2, 3, 1)).reshape(B * H * W, C0)
    n = len(prepared)
    for i, st in enumerate(prepared):
        last = i == n - 1
        a = matmul_bias_act(a, st["w"], st["b"],
                            activation=None if last else "relu",
                            out_dtype=jnp.float32 if last else jnp.bfloat16)
        # TODO(synk): nn.Dropout(0.1) after dec_1 / dec_2 (train mode) treated as identity.
        if st["flatten_after"]:
            a = a.reshape(-1, st["cout"])          # free row-major reshape
    ks = [st["k"] for st in prepared]
    out_dim = prepared[-1]["cout"]
    return _unscramble(a, B, H, W, ks[:n_row_stages], ks[n_row_stages:], out_dim)


# ------------------------------- reference ----------------------------------

def deconv_reference(x, stages):
    """Pure-JAX ConvTranspose2d (k == stride) chain, bf16-rounded weights."""
    a = x
    n = len(stages)
    for i, st in enumerate(stages):
        w = st["w"].astype(jnp.bfloat16).astype(jnp.float32)
        k = st["k"]
        y = jnp.einsum("bcij,copq->boipjq", a, w, precision="highest")
        Bb, Oo, Hh, _, Ww, _ = y.shape
        y = y.reshape(Bb, Oo, Hh * k, Ww * k) + st["b"][None, :, None, None]
        if i < n - 1:
            y = jnp.maximum(y, 0.0)
        a = y
    return a


# --------------------------------- main --------------------------------------

if __name__ == "__main__":
    key = jax.random.PRNGKey(0)
    # Small stand-in for DeConv(in_dim=4096, out_dim=2, compress_bn=False):
    # in_dim scaled to 1024 (still exercises the K-tiled accumulator path),
    # 4x4 bottleneck map, batch 2. Channel/stride chain keeps the reference
    # structure: strides 2,4,2,2 -> 32x spatial upsample, out_dim=2.
    B, in_dim, H, W, out_dim = 2, 1024, 4, 4, 2
    dec_cfg = ((in_dim, 512, 2), (512, 64, 4), (64, 8, 2), (8, out_dim, 2))

    stages = init_deconv_params(jax.random.fold_in(key, 1), dec_cfg)
    prepared, n_row_stages = prepare_deconv(stages)
    x = jax.random.normal(jax.random.fold_in(key, 2), (B, in_dim, H, W), jnp.float32)

    fwd = jax.jit(lambda xx: deconv_forward(xx, prepared, n_row_stages))
    out = jax.block_until_ready(fwd(x))

    up = 1
    for (_, _, k) in dec_cfg:
        up *= k
    assert out.shape == (B, out_dim, H * up, W * up), out.shape
    assert bool(jnp.all(jnp.isfinite(out)))

    ref = deconv_reference(x, stages)
    err = float(jnp.max(jnp.abs(out - ref)) / (jnp.max(jnp.abs(ref)) + 1e-6))
    assert err < 5e-2, err

    print("KERNEL_OK")
</pallas_src>

<mosaic_0001>
module attributes {stable_mosaic.version = 11 : i64} {
  func.func @_mm_fused_acc_kernel(%arg0: i32, %arg1: i32, %arg2: i32, %arg3: memref<32x512xf32, #tpu.memory_space<vmem>>, %arg4: memref<512x512xbf16, #tpu.memory_space<vmem>>, %arg5: memref<1x512xf32, #tpu.memory_space<vmem>>, %arg6: memref<32x512xbf16, #tpu.memory_space<vmem>>, %arg7: memref<32x512xf32, #tpu.memory_space<vmem>>) attributes {dimension_semantics = [#tpu.dimension_semantics<parallel>, #tpu.dimension_semantics<parallel>, #tpu.dimension_semantics<arbitrary>], iteration_bounds = array<i64: 1, 4, 2>, scalar_prefetch = 0 : i64, scratch_operands = 1 : i64, tpu.core_type = #tpu.core_type<tc>, window_params = [{transform_indices = @transform_0, window_bounds = array<i64: 32, 512>}, {transform_indices = @transform_1, window_bounds = array<i64: 512, 512>}, {transform_indices = @transform_2, window_bounds = array<i64: 1, 512>}, {transform_indices = @transform_3, window_bounds = array<i64: 32, 512>}]} {
    %c0_i32 = arith.constant 0 : i32
    %0 = arith.cmpi eq, %arg2, %c0_i32 : i32
    %1 = arith.extui %0 : i1 to i32
    %c0_i32_0 = arith.constant 0 : i32
    %2 = arith.cmpi ne, %1, %c0_i32_0 : i32
    scf.if %2 {
      %cst_9 = arith.constant 0.000000e+00 : f32
      %13 = vector.broadcast %cst_9 : f32 to vector<32x512xf32>
      %c0_10 = arith.constant 0 : index
      %c0_11 = arith.constant 0 : index
      %14 = vector.load %arg7[%c0_10, %c0_11] : memref<32x512xf32, #tpu.memory_space<vmem>>, vector<32x512xf32>
      tpu.vector_store %arg7[%c0_10, %c0_11], %13 {strides = array<i32>} : memref<32x512xf32, #tpu.memory_space<vmem>>, vector<32x512xf32>,
    } else {
    }
    %c0 = arith.constant 0 : index
    %c0_1 = arith.constant 0 : index
    %3 = vector.load %arg7[%c0, %c0_1] : memref<32x512xf32, #tpu.memory_space<vmem>>, vector<32x512xf32>
    %c0_2 = arith.constant 0 : index
    %c0_3 = arith.constant 0 : index
    %4 = vector.load %arg3[%c0_2, %c0_3] : memref<32x512xf32, #tpu.memory_space<vmem>>, vector<32x512xf32>
    %5 = arith.truncf %4 : vector<32x512xf32> to vector<32x512xbf16>
    %c0_4 = arith.constant 0 : index
    %c0_5 = arith.constant 0 : index
    %6 = vector.load %arg4[%c0_4, %c0_5] : memref<512x512xbf16, #tpu.memory_space<vmem>>, vector<512x512xbf16>
    %cst = arith.constant dense<0.000000e+00> : vector<32x512xf32>
    %7 = tpu.matmul %5, %6, %cst {dimension_numbers = #tpu.dot_dimension_numbers<[1], [0], [0], [1], [0, 0, 1, 1], [], []>} : vector<32x512xbf16>, vector<512x512xbf16>, vector<32x512xf32> -> vector<32x512xf32>
    %8 = arith.addf %3, %7 : vector<32x512xf32>
    %c0_6 = arith.constant 0 : index
    %c0_7 = arith.constant 0 : index
    %9 = vector.load %arg7[%c0_6, %c0_7] : memref<32x512xf32, #tpu.memory_space<vmem>>, vector<32x512xf32>
    tpu.vector_store %arg7[%c0_6, %c0_7], %8 {strides = array<i32>} : memref<32x512xf32, #tpu.memory_space<vmem>>, vector<32x512xf32>,
    %c1_i32 = arith.constant 1 : i32
    %10 = arith.cmpi eq, %arg2, %c1_i32 : i32
    %11 = arith.extui %10 : i1 to i32
    %c0_i32_8 = arith.constant 0 : i32
    %12 = arith.cmpi ne, %11, %c0_i32_8 : i32
    scf.if %12 {
      %c0_9 = arith.constant 0 : index
      %c0_10 = arith.constant 0 : index
      %13 = vector.load %arg7[%c0_9, %c0_10] : memref<32x512xf32, #tpu.memory_space<vmem>>, vector<32x512xf32>
      %c0_11 = arith.constant 0 : index
      %c0_12 = arith.constant 0 : index
      %14 = vector.load %arg5[%c0_11, %c0_12] : memref<1x512xf32, #tpu.memory_space<vmem>>, vector<1x512xf32>
      %15 = vector.broadcast %14 : vector<1x512xf32> to vector<32x512xf32>
      %16 = arith.addf %13, %15 : vector<32x512xf32>
      %cst_13 = arith.constant 0.000000e+00 : f32
      %17 = vector.broadcast %cst_13 : f32 to vector<32x512xf32>
      %18 = arith.maximumf %16, %17 : vector<32x512xf32>
      %19 = arith.truncf %18 : vector<32x512xf32> to vector<32x512xbf16>
      %c0_14 = arith.constant 0 : index
      %c0_15 = arith.constant 0 : index
      %20 = vector.load %arg6[%c0_14, %c0_15] : memref<32x512xbf16, #tpu.memory_space<vmem>>, vector<32x512xbf16>
      tpu.vector_store %arg6[%c0_14, %c0_15], %19 {strides = array<i32>} : memref<32x512xbf16, #tpu.memory_space<vmem>>, vector<32x512xbf16>,
    } else {
    }
    return
  }
  func.func @transform_0(%arg0: i32, %arg1: i32, %arg2: i32) -> (i32, i32) {
    %c0_i32 = arith.constant 0 : i32
    return %arg0, %arg2 : i32, i32
  }
  func.func @transform_1(%arg0: i32, %arg1: i32, %arg2: i32) -> (i32, i32) {
    %c0_i32 = arith.constant 0 : i32
    return %arg2, %arg1 : i32, i32
  }
  func.func @transform_2(%arg0: i32, %arg1: i32, %arg2: i32) -> (i32, i32) {
    %c0_i32 = arith.constant 0 : i32
    %c0_i32_0 = arith.constant 0 : i32
    return %c0_i32, %arg1 : i32, i32
  }
  func.func @transform_3(%arg0: i32, %arg1: i32, %arg2: i32) -> (i32, i32) {
    %c0_i32 = arith.constant 0 : i32
    return %arg0, %arg1 : i32, i32
  }
}

module attributes {stable_mosaic.version = 11 : i64} {
  func.func @_mm_fused_kernel(%arg0: i32, %arg1: i32, %arg2: memref<128x512xbf16, #tpu.memory_space<vmem>>, %arg3: memref<512x512xbf16, #tpu.memory_space<vmem>>, %arg4: memref<1x512xf32, #tpu.memory_space<vmem>>, %arg5: memref<128x512xbf16, #tpu.memory_space<vmem>>) attributes {dimension_semantics = [#tpu.dimension_semantics<parallel>, #tpu.dimension_semantics<parallel>], iteration_bounds = array<i64: 1, 2>, scalar_prefetch = 0 : i64, scratch_operands = 0 : i64, tpu.core_type = #tpu.core_type<tc>, window_params = [{transform_indices = @transform_0, window_bounds = array<i64: 128, 512>}, {transform_indices = @transform_1, window_bounds = array<i64: 512, 512>}, {transform_indices = @transform_2, window_bounds = array<i64: 1, 512>}, {transform_indices = @transform_3, window_bounds = array<i64: 128, 512>}]} {
    %c0 = arith.constant 0 : index
    %c0_0 = arith.constant 0 : index
    %0 = vector.load %arg2[%c0, %c0_0] : memref<128x512xbf16, #tpu.memory_space<vmem>>, vector<128x512xbf16>
    %c0_1 = arith.constant 0 : index
    %c0_2 = arith.constant 0 : index
    %1 = vector.load %arg3[%c0_1, %c0_2] : memref<512x512xbf16, #tpu.memory_space<vmem>>, vector<512x512xbf16>
    %cst = arith.constant dense<0.000000e+00> : vector<128x512xf32>
    %2 = tpu.matmul %0, %1, %cst {dimension_numbers = #tpu.dot_dimension_numbers<[1], [0], [0], [1], [0, 0, 1, 1], [], []>} : vector<128x512xbf16>, vector<512x512xbf16>, vector<128x512xf32> -> vector<128x512xf32>
    %c0_3 = arith.constant 0 : index
    %c0_4 = arith.constant 0 : index
    %3 = vector.load %arg4[%c0_3, %c0_4] : memref<1x512xf32, #tpu.memory_space<vmem>>, vector<1x512xf32>
    %4 = vector.broadcast %3 : vector<1x512xf32> to vector<128x512xf32>
    %5 = arith.addf %2, %4 : vector<128x512xf32>
    %cst_5 = arith.constant 0.000000e+00 : f32
    %6 = vector.broadcast %cst_5 : f32 to vector<128x512xf32>
    %7 = arith.maximumf %5, %6 : vector<128x512xf32>
    %8 = arith.truncf %7 : vector<128x512xf32> to vector<128x512xbf16>
    %c0_6 = arith.constant 0 : index
    %c0_7 = arith.constant 0 : index
    %9 = vector.load %arg5[%c0_6, %c0_7] : memref<128x512xbf16, #tpu.memory_space<vmem>>, vector<128x512xbf16>
    tpu.vector_store %arg5[%c0_6, %c0_7], %8 {strides = array<i32>} : memref<128x512xbf16, #tpu.memory_space<vmem>>, vector<128x512xbf16>,
    return
  }
  func.func @transform_0(%arg0: i32, %arg1: i32) -> (i32, i32) {
    %c0_i32 = arith.constant 0 : i32
    %c0_i32_0 = arith.constant 0 : i32
    return %arg0, %c0_i32 : i32, i32
  }
  func.func @transform_1(%arg0: i32, %arg1: i32) -> (i32, i32) {
    %c0_i32 = arith.constant 0 : i32
    %c0_i32_0 = arith.constant 0 : i32
    return %c0_i32, %arg1 : i32, i32
  }
  func.func @transform_2(%arg0: i32, %arg1: i32) -> (i32, i32) {
    %c0_i32 = arith.constant 0 : i32
    %c0_i32_0 = arith.constant 0 : i32
    return %c0_i32, %arg1 : i32, i32
  }
  func.func @transform_3(%arg0: i32, %arg1: i32) -> (i32, i32) {
    %c0_i32 = arith.constant 0 : i32
    return %arg0, %arg1 : i32, i32
  }
}

module attributes {stable_mosaic.version = 11 : i64} {
  func.func @_mm_fused_acc_kernel(%arg0: i32, %arg1: i32, %arg2: i32, %arg3: memref<128x512xbf16, #tpu.memory_space<vmem>>, %arg4: memref<512x512xbf16, #tpu.memory_space<vmem>>, %arg5: memref<1x512xf32, #tpu.memory_space<vmem>>, %arg6: memref<128x512xbf16, #tpu.memory_space<vmem>>, %arg7: memref<128x512xf32, #tpu.memory_space<vmem>>) attributes {dimension_semantics = [#tpu.dimension_semantics<parallel>, #tpu.dimension_semantics<parallel>, #tpu.dimension_semantics<arbitrary>], iteration_bounds = array<i64: 1, 1, 2>, scalar_prefetch = 0 : i64, scratch_operands = 1 : i64, tpu.core_type = #tpu.core_type<tc>, window_params = [{transform_indices = @transform_0, window_bounds = array<i64: 128, 512>}, {transform_indices = @transform_1, window_bounds = array<i64: 512, 512>}, {transform_indices = @transform_2, window_bounds = array<i64: 1, 512>}, {transform_indices = @transform_3, window_bounds = array<i64: 128, 512>}]} {
    %c0_i32 = arith.constant 0 : i32
    %0 = arith.cmpi eq, %arg2, %c0_i32 : i32
    %1 = arith.extui %0 : i1 to i32
    %c0_i32_0 = arith.constant 0 : i32
    %2 = arith.cmpi ne, %1, %c0_i32_0 : i32
    scf.if %2 {
      %cst_9 = arith.constant 0.000000e+00 : f32
      %12 = vector.broadcast %cst_9 : f32 to vector<128x512xf32>
      %c0_10 = arith.constant 0 : index
      %c0_11 = arith.constant 0 : index
      %13 = vector.load %arg7[%c0_10, %c0_11] : memref<128x512xf32, #tpu.memory_space<vmem>>, vector<128x512xf32>
      tpu.vector_store %arg7[%c0_10, %c0_11], %12 {strides = array<i32>} : memref<128x512xf32, #tpu.memory_space<vmem>>, vector<128x512xf32>,
    } else {
    }
    %c0 = arith.constant 0 : index
    %c0_1 = arith.constant 0 : index
    %3 = vector.load %arg7[%c0, %c0_1] : memref<128x512xf32, #tpu.memory_space<vmem>>, vector<128x512xf32>
    %c0_2 = arith.constant 0 : index
    %c0_3 = arith.constant 0 : index
    %4 = vector.load %arg3[%c0_2, %c0_3] : memref<128x512xbf16, #tpu.memory_space<vmem>>, vector<128x512xbf16>
    %c0_4 = arith.constant 0 : index
    %c0_5 = arith.constant 0 : index
    %5 = vector.load %arg4[%c0_4, %c0_5] : memref<512x512xbf16, #tpu.memory_space<vmem>>, vector<512x512xbf16>
    %cst = arith.constant dense<0.000000e+00> : vector<128x512xf32>
    %6 = tpu.matmul %4, %5, %cst {dimension_numbers = #tpu.dot_dimension_numbers<[1], [0], [0], [1], [0, 0, 1, 1], [], []>} : vector<128x512xbf16>, vector<512x512xbf16>, vector<128x512xf32> -> vector<128x512xf32>
    %7 = arith.addf %3, %6 : vector<128x512xf32>
    %c0_6 = arith.constant 0 : index
    %c0_7 = arith.constant 0 : index
    %8 = vector.load %arg7[%c0_6, %c0_7] : memref<128x512xf32, #tpu.memory_space<vmem>>, vector<128x512xf32>
    tpu.vector_store %arg7[%c0_6, %c0_7], %7 {strides = array<i32>} : memref<128x512xf32, #tpu.memory_space<vmem>>, vector<128x512xf32>,
    %c1_i32 = arith.constant 1 : i32
    %9 = arith.cmpi eq, %arg2, %c1_i32 : i32
    %10 = arith.extui %9 : i1 to i32
    %c0_i32_8 = arith.constant 0 : i32
    %11 = arith.cmpi ne, %10, %c0_i32_8 : i32
    scf.if %11 {
      %c0_9 = arith.constant 0 : index
      %c0_10 = arith.constant 0 : index
      %12 = vector.load %arg7[%c0_9, %c0_10] : memref<128x512xf32, #tpu.memory_space<vmem>>, vector<128x512xf32>
      %c0_11 = arith.constant 0 : index
      %c0_12 = arith.constant 0 : index
      %13 = vector.load %arg5[%c0_11, %c0_12] : memref<1x512xf32, #tpu.memory_space<vmem>>, vector<1x512xf32>
      %14 = vector.broadcast %13 : vector<1x512xf32> to vector<128x512xf32>
      %15 = arith.addf %12, %14 : vector<128x512xf32>
      %cst_13 = arith.constant 0.000000e+00 : f32
      %16 = vector.broadcast %cst_13 : f32 to vector<128x512xf32>
      %17 = arith.maximumf %15, %16 : vector<128x512xf32>
      %18 = arith.truncf %17 : vector<128x512xf32> to vector<128x512xbf16>
      %c0_14 = arith.constant 0 : index
      %c0_15 = arith.constant 0 : index
      %19 = vector.load %arg6[%c0_14, %c0_15] : memref<128x512xbf16, #tpu.memory_space<vmem>>, vector<128x512xbf16>
      tpu.vector_store %arg6[%c0_14, %c0_15], %18 {strides = array<i32>} : memref<128x512xbf16, #tpu.memory_space<vmem>>, vector<128x512xbf16>,
    } else {
    }
    return
  }
  func.func @transform_0(%arg0: i32, %arg1: i32, %arg2: i32) -> (i32, i32) {
    %c0_i32 = arith.constant 0 : i32
    return %arg0, %arg2 : i32, i32
  }
  func.func @transform_1(%arg0: i32, %arg1: i32, %arg2: i32) -> (i32, i32) {
    %c0_i32 = arith.constant 0 : i32
    return %arg2, %arg1 : i32, i32
  }
  func.func @transform_2(%arg0: i32, %arg1: i32, %arg2: i32) -> (i32, i32) {
    %c0_i32 = arith.constant 0 : i32
    %c0_i32_0 = arith.constant 0 : i32
    return %c0_i32, %arg1 : i32, i32
  }
  func.func @transform_3(%arg0: i32, %arg1: i32, %arg2: i32) -> (i32, i32) {
    %c0_i32 = arith.constant 0 : i32
    return %arg0, %arg1 : i32, i32
  }
}

module attributes {stable_mosaic.version = 11 : i64} {
  func.func @_mm_fused_kernel(%arg0: i32, %arg1: i32, %arg2: memref<128x512xbf16, #tpu.memory_space<vmem>>, %arg3: memref<512x512xbf16, #tpu.memory_space<vmem>>, %arg4: memref<1x512xf32, #tpu.memory_space<vmem>>, %arg5: memref<128x512xf32, #tpu.memory_space<vmem>>) attributes {dimension_semantics = [#tpu.dimension_semantics<parallel>, #tpu.dimension_semantics<parallel>], iteration_bounds = array<i64: 1, 1>, scalar_prefetch = 0 : i64, scratch_operands = 0 : i64, tpu.core_type = #tpu.core_type<tc>, window_params = [{transform_indices = @transform_0, window_bounds = array<i64: 128, 512>}, {transform_indices = @transform_1, window_bounds = array<i64: 512, 512>}, {transform_indices = @transform_2, window_bounds = array<i64: 1, 512>}, {transform_indices = @transform_3, window_bounds = array<i64: 128, 512>}]} {
    %c0 = arith.constant 0 : index
    %c0_0 = arith.constant 0 : index
    %0 = vector.load %arg2[%c0, %c0_0] : memref<128x512xbf16, #tpu.memory_space<vmem>>, vector<128x512xbf16>
    %c0_1 = arith.constant 0 : index
    %c0_2 = arith.constant 0 : index
    %1 = vector.load %arg3[%c0_1, %c0_2] : memref<512x512xbf16, #tpu.memory_space<vmem>>, vector<512x512xbf16>
    %cst = arith.constant dense<0.000000e+00> : vector<128x512xf32>
    %2 = tpu.matmul %0, %1, %cst {dimension_numbers = #tpu.dot_dimension_numbers<[1], [0], [0], [1], [0, 0, 1, 1], [], []>} : vector<128x512xbf16>, vector<512x512xbf16>, vector<128x512xf32> -> vector<128x512xf32>
    %c0_3 = arith.constant 0 : index
    %c0_4 = arith.constant 0 : index
    %3 = vector.load %arg4[%c0_3, %c0_4] : memref<1x512xf32, #tpu.memory_space<vmem>>, vector<1x512xf32>
    %4 = vector.broadcast %3 : vector<1x512xf32> to vector<128x512xf32>
    %5 = arith.addf %2, %4 : vector<128x512xf32>
    %c0_5 = arith.constant 0 : index
    %c0_6 = arith.constant 0 : index
    %6 = vector.load %arg5[%c0_5, %c0_6] : memref<128x512xf32, #tpu.memory_space<vmem>>, vector<128x512xf32>
    tpu.vector_store %arg5[%c0_5, %c0_6], %5 {strides = array<i32>} : memref<128x512xf32, #tpu.memory_space<vmem>>, vector<128x512xf32>,
    return
  }
  func.func @transform_0(%arg0: i32, %arg1: i32) -> (i32, i32) {
    %c0_i32 = arith.constant 0 : i32
    %c0_i32_0 = arith.constant 0 : i32
    return %arg0, %c0_i32 : i32, i32
  }
  func.func @transform_1(%arg0: i32, %arg1: i32) -> (i32, i32) {
    %c0_i32 = arith.constant 0 : i32
    %c0_i32_0 = arith.constant 0 : i32
    return %c0_i32, %arg1 : i32, i32
  }
  func.func @transform_2(%arg0: i32, %arg1: i32) -> (i32, i32) {
    %c0_i32 = arith.constant 0 : i32
    %c0_i32_0 = arith.constant 0 : i32
    return %c0_i32, %arg1 : i32, i32
  }
  func.func @transform_3(%arg0: i32, %arg1: i32) -> (i32, i32) {
    %c0_i32 = arith.constant 0 : i32
    return %arg0, %arg1 : i32, i32
  }
}

</mosaic_0001>

<llo_original>
// kernel: _lambda_.4
$region0: #{_lambda_.4}
  #allocation0 [shape = 'u32[]', space=smem, size = 0x4, offset = 0x4, fixed_abs, tag = 'smem constant byte address 0x4 - core index']
  #allocation1 [shape = 'u32[144,128]{1,0:T(1,128)}', space=vmem, size = 0x12000, scoped, tag = 'internal scratch']
  #allocation2 [shape = 'f32[32,512]{1,0:T(8,128)}', space=vmem, size = 0x10000, scoped, tag = 'scratch operand']
  %s0 = inlined_call_operand.vmem [shape: f32[32,1024], index: 0, kind: input, shape index: {}]
  %s1 = inlined_call_operand.vmem [shape: bf16[1024,2048], index: 1, kind: input, shape index: {}]
  %s2 = inlined_call_operand.vmem [shape: f32[1,2048], index: 2, kind: input, shape index: {}]
  %s3 = inlined_call_operand.vmem [shape: bf16[32,2048], index: 3, kind: output, shape index: {}]
  %s4 = sld [smem:[#allocation0]]
  $region118: #{_lambda_.4} parent=0
    _
  %s6 = ssub.s32 1, %s4
  %s7 = scalar_select 0, %s6, %s4
  $region1: #{_lambda_.4} parent=0
    #allocation3 [shape = 'u8[131072]{0}', space=vmem, size = 0x20000, scoped, tag = 'input window, operand 0']
    #allocation4 [shape = 'u8[1048576]{0}', space=vmem, size = 0x100000, scoped, tag = 'input window, operand 1']
    #allocation5 [shape = 'u8[65536]{0}', space=vmem, size = 0x10000, scoped, tag = 'output window, operand 0']
    loop: start=0, step=1, limit=10
    $region2: #{_lambda_.4} parent=1 // loop_pre_header
      _
    $region3: #{_lambda_.4} parent=1 // loop_header
      %s9 = sphi 0, %s13
      %p10 = scmp.ge.s32.totalorder %s9, 10
      %s16 = sphi 0, %s35
      %s17 = sphi 0, %s31
      %s18 = sphi 0, %s27
      %s19 = sphi 0, %s16
      %s20 = sphi 0, %s17
      %s21 = sphi 0, %s18
      %s22 = sphi 0, %s19
      %s23 = sphi 0, %s20
      %s24 = sphi 0, %s21
      %s40 = sphi 0, %s42
      %s43 = sphi 0, %s40
      %s44 = sphi 0, %s43
      %s60 = sphi 0, %s44
      %s68 = sphi 0, %s70
      %s71 = sphi 0, %s68
      %s72 = sphi 0, %s71
      %s88 = sphi 0, %s72
      %s94 = sphi 0, %s96
      %s97 = sphi 0, %s94
      %s98 = sphi 0, %s97
      %s114 = sphi 0, %s98
      %s122 = sphi 0, %s124
      %s125 = sphi 0, %s122
      %s126 = sphi 0, %s125
      %s142 = sphi 0, %s126
    $region4: #{_lambda_.4} parent=1 // loop_header_branch
      %12 = sbr.rel (%p10) target = $region8
    $region5: #{_lambda_.4} parent=1 // loop_body
      %s14 = ssub.s32 %s9, 1
      %s15 = ssub.s32 %s9, 2
      %s25 = sadd.s32 1, %s18
      %p26 = scmp.ge.s32.totalorder %s25, 2
      %s27 = scalar_select %p26, 0, %s25
      %s28 = sadd.s32 1, %s17
      %s29 = scalar_select %p26, %s28, %s17
      %p30 = scmp.ge.s32.totalorder %s29, 4
      %s31 = scalar_select %p30, 0, %s29
      %s32 = sadd.s32 1, %s16
      %s33 = scalar_select %p30, %s32, %s16
      %p34 = scmp.ge.s32.totalorder %s33, 1
      %s35 = scalar_select %p34, 0, %s33
      %s36 = ssub.s32 %s16, %s35
      %s37 = ssub.s32 %s18, %s27
      %s38 = sor.u32 %s36, %s37
      %p39 = scmp.eq.s32.totalorder %s38, 0
      %s41 = sadd.s32 %s40, 1
      %s42 = scalar_select %p39, %s40, %s41
      %p45 = pneg %p39
      %p46 = scmp.eq.s32.totalorder %s9, 7
      %p47 = por %p45, %p46
      %p48 = scmp.ne.s32.totalorder %s40, %s43
      %p49 = scmp.eq.s32.totalorder %s9, 0
      %p50 = por %p48, %p49
      %p51 = scmp.ne.s32.totalorder %s40, %s43
      %p52 = scmp.eq.s32.totalorder %s14, 7
      %p53 = por %p51, %p52
      %p54 = scmp.ne.s32.totalorder %s43, %s44
      %p55 = scmp.eq.s32.totalorder %s14, 0
      %p56 = por %p54, %p55
      %p57 = scmp.ne.s32.totalorder %s43, %s44
      %p58 = scmp.eq.s32.totalorder %s15, 7
      %p59 = por %p57, %p58
      %p61 = scmp.ne.s32.totalorder %s44, %s60
      %p62 = scmp.eq.s32.totalorder %s15, 0
      %p63 = por %p61, %p62
      %s64 = ssub.s32 %s18, %s27
      %s65 = ssub.s32 %s17, %s31
      %s66 = sor.u32 %s64, %s65
      %p67 = scmp.eq.s32.totalorder %s66, 0
      %s69 = sadd.s32 %s68, 1
      %s70 = scalar_select %p67, %s68, %s69
      %p73 = pneg %p67
      %p74 = scmp.eq.s32.totalorder %s9, 7
      %p75 = por %p73, %p74
      %p76 = scmp.ne.s32.totalorder %s68, %s71
      %p77 = scmp.eq.s32.totalorder %s9, 0
      %p78 = por %p76, %p77
      %p79 = scmp.ne.s32.totalorder %s68, %s71
      %p80 = scmp.eq.s32.totalorder %s14, 7
      %p81 = por %p79, %p80
      %p82 = scmp.ne.s32.totalorder %s71, %s72
      %p83 = scmp.eq.s32.totalorder %s14, 0
      %p84 = por %p82, %p83
      %p85 = scmp.ne.s32.totalorder %s71, %s72
      %p86 = scmp.eq.s32.totalorder %s15, 7
      %p87 = por %p85, %p86
      %p89 = scmp.ne.s32.totalorder %s72, %s88
      %p90 = scmp.eq.s32.totalorder %s15, 0
      %p91 = por %p89, %p90
      %s92 = ssub.s32 %s17, %s31
      %p93 = scmp.eq.s32.totalorder %s92, 0
      %s95 = sadd.s32 %s94, 1
      %s96 = scalar_select %p93, %s94, %s95
      %p99 = pneg %p93
      %p100 = scmp.eq.s32.totalorder %s9, 7
      %p101 = por %p99, %p100
      %p102 = scmp.ne.s32.totalorder %s94, %s97
      %p103 = scmp.eq.s32.totalorder %s9, 0
      %p104 = por %p102, %p103
      %p105 = scmp.ne.s32.totalorder %s94, %s97
      %p106 = scmp.eq.s32.totalorder %s14, 7
      %p107 = por %p105, %p106
      %p108 = scmp.ne.s32.totalorder %s97, %s98
      %p109 = scmp.eq.s32.totalorder %s14, 0
      %p110 = por %p108, %p109
      %p111 = scmp.ne.s32.totalorder %s97, %s98
      %p112 = scmp.eq.s32.totalorder %s15, 7
      %p113 = por %p111, %p112
      %p115 = scmp.ne.s32.totalorder %s98, %s114
      %p116 = scmp.eq.s32.totalorder %s15, 0
      %p117 = por %p115, %p116
      %s118 = ssub.s32 %s16, %s35
      %s119 = ssub.s32 %s17, %s31
      %s120 = sor.u32 %s118, %s119
      %p121 = scmp.eq.s32.totalorder %s120, 0
      %s123 = sadd.s32 %s122, 1
      %s124 = scalar_select %p121, %s122, %s123
      %p127 = pneg %p121
      %p128 = scmp.eq.s32.totalorder %s9, 7
      %p129 = por %p127, %p128
      %p130 = scmp.ne.s32.totalorder %s122, %s125
      %p131 = scmp.eq.s32.totalorder %s9, 0
      %p132 = por %p130, %p131
      %p133 = scmp.ne.s32.totalorder %s122, %s125
      %p134 = scmp.eq.s32.totalorder %s14, 7
      %p135 = por %p133, %p134
      %p136 = scmp.ne.s32.totalorder %s125, %s126
      %p137 = scmp.eq.s32.totalorder %s14, 0
      %p138 = por %p136, %p137
      %p139 = scmp.ne.s32.totalorder %s125, %s126
      %p140 = scmp.eq.s32.totalorder %s15, 7
      %p141 = por %p139, %p140
      %p143 = scmp.ne.s32.totalorder %s126, %s142
      %p144 = scmp.eq.s32.totalorder %s15, 0
      %p145 = por %p143, %p144
      %p146 = scmp.le.s32.totalorder 1, %s9
      %p147 = scmp.lt.s32.totalorder %s9, 9
      %p148 = pnand %p146, %p147
      %p149 = pneg %p148
      // Predicated region
      $region9: #{_lambda_.4} parent=5 // pred_check
        _
      $region10: #{_lambda_.4} parent=5 // pred_check_branch
        %151 = sbr.rel (%p148) target = $region12
      $region11: #{_lambda_.4} parent=5 // pred_region
        %s152 = ssub.s32 %s9, 1
      $region12: #{_lambda_.4} parent=5 // pred_fallthru
        _
      %p153 = scmp.lt.s32.totalorder %s9, 8
      // Predicated region
      $region13: #{_lambda_.4} parent=5 // pred_check
        %p154 = pneg %p153
      $region14: #{_lambda_.4} parent=5 // pred_check_branch
        %156 = sbr.rel (%p154) target = $region16
      $region15: #{_lambda_.4} parent=5 // pred_region
        // Predicated region
        $region17: #{_lambda_.4} parent=15 // pred_check
          %p157 = pneg %p50
        $region18: #{_lambda_.4} parent=15 // pred_check_branch
          %159 = sbr.rel (%p157) target = $region20
        $region19: #{_lambda_.4} parent=15 // pred_region
          %s160 = sand.u32 %s40, 1
          %s161 = sand.u32 %s40, 1
          %s162 = smul.addr %s161, 128
          %s163 = scalar_lea.vmem [#allocation3], %s162
          %s164 = smul.u32 4, %s16
          %s165 = smul.u32 4, %s18
          %s166 = smul.addr %s164, 8
          %s167 = sadd.s32 %s165, %s166
          %s168 = smul.addr %s167, 8
          %s169 = scalar_lea.vmem %s0, %s168
          // Predicated region
          $region21: #{_lambda_.4} parent=19 // pred_check
            _
          $region22: #{_lambda_.4} parent=19 // pred_check_branch
            %171 = sbr.rel (0) target = $region24
          $region23: #{_lambda_.4} parent=19 // pred_region
            // Predicated region
            $region25: #{_lambda_.4} parent=23 // pred_check
              _
            $region26: #{_lambda_.4} parent=23 // pred_check_branch
              %173 = sbr.rel (0) target = $region28
            $region27: #{_lambda_.4} parent=23 // pred_region
              loop: start=0, step=1, limit=1
              $region29: #{_lambda_.4} parent=27 // loop_pre_header
                _
              $region30: #{_lambda_.4} parent=27 // loop_header
                %s175 = sphi 0, %s179
                %p176 = scmp.ge.s32.totalorder %s175, 1
                %s180 = sphi %s169, %s169
                %s181 = sphi %s163, %s163
              $region31: #{_lambda_.4} parent=27 // loop_header_branch
                %178 = sbr.rel (%p176) target = $region35
              $region32: #{_lambda_.4} parent=27 // loop_body
                %v182 = vld [vmem:[%s180] sm:$0xff]
                %183 = vst [vmem:[%s181] sm:$0xff] %v182
                %v184 = vld [vmem:[%s180 + $0x8] sm:$0xff]
                %185 = vst [vmem:[%s181 + $0x8] sm:$0xff] %v184
                %v186 = vld [vmem:[%s180 + $0x10] sm:$0xff]
                %187 = vst [vmem:[%s181 + $0x10] sm:$0xff] %v186
                %v188 = vld [vmem:[%s180 + $0x18] sm:$0xff]
                %189 = vst [vmem:[%s181 + $0x18] sm:$0xff] %v188
                %v190 = vld [vmem:[%s180 + $0x40] sm:$0xff]
                %191 = vst [vmem:[%s181 + $0x20] sm:$0xff] %v190
                %v192 = vld [vmem:[%s180 + $0x48] sm:$0xff]
                %193 = vst [vmem:[%s181 + $0x28] sm:$0xff] %v192
                %v194 = vld [vmem:[%s180 + $0x50] sm:$0xff]
                %195 = vst [vmem:[%s181 + $0x30] sm:$0xff] %v194
                %v196 = vld [vmem:[%s180 + $0x58] sm:$0xff]
                %197 = vst [vmem:[%s181 + $0x38] sm:$0xff] %v196
                %v198 = vld [vmem:[%s180 + $0x80] sm:$0xff]
                %199 = vst [vmem:[%s181 + $0x40] sm:$0xff] %v198
                %v200 = vld [vmem:[%s180 + $0x88] sm:$0xff]
                %201 = vst [vmem:[%s181 + $0x48] sm:$0xff] %v200
                %v202 = vld [vmem:[%s180 + $0x90] sm:$0xff]
                %203 = vst [vmem:[%s181 + $0x50] sm:$0xff] %v202
                %v204 = vld [vmem:[%s180 + $0x98] sm:$0xff]
                %205 = vst [vmem:[%s181 + $0x58] sm:$0xff] %v204
                %v206 = vld [vmem:[%s180 + $0xc0] sm:$0xff]
                %207 = vst [vmem:[%s181 + $0x60] sm:$0xff] %v206
                %v208 = vld [vmem:[%s180 + $0xc8] sm:$0xff]
                %209 = vst [vmem:[%s181 + $0x68] sm:$0xff] %v208
                %v210 = vld [vmem:[%s180 + $0xd0] sm:$0xff]
                %211 = vst [vmem:[%s181 + $0x70] sm:$0xff] %v210
                %v212 = vld [vmem:[%s180 + $0xd8] sm:$0xff]
                %213 = vst [vmem:[%s181 + $0x78] sm:$0xff] %v212
              $region33: #{_lambda_.4} parent=27 // loop_footer
                %s179 = sadd.s32 1, %s175
              $region34: #{_lambda_.4} parent=27 // loop_footer_branch
                %174 = sbr.rel target = $region30
              $region35: #{_lambda_.4} parent=27 // loop_exit
                _
            $region28: #{_lambda_.4} parent=23 // pred_fallthru
              _
            // Predicated region
            $region36: #{_lambda_.4} parent=23 // pred_check
              _
            $region37: #{_lambda_.4} parent=23 // pred_check_branch
              %215 = sbr.rel target = $region39
            $region38: #{_lambda_.4} parent=23 // pred_region
              _
            $region39: #{_lambda_.4} parent=23 // pred_fallthru
              _
          $region24: #{_lambda_.4} parent=19 // pred_fallthru
            _
          %216 = vnop
        $region20: #{_lambda_.4} parent=15 // pred_fallthru
          _
        // Predicated region
        $region40: #{_lambda_.4} parent=15 // pred_check
          %p217 = pneg %p78
        $region41: #{_lambda_.4} parent=15 // pred_check_branch
          %219 = sbr.rel (%p217) target = $region43
        $region42: #{_lambda_.4} parent=15 // pred_region
          %s220 = sand.u32 %s68, 1
          %s221 = sand.u32 %s68, 1
          %s222 = smul.addr %s221, 1024
          %s223 = scalar_lea.vmem [#allocation4], %s222
          %s224 = smul.u32 64, %s18
          %s225 = smul.u32 4, %s17
          %s226 = smul.addr %s224, 16
          %s227 = sadd.s32 %s225, %s226
          %s228 = smul.addr %s227, 4
          %s229 = scalar_lea.vmem %s1, %s228
          // Predicated region
          $region44: #{_lambda_.4} parent=42 // pred_check
            _
          $region45: #{_lambda_.4} parent=42 // pred_check_branch
            %231 = sbr.rel (0) target = $region47
          $region46: #{_lambda_.4} parent=42 // pred_region
            // Predicated region
            $region48: #{_lambda_.4} parent=46 // pred_check
              _
            $region49: #{_lambda_.4} parent=46 // pred_check_branch
              %233 = sbr.rel (0) target = $region51
            $region50: #{_lambda_.4} parent=46 // pred_region
              loop: start=0, step=1, limit=1
              $region52: #{_lambda_.4} parent=50 // loop_pre_header
                _
              $region53: #{_lambda_.4} parent=50 // loop_header
                %s235 = sphi 0, %s239
                %p236 = scmp.ge.s32.totalorder %s235, 1
                %s240 = sphi %s229, %s229
                %s241 = sphi %s223, %s223
              $region54: #{_lambda_.4} parent=50 // loop_header_branch
                %238 = sbr.rel (%p236) target = $region58
              $region55: #{_lambda_.4} parent=50 // loop_body
                %v242 = vld [vmem:[%s240] sm:$0xff]
                %243 = vst [vmem:[%s241] sm:$0xff] %v242
                %v244 = vld [vmem:[%s240 + $0x8] sm:$0xff]
                %245 = vst [vmem:[%s241 + $0x8] sm:$0xff] %v244
                %v246 = vld [vmem:[%s240 + $0x40] sm:$0xff]
                %247 = vst [vmem:[%s241 + $0x10] sm:$0xff] %v246
                %v248 = vld [vmem:[%s240 + $0x48] sm:$0xff]
                %249 = vst [vmem:[%s241 + $0x18] sm:$0xff] %v248
                %v250 = vld [vmem:[%s240 + $0x80] sm:$0xff]
                %251 = vst [vmem:[%s241 + $0x20] sm:$0xff] %v250
                %v252 = vld [vmem:[%s240 + $0x88] sm:$0xff]
                %253 = vst [vmem:[%s241 + $0x28] sm:$0xff] %v252
                %v254 = vld [vmem:[%s240 + $0xc0] sm:$0xff]
                %255 = vst [vmem:[%s241 + $0x30] sm:$0xff] %v254
                %v256 = vld [vmem:[%s240 + $0xc8] sm:$0xff]
                %257 = vst [vmem:[%s241 + $0x38] sm:$0xff] %v256
                %v258 = vld [vmem:[%s240 + $0x100] sm:$0xff]
                %259 = vst [vmem:[%s241 + $0x40] sm:$0xff] %v258
                %v260 = vld [vmem:[%s240 + $0x108] sm:$0xff]
                %261 = vst [vmem:[%s241 + $0x48] sm:$0xff] %v260
                %v262 = vld [vmem:[%s240 + $0x140] sm:$0xff]
                %263 = vst [vmem:[%s241 + $0x50] sm:$0xff] %v262
                %v264 = vld [vmem:[%s240 + $0x148] sm:$0xff]
                %265 = vst [vmem:[%s241 + $0x58] sm:$0xff] %v264
                %v266 = vld [vmem:[%s240 + $0x180] sm:$0xff]
                %267 = vst [vmem:[%s241 + $0x60] sm:$0xff] %v266
                %v268 = vld [vmem:[%s240 + $0x188] sm:$0xff]
                %269 = vst [vmem:[%s241 + $0x68] sm:$0xff] %v268
                %v270 = vld [vmem:[%s240 + $0x1c0] sm:$0xff]
                %271 = vst [vmem:[%s241 + $0x70] sm:$0xff] %v270
                %v272 = vld [vmem:[%s240 + $0x1c8] sm:$0xff]
                %273 = vst [vmem:[%s241 + $0x78] sm:$0xff] %v272
                %v274 = vld [vmem:[%s240 + $0x200] sm:$0xff]
                %275 = vst [vmem:[%s241 + $0x80] sm:$0xff] %v274
                %v276 = vld [vmem:[%s240 + $0x208] sm:$0xff]
                %277 = vst [vmem:[%s241 + $0x88] sm:$0xff] %v276
                %v278 = vld [vmem:[%s240 + $0x240] sm:$0xff]
                %279 = vst [vmem:[%s241 + $0x90] sm:$0xff] %v278
                %v280 = vld [vmem:[%s240 + $0x248] sm:$0xff]
                %281 = vst [vmem:[%s241 + $0x98] sm:$0xff] %v280
                %v282 = vld [vmem:[%s240 + $0x280] sm:$0xff]
                %283 = vst [vmem:[%s241 + $0xa0] sm:$0xff] %v282
                %v284 = vld [vmem:[%s240 + $0x288] sm:$0xff]
                %285 = vst [vmem:[%s241 + $0xa8] sm:$0xff] %v284
                %v286 = vld [vmem:[%s240 + $0x2c0] sm:$0xff]
                %287 = vst [vmem:[%s241 + $0xb0] sm:$0xff] %v286
                %v288 = vld [vmem:[%s240 + $0x2c8] sm:$0xff]
                %289 = vst [vmem:[%s241 + $0xb8] sm:$0xff] %v288
                %v290 = vld [vmem:[%s240 + $0x300] sm:$0xff]
                %291 = vst [vmem:[%s241 + $0xc0] sm:$0xff] %v290
                %v292 = vld [vmem:[%s240 + $0x308] sm:$0xff]
                %293 = vst [vmem:[%s241 + $0xc8] sm:$0xff] %v292
                %v294 = vld [vmem:[%s240 + $0x340] sm:$0xff]
                %295 = vst [vmem:[%s241 + $0xd0] sm:$0xff] %v294
                %v296 = vld [vmem:[%s240 + $0x348] sm:$0xff]
                %297 = vst [vmem:[%s241 + $0xd8] sm:$0xff] %v296
                %v298 = vld [vmem:[%s240 + $0x380] sm:$0xff]
                %299 = vst [vmem:[%s241 + $0xe0] sm:$0xff] %v298
                %v300 = vld [vmem:[%s240 + $0x388] sm:$0xff]
                %301 = vst [vmem:[%s241 + $0xe8] sm:$0xff] %v300
                %v302 = vld [vmem:[%s240 + $0x3c0] sm:$0xff]
                %303 = vst [vmem:[%s241 + $0xf0] sm:$0xff] %v302
                %v304 = vld [vmem:[%s240 + $0x3c8] sm:$0xff]
                %305 = vst [vmem:[%s241 + $0xf8] sm:$0xff] %v304
                %v306 = vld [vmem:[%s240 + $0x400] sm:$0xff]
                %307 = vst [vmem:[%s241 + $0x100] sm:$0xff] %v306
                %v308 = vld [vmem:[%s240 + $0x408] sm:$0xff]
                %309 = vst [vmem:[%s241 + $0x108] sm:$0xff] %v308
                %v310 = vld [vmem:[%s240 + $0x440] sm:$0xff]
                %311 = vst [vmem:[%s241 + $0x110] sm:$0xff] %v310
                %v312 = vld [vmem:[%s240 + $0x448] sm:$0xff]
                %313 = vst [vmem:[%s241 + $0x118] sm:$0xff] %v312
                %v314 = vld [vmem:[%s240 + $0x480] sm:$0xff]
                %315 = vst [vmem:[%s241 + $0x120] sm:$0xff] %v314
                %v316 = vld [vmem:[%s240 + $0x488] sm:$0xff]
                %317 = vst [vmem:[%s241 + $0x128] sm:$0xff] %v316
                %v318 = vld [vmem:[%s240 + $0x4c0] sm:$0xff]
                %319 = vst [vmem:[%s241 + $0x130] sm:$0xff] %v318
                %v320 = vld [vmem:[%s240 + $0x4c8] sm:$0xff]
                %321 = vst [vmem:[%s241 + $0x138] sm:$0xff] %v320
                %v322 = vld [vmem:[%s240 + $0x500] sm:$0xff]
                %323 = vst [vmem:[%s241 + $0x140] sm:$0xff] %v322
                %v324 = vld [vmem:[%s240 + $0x508] sm:$0xff]
                %325 = vst [vmem:[%s241 + $0x148] sm:$0xff] %v324
                %v326 = vld [vmem:[%s240 + $0x540] sm:$0xff]
                %327 = vst [vmem:[%s241 + $0x150] sm:$0xff] %v326
                %v328 = vld [vmem:[%s240 + $0x548] sm:$0xff]
                %329 = vst [vmem:[%s241 + $0x158] sm:$0xff] %v328
                %v330 = vld [vmem:[%s240 + $0x580] sm:$0xff]
                %331 = vst [vmem:[%s241 + $0x160] sm:$0xff] %v330
                %v332 = vld [vmem:[%s240 + $0x588] sm:$0xff]
                %333 = vst [vmem:[%s241 + $0x168] sm:$0xff] %v332
                %v334 = vld [vmem:[%s240 + $0x5c0] sm:$0xff]
                %335 = vst [vmem:[%s241 + $0x170] sm:$0xff] %v334
                %v336 = vld [vmem:[%s240 + $0x5c8] sm:$0xff]
                %337 = vst [vmem:[%s241 + $0x178] sm:$0xff] %v336
                %v338 = vld [vmem:[%s240 + $0x600] sm:$0xff]
                %339 = vst [vmem:[%s241 + $0x180] sm:$0xff] %v338
                %v340 = vld [vmem:[%s240 + $0x608] sm:$0xff]
                %341 = vst [vmem:[%s241 + $0x188] sm:$0xff] %v340
                %v342 = vld [vmem:[%s240 + $0x640] sm:$0xff]
                %343 = vst [vmem:[%s241 + $0x190] sm:$0xff] %v342
                %v344 = vld [vmem:[%s240 + $0x648] sm:$0xff]
                %345 = vst [vmem:[%s241 + $0x198] sm:$0xff] %v344
                %v346 = vld [vmem:[%s240 + $0x680] sm:$0xff]
                %347 = vst [vmem:[%s241 + $0x1a0] sm:$0xff] %v346
                %v348 = vld [vmem:[%s240 + $0x688] sm:$0xff]
                %349 = vst [vmem:[%s241 + $0x1a8] sm:$0xff] %v348
                %v350 = vld [vmem:[%s240 + $0x6c0] sm:$0xff]
                %351 = vst [vmem:[%s241 + $0x1b0] sm:$0xff] %v350
                %v352 = vld [vmem:[%s240 + $0x6c8] sm:$0xff]
                %353 = vst [vmem:[%s241 + $0x1b8] sm:$0xff] %v352
                %v354 = vld [vmem:[%s240 + $0x700] sm:$0xff]
                %355 = vst [vmem:[%s241 + $0x1c0] sm:$0xff] %v354
                %v356 = vld [vmem:[%s240 + $0x708] sm:$0xff]
                %357 = vst [vmem:[%s241 + $0x1c8] sm:$0xff] %v356
                %v358 = vld [vmem:[%s240 + $0x740] sm:$0xff]
                %359 = vst [vmem:[%s241 + $0x1d0] sm:$0xff] %v358
                %v360 = vld [vmem:[%s240 + $0x748] sm:$0xff]
                %361 = vst [vmem:[%s241 + $0x1d8] sm:$0xff] %v360
                %v362 = vld [vmem:[%s240 + $0x780] sm:$0xff]
                %363 = vst [vmem:[%s241 + $0x1e0] sm:$0xff] %v362
                %v364 = vld [vmem:[%s240 + $0x788] sm:$0xff]
                %365 = vst [vmem:[%s241 + $0x1e8] sm:$0xff] %v364
                %v366 = vld [vmem:[%s240 + $0x7c0] sm:$0xff]
                %367 = vst [vmem:[%s241 + $0x1f0] sm:$0xff] %v366
                %v368 = vld [vmem:[%s240 + $0x7c8] sm:$0xff]
                %369 = vst [vmem:[%s241 + $0x1f8] sm:$0xff] %v368
                %v370 = vld [vmem:[%s240 + $0x800] sm:$0xff]
                %371 = vst [vmem:[%s241 + $0x200] sm:$0xff] %v370
                %v372 = vld [vmem:[%s240 + $0x808] sm:$0xff]
                %373 = vst [vmem:[%s241 + $0x208] sm:$0xff] %v372
                %v374 = vld [vmem:[%s240 + $0x840] sm:$0xff]
                %375 = vst [vmem:[%s241 + $0x210] sm:$0xff] %v374
                %v376 = vld [vmem:[%s240 + $0x848] sm:$0xff]
                %377 = vst [vmem:[%s241 + $0x218] sm:$0xff] %v376
                %v378 = vld [vmem:[%s240 + $0x880] sm:$0xff]
                %379 = vst [vmem:[%s241 + $0x220] sm:$0xff] %v378
                %v380 = vld [vmem:[%s240 + $0x888] sm:$0xff]
                %381 = vst [vmem:[%s241 + $0x228] sm:$0xff] %v380
                %v382 = vld [vmem:[%s240 + $0x8c0] sm:$0xff]
                %383 = vst [vmem:[%s241 + $0x230] sm:$0xff] %v382
                %v384 = vld [vmem:[%s240 + $0x8c8] sm:$0xff]
                %385 = vst [vmem:[%s241 + $0x238] sm:$0xff] %v384
                %v386 = vld [vmem:[%s240 + $0x900] sm:$0xff]
                %387 = vst [vmem:[%s241 + $0x240] sm:$0xff] %v386
                %v388 = vld [vmem:[%s240 + $0x908] sm:$0xff]
                %389 = vst [vmem:[%s241 + $0x248] sm:$0xff] %v388
                %v390 = vld [vmem:[%s240 + $0x940] sm:$0xff]
                %391 = vst [vmem:[%s241 + $0x250] sm:$0xff] %v390
                %v392 = vld [vmem:[%s240 + $0x948] sm:$0xff]
                %393 = vst [vmem:[%s241 + $0x258] sm:$0xff] %v392
                %v394 = vld [vmem:[%s240 + $0x980] sm:$0xff]
                %395 = vst [vmem:[%s241 + $0x260] sm:$0xff] %v394
                %v396 = vld [vmem:[%s240 + $0x988] sm:$0xff]
                %397 = vst [vmem:[%s241 + $0x268] sm:$0xff] %v396
                %v398 = vld [vmem:[%s240 + $0x9c0] sm:$0xff]
                %399 = vst [vmem:[%s241 + $0x270] sm:$0xff] %v398
                %v400 = vld [vmem:[%s240 + $0x9c8] sm:$0xff]
                %401 = vst [vmem:[%s241 + $0x278] sm:$0xff] %v400
                %v402 = vld [vmem:[%s240 + $0xa00] sm:$0xff]
                %403 = vst [vmem:[%s241 + $0x280] sm:$0xff] %v402
                %v404 = vld [vmem:[%s240 + $0xa08] sm:$0xff]
                %405 = vst [vmem:[%s241 + $0x288] sm:$0xff] %v404
                %v406 = vld [vmem:[%s240 + $0xa40] sm:$0xff]
                %407 = vst [vmem:[%s241 + $0x290] sm:$0xff] %v406
                %v408 = vld [vmem:[%s240 + $0xa48] sm:$0xff]
                %409 = vst [vmem:[%s241 + $0x298] sm:$0xff] %v408
                %v410 = vld [vmem:[%s240 + $0xa80] sm:$0xff]
                %411 = vst [vmem:[%s241 + $0x2a0] sm:$0xff] %v410
                %v412 = vld [vmem:[%s240 + $0xa88] sm:$0xff]
                %413 = vst [vmem:[%s241 + $0x2a8] sm:$0xff] %v412
                %v414 = vld [vmem:[%s240 + $0xac0] sm:$0xff]
                %415 = vst [vmem:[%s241 + $0x2b0] sm:$0xff] %v414
                %v416 = vld [vmem:[%s240 + $0xac8] sm:$0xff]
                %417 = vst [vmem:[%s241 + $0x2b8] sm:$0xff] %v416
                %v418 = vld [vmem:[%s240 + $0xb00] sm:$0xff]
                %419 = vst [vmem:[%s241 + $0x2c0] sm:$0xff] %v418
                %v420 = vld [vmem:[%s240 + $0xb08] sm:$0xff]
                %421 = vst [vmem:[%s241 + $0x2c8] sm:$0xff] %v420
                %v422 = vld [vmem:[%s240 + $0xb40] sm:$0xff]
                %423 = vst [vmem:[%s241 + $0x2d0] sm:$0xff] %v422
                %v424 = vld [vmem:[%s240 + $0xb48] sm:$0xff]
                %425 = vst [vmem:[%s241 + $0x2d8] sm:$0xff] %v424
                %v426 = vld [vmem:[%s240 + $0xb80] sm:$0xff]
                %427 = vst [vmem:[%s241 + $0x2e0] sm:$0xff] %v426
                %v428 = vld [vmem:[%s240 + $0xb88] sm:$0xff]
                %429 = vst [vmem:[%s241 + $0x2e8] sm:$0xff] %v428
                %v430 = vld [vmem:[%s240 + $0xbc0] sm:$0xff]
                %431 = vst [vmem:[%s241 + $0x2f0] sm:$0xff] %v430
                %v432 = vld [vmem:[%s240 + $0xbc8] sm:$0xff]
                %433 = vst [vmem:[%s241 + $0x2f8] sm:$0xff] %v432
                %v434 = vld [vmem:[%s240 + $0xc00] sm:$0xff]
                %435 = vst [vmem:[%s241 + $0x300] sm:$0xff] %v434
                %v436 = vld [vmem:[%s240 + $0xc08] sm:$0xff]
                %437 = vst [vmem:[%s241 + $0x308] sm:$0xff] %v436
                %v438 = vld [vmem:[%s240 + $0xc40] sm:$0xff]
                %439 = vst [vmem:[%s241 + $0x310] sm:$0xff] %v438
                %v440 = vld [vmem:[%s240 + $0xc48] sm:$0xff]
                %441 = vst [vmem:[%s241 + $0x318] sm:$0xff] %v440
                %v442 = vld [vmem:[%s240 + $0xc80] sm:$0xff]
                %443 = vst [vmem:[%s241 + $0x320] sm:$0xff] %v442
                %v444 = vld [vmem:[%s240 + $0xc88] sm:$0xff]
                %445 = vst [vmem:[%s241 + $0x328] sm:$0xff] %v444
                %v446 = vld [vmem:[%s240 + $0xcc0] sm:$0xff]
                %447 = vst [vmem:[%s241 + $0x330] sm:$0xff] %v446
                %v448 = vld [vmem:[%s240 + $0xcc8] sm:$0xff]
                %449 = vst [vmem:[%s241 + $0x338] sm:$0xff] %v448
                %v450 = vld [vmem:[%s240 + $0xd00] sm:$0xff]
                %451 = vst [vmem:[%s241 + $0x340] sm:$0xff] %v450
                %v452 = vld [vmem:[%s240 + $0xd08] sm:$0xff]
                %453 = vst [vmem:[%s241 + $0x348] sm:$0xff] %v452
                %v454 = vld [vmem:[%s240 + $0xd40] sm:$0xff]
                %455 = vst [vmem:[%s241 + $0x350] sm:$0xff] %v454
                %v456 = vld [vmem:[%s240 + $0xd48] sm:$0xff]
                %457 = vst [vmem:[%s241 + $0x358] sm:$0xff] %v456
                %v458 = vld [vmem:[%s240 + $0xd80] sm:$0xff]
                %459 = vst [vmem:[%s241 + $0x360] sm:$0xff] %v458
                %v460 = vld [vmem:[%s240 + $0xd88] sm:$0xff]
                %461 = vst [vmem:[%s241 + $0x368] sm:$0xff] %v460
                %v462 = vld [vmem:[%s240 + $0xdc0] sm:$0xff]
                %463 = vst [vmem:[%s241 + $0x370] sm:$0xff] %v462
                %v464 = vld [vmem:[%s240 + $0xdc8] sm:$0xff]
                %465 = vst [vmem:[%s241 + $0x378] sm:$0xff] %v464
                %v466 = vld [vmem:[%s240 + $0xe00] sm:$0xff]
                %467 = vst [vmem:[%s241 + $0x380] sm:$0xff] %v466
                %v468 = vld [vmem:[%s240 + $0xe08] sm:$0xff]
                %469 = vst [vmem:[%s241 + $0x388] sm:$0xff] %v468
                %v470 = vld [vmem:[%s240 + $0xe40] sm:$0xff]
                %471 = vst [vmem:[%s241 + $0x390] sm:$0xff] %v470
                %v472 = vld [vmem:[%s240 + $0xe48] sm:$0xff]
                %473 = vst [vmem:[%s241 + $0x398] sm:$0xff] %v472
                %v474 = vld [vmem:[%s240 + $0xe80] sm:$0xff]
                %475 = vst [vmem:[%s241 + $0x3a0] sm:$0xff] %v474
                %v476 = vld [vmem:[%s240 + $0xe88] sm:$0xff]
                %477 = vst [vmem:[%s241 + $0x3a8] sm:$0xff] %v476
                %v478 = vld [vmem:[%s240 + $0xec0] sm:$0xff]
                %479 = vst [vmem:[%s241 + $0x3b0] sm:$0xff] %v478
                %v480 = vld [vmem:[%s240 + $0xec8] sm:$0xff]
                %481 = vst [vmem:[%s241 + $0x3b8] sm:$0xff] %v480
                %v482 = vld [vmem:[%s240 + $0xf00] sm:$0xff]
                %483 = vst [vmem:[%s241 + $0x3c0] sm:$0xff] %v482
                %v484 = vld [vmem:[%s240 + $0xf08] sm:$0xff]
                %485 = vst [vmem:[%s241 + $0x3c8] sm:$0xff] %v484
                %v486 = vld [vmem:[%s240 + $0xf40] sm:$0xff]
                %487 = vst [vmem:[%s241 + $0x3d0] sm:$0xff] %v486
                %v488 = vld [vmem:[%s240 + $0xf48] sm:$0xff]
                %489 = vst [vmem:[%s241 + $0x3d8] sm:$0xff] %v488
                %v490 = vld [vmem:[%s240 + $0xf80] sm:$0xff]
                %491 = vst [vmem:[%s241 + $0x3e0] sm:$0xff] %v490
                %v492 = vld [vmem:[%s240 + $0xf88] sm:$0xff]
                %493 = vst [vmem:[%s241 + $0x3e8] sm:$0xff] %v492
                %v494 = vld [vmem:[%s240 + $0xfc0] sm:$0xff]
                %495 = vst [vmem:[%s241 + $0x3f0] sm:$0xff] %v494
                %v496 = vld [vmem:[%s240 + $0xfc8] sm:$0xff]
                %497 = vst [vmem:[%s241 + $0x3f8] sm:$0xff] %v496
              $region56: #{_lambda_.4} parent=50 // loop_footer
                %s239 = sadd.s32 1, %s235
              $region57: #{_lambda_.4} parent=50 // loop_footer_branch
                %234 = sbr.rel target = $region53
              $region58: #{_lambda_.4} parent=50 // loop_exit
                _
            $region51: #{_lambda_.4} parent=46 // pred_fallthru
              _
            // Predicated region
            $region59: #{_lambda_.4} parent=46 // pred_check
              _
            $region60: #{_lambda_.4} parent=46 // pred_check_branch
              %499 = sbr.rel target = $region62
            $region61: #{_lambda_.4} parent=46 // pred_region
              _
            $region62: #{_lambda_.4} parent=46 // pred_fallthru
              _
          $region47: #{_lambda_.4} parent=42 // pred_fallthru
            _
          %500 = vnop
        $region43: #{_lambda_.4} parent=15 // pred_fallthru
          _
        // Predicated region
        $region63: #{_lambda_.4} parent=15 // pred_check
          %p501 = pneg %p104
        $region64: #{_lambda_.4} parent=15 // pred_check_branch
          %503 = sbr.rel (%p501) target = $region66
        $region65: #{_lambda_.4} parent=15 // pred_region
          %s504 = smul.u32 4, %s17
          %p505 = scmp.lt.s32.totalorder %s504, 15
          %s506 = scalar_select %p505, %s504, 15
          %s507 = scalar_lea.vmem %s2, %s506
          %s508 = smul.u32 4, %s17
        $region66: #{_lambda_.4} parent=15 // pred_fallthru
          _
      $region16: #{_lambda_.4} parent=5 // pred_fallthru
        _
      %p509 = scmp.le.s32.totalorder 1, %s9
      %p510 = scmp.lt.s32.totalorder %s9, 9
      %p511 = pnand %p509, %p510
      %p512 = pneg %p511
      // Predicated region
      $region67: #{_lambda_.4} parent=5 // pred_check
        _
      $region68: #{_lambda_.4} parent=5 // pred_check_branch
        %514 = sbr.rel (%p511) target = $region70
      $region69: #{_lambda_.4} parent=5 // pred_region
        %s515 = ssub.s32 %s9, 1
        %s516 = sand.u32 %s43, 1
        %s517 = sand.u32 %s43, 1
        %s518 = smul.addr %s517, 128
        %s519 = scalar_lea.vmem [#allocation3], %s518
        // Predicated region
        $region71: #{_lambda_.4} parent=69 // pred_check
          %p520 = pneg %p56
        $region72: #{_lambda_.4} parent=69 // pred_check_branch
          %522 = sbr.rel (%p520) target = $region74
        $region73: #{_lambda_.4} parent=69 // pred_region
          _
        $region74: #{_lambda_.4} parent=69 // pred_fallthru
          _
        %s523 = sand.u32 %s71, 1
        %s524 = sand.u32 %s71, 1
        %s525 = smul.addr %s524, 1024
        %s526 = scalar_lea.vmem [#allocation4], %s525
        // Predicated region
        $region75: #{_lambda_.4} parent=69 // pred_check
          %p527 = pneg %p84
        $region76: #{_lambda_.4} parent=69 // pred_check_branch
          %529 = sbr.rel (%p527) target = $region78
        $region77: #{_lambda_.4} parent=69 // pred_region
          _
        $region78: #{_lambda_.4} parent=69 // pred_fallthru
          _
        %s530 = sand.u32 %s43, 1
        %s531 = sand.u32 %s43, 1
        %s532 = smul.addr %s531, 128
        %s533 = scalar_lea.vmem [#allocation3], %s532
        %p534 = pneg %p56
        %p535 = pneg %p53
        %s536 = sand.u32 %s71, 1
        %s537 = sand.u32 %s71, 1
        %s538 = smul.addr %s537, 1024
        %s539 = scalar_lea.vmem [#allocation4], %s538
        %p540 = pneg %p84
        %p541 = pneg %p81
        %s542 = smul.u32 4, %s20
        %p543 = scmp.lt.s32.totalorder %s542, 15
        %s544 = scalar_select %p543, %s542, 15
        %s545 = scalar_lea.vmem %s2, %s544
        %p546 = pneg %p110
        %p547 = pneg %p107
        %p548 = pneg %p138
        %p549 = pneg %p135
        %s550 = sand.u32 %s125, 1
        %s551 = sand.u32 %s125, 1
        %s552 = smul.addr %s551, 64
        %s553 = scalar_lea.vmem [#allocation5], %s552
        %s554 = smul.u32 4, %s19
        %s555 = smul.u32 4, %s21
        %s556 = smul.u32 64, %s21
        %s557 = smul.u32 4, %s20
        %s558 = smul.u32 4, %s20
        %p559 = scmp.lt.s32.totalorder %s558, 15
        %s560 = scalar_select %p559, %s558, 15
        %s561 = scalar_lea.vmem %s2, %s560
        %s562 = smul.u32 4, %s20
        %s563 = smul.u32 4, %s19
        %s564 = smul.u32 4, %s20
        %p565 = scmp.eq.s32.totalorder %s21, 0
        // Predicated region
        $region79: #{_lambda_.4} parent=69 // pred_check
          %p566 = pneg %p565
        $region80: #{_lambda_.4} parent=69 // pred_check_branch
          %568 = sbr.rel (%p566) target = $region82
        $region81: #{_lambda_.4} parent=69 // pred_region
          %569 = vst [vmem:[#allocation2] sm:$0xff] 0.0
          %570 = vst [vmem:[#allocation2 + $0x8] sm:$0xff] 0.0
          %571 = vst [vmem:[#allocation2 + $0x10] sm:$0xff] 0.0
          %572 = vst [vmem:[#allocation2 + $0x18] sm:$0xff] 0.0
          %573 = vst [vmem:[#allocation2 + $0x20] sm:$0xff] 0.0
          %574 = vst [vmem:[#allocation2 + $0x28] sm:$0xff] 0.0
          %575 = vst [vmem:[#allocation2 + $0x30] sm:$0xff] 0.0
          %576 = vst [vmem:[#allocation2 + $0x38] sm:$0xff] 0.0
          %577 = vst [vmem:[#allocation2 + $0x40] sm:$0xff] 0.0
          %578 = vst [vmem:[#allocation2 + $0x48] sm:$0xff] 0.0
          %579 = vst [vmem:[#allocation2 + $0x50] sm:$0xff] 0.0
          %580 = vst [vmem:[#allocation2 + $0x58] sm:$0xff] 0.0
          %581 = vst [vmem:[#allocation2 + $0x60] sm:$0xff] 0.0
          %582 = vst [vmem:[#allocation2 + $0x68] sm:$0xff] 0.0
          %583 = vst [vmem:[#allocation2 + $0x70] sm:$0xff] 0.0
          %584 = vst [vmem:[#allocation2 + $0x78] sm:$0xff] 0.0
        $region82: #{_lambda_.4} parent=69 // pred_fallthru
          _
        %v585 = vld [vmem:[#allocation2] sm:$0xff]
        %v586 = vld [vmem:[#allocation2 + $0x8] sm:$0xff]
        %v587 = vld [vmem:[#allocation2 + $0x10] sm:$0xff]
        %v588 = vld [vmem:[#allocation2 + $0x18] sm:$0xff]
        %v589 = vld [vmem:[#allocation2 + $0x20] sm:$0xff]
        %v590 = vld [vmem:[#allocation2 + $0x28] sm:$0xff]
        %v591 = vld [vmem:[#allocation2 + $0x30] sm:$0xff]
        %v592 = vld [vmem:[#allocation2 + $0x38] sm:$0xff]
        %v593 = vld [vmem:[#allocation2 + $0x40] sm:$0xff]
        %v594 = vld [vmem:[#allocation2 + $0x48] sm:$0xff]
        %v595 = vld [vmem:[#allocation2 + $0x50] sm:$0xff]
        %v596 = vld [vmem:[#allocation2 + $0x58] sm:$0xff]
        %v597 = vld [vmem:[#allocation2 + $0x60] sm:$0xff]
        %v598 = vld [vmem:[#allocation2 + $0x68] sm:$0xff]
        %v599 = vld [vmem:[#allocation2 + $0x70] sm:$0xff]
        %v600 = vld [vmem:[#allocation2 + $0x78] sm:$0xff]
        %v601 = vld [vmem:[%s519] sm:$0xff]
        %v602 = vld [vmem:[%s519 + $0x8] sm:$0xff]
        %v603 = vld [vmem:[%s519 + $0x10] sm:$0xff]
        %v604 = vld [vmem:[%s519 + $0x18] sm:$0xff]
        %v605 = vld [vmem:[%s519 + $0x20] sm:$0xff]
        %v606 = vld [vmem:[%s519 + $0x28] sm:$0xff]
        %v607 = vld [vmem:[%s519 + $0x30] sm:$0xff]
        %v608 = vld [vmem:[%s519 + $0x38] sm:$0xff]
        %v609 = vld [vmem:[%s519 + $0x40] sm:$0xff]
        %v610 = vld [vmem:[%s519 + $0x48] sm:$0xff]
        %v611 = vld [vmem:[%s519 + $0x50] sm:$0xff]
        %v612 = vld [vmem:[%s519 + $0x58] sm:$0xff]
        %v613 = vld [vmem:[%s519 + $0x60] sm:$0xff]
        %v614 = vld [vmem:[%s519 + $0x68] sm:$0xff]
        %v615 = vld [vmem:[%s519 + $0x70] sm:$0xff]
        %v616 = vld [vmem:[%s519 + $0x78] sm:$0xff]
        %v617 = vpack.c.bf16 %v605, %v601
        %v618 = vpack.c.bf16 %v606, %v602
        %v619 = vpack.c.bf16 %v607, %v603
        %v620 = vpack.c.bf16 %v608, %v604
        %v621 = vpack.c.bf16 %v613, %v609
        %v622 = vpack.c.bf16 %v614, %v610
        %v623 = vpack.c.bf16 %v615, %v611
        %v624 = vpack.c.bf16 %v616, %v612
        %v625 = vld [vmem:[%s526] sm:$0xff]
        %v626 = vld [vmem:[%s526 + $0x8] sm:$0xff]
        %v627 = vld [vmem:[%s526 + $0x10] sm:$0xff]
        %v628 = vld [vmem:[%s526 + $0x18] sm:$0xff]
        %v629 = vld [vmem:[%s526 + $0x20] sm:$0xff]
        %v630 = vld [vmem:[%s526 + $0x28] sm:$0xff]
        %v631 = vld [vmem:[%s526 + $0x30] sm:$0xff]
        %v632 = vld [vmem:[%s526 + $0x38] sm:$0xff]
        %v633 = vld [vmem:[%s526 + $0x40] sm:$0xff]
        %v634 = vld [vmem:[%s526 + $0x48] sm:$0xff]
        %v635 = vld [vmem:[%s526 + $0x50] sm:$0xff]
        %v636 = vld [vmem:[%s526 + $0x58] sm:$0xff]
        %v637 = vld [vmem:[%s526 + $0x60] sm:$0xff]
        %v638 = vld [vmem:[%s526 + $0x68] sm:$0xff]
        %v639 = vld [vmem:[%s526 + $0x70] sm:$0xff]
        %v640 = vld [vmem:[%s526 + $0x78] sm:$0xff]
        %v641 = vld [vmem:[%s526 + $0x80] sm:$0xff]
        %v642 = vld [vmem:[%s526 + $0x88] sm:$0xff]
        %v643 = vld [vmem:[%s526 + $0x90] sm:$0xff]
        %v644 = vld [vmem:[%s526 + $0x98] sm:$0xff]
        %v645 = vld [vmem:[%s526 + $0xa0] sm:$0xff]
        %v646 = vld [vmem:[%s526 + $0xa8] sm:$0xff]
        %v647 = vld [vmem:[%s526 + $0xb0] sm:$0xff]
        %v648 = vld [vmem:[%s526 + $0xb8] sm:$0xff]
        %v649 = vld [vmem:[%s526 + $0xc0] sm:$0xff]
        %v650 = vld [vmem:[%s526 + $0xc8] sm:$0xff]
        %v651 = vld [vmem:[%s526 + $0xd0] sm:$0xff]
        %v652 = vld [vmem:[%s526 + $0xd8] sm:$0xff]
        %v653 = vld [vmem:[%s526 + $0xe0] sm:$0xff]
        %v654 = vld [vmem:[%s526 + $0xe8] sm:$0xff]
        %v655 = vld [vmem:[%s526 + $0xf0] sm:$0xff]
        %v656 = vld [vmem:[%s526 + $0xf8] sm:$0xff]
        %v657 = vld [vmem:[%s526 + $0x100] sm:$0xff]
        %v658 = vld [vmem:[%s526 + $0x108] sm:$0xff]
        %v659 = vld [vmem:[%s526 + $0x110] sm:$0xff]
        %v660 = vld [vmem:[%s526 + $0x118] sm:$0xff]
        %v661 = vld [vmem:[%s526 + $0x120] sm:$0xff]
        %v662 = vld [vmem:[%s526 + $0x128] sm:$0xff]
        %v663 = vld [vmem:[%s526 + $0x130] sm:$0xff]
        %v664 = vld [vmem:[%s526 + $0x138] sm:$0xff]
        %v665 = vld [vmem:[%s526 + $0x140] sm:$0xff]
        %v666 = vld [vmem:[%s526 + $0x148] sm:$0xff]
        %v667 = vld [vmem:[%s526 + $0x150] sm:$0xff]
        %v668 = vld [vmem:[%s526 + $0x158] sm:$0xff]
        %v669 = vld [vmem:[%s526 + $0x160] sm:$0xff]
        %v670 = vld [vmem:[%s526 + $0x168] sm:$0xff]
        %v671 = vld [vmem:[%s526 + $0x170] sm:$0xff]
        %v672 = vld [vmem:[%s526 + $0x178] sm:$0xff]
        %v673 = vld [vmem:[%s526 + $0x180] sm:$0xff]
        %v674 = vld [vmem:[%s526 + $0x188] sm:$0xff]
        %v675 = vld [vmem:[%s526 + $0x190] sm:$0xff]
        %v676 = vld [vmem:[%s526 + $0x198] sm:$0xff]
        %v677 = vld [vmem:[%s526 + $0x1a0] sm:$0xff]
        %v678 = vld [vmem:[%s526 + $0x1a8] sm:$0xff]
        %v679 = vld [vmem:[%s526 + $0x1b0] sm:$0xff]
        %v680 = vld [vmem:[%s526 + $0x1b8] sm:$0xff]
        %v681 = vld [vmem:[%s526 + $0x1c0] sm:$0xff]
        %v682 = vld [vmem:[%s526 + $0x1c8] sm:$0xff]
        %v683 = vld [vmem:[%s526 + $0x1d0] sm:$0xff]
        %v684 = vld [vmem:[%s526 + $0x1d8] sm:$0xff]
        %v685 = vld [vmem:[%s526 + $0x1e0] sm:$0xff]
        %v686 = vld [vmem:[%s526 + $0x1e8] sm:$0xff]
        %v687 = vld [vmem:[%s526 + $0x1f0] sm:$0xff]
        %v688 = vld [vmem:[%s526 + $0x1f8] sm:$0xff]
        %v689 = vld [vmem:[%s526 + $0x200] sm:$0xff]
        %v690 = vld [vmem:[%s526 + $0x208] sm:$0xff]
        %v691 = vld [vmem:[%s526 + $0x210] sm:$0xff]
        %v692 = vld [vmem:[%s526 + $0x218] sm:$0xff]
        %v693 = vld [vmem:[%s526 + $0x220] sm:$0xff]
        %v694 = vld [vmem:[%s526 + $0x228] sm:$0xff]
        %v695 = vld [vmem:[%s526 + $0x230] sm:$0xff]
        %v696 = vld [vmem:[%s526 + $0x238] sm:$0xff]
        %v697 = vld [vmem:[%s526 + $0x240] sm:$0xff]
        %v698 = vld [vmem:[%s526 + $0x248] sm:$0xff]
        %v699 = vld [vmem:[%s526 + $0x250] sm:$0xff]
        %v700 = vld [vmem:[%s526 + $0x258] sm:$0xff]
        %v701 = vld [vmem:[%s526 + $0x260] sm:$0xff]
        %v702 = vld [vmem:[%s526 + $0x268] sm:$0xff]
        %v703 = vld [vmem:[%s526 + $0x270] sm:$0xff]
        %v704 = vld [vmem:[%s526 + $0x278] sm:$0xff]
        %v705 = vld [vmem:[%s526 + $0x280] sm:$0xff]
        %v706 = vld [vmem:[%s526 + $0x288] sm:$0xff]
        %v707 = vld [vmem:[%s526 + $0x290] sm:$0xff]
        %v708 = vld [vmem:[%s526 + $0x298] sm:$0xff]
        %v709 = vld [vmem:[%s526 + $0x2a0] sm:$0xff]
        %v710 = vld [vmem:[%s526 + $0x2a8] sm:$0xff]
        %v711 = vld [vmem:[%s526 + $0x2b0] sm:$0xff]
        %v712 = vld [vmem:[%s526 + $0x2b8] sm:$0xff]
        %v713 = vld [vmem:[%s526 + $0x2c0] sm:$0xff]
        %v714 = vld [vmem:[%s526 + $0x2c8] sm:$0xff]
        %v715 = vld [vmem:[%s526 + $0x2d0] sm:$0xff]
        %v716 = vld [vmem:[%s526 + $0x2d8] sm:$0xff]
        %v717 = vld [vmem:[%s526 + $0x2e0] sm:$0xff]
        %v718 = vld [vmem:[%s526 + $0x2e8] sm:$0xff]
        %v719 = vld [vmem:[%s526 + $0x2f0] sm:$0xff]
        %v720 = vld [vmem:[%s526 + $0x2f8] sm:$0xff]
        %v721 = vld [vmem:[%s526 + $0x300] sm:$0xff]
        %v722 = vld [vmem:[%s526 + $0x308] sm:$0xff]
        %v723 = vld [vmem:[%s526 + $0x310] sm:$0xff]
        %v724 = vld [vmem:[%s526 + $0x318] sm:$0xff]
        %v725 = vld [vmem:[%s526 + $0x320] sm:$0xff]
        %v726 = vld [vmem:[%s526 + $0x328] sm:$0xff]
        %v727 = vld [vmem:[%s526 + $0x330] sm:$0xff]
        %v728 = vld [vmem:[%s526 + $0x338] sm:$0xff]
        %v729 = vld [vmem:[%s526 + $0x340] sm:$0xff]
        %v730 = vld [vmem:[%s526 + $0x348] sm:$0xff]
        %v731 = vld [vmem:[%s526 + $0x350] sm:$0xff]
        %v732 = vld [vmem:[%s526 + $0x358] sm:$0xff]
        %v733 = vld [vmem:[%s526 + $0x360] sm:$0xff]
        %v734 = vld [vmem:[%s526 + $0x368] sm:$0xff]
        %v735 = vld [vmem:[%s526 + $0x370] sm:$0xff]
        %v736 = vld [vmem:[%s526 + $0x378] sm:$0xff]
        %v737 = vld [vmem:[%s526 + $0x380] sm:$0xff]
        %v738 = vld [vmem:[%s526 + $0x388] sm:$0xff]
        %v739 = vld [vmem:[%s526 + $0x390] sm:$0xff]
        %v740 = vld [vmem:[%s526 + $0x398] sm:$0xff]
        %v741 = vld [vmem:[%s526 + $0x3a0] sm:$0xff]
        %v742 = vld [vmem:[%s526 + $0x3a8] sm:$0xff]
        %v743 = vld [vmem:[%s526 + $0x3b0] sm:$0xff]
        %v744 = vld [vmem:[%s526 + $0x3b8] sm:$0xff]
        %v745 = vld [vmem:[%s526 + $0x3c0] sm:$0xff]
        %v746 = vld [vmem:[%s526 + $0x3c8] sm:$0xff]
        %v747 = vld [vmem:[%s526 + $0x3d0] sm:$0xff]
        %v748 = vld [vmem:[%s526 + $0x3d8] sm:$0xff]
        %v749 = vld [vmem:[%s526 + $0x3e0] sm:$0xff]
        %v750 = vld [vmem:[%s526 + $0x3e8] sm:$0xff]
        %v751 = vld [vmem:[%s526 + $0x3f0] sm:$0xff]
        %v752 = vld [vmem:[%s526 + $0x3f8] sm:$0xff]
        %v881 = vunpack.c.l.b16 %v625
        %v882 = vunpack.c.h.b16 %v625
        %v883 = vunpack.c.l.b16 %v626
        %v884 = vunpack.c.h.b16 %v626
        %v885 = vunpack.c.l.b16 %v627
        %v886 = vunpack.c.h.b16 %v627
        %v887 = vunpack.c.l.b16 %v628
        %v888 = vunpack.c.h.b16 %v628
        %v889 = vunpack.c.l.b16 %v629
        %v890 = vunpack.c.h.b16 %v629
        %v891 = vunpack.c.l.b16 %v630
        %v892 = vunpack.c.h.b16 %v630
        %v893 = vunpack.c.l.b16 %v631
        %v894 = vunpack.c.h.b16 %v631
        %v895 = vunpack.c.l.b16 %v632
        %v896 = vunpack.c.h.b16 %v632
        %v897 = vunpack.c.l.b16 %v633
        %v898 = vunpack.c.h.b16 %v633
        %v899 = vunpack.c.l.b16 %v634
        %v900 = vunpack.c.h.b16 %v634
        %v901 = vunpack.c.l.b16 %v635
        %v902 = vunpack.c.h.b16 %v635
        %v903 = vunpack.c.l.b16 %v636
        %v904 = vunpack.c.h.b16 %v636
        %v905 = vunpack.c.l.b16 %v637
        %v906 = vunpack.c.h.b16 %v637
        %v907 = vunpack.c.l.b16 %v638
        %v908 = vunpack.c.h.b16 %v638
        %v909 = vunpack.c.l.b16 %v639
        %v910 = vunpack.c.h.b16 %v639
        %v911 = vunpack.c.l.b16 %v640
        %v912 = vunpack.c.h.b16 %v640
        %v913 = vunpack.c.l.b16 %v641
        %v914 = vunpack.c.h.b16 %v641
        %v915 = vunpack.c.l.b16 %v642
        %v916 = vunpack.c.h.b16 %v642
        %v917 = vunpack.c.l.b16 %v643
        %v918 = vunpack.c.h.b16 %v643
        %v919 = vunpack.c.l.b16 %v644
        %v920 = vunpack.c.h.b16 %v644
        %v921 = vunpack.c.l.b16 %v645
        %v922 = vunpack.c.h.b16 %v645
        %v923 = vunpack.c.l.b16 %v646
        %v924 = vunpack.c.h.b16 %v646
        %v925 = vunpack.c.l.b16 %v647
        %v926 = vunpack.c.h.b16 %v647
        %v927 = vunpack.c.l.b16 %v648
        %v928 = vunpack.c.h.b16 %v648
        %v929 = vunpack.c.l.b16 %v649
        %v930 = vunpack.c.h.b16 %v649
        %v931 = vunpack.c.l.b16 %v650
        %v932 = vunpack.c.h.b16 %v650
        %v933 = vunpack.c.l.b16 %v651
        %v934 = vunpack.c.h.b16 %v651
        %v935 = vunpack.c.l.b16 %v652
        %v936 = vunpack.c.h.b16 %v652
        %v937 = vunpack.c.l.b16 %v653
        %v938 = vunpack.c.h.b16 %v653
        %v939 = vunpack.c.l.b16 %v654
        %v940 = vunpack.c.h.b16 %v654
        %v941 = vunpack.c.l.b16 %v655
        %v942 = vunpack.c.h.b16 %v655
        %v943 = vunpack.c.l.b16 %v656
        %v944 = vunpack.c.h.b16 %v656
        %v945 = vunpack.c.l.b16 %v657
        %v946 = vunpack.c.h.b16 %v657
        %v947 = vunpack.c.l.b16 %v658
        %v948 = vunpack.c.h.b16 %v658
        %v949 = vunpack.c.l.b16 %v659
        %v950 = vunpack.c.h.b16 %v659
        %v951 = vunpack.c.l.b16 %v660
        %v952 = vunpack.c.h.b16 %v660
        %v953 = vunpack.c.l.b16 %v661
        %v954 = vunpack.c.h.b16 %v661
        %v955 = vunpack.c.l.b16 %v662
        %v956 = vunpack.c.h.b16 %v662
        %v957 = vunpack.c.l.b16 %v663
        %v958 = vunpack.c.h.b16 %v663
        %v959 = vunpack.c.l.b16 %v664
        %v960 = vunpack.c.h.b16 %v664
        %v961 = vunpack.c.l.b16 %v665
        %v962 = vunpack.c.h.b16 %v665
        %v963 = vunpack.c.l.b16 %v666
        %v964 = vunpack.c.h.b16 %v666
        %v965 = vunpack.c.l.b16 %v667
        %v966 = vunpack.c.h.b16 %v667
        %v967 = vunpack.c.l.b16 %v668
        %v968 = vunpack.c.h.b16 %v668
        %v969 = vunpack.c.l.b16 %v669
        %v970 = vunpack.c.h.b16 %v669
        %v971 = vunpack.c.l.b16 %v670
        %v972 = vunpack.c.h.b16 %v670
        %v973 = vunpack.c.l.b16 %v671
        %v974 = vunpack.c.h.b16 %v671
        %v975 = vunpack.c.l.b16 %v672
        %v976 = vunpack.c.h.b16 %v672
        %v977 = vunpack.c.l.b16 %v673
        %v978 = vunpack.c.h.b16 %v673
        %v979 = vunpack.c.l.b16 %v674
        %v980 = vunpack.c.h.b16 %v674
        %v981 = vunpack.c.l.b16 %v675
        %v982 = vunpack.c.h.b16 %v675
        %v983 = vunpack.c.l.b16 %v676
        %v984 = vunpack.c.h.b16 %v676
        %v985 = vunpack.c.l.b16 %v677
        %v986 = vunpack.c.h.b16 %v677
        %v987 = vunpack.c.l.b16 %v678
        %v988 = vunpack.c.h.b16 %v678
        %v989 = vunpack.c.l.b16 %v679
        %v990 = vunpack.c.h.b16 %v679
        %v991 = vunpack.c.l.b16 %v680
        %v992 = vunpack.c.h.b16 %v680
        %v993 = vunpack.c.l.b16 %v681
        %v994 = vunpack.c.h.b16 %v681
        %v995 = vunpack.c.l.b16 %v682
        %v996 = vunpack.c.h.b16 %v682
        %v997 = vunpack.c.l.b16 %v683
        %v998 = vunpack.c.h.b16 %v683
        %v999 = vunpack.c.l.b16 %v684
        %v1000 = vunpack.c.h.b16 %v684
        %v1001 = vunpack.c.l.b16 %v685
        %v1002 = vunpack.c.h.b16 %v685
        %v1003 = vunpack.c.l.b16 %v686
        %v1004 = vunpack.c.h.b16 %v686
        %v1005 = vunpack.c.l.b16 %v687
        %v1006 = vunpack.c.h.b16 %v687
        %v1007 = vunpack.c.l.b16 %v688
        %v1008 = vunpack.c.h.b16 %v688
        %v1009 = vunpack.c.l.b16 %v689
        %v1010 = vunpack.c.h.b16 %v689
        %v1011 = vunpack.c.l.b16 %v690
        %v1012 = vunpack.c.h.b16 %v690
        %v1013 = vunpack.c.l.b16 %v691
        %v1014 = vunpack.c.h.b16 %v691
        %v1015 = vunpack.c.l.b16 %v692
        %v1016 = vunpack.c.h.b16 %v692
        %v1017 = vunpack.c.l.b16 %v693
        %v1018 = vunpack.c.h.b16 %v693
        %v1019 = vunpack.c.l.b16 %v694
        %v1020 = vunpack.c.h.b16 %v694
        %v1021 = vunpack.c.l.b16 %v695
        %v1022 = vunpack.c.h.b16 %v695
        %v1023 = vunpack.c.l.b16 %v696
        %v1024 = vunpack.c.h.b16 %v696
        %v1025 = vunpack.c.l.b16 %v697
        %v1026 = vunpack.c.h.b16 %v697
        %v1027 = vunpack.c.l.b16 %v698
        %v1028 = vunpack.c.h.b16 %v698
        %v1029 = vunpack.c.l.b16 %v699
        %v1030 = vunpack.c.h.b16 %v699
        %v1031 = vunpack.c.l.b16 %v700
        %v1032 = vunpack.c.h.b16 %v700
        %v1033 = vunpack.c.l.b16 %v701
        %v1034 = vunpack.c.h.b16 %v701
        %v1035 = vunpack.c.l.b16 %v702
        %v1036 = vunpack.c.h.b16 %v702
        %v1037 = vunpack.c.l.b16 %v703
        %v1038 = vunpack.c.h.b16 %v703
        %v1039 = vunpack.c.l.b16 %v704
        %v1040 = vunpack.c.h.b16 %v704
        %v1041 = vunpack.c.l.b16 %v705
        %v1042 = vunpack.c.h.b16 %v705
        %v1043 = vunpack.c.l.b16 %v706
        %v1044 = vunpack.c.h.b16 %v706
        %v1045 = vunpack.c.l.b16 %v707
        %v1046 = vunpack.c.h.b16 %v707
        %v1047 = vunpack.c.l.b16 %v708
        %v1048 = vunpack.c.h.b16 %v708
        %v1049 = vunpack.c.l.b16 %v709
        %v1050 = vunpack.c.h.b16 %v709
        %v1051 = vunpack.c.l.b16 %v710
        %v1052 = vunpack.c.h.b16 %v710
        %v1053 = vunpack.c.l.b16 %v711
        %v1054 = vunpack.c.h.b16 %v711
        %v1055 = vunpack.c.l.b16 %v712
        %v1056 = vunpack.c.h.b16 %v712
        %v1057 = vunpack.c.l.b16 %v713
        %v1058 = vunpack.c.h.b16 %v713
        %v1059 = vunpack.c.l.b16 %v714
        %v1060 = vunpack.c.h.b16 %v714
        %v1061 = vunpack.c.l.b16 %v715
        %v1062 = vunpack.c.h.b16 %v715
        %v1063 = vunpack.c.l.b16 %v716
        %v1064 = vunpack.c.h.b16 %v716
        %v1065 = vunpack.c.l.b16 %v717
        %v1066 = vunpack.c.h.b16 %v717
        %v1067 = vunpack.c.l.b16 %v718
        %v1068 = vunpack.c.h.b16 %v718
        %v1069 = vunpack.c.l.b16 %v719
        %v1070 = vunpack.c.h.b16 %v719
        %v1071 = vunpack.c.l.b16 %v720
        %v1072 = vunpack.c.h.b16 %v720
        %v1073 = vunpack.c.l.b16 %v721
        %v1074 = vunpack.c.h.b16 %v721
        %v1075 = vunpack.c.l.b16 %v722
        %v1076 = vunpack.c.h.b16 %v722
        %v1077 = vunpack.c.l.b16 %v723
        %v1078 = vunpack.c.h.b16 %v723
        %v1079 = vunpack.c.l.b16 %v724
        %v1080 = vunpack.c.h.b16 %v724
        %v1081 = vunpack.c.l.b16 %v725
        %v1082 = vunpack.c.h.b16 %v725
        %v1083 = vunpack.c.l.b16 %v726
        %v1084 = vunpack.c.h.b16 %v726
        %v1085 = vunpack.c.l.b16 %v727
        %v1086 = vunpack.c.h.b16 %v727
        %v1087 = vunpack.c.l.b16 %v728
        %v1088 = vunpack.c.h.b16 %v728
        %v1089 = vunpack.c.l.b16 %v729
        %v1090 = vunpack.c.h.b16 %v729
        %v1091 = vunpack.c.l.b16 %v730
        %v1092 = vunpack.c.h.b16 %v730
        %v1093 = vunpack.c.l.b16 %v731
        %v1094 = vunpack.c.h.b16 %v731
        %v1095 = vunpack.c.l.b16 %v732
        %v1096 = vunpack.c.h.b16 %v732
        %v1097 = vunpack.c.l.b16 %v733
        %v1098 = vunpack.c.h.b16 %v733
        %v1099 = vunpack.c.l.b16 %v734
        %v1100 = vunpack.c.h.b16 %v734
        %v1101 = vunpack.c.l.b16 %v735
        %v1102 = vunpack.c.h.b16 %v735
        %v1103 = vunpack.c.l.b16 %v736
        %v1104 = vunpack.c.h.b16 %v736
        %v1105 = vunpack.c.l.b16 %v737
        %v1106 = vunpack.c.h.b16 %v737
        %v1107 = vunpack.c.l.b16 %v738
        %v1108 = vunpack.c.h.b16 %v738
        %v1109 = vunpack.c.l.b16 %v739
        %v1110 = vunpack.c.h.b16 %v739
        %v1111 = vunpack.c.l.b16 %v740
        %v1112 = vunpack.c.h.b16 %v740
        %v1113 = vunpack.c.l.b16 %v741
        %v1114 = vunpack.c.h.b16 %v741
        %v1115 = vunpack.c.l.b16 %v742
        %v1116 = vunpack.c.h.b16 %v742
        %v1117 = vunpack.c.l.b16 %v743
        %v1118 = vunpack.c.h.b16 %v743
        %v1119 = vunpack.c.l.b16 %v744
        %v1120 = vunpack.c.h.b16 %v744
        %v1121 = vunpack.c.l.b16 %v745
        %v1122 = vunpack.c.h.b16 %v745
        %v1123 = vunpack.c.l.b16 %v746
        %v1124 = vunpack.c.h.b16 %v746
        %v1125 = vunpack.c.l.b16 %v747
        %v1126 = vunpack.c.h.b16 %v747
        %v1127 = vunpack.c.l.b16 %v748
        %v1128 = vunpack.c.h.b16 %v748
        %v1129 = vunpack.c.l.b16 %v749
        %v1130 = vunpack.c.h.b16 %v749
        %v1131 = vunpack.c.l.b16 %v750
        %v1132 = vunpack.c.h.b16 %v750
        %v1133 = vunpack.c.l.b16 %v751
        %v1134 = vunpack.c.h.b16 %v751
        %v1135 = vunpack.c.l.b16 %v752
        %v1136 = vunpack.c.h.b16 %v752
        %v1137 = vpack.c.b16 %v885, %v881
        %v1138 = vpack.c.b16 %v886, %v882
        %v1139 = vpack.c.b16 %v887, %v883
        %v1140 = vpack.c.b16 %v888, %v884
        %v1141 = vpack.c.b16 %v893, %v889
        %v1142 = vpack.c.b16 %v894, %v890
        %v1143 = vpack.c.b16 %v895, %v891
        %v1144 = vpack.c.b16 %v896, %v892
        %v1145 = vpack.c.b16 %v901, %v897
        %v1146 = vpack.c.b16 %v902, %v898
        %v1147 = vpack.c.b16 %v903, %v899
        %v1148 = vpack.c.b16 %v904, %v900
        %v1149 = vpack.c.b16 %v909, %v905
        %v1150 = vpack.c.b16 %v910, %v906
        %v1151 = vpack.c.b16 %v911, %v907
        %v1152 = vpack.c.b16 %v912, %v908
        %v1153 = vpack.c.b16 %v917, %v913
        %v1154 = vpack.c.b16 %v918, %v914
        %v1155 = vpack.c.b16 %v919, %v915
        %v1156 = vpack.c.b16 %v920, %v916
        %v1157 = vpack.c.b16 %v925, %v921
        %v1158 = vpack.c.b16 %v926, %v922
        %v1159 = vpack.c.b16 %v927, %v923
        %v1160 = vpack.c.b16 %v928, %v924
        %v1161 = vpack.c.b16 %v933, %v929
        %v1162 = vpack.c.b16 %v934, %v930
        %v1163 = vpack.c.b16 %v935, %v931
        %v1164 = vpack.c.b16 %v936, %v932
        %v1165 = vpack.c.b16 %v941, %v937
        %v1166 = vpack.c.b16 %v942, %v938
        %v1167 = vpack.c.b16 %v943, %v939
        %v1168 = vpack.c.b16 %v944, %v940
        %v1169 = vpack.c.b16 %v949, %v945
        %v1170 = vpack.c.b16 %v950, %v946
        %v1171 = vpack.c.b16 %v951, %v947
        %v1172 = vpack.c.b16 %v952, %v948
        %v1173 = vpack.c.b16 %v957, %v953
        %v1174 = vpack.c.b16 %v958, %v954
        %v1175 = vpack.c.b16 %v959, %v955
        %v1176 = vpack.c.b16 %v960, %v956
        %v1177 = vpack.c.b16 %v965, %v961
        %v1178 = vpack.c.b16 %v966, %v962
        %v1179 = vpack.c.b16 %v967, %v963
        %v1180 = vpack.c.b16 %v968, %v964
        %v1181 = vpack.c.b16 %v973, %v969
        %v1182 = vpack.c.b16 %v974, %v970
        %v1183 = vpack.c.b16 %v975, %v971
        %v1184 = vpack.c.b16 %v976, %v972
        %v1185 = vpack.c.b16 %v981, %v977
        %v1186 = vpack.c.b16 %v982, %v978
        %v1187 = vpack.c.b16 %v983, %v979
        %v1188 = vpack.c.b16 %v984, %v980
        %v1189 = vpack.c.b16 %v989, %v985
        %v1190 = vpack.c.b16 %v990, %v986
        %v1191 = vpack.c.b16 %v991, %v987
        %v1192 = vpack.c.b16 %v992, %v988
        %v1193 = vpack.c.b16 %v997, %v993
        %v1194 = vpack.c.b16 %v998, %v994
        %v1195 = vpack.c.b16 %v999, %v995
        %v1196 = vpack.c.b16 %v1000, %v996
        %v1197 = vpack.c.b16 %v1005, %v1001
        %v1198 = vpack.c.b16 %v1006, %v1002
        %v1199 = vpack.c.b16 %v1007, %v1003
        %v1200 = vpack.c.b16 %v1008, %v1004
        %v1201 = vpack.c.b16 %v1013, %v1009
        %v1202 = vpack.c.b16 %v1014, %v1010
        %v1203 = vpack.c.b16 %v1015, %v1011
        %v1204 = vpack.c.b16 %v1016, %v1012
        %v1205 = vpack.c.b16 %v1021, %v1017
        %v1206 = vpack.c.b16 %v1022, %v1018
        %v1207 = vpack.c.b16 %v1023, %v1019
        %v1208 = vpack.c.b16 %v1024, %v1020
        %v1209 = vpack.c.b16 %v1029, %v1025
        %v1210 = vpack.c.b16 %v1030, %v1026
        %v1211 = vpack.c.b16 %v1031, %v1027
        %v1212 = vpack.c.b16 %v1032, %v1028
        %v1213 = vpack.c.b16 %v1037, %v1033
        %v1214 = vpack.c.b16 %v1038, %v1034
        %v1215 = vpack.c.b16 %v1039, %v1035
        %v1216 = vpack.c.b16 %v1040, %v1036
        %v1217 = vpack.c.b16 %v1045, %v1041
        %v1218 = vpack.c.b16 %v1046, %v1042
        %v1219 = vpack.c.b16 %v1047, %v1043
        %v1220 = vpack.c.b16 %v1048, %v1044
        %v1221 = vpack.c.b16 %v1053, %v1049
        %v1222 = vpack.c.b16 %v1054, %v1050
        %v1223 = vpack.c.b16 %v1055, %v1051
        %v1224 = vpack.c.b16 %v1056, %v1052
        %v1225 = vpack.c.b16 %v1061, %v1057
        %v1226 = vpack.c.b16 %v1062, %v1058
        %v1227 = vpack.c.b16 %v1063, %v1059
        %v1228 = vpack.c.b16 %v1064, %v1060
        %v1229 = vpack.c.b16 %v1069, %v1065
        %v1230 = vpack.c.b16 %v1070, %v1066
        %v1231 = vpack.c.b16 %v1071, %v1067
        %v1232 = vpack.c.b16 %v1072, %v1068
        %v1233 = vpack.c.b16 %v1077, %v1073
        %v1234 = vpack.c.b16 %v1078, %v1074
        %v1235 = vpack.c.b16 %v1079, %v1075
        %v1236 = vpack.c.b16 %v1080, %v1076
        %v1237 = vpack.c.b16 %v1085, %v1081
        %v1238 = vpack.c.b16 %v1086, %v1082
        %v1239 = vpack.c.b16 %v1087, %v1083
        %v1240 = vpack.c.b16 %v1088, %v1084
        %v1241 = vpack.c.b16 %v1093, %v1089
        %v1242 = vpack.c.b16 %v1094, %v1090
        %v1243 = vpack.c.b16 %v1095, %v1091
        %v1244 = vpack.c.b16 %v1096, %v1092
        %v1245 = vpack.c.b16 %v1101, %v1097
        %v1246 = vpack.c.b16 %v1102, %v1098
        %v1247 = vpack.c.b16 %v1103, %v1099
        %v1248 = vpack.c.b16 %v1104, %v1100
        %v1249 = vpack.c.b16 %v1109, %v1105
        %v1250 = vpack.c.b16 %v1110, %v1106
        %v1251 = vpack.c.b16 %v1111, %v1107
        %v1252 = vpack.c.b16 %v1112, %v1108
        %v1253 = vpack.c.b16 %v1117, %v1113
        %v1254 = vpack.c.b16 %v1118, %v1114
        %v1255 = vpack.c.b16 %v1119, %v1115
        %v1256 = vpack.c.b16 %v1120, %v1116
        %v1257 = vpack.c.b16 %v1125, %v1121
        %v1258 = vpack.c.b16 %v1126, %v1122
        %v1259 = vpack.c.b16 %v1127, %v1123
        %v1260 = vpack.c.b16 %v1128, %v1124
        %v1261 = vpack.c.b16 %v1133, %v1129
        %v1262 = vpack.c.b16 %v1134, %v1130
        %v1263 = vpack.c.b16 %v1135, %v1131
        %v1264 = vpack.c.b16 %v1136, %v1132
        %1393 = vmatprep.subr.bf16.mxu0 %v1138
        %1394 = vmatpush1.bf16.msra.mxu0 %v1137
        %1395 = vmatprep.subr.bf16.mxu0 %v1142
        %1396 = vmatpush1.bf16.msra.mxu0 %v1141
        %1397 = vmatprep.subr.bf16.mxu0 %v1146
        %1398 = vmatpush1.bf16.msra.mxu0 %v1145
        %1399 = vmatprep.subr.bf16.mxu0 %v1150
        %1400 = vmatpush1.bf16.msra.mxu0 %v1149
        %1401 = vmatprep.subr.bf16.mxu0 %v1154
        %1402 = vmatpush1.bf16.msra.mxu0 %v1153
        %1403 = vmatprep.subr.bf16.mxu0 %v1158
        %1404 = vmatpush1.bf16.msra.mxu0 %v1157
        %1405 = vmatprep.subr.bf16.mxu0 %v1162
        %1406 = vmatpush1.bf16.msra.mxu0 %v1161
        %1407 = vmatprep.subr.bf16.mxu0 %v1166
        %1408 = vmatpush1.bf16.msra.mxu0 %v1165
        %1409 = vmatprep.subr.bf16.mxu0 %v1170
        %1410 = vmatpush1.bf16.msra.mxu0 %v1169
        %1411 = vmatprep.subr.bf16.mxu0 %v1174
        %1412 = vmatpush1.bf16.msra.mxu0 %v1173
        %1413 = vmatprep.subr.bf16.mxu0 %v1178
        %1414 = vmatpush1.bf16.msra.mxu0 %v1177
        %1415 = vmatprep.subr.bf16.mxu0 %v1182
        %1416 = vmatpush1.bf16.msra.mxu0 %v1181
        %1417 = vmatprep.subr.bf16.mxu0 %v1186
        %1418 = vmatpush1.bf16.msra.mxu0 %v1185
        %1419 = vmatprep.subr.bf16.mxu0 %v1190
        %1420 = vmatpush1.bf16.msra.mxu0 %v1189
        %1421 = vmatprep.subr.bf16.mxu0 %v1194
        %1422 = vmatpush1.bf16.msra.mxu0 %v1193
        %1423 = vmatprep.subr.bf16.mxu0 %v1198
        %1424 = vmatpush1.bf16.msra.mxu0 %v1197
        %1425 = vmatprep.mubr.bf16.mxu0 %v618
        %1426 = vmatmul.mubr.bf16.gmra.mrb[0].mxu0 %v617
        %v1427 = vpop.f32.mrb[0].mxu0
        %v1428 = vadd.f32 0.0, %v1427
        %v1429 = vpop.f32.mrb[0].mxu0
        %v1430 = vadd.f32 0.0, %v1429
        %v1431 = vpop.f32.mrb[0].mxu0
        %v1432 = vadd.f32 0.0, %v1431
        %v1433 = vpop.f32.mrb[0].mxu0
        %v1434 = vadd.f32 0.0, %v1433
        %1435 = vmatprep.mubr.bf16.mxu0 %v622
        %1436 = vmatmul.mubr.bf16.gmra.mrb[0].mxu0 %v621
        %v1437 = vpop.f32.mrb[0].mxu0
        %v1438 = vadd.f32 0.0, %v1437
        %v1439 = vpop.f32.mrb[0].mxu0
        %v1440 = vadd.f32 0.0, %v1439
        %v1441 = vpop.f32.mrb[0].mxu0
        %v1442 = vadd.f32 0.0, %v1441
        %v1443 = vpop.f32.mrb[0].mxu0
        %v1444 = vadd.f32 0.0, %v1443
        %1445 = vdwg.mxu0
        %1446 = vmatprep.subr.bf16.mxu0 %v1202
        %1447 = vmatpush1.bf16.msra.mxu0 %v1201
        %1448 = vmatprep.subr.bf16.mxu0 %v1206
        %1449 = vmatpush1.bf16.msra.mxu0 %v1205
        %1450 = vmatprep.subr.bf16.mxu0 %v1210
        %1451 = vmatpush1.bf16.msra.mxu0 %v1209
        %1452 = vmatprep.subr.bf16.mxu0 %v1214
        %1453 = vmatpush1.bf16.msra.mxu0 %v1213
        %1454 = vmatprep.subr.bf16.mxu0 %v1218
        %1455 = vmatpush1.bf16.msra.mxu0 %v1217
        %1456 = vmatprep.subr.bf16.mxu0 %v1222
        %1457 = vmatpush1.bf16.msra.mxu0 %v1221
        %1458 = vmatprep.subr.bf16.mxu0 %v1226
        %1459 = vmatpush1.bf16.msra.mxu0 %v1225
        %1460 = vmatprep.subr.bf16.mxu0 %v1230
        %1461 = vmatpush1.bf16.msra.mxu0 %v1229
        %1462 = vmatprep.subr.bf16.mxu0 %v1234
        %1463 = vmatpush1.bf16.msra.mxu0 %v1233
        %1464 = vmatprep.subr.bf16.mxu0 %v1238
        %1465 = vmatpush1.bf16.msra.mxu0 %v1237
        %1466 = vmatprep.subr.bf16.mxu0 %v1242
        %1467 = vmatpush1.bf16.msra.mxu0 %v1241
        %1468 = vmatprep.subr.bf16.mxu0 %v1246
        %1469 = vmatpush1.bf16.msra.mxu0 %v1245
        %1470 = vmatprep.subr.bf16.mxu0 %v1250
        %1471 = vmatpush1.bf16.msra.mxu0 %v1249
        %1472 = vmatprep.subr.bf16.mxu0 %v1254
        %1473 = vmatpush1.bf16.msra.mxu0 %v1253
        %1474 = vmatprep.subr.bf16.mxu0 %v1258
        %1475 = vmatpush1.bf16.msra.mxu0 %v1257
        %1476 = vmatprep.subr.bf16.mxu0 %v1262
        %1477 = vmatpush1.bf16.msra.mxu0 %v1261
        %1478 = vmatprep.mubr.bf16.mxu0 %v620
        %1479 = vmatmul.mubr.bf16.gmra.mrb[0].mxu0 %v619
        %v1480 = vpop.f32.mrb[0].mxu0
        %v1481 = vadd.f32 %v1428, %v1480
        %v1482 = vpop.f32.mrb[0].mxu0
        %v1483 = vadd.f32 %v1430, %v1482
        %v1484 = vpop.f32.mrb[0].mxu0
        %v1485 = vadd.f32 %v1432, %v1484
        %v1486 = vpop.f32.mrb[0].mxu0
        %v1487 = vadd.f32 %v1434, %v1486
        %1488 = vmatprep.mubr.bf16.mxu0 %v624
        %1489 = vmatmul.mubr.bf16.gmra.mrb[0].mxu0 %v623
        %v1490 = vpop.f32.mrb[0].mxu0
        %v1491 = vadd.f32 %v1438, %v1490
        %v1492 = vpop.f32.mrb[0].mxu0
        %v1493 = vadd.f32 %v1440, %v1492
        %v1494 = vpop.f32.mrb[0].mxu0
        %v1495 = vadd.f32 %v1442, %v1494
        %v1496 = vpop.f32.mrb[0].mxu0
        %v1497 = vadd.f32 %v1444, %v1496
        %1498 = vdwg.mxu0
        %1499 = vmatprep.subr.bf16.mxu0 %v1140
        %1500 = vmatpush1.bf16.msra.mxu0 %v1139
        %1501 = vmatprep.subr.bf16.mxu0 %v1144
        %1502 = vmatpush1.bf16.msra.mxu0 %v1143
        %1503 = vmatprep.subr.bf16.mxu0 %v1148
        %1504 = vmatpush1.bf16.msra.mxu0 %v1147
        %1505 = vmatprep.subr.bf16.mxu0 %v1152
        %1506 = vmatpush1.bf16.msra.mxu0 %v1151
        %1507 = vmatprep.subr.bf16.mxu0 %v1156
        %1508 = vmatpush1.bf16.msra.mxu0 %v1155
        %1509 = vmatprep.subr.bf16.mxu0 %v1160
        %1510 = vmatpush1.bf16.msra.mxu0 %v1159
        %1511 = vmatprep.subr.bf16.mxu0 %v1164
        %1512 = vmatpush1.bf16.msra.mxu0 %v1163
        %1513 = vmatprep.subr.bf16.mxu0 %v1168
        %1514 = vmatpush1.bf16.msra.mxu0 %v1167
        %1515 = vmatprep.subr.bf16.mxu0 %v1172
        %1516 = vmatpush1.bf16.msra.mxu0 %v1171
        %1517 = vmatprep.subr.bf16.mxu0 %v1176
        %1518 = vmatpush1.bf16.msra.mxu0 %v1175
        %1519 = vmatprep.subr.bf16.mxu0 %v1180
        %1520 = vmatpush1.bf16.msra.mxu0 %v1179
        %1521 = vmatprep.subr.bf16.mxu0 %v1184
        %1522 = vmatpush1.bf16.msra.mxu0 %v1183
        %1523 = vmatprep.subr.bf16.mxu0 %v1188
        %1524 = vmatpush1.bf16.msra.mxu0 %v1187
        %1525 = vmatprep.subr.bf16.mxu0 %v1192
        %1526 = vmatpush1.bf16.msra.mxu0 %v1191
        %1527 = vmatprep.subr.bf16.mxu0 %v1196
        %1528 = vmatpush1.bf16.msra.mxu0 %v1195
        %1529 = vmatprep.subr.bf16.mxu0 %v1200
        %1530 = vmatpush1.bf16.msra.mxu0 %v1199
        %1531 = vmatprep.mubr.bf16.mxu0 %v618
        %1532 = vmatmul.mubr.bf16.gmra.mrb[0].mxu0 %v617
        %v1533 = vpop.f32.mrb[0].mxu0
        %v1534 = vadd.f32 0.0, %v1533
        %v1535 = vpop.f32.mrb[0].mxu0
        %v1536 = vadd.f32 0.0, %v1535
        %v1537 = vpop.f32.mrb[0].mxu0
        %v1538 = vadd.f32 0.0, %v1537
        %v1539 = vpop.f32.mrb[0].mxu0
        %v1540 = vadd.f32 0.0, %v1539
        %1541 = vmatprep.mubr.bf16.mxu0 %v622
        %1542 = vmatmul.mubr.bf16.gmra.mrb[0].mxu0 %v621
        %v1543 = vpop.f32.mrb[0].mxu0
        %v1544 = vadd.f32 0.0, %v1543
        %v1545 = vpop.f32.mrb[0].mxu0
        %v1546 = vadd.f32 0.0, %v1545
        %v1547 = vpop.f32.mrb[0].mxu0
        %v1548 = vadd.f32 0.0, %v1547
        %v1549 = vpop.f32.mrb[0].mxu0
        %v1550 = vadd.f32 0.0, %v1549
        %1551 = vdwg.mxu0
        %1552 = vmatprep.subr.bf16.mxu0 %v1204
        %1553 = vmatpush1.bf16.msra.mxu0 %v1203
        %1554 = vmatprep.subr.bf16.mxu0 %v1208
        %1555 = vmatpush1.bf16.msra.mxu0 %v1207
        %1556 = vmatprep.subr.bf16.mxu0 %v1212
        %1557 = vmatpush1.bf16.msra.mxu0 %v1211
        %1558 = vmatprep.subr.bf16.mxu0 %v1216
        %1559 = vmatpush1.bf16.msra.mxu0 %v1215
        %1560 = vmatprep.subr.bf16.mxu0 %v1220
        %1561 = vmatpush1.bf16.msra.mxu0 %v1219
        %1562 = vmatprep.subr.bf16.mxu0 %v1224
        %1563 = vmatpush1.bf16.msra.mxu0 %v1223
        %1564 = vmatprep.subr.bf16.mxu0 %v1228
        %1565 = vmatpush1.bf16.msra.mxu0 %v1227
        %1566 = vmatprep.subr.bf16.mxu0 %v1232
        %1567 = vmatpush1.bf16.msra.mxu0 %v1231
        %1568 = vmatprep.subr.bf16.mxu0 %v1236
        %1569 = vmatpush1.bf16.msra.mxu0 %v1235
        %1570 = vmatprep.subr.bf16.mxu0 %v1240
        %1571 = vmatpush1.bf16.msra.mxu0 %v1239
        %1572 = vmatprep.subr.bf16.mxu0 %v1244
        %1573 = vmatpush1.bf16.msra.mxu0 %v1243
        %1574 = vmatprep.subr.bf16.mxu0 %v1248
        %1575 = vmatpush1.bf16.msra.mxu0 %v1247
        %1576 = vmatprep.subr.bf16.mxu0 %v1252
        %1577 = vmatpush1.bf16.msra.mxu0 %v1251
        %1578 = vmatprep.subr.bf16.mxu0 %v1256
        %1579 = vmatpush1.bf16.msra.mxu0 %v1255
        %1580 = vmatprep.subr.bf16.mxu0 %v1260
        %1581 = vmatpush1.bf16.msra.mxu0 %v1259
        %1582 = vmatprep.subr.bf16.mxu0 %v1264
        %1583 = vmatpush1.bf16.msra.mxu0 %v1263
        %1584 = vmatprep.mubr.bf16.mxu0 %v620
        %1585 = vmatmul.mubr.bf16.gmra.mrb[0].mxu0 %v619
        %v1586 = vpop.f32.mrb[0].mxu0
        %v1587 = vadd.f32 %v1534, %v1586
        %v1588 = vpop.f32.mrb[0].mxu0
        %v1589 = vadd.f32 %v1536, %v1588
        %v1590 = vpop.f32.mrb[0].mxu0
        %v1591 = vadd.f32 %v1538, %v1590
        %v1592 = vpop.f32.mrb[0].mxu0
        %v1593 = vadd.f32 %v1540, %v1592
        %1594 = vmatprep.mubr.bf16.mxu0 %v624
        %1595 = vmatmul.mubr.bf16.gmra.mrb[0].mxu0 %v623
        %v1596 = vpop.f32.mrb[0].mxu0
        %v1597 = vadd.f32 %v1544, %v1596
        %v1598 = vpop.f32.mrb[0].mxu0
        %v1599 = vadd.f32 %v1546, %v1598
        %v1600 = vpop.f32.mrb[0].mxu0
        %v1601 = vadd.f32 %v1548, %v1600
        %v1602 = vpop.f32.mrb[0].mxu0
        %v1603 = vadd.f32 %v1550, %v1602
        %1604 = vdwg.mxu0
        %v1605 = vadd.f32 %v585, %v1481
        %v1606 = vadd.f32 %v586, %v1483
        %v1607 = vadd.f32 %v587, %v1587
        %v1608 = vadd.f32 %v588, %v1589
        %v1609 = vadd.f32 %v589, %v1485
        %v1610 = vadd.f32 %v590, %v1487
        %v1611 = vadd.f32 %v591, %v1591
        %v1612 = vadd.f32 %v592, %v1593
        %v1613 = vadd.f32 %v593, %v1491
        %v1614 = vadd.f32 %v594, %v1493
        %v1615 = vadd.f32 %v595, %v1597
        %v1616 = vadd.f32 %v596, %v1599
        %v1617 = vadd.f32 %v597, %v1495
        %v1618 = vadd.f32 %v598, %v1497
        %v1619 = vadd.f32 %v599, %v1601
        %v1620 = vadd.f32 %v600, %v1603
        %1621 = vst [vmem:[#allocation2] sm:$0xff] %v1605
        %1622 = vst [vmem:[#allocation2 + $0x8] sm:$0xff] %v1606
        %1623 = vst [vmem:[#allocation2 + $0x10] sm:$0xff] %v1607
        %1624 = vst [vmem:[#allocation2 + $0x18] sm:$0xff] %v1608
        %1625 = vst [vmem:[#allocation2 + $0x20] sm:$0xff] %v1609
        %1626 = vst [vmem:[#allocation2 + $0x28] sm:$0xff] %v1610
        %1627 = vst [vmem:[#allocation2 + $0x30] sm:$0xff] %v1611
        %1628 = vst [vmem:[#allocation2 + $0x38] sm:$0xff] %v1612
        %1629 = vst [vmem:[#allocation2 + $0x40] sm:$0xff] %v1613
        %1630 = vst [vmem:[#allocation2 + $0x48] sm:$0xff] %v1614
        %1631 = vst [vmem:[#allocation2 + $0x50] sm:$0xff] %v1615
        %1632 = vst [vmem:[#allocation2 + $0x58] sm:$0xff] %v1616
        %1633 = vst [vmem:[#allocation2 + $0x60] sm:$0xff] %v1617
        %1634 = vst [vmem:[#allocation2 + $0x68] sm:$0xff] %v1618
        %1635 = vst [vmem:[#allocation2 + $0x70] sm:$0xff] %v1619
        %1636 = vst [vmem:[#allocation2 + $0x78] sm:$0xff] %v1620
        %p1637 = scmp.eq.s32.totalorder %s21, 1
        // Predicated region
        $region83: #{_lambda_.4} parent=69 // pred_check
          %p1638 = pneg %p1637
        $region84: #{_lambda_.4} parent=69 // pred_check_branch
          %1640 = sbr.rel (%p1638) target = $region86
        $region85: #{_lambda_.4} parent=69 // pred_region
          %v1641 = vld [vmem:[#allocation2] sm:$0xff]
          %v1642 = vld [vmem:[#allocation2 + $0x8] sm:$0xff]
          %v1643 = vld [vmem:[#allocation2 + $0x10] sm:$0xff]
          %v1644 = vld [vmem:[#allocation2 + $0x18] sm:$0xff]
          %v1645 = vld [vmem:[#allocation2 + $0x20] sm:$0xff]
          %v1646 = vld [vmem:[#allocation2 + $0x28] sm:$0xff]
          %v1647 = vld [vmem:[#allocation2 + $0x30] sm:$0xff]
          %v1648 = vld [vmem:[#allocation2 + $0x38] sm:$0xff]
          %v1649 = vld [vmem:[#allocation2 + $0x40] sm:$0xff]
          %v1650 = vld [vmem:[#allocation2 + $0x48] sm:$0xff]
          %v1651 = vld [vmem:[#allocation2 + $0x50] sm:$0xff]
          %v1652 = vld [vmem:[#allocation2 + $0x58] sm:$0xff]
          %v1653 = vld [vmem:[#allocation2 + $0x60] sm:$0xff]
          %v1654 = vld [vmem:[#allocation2 + $0x68] sm:$0xff]
          %v1655 = vld [vmem:[#allocation2 + $0x70] sm:$0xff]
          %v1656 = vld [vmem:[#allocation2 + $0x78] sm:$0xff]
          %v1657 = vld [vmem:[%s561] sm:$0xf]
          %v1659 = vlaneseq
          %v1660 = vshrl.u32 %v1659, 7
          %v1661 = vsub.s32 0, %v1660
          %v1662 = vrot.slane %v1657, %v1661
          %v1663 = vlaneseq
          %v1664 = vshrl.u32 %v1663, 7
          %v1665 = vsub.s32 1, %v1664
          %v1666 = vrot.slane %v1657, %v1665
          %v1667 = vlaneseq
          %v1668 = vshrl.u32 %v1667, 7
          %v1669 = vsub.s32 2, %v1668
          %v1670 = vrot.slane %v1657, %v1669
          %v1671 = vlaneseq
          %v1672 = vshrl.u32 %v1671, 7
          %v1673 = vsub.s32 3, %v1672
          %v1674 = vrot.slane %v1657, %v1673
          %v1679 = vadd.f32 %v1641, %v1662
          %v1680 = vadd.f32 %v1642, %v1666
          %v1681 = vadd.f32 %v1643, %v1670
          %v1682 = vadd.f32 %v1644, %v1674
          %v1683 = vadd.f32 %v1645, %v1662
          %v1684 = vadd.f32 %v1646, %v1666
          %v1685 = vadd.f32 %v1647, %v1670
          %v1686 = vadd.f32 %v1648, %v1674
          %v1687 = vadd.f32 %v1649, %v1662
          %v1688 = vadd.f32 %v1650, %v1666
          %v1689 = vadd.f32 %v1651, %v1670
          %v1690 = vadd.f32 %v1652, %v1674
          %v1691 = vadd.f32 %v1653, %v1662
          %v1692 = vadd.f32 %v1654, %v1666
          %v1693 = vadd.f32 %v1655, %v1670
          %v1694 = vadd.f32 %v1656, %v1674
          %v1695 = vmax.f32 %v1679, 0.0
          %v1696 = vmax.f32 %v1680, 0.0
          %v1697 = vmax.f32 %v1681, 0.0
          %v1698 = vmax.f32 %v1682, 0.0
          %v1699 = vmax.f32 %v1683, 0.0
          %v1700 = vmax.f32 %v1684, 0.0
          %v1701 = vmax.f32 %v1685, 0.0
          %v1702 = vmax.f32 %v1686, 0.0
          %v1703 = vmax.f32 %v1687, 0.0
          %v1704 = vmax.f32 %v1688, 0.0
          %v1705 = vmax.f32 %v1689, 0.0
          %v1706 = vmax.f32 %v1690, 0.0
          %v1707 = vmax.f32 %v1691, 0.0
          %v1708 = vmax.f32 %v1692, 0.0
          %v1709 = vmax.f32 %v1693, 0.0
          %v1710 = vmax.f32 %v1694, 0.0
          %v1711 = vpack.c.bf16 %v1699, %v1695
          %v1712 = vpack.c.bf16 %v1700, %v1696
          %v1713 = vpack.c.bf16 %v1701, %v1697
          %v1714 = vpack.c.bf16 %v1702, %v1698
          %v1715 = vpack.c.bf16 %v1707, %v1703
          %v1716 = vpack.c.bf16 %v1708, %v1704
          %v1717 = vpack.c.bf16 %v1709, %v1705
          %v1718 = vpack.c.bf16 %v1710, %v1706
          %v1727 = vunpack.c.l.b16 %v1711
          %v1728 = vunpack.c.l.b16 %v1712
          %v1729 = vunpack.c.l.b16 %v1713
          %v1730 = vunpack.c.l.b16 %v1714
          %v1731 = vunpack.c.h.b16 %v1711
          %v1732 = vunpack.c.h.b16 %v1712
          %v1733 = vunpack.c.h.b16 %v1713
          %v1734 = vunpack.c.h.b16 %v1714
          %v1735 = vunpack.c.l.b16 %v1715
          %v1736 = vunpack.c.l.b16 %v1716
          %v1737 = vunpack.c.l.b16 %v1717
          %v1738 = vunpack.c.l.b16 %v1718
          %v1739 = vunpack.c.h.b16 %v1715
          %v1740 = vunpack.c.h.b16 %v1716
          %v1741 = vunpack.c.h.b16 %v1717
          %v1742 = vunpack.c.h.b16 %v1718
          %v1743 = vpack.c.b16 %v1728, %v1727
          %v1744 = vpack.c.b16 %v1730, %v1729
          %v1745 = vpack.c.b16 %v1732, %v1731
          %v1746 = vpack.c.b16 %v1734, %v1733
          %v1747 = vpack.c.b16 %v1736, %v1735
          %v1748 = vpack.c.b16 %v1738, %v1737
          %v1749 = vpack.c.b16 %v1740, %v1739
          %v1750 = vpack.c.b16 %v1742, %v1741
          %1759 = vst [vmem:[%s553] sm:$0xff] %v1743
          %1760 = vst [vmem:[%s553 + $0x8] sm:$0xff] %v1744
          %1761 = vst [vmem:[%s553 + $0x10] sm:$0xff] %v1745
          %1762 = vst [vmem:[%s553 + $0x18] sm:$0xff] %v1746
          %1763 = vst [vmem:[%s553 + $0x20] sm:$0xff] %v1747
          %1764 = vst [vmem:[%s553 + $0x28] sm:$0xff] %v1748
          %1765 = vst [vmem:[%s553 + $0x30] sm:$0xff] %v1749
          %1766 = vst [vmem:[%s553 + $0x38] sm:$0xff] %v1750
        $region86: #{_lambda_.4} parent=69 // pred_fallthru
          _
        %s1767 = sand.u32 %s125, 1
        %s1768 = sand.u32 %s125, 1
        %s1769 = smul.addr %s1768, 64
        %s1770 = scalar_lea.vmem [#allocation5], %s1769
        // Predicated region
        $region87: #{_lambda_.4} parent=69 // pred_check
          %p1771 = pneg %p135
        $region88: #{_lambda_.4} parent=69 // pred_check_branch
          %1773 = sbr.rel (%p1771) target = $region90
        $region89: #{_lambda_.4} parent=69 // pred_region
          %s1774 = smul.u32 4, %s19
          %s1775 = smul.u32 4, %s20
          %s1776 = smul.addr %s1774, 16
          %s1777 = sadd.s32 %s1775, %s1776
          %s1778 = smul.addr %s1777, 4
          %s1779 = scalar_lea.vmem %s3, %s1778
          // Predicated region
          $region91: #{_lambda_.4} parent=89 // pred_check
            _
          $region92: #{_lambda_.4} parent=89 // pred_check_branch
            %1781 = sbr.rel (0) target = $region94
          $region93: #{_lambda_.4} parent=89 // pred_region
            // Predicated region
            $region95: #{_lambda_.4} parent=93 // pred_check
              _
            $region96: #{_lambda_.4} parent=93 // pred_check_branch
              %1783 = sbr.rel (0) target = $region98
            $region97: #{_lambda_.4} parent=93 // pred_region
              loop: start=0, step=1, limit=1
              $region99: #{_lambda_.4} parent=97 // loop_pre_header
                _
              $region100: #{_lambda_.4} parent=97 // loop_header
                %s1785 = sphi 0, %s1789
                %p1786 = scmp.ge.s32.totalorder %s1785, 1
                %s1790 = sphi %s1770, %s1770
                %s1791 = sphi %s1779, %s1779
              $region101: #{_lambda_.4} parent=97 // loop_header_branch
                %1788 = sbr.rel (%p1786) target = $region105
              $region102: #{_lambda_.4} parent=97 // loop_body
                %v1792 = vld [vmem:[%s1790] sm:$0xff]
                %1793 = vst [vmem:[%s1791] sm:$0xff] %v1792
                %v1794 = vld [vmem:[%s1790 + $0x8] sm:$0xff]
                %1795 = vst [vmem:[%s1791 + $0x8] sm:$0xff] %v1794
                %v1796 = vld [vmem:[%s1790 + $0x10] sm:$0xff]
                %1797 = vst [vmem:[%s1791 + $0x40] sm:$0xff] %v1796
                %v1798 = vld [vmem:[%s1790 + $0x18] sm:$0xff]
                %1799 = vst [vmem:[%s1791 + $0x48] sm:$0xff] %v1798
                %v1800 = vld [vmem:[%s1790 + $0x20] sm:$0xff]
                %1801 = vst [vmem:[%s1791 + $0x80] sm:$0xff] %v1800
                %v1802 = vld [vmem:[%s1790 + $0x28] sm:$0xff]
                %1803 = vst [vmem:[%s1791 + $0x88] sm:$0xff] %v1802
                %v1804 = vld [vmem:[%s1790 + $0x30] sm:$0xff]
                %1805 = vst [vmem:[%s1791 + $0xc0] sm:$0xff] %v1804
                %v1806 = vld [vmem:[%s1790 + $0x38] sm:$0xff]
                %1807 = vst [vmem:[%s1791 + $0xc8] sm:$0xff] %v1806
              $region103: #{_lambda_.4} parent=97 // loop_footer
                %s1789 = sadd.s32 1, %s1785
              $region104: #{_lambda_.4} parent=97 // loop_footer_branch
                %1784 = sbr.rel target = $region100
              $region105: #{_lambda_.4} parent=97 // loop_exit
                _
            $region98: #{_lambda_.4} parent=93 // pred_fallthru
              _
            // Predicated region
            $region106: #{_lambda_.4} parent=93 // pred_check
              _
            $region107: #{_lambda_.4} parent=93 // pred_check_branch
              %1809 = sbr.rel target = $region109
            $region108: #{_lambda_.4} parent=93 // pred_region
              _
            $region109: #{_lambda_.4} parent=93 // pred_fallthru
              _
          $region94: #{_lambda_.4} parent=89 // pred_fallthru
            _
          %1810 = vnop
        $region90: #{_lambda_.4} parent=69 // pred_fallthru
          _
      $region70: #{_lambda_.4} parent=5 // pred_fallthru
        _
      %p1811 = scmp.le.s32.totalorder 2, %s9
      // Predicated region
      $region110: #{_lambda_.4} parent=5 // pred_check
        %p1812 = pneg %p1811
      $region111: #{_lambda_.4} parent=5 // pred_check_branch
        %1814 = sbr.rel (%p1812) target = $region113
      $region112: #{_lambda_.4} parent=5 // pred_region
        %s1815 = ssub.s32 %s9, 2
        // Predicated region
        $region114: #{_lambda_.4} parent=112 // pred_check
          %p1816 = pneg %p141
        $region115: #{_lambda_.4} parent=112 // pred_check_branch
          %1818 = sbr.rel (%p1816) target = $region117
        $region116: #{_lambda_.4} parent=112 // pred_region
          %s1819 = sand.u32 %s126, 1
          %s1820 = sand.u32 %s126, 1
          %s1821 = smul.addr %s1820, 64
          %s1822 = scalar_lea.vmem [#allocation5], %s1821
        $region117: #{_lambda_.4} parent=112 // pred_fallthru
          _
      $region113: #{_lambda_.4} parent=5 // pred_fallthru
        _
    $region6: #{_lambda_.4} parent=1 // loop_footer
      %s13 = sadd.s32 1, %s9
    $region7: #{_lambda_.4} parent=1 // loop_footer_branch
      %8 = sbr.rel target = $region3
    $region8: #{_lambda_.4} parent=1 // loop_exit
      _

// kernel: _lambda_.5
$region0: #{_lambda_.5}
  #allocation0 [shape = 'u32[]', space=smem, size = 0x4, offset = 0x4, fixed_abs, tag = 'smem constant byte address 0x4 - core index']
  #allocation1 [shape = 'u32[144,128]{1,0:T(1,128)}', space=vmem, size = 0x12000, scoped, tag = 'internal scratch']
  %s0 = inlined_call_operand.vmem [shape: bf16[128,512], index: 0, kind: input, shape index: {}]
  %s1 = inlined_call_operand.vmem [shape: bf16[512,1024], index: 1, kind: input, shape index: {}]
  %s2 = inlined_call_operand.vmem [shape: f32[1,1024], index: 2, kind: input, shape index: {}]
  %s3 = inlined_call_operand.vmem [shape: bf16[128,1024], index: 3, kind: output, shape index: {}]
  %s4 = sld [smem:[#allocation0]]
  $region87: #{_lambda_.5} parent=0
    _
  %s6 = ssub.s32 1, %s4
  %s7 = scalar_select 0, %s6, %s4
  $region1: #{_lambda_.5} parent=0
    #allocation2 [shape = 'u8[1048576]{0}', space=vmem, size = 0x100000, scoped, tag = 'input window, operand 1']
    #allocation3 [shape = 'u8[262144]{0}', space=vmem, size = 0x40000, scoped, tag = 'output window, operand 0']
    loop: start=0, step=1, limit=4
    $region2: #{_lambda_.5} parent=1 // loop_pre_header
      _
    $region3: #{_lambda_.5} parent=1 // loop_header
      %s9 = sphi 0, %s13
      %p10 = scmp.ge.s32.totalorder %s9, 4
      %s16 = sphi 0, %s28
      %s17 = sphi 0, %s24
      %s18 = sphi 0, %s16
      %s19 = sphi 0, %s17
      %s20 = sphi 0, %s18
      %s21 = sphi 0, %s19
      %s31 = sphi 0, %s33
      %s34 = sphi 0, %s31
      %s35 = sphi 0, %s34
      %s51 = sphi 0, %s35
      %s57 = sphi 0, %s59
      %s60 = sphi 0, %s57
      %s61 = sphi 0, %s60
      %s77 = sphi 0, %s61
      %s83 = sphi 0, %s85
      %s86 = sphi 0, %s83
      %s87 = sphi 0, %s86
      %s103 = sphi 0, %s87
      %s111 = sphi 0, %s113
      %s114 = sphi 0, %s111
      %s115 = sphi 0, %s114
      %s131 = sphi 0, %s115
    $region4: #{_lambda_.5} parent=1 // loop_header_branch
      %12 = sbr.rel (%p10) target = $region8
    $region5: #{_lambda_.5} parent=1 // loop_body
      %s14 = ssub.s32 %s9, 1
      %s15 = ssub.s32 %s9, 2
      %s22 = sadd.s32 1, %s17
      %p23 = scmp.ge.s32.totalorder %s22, 2
      %s24 = scalar_select %p23, 0, %s22
      %s25 = sadd.s32 1, %s16
      %s26 = scalar_select %p23, %s25, %s16
      %p27 = scmp.ge.s32.totalorder %s26, 1
      %s28 = scalar_select %p27, 0, %s26
      %s29 = ssub.s32 %s16, %s28
      %p30 = scmp.eq.s32.totalorder %s29, 0
      %s32 = sadd.s32 %s31, 1
      %s33 = scalar_select %p30, %s31, %s32
      %p36 = pneg %p30
      %p37 = scmp.eq.s32.totalorder %s9, 1
      %p38 = por %p36, %p37
      %p39 = scmp.ne.s32.totalorder %s31, %s34
      %p40 = scmp.eq.s32.totalorder %s9, 0
      %p41 = por %p39, %p40
      %p42 = scmp.ne.s32.totalorder %s31, %s34
      %p43 = scmp.eq.s32.totalorder %s14, 1
      %p44 = por %p42, %p43
      %p45 = scmp.ne.s32.totalorder %s34, %s35
      %p46 = scmp.eq.s32.totalorder %s14, 0
      %p47 = por %p45, %p46
      %p48 = scmp.ne.s32.totalorder %s34, %s35
      %p49 = scmp.eq.s32.totalorder %s15, 1
      %p50 = por %p48, %p49
      %p52 = scmp.ne.s32.totalorder %s35, %s51
      %p53 = scmp.eq.s32.totalorder %s15, 0
      %p54 = por %p52, %p53
      %s55 = ssub.s32 %s17, %s24
      %p56 = scmp.eq.s32.totalorder %s55, 0
      %s58 = sadd.s32 %s57, 1
      %s59 = scalar_select %p56, %s57, %s58
      %p62 = pneg %p56
      %p63 = scmp.eq.s32.totalorder %s9, 1
      %p64 = por %p62, %p63
      %p65 = scmp.ne.s32.totalorder %s57, %s60
      %p66 = scmp.eq.s32.totalorder %s9, 0
      %p67 = por %p65, %p66
      %p68 = scmp.ne.s32.totalorder %s57, %s60
      %p69 = scmp.eq.s32.totalorder %s14, 1
      %p70 = por %p68, %p69
      %p71 = scmp.ne.s32.totalorder %s60, %s61
      %p72 = scmp.eq.s32.totalorder %s14, 0
      %p73 = por %p71, %p72
      %p74 = scmp.ne.s32.totalorder %s60, %s61
      %p75 = scmp.eq.s32.totalorder %s15, 1
      %p76 = por %p74, %p75
      %p78 = scmp.ne.s32.totalorder %s61, %s77
      %p79 = scmp.eq.s32.totalorder %s15, 0
      %p80 = por %p78, %p79
      %s81 = ssub.s32 %s17, %s24
      %p82 = scmp.eq.s32.totalorder %s81, 0
      %s84 = sadd.s32 %s83, 1
      %s85 = scalar_select %p82, %s83, %s84
      %p88 = pneg %p82
      %p89 = scmp.eq.s32.totalorder %s9, 1
      %p90 = por %p88, %p89
      %p91 = scmp.ne.s32.totalorder %s83, %s86
      %p92 = scmp.eq.s32.totalorder %s9, 0
      %p93 = por %p91, %p92
      %p94 = scmp.ne.s32.totalorder %s83, %s86
      %p95 = scmp.eq.s32.totalorder %s14, 1
      %p96 = por %p94, %p95
      %p97 = scmp.ne.s32.totalorder %s86, %s87
      %p98 = scmp.eq.s32.totalorder %s14, 0
      %p99 = por %p97, %p98
      %p100 = scmp.ne.s32.totalorder %s86, %s87
      %p101 = scmp.eq.s32.totalorder %s15, 1
      %p102 = por %p100, %p101
      %p104 = scmp.ne.s32.totalorder %s87, %s103
      %p105 = scmp.eq.s32.totalorder %s15, 0
      %p106 = por %p104, %p105
      %s107 = ssub.s32 %s16, %s28
      %s108 = ssub.s32 %s17, %s24
      %s109 = sor.u32 %s107, %s108
      %p110 = scmp.eq.s32.totalorder %s109, 0
      %s112 = sadd.s32 %s111, 1
      %s113 = scalar_select %p110, %s111, %s112
      %p116 = pneg %p110
      %p117 = scmp.eq.s32.totalorder %s9, 1
      %p118 = por %p116, %p117
      %p119 = scmp.ne.s32.totalorder %s111, %s114
      %p120 = scmp.eq.s32.totalorder %s9, 0
      %p121 = por %p119, %p120
      %p122 = scmp.ne.s32.totalorder %s111, %s114
      %p123 = scmp.eq.s32.totalorder %s14, 1
      %p124 = por %p122, %p123
      %p125 = scmp.ne.s32.totalorder %s114, %s115
      %p126 = scmp.eq.s32.totalorder %s14, 0
      %p127 = por %p125, %p126
      %p128 = scmp.ne.s32.totalorder %s114, %s115
      %p129 = scmp.eq.s32.totalorder %s15, 1
      %p130 = por %p128, %p129
      %p132 = scmp.ne.s32.totalorder %s115, %s131
      %p133 = scmp.eq.s32.totalorder %s15, 0
      %p134 = por %p132, %p133
      %p135 = scmp.le.s32.totalorder 1, %s9
      %p136 = scmp.lt.s32.totalorder %s9, 3
      %p137 = pnand %p135, %p136
      %p138 = pneg %p137
      // Predicated region
      $region9: #{_lambda_.5} parent=5 // pred_check
        _
      $region10: #{_lambda_.5} parent=5 // pred_check_branch
        %140 = sbr.rel (%p137) target = $region12
      $region11: #{_lambda_.5} parent=5 // pred_region
        %s141 = ssub.s32 %s9, 1
        // Predicated region
        $region13: #{_lambda_.5} parent=11 // pred_check
          %p142 = pneg %p47
        $region14: #{_lambda_.5} parent=11 // pred_check_branch
          %144 = sbr.rel (%p142) target = $region16
        $region15: #{_lambda_.5} parent=11 // pred_region
          %s145 = smul.u32 16, %s18
          %p146 = scmp.lt.s32.totalorder %s145, 15
          %s147 = scalar_select %p146, %s145, 15
          %s148 = smul.addr %s147, 4
          %s149 = smul.addr %s148, 4
          %s150 = scalar_lea.vmem %s0, %s149
          %s151 = smul.u32 16, %s18
        $region16: #{_lambda_.5} parent=11 // pred_fallthru
          _
      $region12: #{_lambda_.5} parent=5 // pred_fallthru
        _
      %p152 = scmp.lt.s32.totalorder %s9, 2
      // Predicated region
      $region17: #{_lambda_.5} parent=5 // pred_check
        %p153 = pneg %p152
      $region18: #{_lambda_.5} parent=5 // pred_check_branch
        %155 = sbr.rel (%p153) target = $region20
      $region19: #{_lambda_.5} parent=5 // pred_region
        // Predicated region
        $region21: #{_lambda_.5} parent=19 // pred_check
          %p156 = pneg %p67
        $region22: #{_lambda_.5} parent=19 // pred_check_branch
          %158 = sbr.rel (%p156) target = $region24
        $region23: #{_lambda_.5} parent=19 // pred_region
          %s159 = sand.u32 %s57, 1
          %s160 = sand.u32 %s57, 1
          %s161 = smul.addr %s160, 1024
          %s162 = scalar_lea.vmem [#allocation2], %s161
          %s163 = smul.u32 4, %s17
          %s164 = smul.addr %s163, 4
          %s165 = scalar_lea.vmem %s1, %s164
          // Predicated region
          $region25: #{_lambda_.5} parent=23 // pred_check
            _
          $region26: #{_lambda_.5} parent=23 // pred_check_branch
            %167 = sbr.rel (0) target = $region28
          $region27: #{_lambda_.5} parent=23 // pred_region
            // Predicated region
            $region29: #{_lambda_.5} parent=27 // pred_check
              _
            $region30: #{_lambda_.5} parent=27 // pred_check_branch
              %169 = sbr.rel (0) target = $region32
            $region31: #{_lambda_.5} parent=27 // pred_region
              loop: start=0, step=1, limit=1
              $region33: #{_lambda_.5} parent=31 // loop_pre_header
                _
              $region34: #{_lambda_.5} parent=31 // loop_header
                %s171 = sphi 0, %s175
                %p172 = scmp.ge.s32.totalorder %s171, 1
                %s176 = sphi %s165, %s165
                %s177 = sphi %s162, %s162
              $region35: #{_lambda_.5} parent=31 // loop_header_branch
                %174 = sbr.rel (%p172) target = $region39
              $region36: #{_lambda_.5} parent=31 // loop_body
                %v178 = vld [vmem:[%s176] sm:$0xff]
                %179 = vst [vmem:[%s177] sm:$0xff] %v178
                %v180 = vld [vmem:[%s176 + $0x8] sm:$0xff]
                %181 = vst [vmem:[%s177 + $0x8] sm:$0xff] %v180
                %v182 = vld [vmem:[%s176 + $0x20] sm:$0xff]
                %183 = vst [vmem:[%s177 + $0x10] sm:$0xff] %v182
                %v184 = vld [vmem:[%s176 + $0x28] sm:$0xff]
                %185 = vst [vmem:[%s177 + $0x18] sm:$0xff] %v184
                %v186 = vld [vmem:[%s176 + $0x40] sm:$0xff]
                %187 = vst [vmem:[%s177 + $0x20] sm:$0xff] %v186
                %v188 = vld [vmem:[%s176 + $0x48] sm:$0xff]
                %189 = vst [vmem:[%s177 + $0x28] sm:$0xff] %v188
                %v190 = vld [vmem:[%s176 + $0x60] sm:$0xff]
                %191 = vst [vmem:[%s177 + $0x30] sm:$0xff] %v190
                %v192 = vld [vmem:[%s176 + $0x68] sm:$0xff]
                %193 = vst [vmem:[%s177 + $0x38] sm:$0xff] %v192
                %v194 = vld [vmem:[%s176 + $0x80] sm:$0xff]
                %195 = vst [vmem:[%s177 + $0x40] sm:$0xff] %v194
                %v196 = vld [vmem:[%s176 + $0x88] sm:$0xff]
                %197 = vst [vmem:[%s177 + $0x48] sm:$0xff] %v196
                %v198 = vld [vmem:[%s176 + $0xa0] sm:$0xff]
                %199 = vst [vmem:[%s177 + $0x50] sm:$0xff] %v198
                %v200 = vld [vmem:[%s176 + $0xa8] sm:$0xff]
                %201 = vst [vmem:[%s177 + $0x58] sm:$0xff] %v200
                %v202 = vld [vmem:[%s176 + $0xc0] sm:$0xff]
                %203 = vst [vmem:[%s177 + $0x60] sm:$0xff] %v202
                %v204 = vld [vmem:[%s176 + $0xc8] sm:$0xff]
                %205 = vst [vmem:[%s177 + $0x68] sm:$0xff] %v204
                %v206 = vld [vmem:[%s176 + $0xe0] sm:$0xff]
                %207 = vst [vmem:[%s177 + $0x70] sm:$0xff] %v206
                %v208 = vld [vmem:[%s176 + $0xe8] sm:$0xff]
                %209 = vst [vmem:[%s177 + $0x78] sm:$0xff] %v208
                %v210 = vld [vmem:[%s176 + $0x100] sm:$0xff]
                %211 = vst [vmem:[%s177 + $0x80] sm:$0xff] %v210
                %v212 = vld [vmem:[%s176 + $0x108] sm:$0xff]
                %213 = vst [vmem:[%s177 + $0x88] sm:$0xff] %v212
                %v214 = vld [vmem:[%s176 + $0x120] sm:$0xff]
                %215 = vst [vmem:[%s177 + $0x90] sm:$0xff] %v214
                %v216 = vld [vmem:[%s176 + $0x128] sm:$0xff]
                %217 = vst [vmem:[%s177 + $0x98] sm:$0xff] %v216
                %v218 = vld [vmem:[%s176 + $0x140] sm:$0xff]
                %219 = vst [vmem:[%s177 + $0xa0] sm:$0xff] %v218
                %v220 = vld [vmem:[%s176 + $0x148] sm:$0xff]
                %221 = vst [vmem:[%s177 + $0xa8] sm:$0xff] %v220
                %v222 = vld [vmem:[%s176 + $0x160] sm:$0xff]
                %223 = vst [vmem:[%s177 + $0xb0] sm:$0xff] %v222
                %v224 = vld [vmem:[%s176 + $0x168] sm:$0xff]
                %225 = vst [vmem:[%s177 + $0xb8] sm:$0xff] %v224
                %v226 = vld [vmem:[%s176 + $0x180] sm:$0xff]
                %227 = vst [vmem:[%s177 + $0xc0] sm:$0xff] %v226
                %v228 = vld [vmem:[%s176 + $0x188] sm:$0xff]
                %229 = vst [vmem:[%s177 + $0xc8] sm:$0xff] %v228
                %v230 = vld [vmem:[%s176 + $0x1a0] sm:$0xff]
                %231 = vst [vmem:[%s177 + $0xd0] sm:$0xff] %v230
                %v232 = vld [vmem:[%s176 + $0x1a8] sm:$0xff]
                %233 = vst [vmem:[%s177 + $0xd8] sm:$0xff] %v232
                %v234 = vld [vmem:[%s176 + $0x1c0] sm:$0xff]
                %235 = vst [vmem:[%s177 + $0xe0] sm:$0xff] %v234
                %v236 = vld [vmem:[%s176 + $0x1c8] sm:$0xff]
                %237 = vst [vmem:[%s177 + $0xe8] sm:$0xff] %v236
                %v238 = vld [vmem:[%s176 + $0x1e0] sm:$0xff]
                %239 = vst [vmem:[%s177 + $0xf0] sm:$0xff] %v238
                %v240 = vld [vmem:[%s176 + $0x1e8] sm:$0xff]
                %241 = vst [vmem:[%s177 + $0xf8] sm:$0xff] %v240
                %v242 = vld [vmem:[%s176 + $0x200] sm:$0xff]
                %243 = vst [vmem:[%s177 + $0x100] sm:$0xff] %v242
                %v244 = vld [vmem:[%s176 + $0x208] sm:$0xff]
                %245 = vst [vmem:[%s177 + $0x108] sm:$0xff] %v244
                %v246 = vld [vmem:[%s176 + $0x220] sm:$0xff]
                %247 = vst [vmem:[%s177 + $0x110] sm:$0xff] %v246
                %v248 = vld [vmem:[%s176 + $0x228] sm:$0xff]
                %249 = vst [vmem:[%s177 + $0x118] sm:$0xff] %v248
                %v250 = vld [vmem:[%s176 + $0x240] sm:$0xff]
                %251 = vst [vmem:[%s177 + $0x120] sm:$0xff] %v250
                %v252 = vld [vmem:[%s176 + $0x248] sm:$0xff]
                %253 = vst [vmem:[%s177 + $0x128] sm:$0xff] %v252
                %v254 = vld [vmem:[%s176 + $0x260] sm:$0xff]
                %255 = vst [vmem:[%s177 + $0x130] sm:$0xff] %v254
                %v256 = vld [vmem:[%s176 + $0x268] sm:$0xff]
                %257 = vst [vmem:[%s177 + $0x138] sm:$0xff] %v256
                %v258 = vld [vmem:[%s176 + $0x280] sm:$0xff]
                %259 = vst [vmem:[%s177 + $0x140] sm:$0xff] %v258
                %v260 = vld [vmem:[%s176 + $0x288] sm:$0xff]
                %261 = vst [vmem:[%s177 + $0x148] sm:$0xff] %v260
                %v262 = vld [vmem:[%s176 + $0x2a0] sm:$0xff]
                %263 = vst [vmem:[%s177 + $0x150] sm:$0xff] %v262
                %v264 = vld [vmem:[%s176 + $0x2a8] sm:$0xff]
                %265 = vst [vmem:[%s177 + $0x158] sm:$0xff] %v264
                %v266 = vld [vmem:[%s176 + $0x2c0] sm:$0xff]
                %267 = vst [vmem:[%s177 + $0x160] sm:$0xff] %v266
                %v268 = vld [vmem:[%s176 + $0x2c8] sm:$0xff]
                %269 = vst [vmem:[%s177 + $0x168] sm:$0xff] %v268
                %v270 = vld [vmem:[%s176 + $0x2e0] sm:$0xff]
                %271 = vst [vmem:[%s177 + $0x170] sm:$0xff] %v270
                %v272 = vld [vmem:[%s176 + $0x2e8] sm:$0xff]
                %273 = vst [vmem:[%s177 + $0x178] sm:$0xff] %v272
                %v274 = vld [vmem:[%s176 + $0x300] sm:$0xff]
                %275 = vst [vmem:[%s177 + $0x180] sm:$0xff] %v274
                %v276 = vld [vmem:[%s176 + $0x308] sm:$0xff]
                %277 = vst [vmem:[%s177 + $0x188] sm:$0xff] %v276
                %v278 = vld [vmem:[%s176 + $0x320] sm:$0xff]
                %279 = vst [vmem:[%s177 + $0x190] sm:$0xff] %v278
                %v280 = vld [vmem:[%s176 + $0x328] sm:$0xff]
                %281 = vst [vmem:[%s177 + $0x198] sm:$0xff] %v280
                %v282 = vld [vmem:[%s176 + $0x340] sm:$0xff]
                %283 = vst [vmem:[%s177 + $0x1a0] sm:$0xff] %v282
                %v284 = vld [vmem:[%s176 + $0x348] sm:$0xff]
                %285 = vst [vmem:[%s177 + $0x1a8] sm:$0xff] %v284
                %v286 = vld [vmem:[%s176 + $0x360] sm:$0xff]
                %287 = vst [vmem:[%s177 + $0x1b0] sm:$0xff] %v286
                %v288 = vld [vmem:[%s176 + $0x368] sm:$0xff]
                %289 = vst [vmem:[%s177 + $0x1b8] sm:$0xff] %v288
                %v290 = vld [vmem:[%s176 + $0x380] sm:$0xff]
                %291 = vst [vmem:[%s177 + $0x1c0] sm:$0xff] %v290
                %v292 = vld [vmem:[%s176 + $0x388] sm:$0xff]
                %293 = vst [vmem:[%s177 + $0x1c8] sm:$0xff] %v292
                %v294 = vld [vmem:[%s176 + $0x3a0] sm:$0xff]
                %295 = vst [vmem:[%s177 + $0x1d0] sm:$0xff] %v294
                %v296 = vld [vmem:[%s176 + $0x3a8] sm:$0xff]
                %297 = vst [vmem:[%s177 + $0x1d8] sm:$0xff] %v296
                %v298 = vld [vmem:[%s176 + $0x3c0] sm:$0xff]
                %299 = vst [vmem:[%s177 + $0x1e0] sm:$0xff] %v298
                %v300 = vld [vmem:[%s176 + $0x3c8] sm:$0xff]
                %301 = vst [vmem:[%s177 + $0x1e8] sm:$0xff] %v300
                %v302 = vld [vmem:[%s176 + $0x3e0] sm:$0xff]
                %303 = vst [vmem:[%s177 + $0x1f0] sm:$0xff] %v302
                %v304 = vld [vmem:[%s176 + $0x3e8] sm:$0xff]
                %305 = vst [vmem:[%s177 + $0x1f8] sm:$0xff] %v304
                %v306 = vld [vmem:[%s176 + $0x400] sm:$0xff]
                %307 = vst [vmem:[%s177 + $0x200] sm:$0xff] %v306
                %v308 = vld [vmem:[%s176 + $0x408] sm:$0xff]
                %309 = vst [vmem:[%s177 + $0x208] sm:$0xff] %v308
                %v310 = vld [vmem:[%s176 + $0x420] sm:$0xff]
                %311 = vst [vmem:[%s177 + $0x210] sm:$0xff] %v310
                %v312 = vld [vmem:[%s176 + $0x428] sm:$0xff]
                %313 = vst [vmem:[%s177 + $0x218] sm:$0xff] %v312
                %v314 = vld [vmem:[%s176 + $0x440] sm:$0xff]
                %315 = vst [vmem:[%s177 + $0x220] sm:$0xff] %v314
                %v316 = vld [vmem:[%s176 + $0x448] sm:$0xff]
                %317 = vst [vmem:[%s177 + $0x228] sm:$0xff] %v316
                %v318 = vld [vmem:[%s176 + $0x460] sm:$0xff]
                %319 = vst [vmem:[%s177 + $0x230] sm:$0xff] %v318
                %v320 = vld [vmem:[%s176 + $0x468] sm:$0xff]
                %321 = vst [vmem:[%s177 + $0x238] sm:$0xff] %v320
                %v322 = vld [vmem:[%s176 + $0x480] sm:$0xff]
                %323 = vst [vmem:[%s177 + $0x240] sm:$0xff] %v322
                %v324 = vld [vmem:[%s176 + $0x488] sm:$0xff]
                %325 = vst [vmem:[%s177 + $0x248] sm:$0xff] %v324
                %v326 = vld [vmem:[%s176 + $0x4a0] sm:$0xff]
                %327 = vst [vmem:[%s177 + $0x250] sm:$0xff] %v326
                %v328 = vld [vmem:[%s176 + $0x4a8] sm:$0xff]
                %329 = vst [vmem:[%s177 + $0x258] sm:$0xff] %v328
                %v330 = vld [vmem:[%s176 + $0x4c0] sm:$0xff]
                %331 = vst [vmem:[%s177 + $0x260] sm:$0xff] %v330
                %v332 = vld [vmem:[%s176 + $0x4c8] sm:$0xff]
                %333 = vst [vmem:[%s177 + $0x268] sm:$0xff] %v332
                %v334 = vld [vmem:[%s176 + $0x4e0] sm:$0xff]
                %335 = vst [vmem:[%s177 + $0x270] sm:$0xff] %v334
                %v336 = vld [vmem:[%s176 + $0x4e8] sm:$0xff]
                %337 = vst [vmem:[%s177 + $0x278] sm:$0xff] %v336
                %v338 = vld [vmem:[%s176 + $0x500] sm:$0xff]
                %339 = vst [vmem:[%s177 + $0x280] sm:$0xff] %v338
                %v340 = vld [vmem:[%s176 + $0x508] sm:$0xff]
                %341 = vst [vmem:[%s177 + $0x288] sm:$0xff] %v340
                %v342 = vld [vmem:[%s176 + $0x520] sm:$0xff]
                %343 = vst [vmem:[%s177 + $0x290] sm:$0xff] %v342
                %v344 = vld [vmem:[%s176 + $0x528] sm:$0xff]
                %345 = vst [vmem:[%s177 + $0x298] sm:$0xff] %v344
                %v346 = vld [vmem:[%s176 + $0x540] sm:$0xff]
                %347 = vst [vmem:[%s177 + $0x2a0] sm:$0xff] %v346
                %v348 = vld [vmem:[%s176 + $0x548] sm:$0xff]
                %349 = vst [vmem:[%s177 + $0x2a8] sm:$0xff] %v348
                %v350 = vld [vmem:[%s176 + $0x560] sm:$0xff]
                %351 = vst [vmem:[%s177 + $0x2b0] sm:$0xff] %v350
                %v352 = vld [vmem:[%s176 + $0x568] sm:$0xff]
                %353 = vst [vmem:[%s177 + $0x2b8] sm:$0xff] %v352
                %v354 = vld [vmem:[%s176 + $0x580] sm:$0xff]
                %355 = vst [vmem:[%s177 + $0x2c0] sm:$0xff] %v354
                %v356 = vld [vmem:[%s176 + $0x588] sm:$0xff]
                %357 = vst [vmem:[%s177 + $0x2c8] sm:$0xff] %v356
                %v358 = vld [vmem:[%s176 + $0x5a0] sm:$0xff]
                %359 = vst [vmem:[%s177 + $0x2d0] sm:$0xff] %v358
                %v360 = vld [vmem:[%s176 + $0x5a8] sm:$0xff]
                %361 = vst [vmem:[%s177 + $0x2d8] sm:$0xff] %v360
                %v362 = vld [vmem:[%s176 + $0x5c0] sm:$0xff]
                %363 = vst [vmem:[%s177 + $0x2e0] sm:$0xff] %v362
                %v364 = vld [vmem:[%s176 + $0x5c8] sm:$0xff]
                %365 = vst [vmem:[%s177 + $0x2e8] sm:$0xff] %v364
                %v366 = vld [vmem:[%s176 + $0x5e0] sm:$0xff]
                %367 = vst [vmem:[%s177 + $0x2f0] sm:$0xff] %v366
                %v368 = vld [vmem:[%s176 + $0x5e8] sm:$0xff]
                %369 = vst [vmem:[%s177 + $0x2f8] sm:$0xff] %v368
                %v370 = vld [vmem:[%s176 + $0x600] sm:$0xff]
                %371 = vst [vmem:[%s177 + $0x300] sm:$0xff] %v370
                %v372 = vld [vmem:[%s176 + $0x608] sm:$0xff]
                %373 = vst [vmem:[%s177 + $0x308] sm:$0xff] %v372
                %v374 = vld [vmem:[%s176 + $0x620] sm:$0xff]
                %375 = vst [vmem:[%s177 + $0x310] sm:$0xff] %v374
                %v376 = vld [vmem:[%s176 + $0x628] sm:$0xff]
                %377 = vst [vmem:[%s177 + $0x318] sm:$0xff] %v376
                %v378 = vld [vmem:[%s176 + $0x640] sm:$0xff]
                %379 = vst [vmem:[%s177 + $0x320] sm:$0xff] %v378
                %v380 = vld [vmem:[%s176 + $0x648] sm:$0xff]
                %381 = vst [vmem:[%s177 + $0x328] sm:$0xff] %v380
                %v382 = vld [vmem:[%s176 + $0x660] sm:$0xff]
                %383 = vst [vmem:[%s177 + $0x330] sm:$0xff] %v382
                %v384 = vld [vmem:[%s176 + $0x668] sm:$0xff]
                %385 = vst [vmem:[%s177 + $0x338] sm:$0xff] %v384
                %v386 = vld [vmem:[%s176 + $0x680] sm:$0xff]
                %387 = vst [vmem:[%s177 + $0x340] sm:$0xff] %v386
                %v388 = vld [vmem:[%s176 + $0x688] sm:$0xff]
                %389 = vst [vmem:[%s177 + $0x348] sm:$0xff] %v388
                %v390 = vld [vmem:[%s176 + $0x6a0] sm:$0xff]
                %391 = vst [vmem:[%s177 + $0x350] sm:$0xff] %v390
                %v392 = vld [vmem:[%s176 + $0x6a8] sm:$0xff]
                %393 = vst [vmem:[%s177 + $0x358] sm:$0xff] %v392
                %v394 = vld [vmem:[%s176 + $0x6c0] sm:$0xff]
                %395 = vst [vmem:[%s177 + $0x360] sm:$0xff] %v394
                %v396 = vld [vmem:[%s176 + $0x6c8] sm:$0xff]
                %397 = vst [vmem:[%s177 + $0x368] sm:$0xff] %v396
                %v398 = vld [vmem:[%s176 + $0x6e0] sm:$0xff]
                %399 = vst [vmem:[%s177 + $0x370] sm:$0xff] %v398
                %v400 = vld [vmem:[%s176 + $0x6e8] sm:$0xff]
                %401 = vst [vmem:[%s177 + $0x378] sm:$0xff] %v400
                %v402 = vld [vmem:[%s176 + $0x700] sm:$0xff]
                %403 = vst [vmem:[%s177 + $0x380] sm:$0xff] %v402
                %v404 = vld [vmem:[%s176 + $0x708] sm:$0xff]
                %405 = vst [vmem:[%s177 + $0x388] sm:$0xff] %v404
                %v406 = vld [vmem:[%s176 + $0x720] sm:$0xff]
                %407 = vst [vmem:[%s177 + $0x390] sm:$0xff] %v406
                %v408 = vld [vmem:[%s176 + $0x728] sm:$0xff]
                %409 = vst [vmem:[%s177 + $0x398] sm:$0xff] %v408
                %v410 = vld [vmem:[%s176 + $0x740] sm:$0xff]
                %411 = vst [vmem:[%s177 + $0x3a0] sm:$0xff] %v410
                %v412 = vld [vmem:[%s176 + $0x748] sm:$0xff]
                %413 = vst [vmem:[%s177 + $0x3a8] sm:$0xff] %v412
                %v414 = vld [vmem:[%s176 + $0x760] sm:$0xff]
                %415 = vst [vmem:[%s177 + $0x3b0] sm:$0xff] %v414
                %v416 = vld [vmem:[%s176 + $0x768] sm:$0xff]
                %417 = vst [vmem:[%s177 + $0x3b8] sm:$0xff] %v416
                %v418 = vld [vmem:[%s176 + $0x780] sm:$0xff]
                %419 = vst [vmem:[%s177 + $0x3c0] sm:$0xff] %v418
                %v420 = vld [vmem:[%s176 + $0x788] sm:$0xff]
                %421 = vst [vmem:[%s177 + $0x3c8] sm:$0xff] %v420
                %v422 = vld [vmem:[%s176 + $0x7a0] sm:$0xff]
                %423 = vst [vmem:[%s177 + $0x3d0] sm:$0xff] %v422
                %v424 = vld [vmem:[%s176 + $0x7a8] sm:$0xff]
                %425 = vst [vmem:[%s177 + $0x3d8] sm:$0xff] %v424
                %v426 = vld [vmem:[%s176 + $0x7c0] sm:$0xff]
                %427 = vst [vmem:[%s177 + $0x3e0] sm:$0xff] %v426
                %v428 = vld [vmem:[%s176 + $0x7c8] sm:$0xff]
                %429 = vst [vmem:[%s177 + $0x3e8] sm:$0xff] %v428
                %v430 = vld [vmem:[%s176 + $0x7e0] sm:$0xff]
                %431 = vst [vmem:[%s177 + $0x3f0] sm:$0xff] %v430
                %v432 = vld [vmem:[%s176 + $0x7e8] sm:$0xff]
                %433 = vst [vmem:[%s177 + $0x3f8] sm:$0xff] %v432
              $region37: #{_lambda_.5} parent=31 // loop_footer
                %s175 = sadd.s32 1, %s171
              $region38: #{_lambda_.5} parent=31 // loop_footer_branch
                %170 = sbr.rel target = $region34
              $region39: #{_lambda_.5} parent=31 // loop_exit
                _
            $region32: #{_lambda_.5} parent=27 // pred_fallthru
              _
            // Predicated region
            $region40: #{_lambda_.5} parent=27 // pred_check
              _
            $region41: #{_lambda_.5} parent=27 // pred_check_branch
              %435 = sbr.rel target = $region43
            $region42: #{_lambda_.5} parent=27 // pred_region
              _
            $region43: #{_lambda_.5} parent=27 // pred_fallthru
              _
          $region28: #{_lambda_.5} parent=23 // pred_fallthru
            _
          %436 = vnop
        $region24: #{_lambda_.5} parent=19 // pred_fallthru
          _
        // Predicated region
        $region44: #{_lambda_.5} parent=19 // pred_check
          %p437 = pneg %p93
        $region45: #{_lambda_.5} parent=19 // pred_check_branch
          %439 = sbr.rel (%p437) target = $region47
        $region46: #{_lambda_.5} parent=19 // pred_region
          %s440 = smul.u32 4, %s17
          %p441 = scmp.lt.s32.totalorder %s440, 7
          %s442 = scalar_select %p441, %s440, 7
          %s443 = scalar_lea.vmem %s2, %s442
          %s444 = smul.u32 4, %s17
        $region47: #{_lambda_.5} parent=19 // pred_fallthru
          _
      $region20: #{_lambda_.5} parent=5 // pred_fallthru
        _
      %p445 = scmp.le.s32.totalorder 1, %s9
      %p446 = scmp.lt.s32.totalorder %s9, 3
      %p447 = pnand %p445, %p446
      %p448 = pneg %p447
      // Predicated region
      $region48: #{_lambda_.5} parent=5 // pred_check
        _
      $region49: #{_lambda_.5} parent=5 // pred_check_branch
        %450 = sbr.rel (%p447) target = $region51
      $region50: #{_lambda_.5} parent=5 // pred_region
        %s451 = ssub.s32 %s9, 1
        %s452 = sand.u32 %s60, 1
        %s453 = sand.u32 %s60, 1
        %s454 = smul.addr %s453, 1024
        %s455 = scalar_lea.vmem [#allocation2], %s454
        // Predicated region
        $region52: #{_lambda_.5} parent=50 // pred_check
          %p456 = pneg %p73
        $region53: #{_lambda_.5} parent=50 // pred_check_branch
          %458 = sbr.rel (%p456) target = $region55
        $region54: #{_lambda_.5} parent=50 // pred_region
          _
        $region55: #{_lambda_.5} parent=50 // pred_fallthru
          _
        %s459 = smul.u32 16, %s18
        %p460 = scmp.lt.s32.totalorder %s459, 15
        %s461 = scalar_select %p460, %s459, 15
        %s462 = smul.addr %s461, 4
        %s463 = smul.addr %s462, 4
        %s464 = scalar_lea.vmem %s0, %s463
        %p465 = pneg %p47
        %p466 = pneg %p44
        %s467 = sand.u32 %s60, 1
        %s468 = sand.u32 %s60, 1
        %s469 = smul.addr %s468, 1024
        %s470 = scalar_lea.vmem [#allocation2], %s469
        %p471 = pneg %p73
        %p472 = pneg %p70
        %s473 = smul.u32 4, %s19
        %p474 = scmp.lt.s32.totalorder %s473, 7
        %s475 = scalar_select %p474, %s473, 7
        %s476 = scalar_lea.vmem %s2, %s475
        %p477 = pneg %p99
        %p478 = pneg %p96
        %p479 = pneg %p127
        %p480 = pneg %p124
        %s481 = sand.u32 %s114, 1
        %s482 = sand.u32 %s114, 1
        %s483 = smul.addr %s482, 256
        %s484 = scalar_lea.vmem [#allocation3], %s483
        %s485 = smul.u32 16, %s18
        %p486 = scmp.lt.s32.totalorder %s485, 15
        %s487 = scalar_select %p486, %s485, 15
        %s488 = smul.addr %s487, 4
        %s489 = smul.addr %s488, 4
        %s490 = scalar_lea.vmem %s0, %s489
        %s491 = smul.u32 16, %s18
        %s492 = smul.u32 4, %s19
        %s493 = smul.u32 4, %s19
        %p494 = scmp.lt.s32.totalorder %s493, 7
        %s495 = scalar_select %p494, %s493, 7
        %s496 = scalar_lea.vmem %s2, %s495
        %s497 = smul.u32 4, %s19
        %s498 = smul.u32 16, %s18
        %s499 = smul.u32 4, %s19
        %v500 = vld [vmem:[%s490] sm:$0xff]
        %v501 = vld [vmem:[%s490 + $0x8] sm:$0xff]
        %v502 = vld [vmem:[%s490 + $0x10] sm:$0xff]
        %v503 = vld [vmem:[%s490 + $0x18] sm:$0xff]
        %v504 = vld [vmem:[%s490 + $0x20] sm:$0xff]
        %v505 = vld [vmem:[%s490 + $0x28] sm:$0xff]
        %v506 = vld [vmem:[%s490 + $0x30] sm:$0xff]
        %v507 = vld [vmem:[%s490 + $0x38] sm:$0xff]
        %v508 = vld [vmem:[%s490 + $0x40] sm:$0xff]
        %v509 = vld [vmem:[%s490 + $0x48] sm:$0xff]
        %v510 = vld [vmem:[%s490 + $0x50] sm:$0xff]
        %v511 = vld [vmem:[%s490 + $0x58] sm:$0xff]
        %v512 = vld [vmem:[%s490 + $0x60] sm:$0xff]
        %v513 = vld [vmem:[%s490 + $0x68] sm:$0xff]
        %v514 = vld [vmem:[%s490 + $0x70] sm:$0xff]
        %v515 = vld [vmem:[%s490 + $0x78] sm:$0xff]
        %v516 = vld [vmem:[%s490 + $0x80] sm:$0xff]
        %v517 = vld [vmem:[%s490 + $0x88] sm:$0xff]
        %v518 = vld [vmem:[%s490 + $0x90] sm:$0xff]
        %v519 = vld [vmem:[%s490 + $0x98] sm:$0xff]
        %v520 = vld [vmem:[%s490 + $0xa0] sm:$0xff]
        %v521 = vld [vmem:[%s490 + $0xa8] sm:$0xff]
        %v522 = vld [vmem:[%s490 + $0xb0] sm:$0xff]
        %v523 = vld [vmem:[%s490 + $0xb8] sm:$0xff]
        %v524 = vld [vmem:[%s490 + $0xc0] sm:$0xff]
        %v525 = vld [vmem:[%s490 + $0xc8] sm:$0xff]
        %v526 = vld [vmem:[%s490 + $0xd0] sm:$0xff]
        %v527 = vld [vmem:[%s490 + $0xd8] sm:$0xff]
        %v528 = vld [vmem:[%s490 + $0xe0] sm:$0xff]
        %v529 = vld [vmem:[%s490 + $0xe8] sm:$0xff]
        %v530 = vld [vmem:[%s490 + $0xf0] sm:$0xff]
        %v531 = vld [vmem:[%s490 + $0xf8] sm:$0xff]
        %v532 = vld [vmem:[%s455] sm:$0xff]
        %v533 = vld [vmem:[%s455 + $0x8] sm:$0xff]
        %v534 = vld [vmem:[%s455 + $0x10] sm:$0xff]
        %v535 = vld [vmem:[%s455 + $0x18] sm:$0xff]
        %v536 = vld [vmem:[%s455 + $0x20] sm:$0xff]
        %v537 = vld [vmem:[%s455 + $0x28] sm:$0xff]
        %v538 = vld [vmem:[%s455 + $0x30] sm:$0xff]
        %v539 = vld [vmem:[%s455 + $0x38] sm:$0xff]
        %v540 = vld [vmem:[%s455 + $0x40] sm:$0xff]
        %v541 = vld [vmem:[%s455 + $0x48] sm:$0xff]
        %v542 = vld [vmem:[%s455 + $0x50] sm:$0xff]
        %v543 = vld [vmem:[%s455 + $0x58] sm:$0xff]
        %v544 = vld [vmem:[%s455 + $0x60] sm:$0xff]
        %v545 = vld [vmem:[%s455 + $0x68] sm:$0xff]
        %v546 = vld [vmem:[%s455 + $0x70] sm:$0xff]
        %v547 = vld [vmem:[%s455 + $0x78] sm:$0xff]
        %v548 = vld [vmem:[%s455 + $0x80] sm:$0xff]
        %v549 = vld [vmem:[%s455 + $0x88] sm:$0xff]
        %v550 = vld [vmem:[%s455 + $0x90] sm:$0xff]
        %v551 = vld [vmem:[%s455 + $0x98] sm:$0xff]
        %v552 = vld [vmem:[%s455 + $0xa0] sm:$0xff]
        %v553 = vld [vmem:[%s455 + $0xa8] sm:$0xff]
        %v554 = vld [vmem:[%s455 + $0xb0] sm:$0xff]
        %v555 = vld [vmem:[%s455 + $0xb8] sm:$0xff]
        %v556 = vld [vmem:[%s455 + $0xc0] sm:$0xff]
        %v557 = vld [vmem:[%s455 + $0xc8] sm:$0xff]
        %v558 = vld [vmem:[%s455 + $0xd0] sm:$0xff]
        %v559 = vld [vmem:[%s455 + $0xd8] sm:$0xff]
        %v560 = vld [vmem:[%s455 + $0xe0] sm:$0xff]
        %v561 = vld [vmem:[%s455 + $0xe8] sm:$0xff]
        %v562 = vld [vmem:[%s455 + $0xf0] sm:$0xff]
        %v563 = vld [vmem:[%s455 + $0xf8] sm:$0xff]
        %v564 = vld [vmem:[%s455 + $0x100] sm:$0xff]
        %v565 = vld [vmem:[%s455 + $0x108] sm:$0xff]
        %v566 = vld [vmem:[%s455 + $0x110] sm:$0xff]
        %v567 = vld [vmem:[%s455 + $0x118] sm:$0xff]
        %v568 = vld [vmem:[%s455 + $0x120] sm:$0xff]
        %v569 = vld [vmem:[%s455 + $0x128] sm:$0xff]
        %v570 = vld [vmem:[%s455 + $0x130] sm:$0xff]
        %v571 = vld [vmem:[%s455 + $0x138] sm:$0xff]
        %v572 = vld [vmem:[%s455 + $0x140] sm:$0xff]
        %v573 = vld [vmem:[%s455 + $0x148] sm:$0xff]
        %v574 = vld [vmem:[%s455 + $0x150] sm:$0xff]
        %v575 = vld [vmem:[%s455 + $0x158] sm:$0xff]
        %v576 = vld [vmem:[%s455 + $0x160] sm:$0xff]
        %v577 = vld [vmem:[%s455 + $0x168] sm:$0xff]
        %v578 = vld [vmem:[%s455 + $0x170] sm:$0xff]
        %v579 = vld [vmem:[%s455 + $0x178] sm:$0xff]
        %v580 = vld [vmem:[%s455 + $0x180] sm:$0xff]
        %v581 = vld [vmem:[%s455 + $0x188] sm:$0xff]
        %v582 = vld [vmem:[%s455 + $0x190] sm:$0xff]
        %v583 = vld [vmem:[%s455 + $0x198] sm:$0xff]
        %v584 = vld [vmem:[%s455 + $0x1a0] sm:$0xff]
        %v585 = vld [vmem:[%s455 + $0x1a8] sm:$0xff]
        %v586 = vld [vmem:[%s455 + $0x1b0] sm:$0xff]
        %v587 = vld [vmem:[%s455 + $0x1b8] sm:$0xff]
        %v588 = vld [vmem:[%s455 + $0x1c0] sm:$0xff]
        %v589 = vld [vmem:[%s455 + $0x1c8] sm:$0xff]
        %v590 = vld [vmem:[%s455 + $0x1d0] sm:$0xff]
        %v591 = vld [vmem:[%s455 + $0x1d8] sm:$0xff]
        %v592 = vld [vmem:[%s455 + $0x1e0] sm:$0xff]
        %v593 = vld [vmem:[%s455 + $0x1e8] sm:$0xff]
        %v594 = vld [vmem:[%s455 + $0x1f0] sm:$0xff]
        %v595 = vld [vmem:[%s455 + $0x1f8] sm:$0xff]
        %v596 = vld [vmem:[%s455 + $0x200] sm:$0xff]
        %v597 = vld [vmem:[%s455 + $0x208] sm:$0xff]
        %v598 = vld [vmem:[%s455 + $0x210] sm:$0xff]
        %v599 = vld [vmem:[%s455 + $0x218] sm:$0xff]
        %v600 = vld [vmem:[%s455 + $0x220] sm:$0xff]
        %v601 = vld [vmem:[%s455 + $0x228] sm:$0xff]
        %v602 = vld [vmem:[%s455 + $0x230] sm:$0xff]
        %v603 = vld [vmem:[%s455 + $0x238] sm:$0xff]
        %v604 = vld [vmem:[%s455 + $0x240] sm:$0xff]
        %v605 = vld [vmem:[%s455 + $0x248] sm:$0xff]
        %v606 = vld [vmem:[%s455 + $0x250] sm:$0xff]
        %v607 = vld [vmem:[%s455 + $0x258] sm:$0xff]
        %v608 = vld [vmem:[%s455 + $0x260] sm:$0xff]
        %v609 = vld [vmem:[%s455 + $0x268] sm:$0xff]
        %v610 = vld [vmem:[%s455 + $0x270] sm:$0xff]
        %v611 = vld [vmem:[%s455 + $0x278] sm:$0xff]
        %v612 = vld [vmem:[%s455 + $0x280] sm:$0xff]
        %v613 = vld [vmem:[%s455 + $0x288] sm:$0xff]
        %v614 = vld [vmem:[%s455 + $0x290] sm:$0xff]
        %v615 = vld [vmem:[%s455 + $0x298] sm:$0xff]
        %v616 = vld [vmem:[%s455 + $0x2a0] sm:$0xff]
        %v617 = vld [vmem:[%s455 + $0x2a8] sm:$0xff]
        %v618 = vld [vmem:[%s455 + $0x2b0] sm:$0xff]
        %v619 = vld [vmem:[%s455 + $0x2b8] sm:$0xff]
        %v620 = vld [vmem:[%s455 + $0x2c0] sm:$0xff]
        %v621 = vld [vmem:[%s455 + $0x2c8] sm:$0xff]
        %v622 = vld [vmem:[%s455 + $0x2d0] sm:$0xff]
        %v623 = vld [vmem:[%s455 + $0x2d8] sm:$0xff]
        %v624 = vld [vmem:[%s455 + $0x2e0] sm:$0xff]
        %v625 = vld [vmem:[%s455 + $0x2e8] sm:$0xff]
        %v626 = vld [vmem:[%s455 + $0x2f0] sm:$0xff]
        %v627 = vld [vmem:[%s455 + $0x2f8] sm:$0xff]
        %v628 = vld [vmem:[%s455 + $0x300] sm:$0xff]
        %v629 = vld [vmem:[%s455 + $0x308] sm:$0xff]
        %v630 = vld [vmem:[%s455 + $0x310] sm:$0xff]
        %v631 = vld [vmem:[%s455 + $0x318] sm:$0xff]
        %v632 = vld [vmem:[%s455 + $0x320] sm:$0xff]
        %v633 = vld [vmem:[%s455 + $0x328] sm:$0xff]
        %v634 = vld [vmem:[%s455 + $0x330] sm:$0xff]
        %v635 = vld [vmem:[%s455 + $0x338] sm:$0xff]
        %v636 = vld [vmem:[%s455 + $0x340] sm:$0xff]
        %v637 = vld [vmem:[%s455 + $0x348] sm:$0xff]
        %v638 = vld [vmem:[%s455 + $0x350] sm:$0xff]
        %v639 = vld [vmem:[%s455 + $0x358] sm:$0xff]
        %v640 = vld [vmem:[%s455 + $0x360] sm:$0xff]
        %v641 = vld [vmem:[%s455 + $0x368] sm:$0xff]
        %v642 = vld [vmem:[%s455 + $0x370] sm:$0xff]
        %v643 = vld [vmem:[%s455 + $0x378] sm:$0xff]
        %v644 = vld [vmem:[%s455 + $0x380] sm:$0xff]
        %v645 = vld [vmem:[%s455 + $0x388] sm:$0xff]
        %v646 = vld [vmem:[%s455 + $0x390] sm:$0xff]
        %v647 = vld [vmem:[%s455 + $0x398] sm:$0xff]
        %v648 = vld [vmem:[%s455 + $0x3a0] sm:$0xff]
        %v649 = vld [vmem:[%s455 + $0x3a8] sm:$0xff]
        %v650 = vld [vmem:[%s455 + $0x3b0] sm:$0xff]
        %v651 = vld [vmem:[%s455 + $0x3b8] sm:$0xff]
        %v652 = vld [vmem:[%s455 + $0x3c0] sm:$0xff]
        %v653 = vld [vmem:[%s455 + $0x3c8] sm:$0xff]
        %v654 = vld [vmem:[%s455 + $0x3d0] sm:$0xff]
        %v655 = vld [vmem:[%s455 + $0x3d8] sm:$0xff]
        %v656 = vld [vmem:[%s455 + $0x3e0] sm:$0xff]
        %v657 = vld [vmem:[%s455 + $0x3e8] sm:$0xff]
        %v658 = vld [vmem:[%s455 + $0x3f0] sm:$0xff]
        %v659 = vld [vmem:[%s455 + $0x3f8] sm:$0xff]
        %v660 = vld [vmem:[%s496] sm:$0xf]
        %v662 = vlaneseq
        %v663 = vshrl.u32 %v662, 7
        %v664 = vsub.s32 0, %v663
        %v665 = vrot.slane %v660, %v664
        %v666 = vlaneseq
        %v667 = vshrl.u32 %v666, 7
        %v668 = vsub.s32 1, %v667
        %v669 = vrot.slane %v660, %v668
        %v670 = vlaneseq
        %v671 = vshrl.u32 %v670, 7
        %v672 = vsub.s32 2, %v671
        %v673 = vrot.slane %v660, %v672
        %v674 = vlaneseq
        %v675 = vshrl.u32 %v674, 7
        %v676 = vsub.s32 3, %v675
        %v677 = vrot.slane %v660, %v676
        %v714 = vunpack.c.l.b16 %v500
        %v715 = vunpack.c.h.b16 %v500
        %v716 = vunpack.c.l.b16 %v501
        %v717 = vunpack.c.h.b16 %v501
        %v718 = vunpack.c.l.b16 %v502
        %v719 = vunpack.c.h.b16 %v502
        %v720 = vunpack.c.l.b16 %v503
        %v721 = vunpack.c.h.b16 %v503
        %v722 = vunpack.c.l.b16 %v504
        %v723 = vunpack.c.h.b16 %v504
        %v724 = vunpack.c.l.b16 %v505
        %v725 = vunpack.c.h.b16 %v505
        %v726 = vunpack.c.l.b16 %v506
        %v727 = vunpack.c.h.b16 %v506
        %v728 = vunpack.c.l.b16 %v507
        %v729 = vunpack.c.h.b16 %v507
        %v730 = vunpack.c.l.b16 %v508
        %v731 = vunpack.c.h.b16 %v508
        %v732 = vunpack.c.l.b16 %v509
        %v733 = vunpack.c.h.b16 %v509
        %v734 = vunpack.c.l.b16 %v510
        %v735 = vunpack.c.h.b16 %v510
        %v736 = vunpack.c.l.b16 %v511
        %v737 = vunpack.c.h.b16 %v511
        %v738 = vunpack.c.l.b16 %v512
        %v739 = vunpack.c.h.b16 %v512
        %v740 = vunpack.c.l.b16 %v513
        %v741 = vunpack.c.h.b16 %v513
        %v742 = vunpack.c.l.b16 %v514
        %v743 = vunpack.c.h.b16 %v514
        %v744 = vunpack.c.l.b16 %v515
        %v745 = vunpack.c.h.b16 %v515
        %v746 = vunpack.c.l.b16 %v516
        %v747 = vunpack.c.h.b16 %v516
        %v748 = vunpack.c.l.b16 %v517
        %v749 = vunpack.c.h.b16 %v517
        %v750 = vunpack.c.l.b16 %v518
        %v751 = vunpack.c.h.b16 %v518
        %v752 = vunpack.c.l.b16 %v519
        %v753 = vunpack.c.h.b16 %v519
        %v754 = vunpack.c.l.b16 %v520
        %v755 = vunpack.c.h.b16 %v520
        %v756 = vunpack.c.l.b16 %v521
        %v757 = vunpack.c.h.b16 %v521
        %v758 = vunpack.c.l.b16 %v522
        %v759 = vunpack.c.h.b16 %v522
        %v760 = vunpack.c.l.b16 %v523
        %v761 = vunpack.c.h.b16 %v523
        %v762 = vunpack.c.l.b16 %v524
        %v763 = vunpack.c.h.b16 %v524
        %v764 = vunpack.c.l.b16 %v525
        %v765 = vunpack.c.h.b16 %v525
        %v766 = vunpack.c.l.b16 %v526
        %v767 = vunpack.c.h.b16 %v526
        %v768 = vunpack.c.l.b16 %v527
        %v769 = vunpack.c.h.b16 %v527
        %v770 = vunpack.c.l.b16 %v528
        %v771 = vunpack.c.h.b16 %v528
        %v772 = vunpack.c.l.b16 %v529
        %v773 = vunpack.c.h.b16 %v529
        %v774 = vunpack.c.l.b16 %v530
        %v775 = vunpack.c.h.b16 %v530
        %v776 = vunpack.c.l.b16 %v531
        %v777 = vunpack.c.h.b16 %v531
        %v778 = vpack.c.b16 %v718, %v714
        %v779 = vpack.c.b16 %v719, %v715
        %v780 = vpack.c.b16 %v720, %v716
        %v781 = vpack.c.b16 %v721, %v717
        %v782 = vpack.c.b16 %v726, %v722
        %v783 = vpack.c.b16 %v727, %v723
        %v784 = vpack.c.b16 %v728, %v724
        %v785 = vpack.c.b16 %v729, %v725
        %v786 = vpack.c.b16 %v734, %v730
        %v787 = vpack.c.b16 %v735, %v731
        %v788 = vpack.c.b16 %v736, %v732
        %v789 = vpack.c.b16 %v737, %v733
        %v790 = vpack.c.b16 %v742, %v738
        %v791 = vpack.c.b16 %v743, %v739
        %v792 = vpack.c.b16 %v744, %v740
        %v793 = vpack.c.b16 %v745, %v741
        %v794 = vpack.c.b16 %v750, %v746
        %v795 = vpack.c.b16 %v751, %v747
        %v796 = vpack.c.b16 %v752, %v748
        %v797 = vpack.c.b16 %v753, %v749
        %v798 = vpack.c.b16 %v758, %v754
        %v799 = vpack.c.b16 %v759, %v755
        %v800 = vpack.c.b16 %v760, %v756
        %v801 = vpack.c.b16 %v761, %v757
        %v802 = vpack.c.b16 %v766, %v762
        %v803 = vpack.c.b16 %v767, %v763
        %v804 = vpack.c.b16 %v768, %v764
        %v805 = vpack.c.b16 %v769, %v765
        %v806 = vpack.c.b16 %v774, %v770
        %v807 = vpack.c.b16 %v775, %v771
        %v808 = vpack.c.b16 %v776, %v772
        %v809 = vpack.c.b16 %v777, %v773
        %v970 = vunpack.c.l.b16 %v532
        %v971 = vunpack.c.h.b16 %v532
        %v972 = vunpack.c.l.b16 %v533
        %v973 = vunpack.c.h.b16 %v533
        %v974 = vunpack.c.l.b16 %v534
        %v975 = vunpack.c.h.b16 %v534
        %v976 = vunpack.c.l.b16 %v535
        %v977 = vunpack.c.h.b16 %v535
        %v978 = vunpack.c.l.b16 %v536
        %v979 = vunpack.c.h.b16 %v536
        %v980 = vunpack.c.l.b16 %v537
        %v981 = vunpack.c.h.b16 %v537
        %v982 = vunpack.c.l.b16 %v538
        %v983 = vunpack.c.h.b16 %v538
        %v984 = vunpack.c.l.b16 %v539
        %v985 = vunpack.c.h.b16 %v539
        %v986 = vunpack.c.l.b16 %v540
        %v987 = vunpack.c.h.b16 %v540
        %v988 = vunpack.c.l.b16 %v541
        %v989 = vunpack.c.h.b16 %v541
        %v990 = vunpack.c.l.b16 %v542
        %v991 = vunpack.c.h.b16 %v542
        %v992 = vunpack.c.l.b16 %v543
        %v993 = vunpack.c.h.b16 %v543
        %v994 = vunpack.c.l.b16 %v544
        %v995 = vunpack.c.h.b16 %v544
        %v996 = vunpack.c.l.b16 %v545
        %v997 = vunpack.c.h.b16 %v545
        %v998 = vunpack.c.l.b16 %v546
        %v999 = vunpack.c.h.b16 %v546
        %v1000 = vunpack.c.l.b16 %v547
        %v1001 = vunpack.c.h.b16 %v547
        %v1002 = vunpack.c.l.b16 %v548
        %v1003 = vunpack.c.h.b16 %v548
        %v1004 = vunpack.c.l.b16 %v549
        %v1005 = vunpack.c.h.b16 %v549
        %v1006 = vunpack.c.l.b16 %v550
        %v1007 = vunpack.c.h.b16 %v550
        %v1008 = vunpack.c.l.b16 %v551
        %v1009 = vunpack.c.h.b16 %v551
        %v1010 = vunpack.c.l.b16 %v552
        %v1011 = vunpack.c.h.b16 %v552
        %v1012 = vunpack.c.l.b16 %v553
        %v1013 = vunpack.c.h.b16 %v553
        %v1014 = vunpack.c.l.b16 %v554
        %v1015 = vunpack.c.h.b16 %v554
        %v1016 = vunpack.c.l.b16 %v555
        %v1017 = vunpack.c.h.b16 %v555
        %v1018 = vunpack.c.l.b16 %v556
        %v1019 = vunpack.c.h.b16 %v556
        %v1020 = vunpack.c.l.b16 %v557
        %v1021 = vunpack.c.h.b16 %v557
        %v1022 = vunpack.c.l.b16 %v558
        %v1023 = vunpack.c.h.b16 %v558
        %v1024 = vunpack.c.l.b16 %v559
        %v1025 = vunpack.c.h.b16 %v559
        %v1026 = vunpack.c.l.b16 %v560
        %v1027 = vunpack.c.h.b16 %v560
        %v1028 = vunpack.c.l.b16 %v561
        %v1029 = vunpack.c.h.b16 %v561
        %v1030 = vunpack.c.l.b16 %v562
        %v1031 = vunpack.c.h.b16 %v562
        %v1032 = vunpack.c.l.b16 %v563
        %v1033 = vunpack.c.h.b16 %v563
        %v1034 = vunpack.c.l.b16 %v564
        %v1035 = vunpack.c.h.b16 %v564
        %v1036 = vunpack.c.l.b16 %v565
        %v1037 = vunpack.c.h.b16 %v565
        %v1038 = vunpack.c.l.b16 %v566
        %v1039 = vunpack.c.h.b16 %v566
        %v1040 = vunpack.c.l.b16 %v567
        %v1041 = vunpack.c.h.b16 %v567
        %v1042 = vunpack.c.l.b16 %v568
        %v1043 = vunpack.c.h.b16 %v568
        %v1044 = vunpack.c.l.b16 %v569
        %v1045 = vunpack.c.h.b16 %v569
        %v1046 = vunpack.c.l.b16 %v570
        %v1047 = vunpack.c.h.b16 %v570
        %v1048 = vunpack.c.l.b16 %v571
        %v1049 = vunpack.c.h.b16 %v571
        %v1050 = vunpack.c.l.b16 %v572
        %v1051 = vunpack.c.h.b16 %v572
        %v1052 = vunpack.c.l.b16 %v573
        %v1053 = vunpack.c.h.b16 %v573
        %v1054 = vunpack.c.l.b16 %v574
        %v1055 = vunpack.c.h.b16 %v574
        %v1056 = vunpack.c.l.b16 %v575
        %v1057 = vunpack.c.h.b16 %v575
        %v1058 = vunpack.c.l.b16 %v576
        %v1059 = vunpack.c.h.b16 %v576
        %v1060 = vunpack.c.l.b16 %v577
        %v1061 = vunpack.c.h.b16 %v577
        %v1062 = vunpack.c.l.b16 %v578
        %v1063 = vunpack.c.h.b16 %v578
        %v1064 = vunpack.c.l.b16 %v579
        %v1065 = vunpack.c.h.b16 %v579
        %v1066 = vunpack.c.l.b16 %v580
        %v1067 = vunpack.c.h.b16 %v580
        %v1068 = vunpack.c.l.b16 %v581
        %v1069 = vunpack.c.h.b16 %v581
        %v1070 = vunpack.c.l.b16 %v582
        %v1071 = vunpack.c.h.b16 %v582
        %v1072 = vunpack.c.l.b16 %v583
        %v1073 = vunpack.c.h.b16 %v583
        %v1074 = vunpack.c.l.b16 %v584
        %v1075 = vunpack.c.h.b16 %v584
        %v1076 = vunpack.c.l.b16 %v585
        %v1077 = vunpack.c.h.b16 %v585
        %v1078 = vunpack.c.l.b16 %v586
        %v1079 = vunpack.c.h.b16 %v586
        %v1080 = vunpack.c.l.b16 %v587
        %v1081 = vunpack.c.h.b16 %v587
        %v1082 = vunpack.c.l.b16 %v588
        %v1083 = vunpack.c.h.b16 %v588
        %v1084 = vunpack.c.l.b16 %v589
        %v1085 = vunpack.c.h.b16 %v589
        %v1086 = vunpack.c.l.b16 %v590
        %v1087 = vunpack.c.h.b16 %v590
        %v1088 = vunpack.c.l.b16 %v591
        %v1089 = vunpack.c.h.b16 %v591
        %v1090 = vunpack.c.l.b16 %v592
        %v1091 = vunpack.c.h.b16 %v592
        %v1092 = vunpack.c.l.b16 %v593
        %v1093 = vunpack.c.h.b16 %v593
        %v1094 = vunpack.c.l.b16 %v594
        %v1095 = vunpack.c.h.b16 %v594
        %v1096 = vunpack.c.l.b16 %v595
        %v1097 = vunpack.c.h.b16 %v595
        %v1098 = vunpack.c.l.b16 %v596
        %v1099 = vunpack.c.h.b16 %v596
        %v1100 = vunpack.c.l.b16 %v597
        %v1101 = vunpack.c.h.b16 %v597
        %v1102 = vunpack.c.l.b16 %v598
        %v1103 = vunpack.c.h.b16 %v598
        %v1104 = vunpack.c.l.b16 %v599
        %v1105 = vunpack.c.h.b16 %v599
        %v1106 = vunpack.c.l.b16 %v600
        %v1107 = vunpack.c.h.b16 %v600
        %v1108 = vunpack.c.l.b16 %v601
        %v1109 = vunpack.c.h.b16 %v601
        %v1110 = vunpack.c.l.b16 %v602
        %v1111 = vunpack.c.h.b16 %v602
        %v1112 = vunpack.c.l.b16 %v603
        %v1113 = vunpack.c.h.b16 %v603
        %v1114 = vunpack.c.l.b16 %v604
        %v1115 = vunpack.c.h.b16 %v604
        %v1116 = vunpack.c.l.b16 %v605
        %v1117 = vunpack.c.h.b16 %v605
        %v1118 = vunpack.c.l.b16 %v606
        %v1119 = vunpack.c.h.b16 %v606
        %v1120 = vunpack.c.l.b16 %v607
        %v1121 = vunpack.c.h.b16 %v607
        %v1122 = vunpack.c.l.b16 %v608
        %v1123 = vunpack.c.h.b16 %v608
        %v1124 = vunpack.c.l.b16 %v609
        %v1125 = vunpack.c.h.b16 %v609
        %v1126 = vunpack.c.l.b16 %v610
        %v1127 = vunpack.c.h.b16 %v610
        %v1128 = vunpack.c.l.b16 %v611
        %v1129 = vunpack.c.h.b16 %v611
        %v1130 = vunpack.c.l.b16 %v612
        %v1131 = vunpack.c.h.b16 %v612
        %v1132 = vunpack.c.l.b16 %v613
        %v1133 = vunpack.c.h.b16 %v613
        %v1134 = vunpack.c.l.b16 %v614
        %v1135 = vunpack.c.h.b16 %v614
        %v1136 = vunpack.c.l.b16 %v615
        %v1137 = vunpack.c.h.b16 %v615
        %v1138 = vunpack.c.l.b16 %v616
        %v1139 = vunpack.c.h.b16 %v616
        %v1140 = vunpack.c.l.b16 %v617
        %v1141 = vunpack.c.h.b16 %v617
        %v1142 = vunpack.c.l.b16 %v618
        %v1143 = vunpack.c.h.b16 %v618
        %v1144 = vunpack.c.l.b16 %v619
        %v1145 = vunpack.c.h.b16 %v619
        %v1146 = vunpack.c.l.b16 %v620
        %v1147 = vunpack.c.h.b16 %v620
        %v1148 = vunpack.c.l.b16 %v621
        %v1149 = vunpack.c.h.b16 %v621
        %v1150 = vunpack.c.l.b16 %v622
        %v1151 = vunpack.c.h.b16 %v622
        %v1152 = vunpack.c.l.b16 %v623
        %v1153 = vunpack.c.h.b16 %v623
        %v1154 = vunpack.c.l.b16 %v624
        %v1155 = vunpack.c.h.b16 %v624
        %v1156 = vunpack.c.l.b16 %v625
        %v1157 = vunpack.c.h.b16 %v625
        %v1158 = vunpack.c.l.b16 %v626
        %v1159 = vunpack.c.h.b16 %v626
        %v1160 = vunpack.c.l.b16 %v627
        %v1161 = vunpack.c.h.b16 %v627
        %v1162 = vunpack.c.l.b16 %v628
        %v1163 = vunpack.c.h.b16 %v628
        %v1164 = vunpack.c.l.b16 %v629
        %v1165 = vunpack.c.h.b16 %v629
        %v1166 = vunpack.c.l.b16 %v630
        %v1167 = vunpack.c.h.b16 %v630
        %v1168 = vunpack.c.l.b16 %v631
        %v1169 = vunpack.c.h.b16 %v631
        %v1170 = vunpack.c.l.b16 %v632
        %v1171 = vunpack.c.h.b16 %v632
        %v1172 = vunpack.c.l.b16 %v633
        %v1173 = vunpack.c.h.b16 %v633
        %v1174 = vunpack.c.l.b16 %v634
        %v1175 = vunpack.c.h.b16 %v634
        %v1176 = vunpack.c.l.b16 %v635
        %v1177 = vunpack.c.h.b16 %v635
        %v1178 = vunpack.c.l.b16 %v636
        %v1179 = vunpack.c.h.b16 %v636
        %v1180 = vunpack.c.l.b16 %v637
        %v1181 = vunpack.c.h.b16 %v637
        %v1182 = vunpack.c.l.b16 %v638
        %v1183 = vunpack.c.h.b16 %v638
        %v1184 = vunpack.c.l.b16 %v639
        %v1185 = vunpack.c.h.b16 %v639
        %v1186 = vunpack.c.l.b16 %v640
        %v1187 = vunpack.c.h.b16 %v640
        %v1188 = vunpack.c.l.b16 %v641
        %v1189 = vunpack.c.h.b16 %v641
        %v1190 = vunpack.c.l.b16 %v642
        %v1191 = vunpack.c.h.b16 %v642
        %v1192 = vunpack.c.l.b16 %v643
        %v1193 = vunpack.c.h.b16 %v643
        %v1194 = vunpack.c.l.b16 %v644
        %v1195 = vunpack.c.h.b16 %v644
        %v1196 = vunpack.c.l.b16 %v645
        %v1197 = vunpack.c.h.b16 %v645
        %v1198 = vunpack.c.l.b16 %v646
        %v1199 = vunpack.c.h.b16 %v646
        %v1200 = vunpack.c.l.b16 %v647
        %v1201 = vunpack.c.h.b16 %v647
        %v1202 = vunpack.c.l.b16 %v648
        %v1203 = vunpack.c.h.b16 %v648
        %v1204 = vunpack.c.l.b16 %v649
        %v1205 = vunpack.c.h.b16 %v649
        %v1206 = vunpack.c.l.b16 %v650
        %v1207 = vunpack.c.h.b16 %v650
        %v1208 = vunpack.c.l.b16 %v651
        %v1209 = vunpack.c.h.b16 %v651
        %v1210 = vunpack.c.l.b16 %v652
        %v1211 = vunpack.c.h.b16 %v652
        %v1212 = vunpack.c.l.b16 %v653
        %v1213 = vunpack.c.h.b16 %v653
        %v1214 = vunpack.c.l.b16 %v654
        %v1215 = vunpack.c.h.b16 %v654
        %v1216 = vunpack.c.l.b16 %v655
        %v1217 = vunpack.c.h.b16 %v655
        %v1218 = vunpack.c.l.b16 %v656
        %v1219 = vunpack.c.h.b16 %v656
        %v1220 = vunpack.c.l.b16 %v657
        %v1221 = vunpack.c.h.b16 %v657
        %v1222 = vunpack.c.l.b16 %v658
        %v1223 = vunpack.c.h.b16 %v658
        %v1224 = vunpack.c.l.b16 %v659
        %v1225 = vunpack.c.h.b16 %v659
        %v1226 = vpack.c.b16 %v974, %v970
        %v1227 = vpack.c.b16 %v975, %v971
        %v1228 = vpack.c.b16 %v976, %v972
        %v1229 = vpack.c.b16 %v977, %v973
        %v1230 = vpack.c.b16 %v982, %v978
        %v1231 = vpack.c.b16 %v983, %v979
        %v1232 = vpack.c.b16 %v984, %v980
        %v1233 = vpack.c.b16 %v985, %v981
        %v1234 = vpack.c.b16 %v990, %v986
        %v1235 = vpack.c.b16 %v991, %v987
        %v1236 = vpack.c.b16 %v992, %v988
        %v1237 = vpack.c.b16 %v993, %v989
        %v1238 = vpack.c.b16 %v998, %v994
        %v1239 = vpack.c.b16 %v999, %v995
        %v1240 = vpack.c.b16 %v1000, %v996
        %v1241 = vpack.c.b16 %v1001, %v997
        %v1242 = vpack.c.b16 %v1006, %v1002
        %v1243 = vpack.c.b16 %v1007, %v1003
        %v1244 = vpack.c.b16 %v1008, %v1004
        %v1245 = vpack.c.b16 %v1009, %v1005
        %v1246 = vpack.c.b16 %v1014, %v1010
        %v1247 = vpack.c.b16 %v1015, %v1011
        %v1248 = vpack.c.b16 %v1016, %v1012
        %v1249 = vpack.c.b16 %v1017, %v1013
        %v1250 = vpack.c.b16 %v1022, %v1018
        %v1251 = vpack.c.b16 %v1023, %v1019
        %v1252 = vpack.c.b16 %v1024, %v1020
        %v1253 = vpack.c.b16 %v1025, %v1021
        %v1254 = vpack.c.b16 %v1030, %v1026
        %v1255 = vpack.c.b16 %v1031, %v1027
        %v1256 = vpack.c.b16 %v1032, %v1028
        %v1257 = vpack.c.b16 %v1033, %v1029
        %v1258 = vpack.c.b16 %v1038, %v1034
        %v1259 = vpack.c.b16 %v1039, %v1035
        %v1260 = vpack.c.b16 %v1040, %v1036
        %v1261 = vpack.c.b16 %v1041, %v1037
        %v1262 = vpack.c.b16 %v1046, %v1042
        %v1263 = vpack.c.b16 %v1047, %v1043
        %v1264 = vpack.c.b16 %v1048, %v1044
        %v1265 = vpack.c.b16 %v1049, %v1045
        %v1266 = vpack.c.b16 %v1054, %v1050
        %v1267 = vpack.c.b16 %v1055, %v1051
        %v1268 = vpack.c.b16 %v1056, %v1052
        %v1269 = vpack.c.b16 %v1057, %v1053
        %v1270 = vpack.c.b16 %v1062, %v1058
        %v1271 = vpack.c.b16 %v1063, %v1059
        %v1272 = vpack.c.b16 %v1064, %v1060
        %v1273 = vpack.c.b16 %v1065, %v1061
        %v1274 = vpack.c.b16 %v1070, %v1066
        %v1275 = vpack.c.b16 %v1071, %v1067
        %v1276 = vpack.c.b16 %v1072, %v1068
        %v1277 = vpack.c.b16 %v1073, %v1069
        %v1278 = vpack.c.b16 %v1078, %v1074
        %v1279 = vpack.c.b16 %v1079, %v1075
        %v1280 = vpack.c.b16 %v1080, %v1076
        %v1281 = vpack.c.b16 %v1081, %v1077
        %v1282 = vpack.c.b16 %v1086, %v1082
        %v1283 = vpack.c.b16 %v1087, %v1083
        %v1284 = vpack.c.b16 %v1088, %v1084
        %v1285 = vpack.c.b16 %v1089, %v1085
        %v1286 = vpack.c.b16 %v1094, %v1090
        %v1287 = vpack.c.b16 %v1095, %v1091
        %v1288 = vpack.c.b16 %v1096, %v1092
        %v1289 = vpack.c.b16 %v1097, %v1093
        %v1290 = vpack.c.b16 %v1102, %v1098
        %v1291 = vpack.c.b16 %v1103, %v1099
        %v1292 = vpack.c.b16 %v1104, %v1100
        %v1293 = vpack.c.b16 %v1105, %v1101
        %v1294 = vpack.c.b16 %v1110, %v1106
        %v1295 = vpack.c.b16 %v1111, %v1107
        %v1296 = vpack.c.b16 %v1112, %v1108
        %v1297 = vpack.c.b16 %v1113, %v1109
        %v1298 = vpack.c.b16 %v1118, %v1114
        %v1299 = vpack.c.b16 %v1119, %v1115
        %v1300 = vpack.c.b16 %v1120, %v1116
        %v1301 = vpack.c.b16 %v1121, %v1117
        %v1302 = vpack.c.b16 %v1126, %v1122
        %v1303 = vpack.c.b16 %v1127, %v1123
        %v1304 = vpack.c.b16 %v1128, %v1124
        %v1305 = vpack.c.b16 %v1129, %v1125
        %v1306 = vpack.c.b16 %v1134, %v1130
        %v1307 = vpack.c.b16 %v1135, %v1131
        %v1308 = vpack.c.b16 %v1136, %v1132
        %v1309 = vpack.c.b16 %v1137, %v1133
        %v1310 = vpack.c.b16 %v1142, %v1138
        %v1311 = vpack.c.b16 %v1143, %v1139
        %v1312 = vpack.c.b16 %v1144, %v1140
        %v1313 = vpack.c.b16 %v1145, %v1141
        %v1314 = vpack.c.b16 %v1150, %v1146
        %v1315 = vpack.c.b16 %v1151, %v1147
        %v1316 = vpack.c.b16 %v1152, %v1148
        %v1317 = vpack.c.b16 %v1153, %v1149
        %v1318 = vpack.c.b16 %v1158, %v1154
        %v1319 = vpack.c.b16 %v1159, %v1155
        %v1320 = vpack.c.b16 %v1160, %v1156
        %v1321 = vpack.c.b16 %v1161, %v1157
        %v1322 = vpack.c.b16 %v1166, %v1162
        %v1323 = vpack.c.b16 %v1167, %v1163
        %v1324 = vpack.c.b16 %v1168, %v1164
        %v1325 = vpack.c.b16 %v1169, %v1165
        %v1326 = vpack.c.b16 %v1174, %v1170
        %v1327 = vpack.c.b16 %v1175, %v1171
        %v1328 = vpack.c.b16 %v1176, %v1172
        %v1329 = vpack.c.b16 %v1177, %v1173
        %v1330 = vpack.c.b16 %v1182, %v1178
        %v1331 = vpack.c.b16 %v1183, %v1179
        %v1332 = vpack.c.b16 %v1184, %v1180
        %v1333 = vpack.c.b16 %v1185, %v1181
        %v1334 = vpack.c.b16 %v1190, %v1186
        %v1335 = vpack.c.b16 %v1191, %v1187
        %v1336 = vpack.c.b16 %v1192, %v1188
        %v1337 = vpack.c.b16 %v1193, %v1189
        %v1338 = vpack.c.b16 %v1198, %v1194
        %v1339 = vpack.c.b16 %v1199, %v1195
        %v1340 = vpack.c.b16 %v1200, %v1196
        %v1341 = vpack.c.b16 %v1201, %v1197
        %v1342 = vpack.c.b16 %v1206, %v1202
        %v1343 = vpack.c.b16 %v1207, %v1203
        %v1344 = vpack.c.b16 %v1208, %v1204
        %v1345 = vpack.c.b16 %v1209, %v1205
        %v1346 = vpack.c.b16 %v1214, %v1210
        %v1347 = vpack.c.b16 %v1215, %v1211
        %v1348 = vpack.c.b16 %v1216, %v1212
        %v1349 = vpack.c.b16 %v1217, %v1213
        %v1350 = vpack.c.b16 %v1222, %v1218
        %v1351 = vpack.c.b16 %v1223, %v1219
        %v1352 = vpack.c.b16 %v1224, %v1220
        %v1353 = vpack.c.b16 %v1225, %v1221
        %1482 = vmatprep.subr.bf16.mxu0 %v1227
        %1483 = vmatpush1.bf16.msra.mxu0 %v1226
        %1484 = vmatprep.subr.bf16.mxu0 %v1231
        %1485 = vmatpush1.bf16.msra.mxu0 %v1230
        %1486 = vmatprep.subr.bf16.mxu0 %v1235
        %1487 = vmatpush1.bf16.msra.mxu0 %v1234
        %1488 = vmatprep.subr.bf16.mxu0 %v1239
        %1489 = vmatpush1.bf16.msra.mxu0 %v1238
        %1490 = vmatprep.subr.bf16.mxu0 %v1243
        %1491 = vmatpush1.bf16.msra.mxu0 %v1242
        %1492 = vmatprep.subr.bf16.mxu0 %v1247
        %1493 = vmatpush1.bf16.msra.mxu0 %v1246
        %1494 = vmatprep.subr.bf16.mxu0 %v1251
        %1495 = vmatpush1.bf16.msra.mxu0 %v1250
        %1496 = vmatprep.subr.bf16.mxu0 %v1255
        %1497 = vmatpush1.bf16.msra.mxu0 %v1254
        %1498 = vmatprep.subr.bf16.mxu0 %v1259
        %1499 = vmatpush1.bf16.msra.mxu0 %v1258
        %1500 = vmatprep.subr.bf16.mxu0 %v1263
        %1501 = vmatpush1.bf16.msra.mxu0 %v1262
        %1502 = vmatprep.subr.bf16.mxu0 %v1267
        %1503 = vmatpush1.bf16.msra.mxu0 %v1266
        %1504 = vmatprep.subr.bf16.mxu0 %v1271
        %1505 = vmatpush1.bf16.msra.mxu0 %v1270
        %1506 = vmatprep.subr.bf16.mxu0 %v1275
        %1507 = vmatpush1.bf16.msra.mxu0 %v1274
        %1508 = vmatprep.subr.bf16.mxu0 %v1279
        %1509 = vmatpush1.bf16.msra.mxu0 %v1278
        %1510 = vmatprep.subr.bf16.mxu0 %v1283
        %1511 = vmatpush1.bf16.msra.mxu0 %v1282
        %1512 = vmatprep.subr.bf16.mxu0 %v1287
        %1513 = vmatpush1.bf16.msra.mxu0 %v1286
        %1514 = vmatprep.mubr.bf16.mxu0 %v779
        %1515 = vmatmul.mubr.bf16.gmra.mrb[0].mxu0 %v778
        %v1516 = vpop.f32.mrb[0].mxu0
        %v1517 = vadd.f32 %v665, %v1516
        %v1518 = vpop.f32.mrb[0].mxu0
        %v1519 = vadd.f32 %v669, %v1518
        %v1520 = vpop.f32.mrb[0].mxu0
        %v1521 = vadd.f32 %v665, %v1520
        %v1522 = vpop.f32.mrb[0].mxu0
        %v1523 = vadd.f32 %v669, %v1522
        %1524 = vmatprep.mubr.bf16.mxu0 %v783
        %1525 = vmatmul.mubr.bf16.gmra.mrb[0].mxu0 %v782
        %v1526 = vpop.f32.mrb[0].mxu0
        %v1527 = vadd.f32 %v665, %v1526
        %v1528 = vpop.f32.mrb[0].mxu0
        %v1529 = vadd.f32 %v669, %v1528
        %v1530 = vpop.f32.mrb[0].mxu0
        %v1531 = vadd.f32 %v665, %v1530
        %v1532 = vpop.f32.mrb[0].mxu0
        %v1533 = vadd.f32 %v669, %v1532
        %1534 = vmatprep.mubr.bf16.mxu0 %v787
        %1535 = vmatmul.mubr.bf16.gmra.mrb[0].mxu0 %v786
        %v1536 = vpop.f32.mrb[0].mxu0
        %v1537 = vadd.f32 %v665, %v1536
        %v1538 = vpop.f32.mrb[0].mxu0
        %v1539 = vadd.f32 %v669, %v1538
        %v1540 = vpop.f32.mrb[0].mxu0
        %v1541 = vadd.f32 %v665, %v1540
        %v1542 = vpop.f32.mrb[0].mxu0
        %v1543 = vadd.f32 %v669, %v1542
        %1544 = vmatprep.mubr.bf16.mxu0 %v791
        %1545 = vmatmul.mubr.bf16.gmra.mrb[0].mxu0 %v790
        %v1546 = vpop.f32.mrb[0].mxu0
        %v1547 = vadd.f32 %v665, %v1546
        %v1548 = vpop.f32.mrb[0].mxu0
        %v1549 = vadd.f32 %v669, %v1548
        %v1550 = vpop.f32.mrb[0].mxu0
        %v1551 = vadd.f32 %v665, %v1550
        %v1552 = vpop.f32.mrb[0].mxu0
        %v1553 = vadd.f32 %v669, %v1552
        %1554 = vmatprep.mubr.bf16.mxu0 %v795
        %1555 = vmatmul.mubr.bf16.gmra.mrb[0].mxu0 %v794
        %v1556 = vpop.f32.mrb[0].mxu0
        %v1557 = vadd.f32 %v665, %v1556
        %v1558 = vpop.f32.mrb[0].mxu0
        %v1559 = vadd.f32 %v669, %v1558
        %v1560 = vpop.f32.mrb[0].mxu0
        %v1561 = vadd.f32 %v665, %v1560
        %v1562 = vpop.f32.mrb[0].mxu0
        %v1563 = vadd.f32 %v669, %v1562
        %1564 = vmatprep.mubr.bf16.mxu0 %v799
        %1565 = vmatmul.mubr.bf16.gmra.mrb[0].mxu0 %v798
        %v1566 = vpop.f32.mrb[0].mxu0
        %v1567 = vadd.f32 %v665, %v1566
        %v1568 = vpop.f32.mrb[0].mxu0
        %v1569 = vadd.f32 %v669, %v1568
        %v1570 = vpop.f32.mrb[0].mxu0
        %v1571 = vadd.f32 %v665, %v1570
        %v1572 = vpop.f32.mrb[0].mxu0
        %v1573 = vadd.f32 %v669, %v1572
        %1574 = vmatprep.mubr.bf16.mxu0 %v803
        %1575 = vmatmul.mubr.bf16.gmra.mrb[0].mxu0 %v802
        %v1576 = vpop.f32.mrb[0].mxu0
        %v1577 = vadd.f32 %v665, %v1576
        %v1578 = vpop.f32.mrb[0].mxu0
        %v1579 = vadd.f32 %v669, %v1578
        %v1580 = vpop.f32.mrb[0].mxu0
        %v1581 = vadd.f32 %v665, %v1580
        %v1582 = vpop.f32.mrb[0].mxu0
        %v1583 = vadd.f32 %v669, %v1582
        %1584 = vmatprep.mubr.bf16.mxu0 %v807
        %1585 = vmatmul.mubr.bf16.gmra.mrb[0].mxu0 %v806
        %v1586 = vpop.f32.mrb[0].mxu0
        %v1587 = vadd.f32 %v665, %v1586
        %v1588 = vpop.f32.mrb[0].mxu0
        %v1589 = vadd.f32 %v669, %v1588
        %v1590 = vpop.f32.mrb[0].mxu0
        %v1591 = vadd.f32 %v665, %v1590
        %v1592 = vpop.f32.mrb[0].mxu0
        %v1593 = vadd.f32 %v669, %v1592
        %1594 = vdwg.mxu0
        %1595 = vmatprep.subr.bf16.mxu0 %v1291
        %1596 = vmatpush1.bf16.msra.mxu0 %v1290
        %1597 = vmatprep.subr.bf16.mxu0 %v1295
        %1598 = vmatpush1.bf16.msra.mxu0 %v1294
        %1599 = vmatprep.subr.bf16.mxu0 %v1299
        %1600 = vmatpush1.bf16.msra.mxu0 %v1298
        %1601 = vmatprep.subr.bf16.mxu0 %v1303
        %1602 = vmatpush1.bf16.msra.mxu0 %v1302
        %1603 = vmatprep.subr.bf16.mxu0 %v1307
        %1604 = vmatpush1.bf16.msra.mxu0 %v1306
        %1605 = vmatprep.subr.bf16.mxu0 %v1311
        %1606 = vmatpush1.bf16.msra.mxu0 %v1310
        %1607 = vmatprep.subr.bf16.mxu0 %v1315
        %1608 = vmatpush1.bf16.msra.mxu0 %v1314
        %1609 = vmatprep.subr.bf16.mxu0 %v1319
        %1610 = vmatpush1.bf16.msra.mxu0 %v1318
        %1611 = vmatprep.subr.bf16.mxu0 %v1323
        %1612 = vmatpush1.bf16.msra.mxu0 %v1322
        %1613 = vmatprep.subr.bf16.mxu0 %v1327
        %1614 = vmatpush1.bf16.msra.mxu0 %v1326
        %1615 = vmatprep.subr.bf16.mxu0 %v1331
        %1616 = vmatpush1.bf16.msra.mxu0 %v1330
        %1617 = vmatprep.subr.bf16.mxu0 %v1335
        %1618 = vmatpush1.bf16.msra.mxu0 %v1334
        %1619 = vmatprep.subr.bf16.mxu0 %v1339
        %1620 = vmatpush1.bf16.msra.mxu0 %v1338
        %1621 = vmatprep.subr.bf16.mxu0 %v1343
        %1622 = vmatpush1.bf16.msra.mxu0 %v1342
        %1623 = vmatprep.subr.bf16.mxu0 %v1347
        %1624 = vmatpush1.bf16.msra.mxu0 %v1346
        %1625 = vmatprep.subr.bf16.mxu0 %v1351
        %1626 = vmatpush1.bf16.msra.mxu0 %v1350
        %1627 = vmatprep.mubr.bf16.mxu0 %v781
        %1628 = vmatmul.mubr.bf16.gmra.mrb[0].mxu0 %v780
        %v1629 = vpop.f32.mrb[0].mxu0
        %v1630 = vadd.f32 %v1517, %v1629
        %v1631 = vpop.f32.mrb[0].mxu0
        %v1632 = vadd.f32 %v1519, %v1631
        %v1633 = vpop.f32.mrb[0].mxu0
        %v1634 = vadd.f32 %v1521, %v1633
        %v1635 = vpop.f32.mrb[0].mxu0
        %v1636 = vadd.f32 %v1523, %v1635
        %1637 = vmatprep.mubr.bf16.mxu0 %v785
        %1638 = vmatmul.mubr.bf16.gmra.mrb[0].mxu0 %v784
        %v1639 = vpop.f32.mrb[0].mxu0
        %v1640 = vadd.f32 %v1527, %v1639
        %v1641 = vpop.f32.mrb[0].mxu0
        %v1642 = vadd.f32 %v1529, %v1641
        %v1643 = vpop.f32.mrb[0].mxu0
        %v1644 = vadd.f32 %v1531, %v1643
        %v1645 = vpop.f32.mrb[0].mxu0
        %v1646 = vadd.f32 %v1533, %v1645
        %1647 = vmatprep.mubr.bf16.mxu0 %v789
        %1648 = vmatmul.mubr.bf16.gmra.mrb[0].mxu0 %v788
        %v1649 = vpop.f32.mrb[0].mxu0
        %v1650 = vadd.f32 %v1537, %v1649
        %v1651 = vpop.f32.mrb[0].mxu0
        %v1652 = vadd.f32 %v1539, %v1651
        %v1653 = vpop.f32.mrb[0].mxu0
        %v1654 = vadd.f32 %v1541, %v1653
        %v1655 = vpop.f32.mrb[0].mxu0
        %v1656 = vadd.f32 %v1543, %v1655
        %1657 = vmatprep.mubr.bf16.mxu0 %v793
        %1658 = vmatmul.mubr.bf16.gmra.mrb[0].mxu0 %v792
        %v1659 = vpop.f32.mrb[0].mxu0
        %v1660 = vadd.f32 %v1547, %v1659
        %v1661 = vpop.f32.mrb[0].mxu0
        %v1662 = vadd.f32 %v1549, %v1661
        %v1663 = vpop.f32.mrb[0].mxu0
        %v1664 = vadd.f32 %v1551, %v1663
        %v1665 = vpop.f32.mrb[0].mxu0
        %v1666 = vadd.f32 %v1553, %v1665
        %1667 = vmatprep.mubr.bf16.mxu0 %v797
        %1668 = vmatmul.mubr.bf16.gmra.mrb[0].mxu0 %v796
        %v1669 = vpop.f32.mrb[0].mxu0
        %v1670 = vadd.f32 %v1557, %v1669
        %v1671 = vpop.f32.mrb[0].mxu0
        %v1672 = vadd.f32 %v1559, %v1671
        %v1673 = vpop.f32.mrb[0].mxu0
        %v1674 = vadd.f32 %v1561, %v1673
        %v1675 = vpop.f32.mrb[0].mxu0
        %v1676 = vadd.f32 %v1563, %v1675
        %1677 = vmatprep.mubr.bf16.mxu0 %v801
        %1678 = vmatmul.mubr.bf16.gmra.mrb[0].mxu0 %v800
        %v1679 = vpop.f32.mrb[0].mxu0
        %v1680 = vadd.f32 %v1567, %v1679
        %v1681 = vpop.f32.mrb[0].mxu0
        %v1682 = vadd.f32 %v1569, %v1681
        %v1683 = vpop.f32.mrb[0].mxu0
        %v1684 = vadd.f32 %v1571, %v1683
        %v1685 = vpop.f32.mrb[0].mxu0
        %v1686 = vadd.f32 %v1573, %v1685
        %1687 = vmatprep.mubr.bf16.mxu0 %v805
        %1688 = vmatmul.mubr.bf16.gmra.mrb[0].mxu0 %v804
        %v1689 = vpop.f32.mrb[0].mxu0
        %v1690 = vadd.f32 %v1577, %v1689
        %v1691 = vpop.f32.mrb[0].mxu0
        %v1692 = vadd.f32 %v1579, %v1691
        %v1693 = vpop.f32.mrb[0].mxu0
        %v1694 = vadd.f32 %v1581, %v1693
        %v1695 = vpop.f32.mrb[0].mxu0
        %v1696 = vadd.f32 %v1583, %v1695
        %1697 = vmatprep.mubr.bf16.mxu0 %v809
        %1698 = vmatmul.mubr.bf16.gmra.mrb[0].mxu0 %v808
        %v1699 = vpop.f32.mrb[0].mxu0
        %v1700 = vadd.f32 %v1587, %v1699
        %v1701 = vpop.f32.mrb[0].mxu0
        %v1702 = vadd.f32 %v1589, %v1701
        %v1703 = vpop.f32.mrb[0].mxu0
        %v1704 = vadd.f32 %v1591, %v1703
        %v1705 = vpop.f32.mrb[0].mxu0
        %v1706 = vadd.f32 %v1593, %v1705
        %1707 = vdwg.mxu0
        %1708 = vmatprep.subr.bf16.mxu0 %v1229
        %1709 = vmatpush1.bf16.msra.mxu0 %v1228
        %1710 = vmatprep.subr.bf16.mxu0 %v1233
        %1711 = vmatpush1.bf16.msra.mxu0 %v1232
        %1712 = vmatprep.subr.bf16.mxu0 %v1237
        %1713 = vmatpush1.bf16.msra.mxu0 %v1236
        %1714 = vmatprep.subr.bf16.mxu0 %v1241
        %1715 = vmatpush1.bf16.msra.mxu0 %v1240
        %1716 = vmatprep.subr.bf16.mxu0 %v1245
        %1717 = vmatpush1.bf16.msra.mxu0 %v1244
        %1718 = vmatprep.subr.bf16.mxu0 %v1249
        %1719 = vmatpush1.bf16.msra.mxu0 %v1248
        %1720 = vmatprep.subr.bf16.mxu0 %v1253
        %1721 = vmatpush1.bf16.msra.mxu0 %v1252
        %1722 = vmatprep.subr.bf16.mxu0 %v1257
        %1723 = vmatpush1.bf16.msra.mxu0 %v1256
        %1724 = vmatprep.subr.bf16.mxu0 %v1261
        %1725 = vmatpush1.bf16.msra.mxu0 %v1260
        %1726 = vmatprep.subr.bf16.mxu0 %v1265
        %1727 = vmatpush1.bf16.msra.mxu0 %v1264
        %1728 = vmatprep.subr.bf16.mxu0 %v1269
        %1729 = vmatpush1.bf16.msra.mxu0 %v1268
        %1730 = vmatprep.subr.bf16.mxu0 %v1273
        %1731 = vmatpush1.bf16.msra.mxu0 %v1272
        %1732 = vmatprep.subr.bf16.mxu0 %v1277
        %1733 = vmatpush1.bf16.msra.mxu0 %v1276
        %1734 = vmatprep.subr.bf16.mxu0 %v1281
        %1735 = vmatpush1.bf16.msra.mxu0 %v1280
        %1736 = vmatprep.subr.bf16.mxu0 %v1285
        %1737 = vmatpush1.bf16.msra.mxu0 %v1284
        %1738 = vmatprep.subr.bf16.mxu0 %v1289
        %1739 = vmatpush1.bf16.msra.mxu0 %v1288
        %1740 = vmatprep.mubr.bf16.mxu0 %v779
        %1741 = vmatmul.mubr.bf16.gmra.mrb[0].mxu0 %v778
        %v1742 = vpop.f32.mrb[0].mxu0
        %v1743 = vadd.f32 %v673, %v1742
        %v1744 = vpop.f32.mrb[0].mxu0
        %v1745 = vadd.f32 %v677, %v1744
        %v1746 = vpop.f32.mrb[0].mxu0
        %v1747 = vadd.f32 %v673, %v1746
        %v1748 = vpop.f32.mrb[0].mxu0
        %v1749 = vadd.f32 %v677, %v1748
        %1750 = vmatprep.mubr.bf16.mxu0 %v783
        %1751 = vmatmul.mubr.bf16.gmra.mrb[0].mxu0 %v782
        %v1752 = vpop.f32.mrb[0].mxu0
        %v1753 = vadd.f32 %v673, %v1752
        %v1754 = vpop.f32.mrb[0].mxu0
        %v1755 = vadd.f32 %v677, %v1754
        %v1756 = vpop.f32.mrb[0].mxu0
        %v1757 = vadd.f32 %v673, %v1756
        %v1758 = vpop.f32.mrb[0].mxu0
        %v1759 = vadd.f32 %v677, %v1758
        %1760 = vmatprep.mubr.bf16.mxu0 %v787
        %1761 = vmatmul.mubr.bf16.gmra.mrb[0].mxu0 %v786
        %v1762 = vpop.f32.mrb[0].mxu0
        %v1763 = vadd.f32 %v673, %v1762
        %v1764 = vpop.f32.mrb[0].mxu0
        %v1765 = vadd.f32 %v677, %v1764
        %v1766 = vpop.f32.mrb[0].mxu0
        %v1767 = vadd.f32 %v673, %v1766
        %v1768 = vpop.f32.mrb[0].mxu0
        %v1769 = vadd.f32 %v677, %v1768
        %1770 = vmatprep.mubr.bf16.mxu0 %v791
        %1771 = vmatmul.mubr.bf16.gmra.mrb[0].mxu0 %v790
        %v1772 = vpop.f32.mrb[0].mxu0
        %v1773 = vadd.f32 %v673, %v1772
        %v1774 = vpop.f32.mrb[0].mxu0
        %v1775 = vadd.f32 %v677, %v1774
        %v1776 = vpop.f32.mrb[0].mxu0
        %v1777 = vadd.f32 %v673, %v1776
        %v1778 = vpop.f32.mrb[0].mxu0
        %v1779 = vadd.f32 %v677, %v1778
        %1780 = vmatprep.mubr.bf16.mxu0 %v795
        %1781 = vmatmul.mubr.bf16.gmra.mrb[0].mxu0 %v794
        %v1782 = vpop.f32.mrb[0].mxu0
        %v1783 = vadd.f32 %v673, %v1782
        %v1784 = vpop.f32.mrb[0].mxu0
        %v1785 = vadd.f32 %v677, %v1784
        %v1786 = vpop.f32.mrb[0].mxu0
        %v1787 = vadd.f32 %v673, %v1786
        %v1788 = vpop.f32.mrb[0].mxu0
        %v1789 = vadd.f32 %v677, %v1788
        %1790 = vmatprep.mubr.bf16.mxu0 %v799
        %1791 = vmatmul.mubr.bf16.gmra.mrb[0].mxu0 %v798
        %v1792 = vpop.f32.mrb[0].mxu0
        %v1793 = vadd.f32 %v673, %v1792
        %v1794 = vpop.f32.mrb[0].mxu0
        %v1795 = vadd.f32 %v677, %v1794
        %v1796 = vpop.f32.mrb[0].mxu0
        %v1797 = vadd.f32 %v673, %v1796
        %v1798 = vpop.f32.mrb[0].mxu0
        %v1799 = vadd.f32 %v677, %v1798
        %1800 = vmatprep.mubr.bf16.mxu0 %v803
        %1801 = vmatmul.mubr.bf16.gmra.mrb[0].mxu0 %v802
        %v1802 = vpop.f32.mrb[0].mxu0
        %v1803 = vadd.f32 %v673, %v1802
        %v1804 = vpop.f32.mrb[0].mxu0
        %v1805 = vadd.f32 %v677, %v1804
        %v1806 = vpop.f32.mrb[0].mxu0
        %v1807 = vadd.f32 %v673, %v1806
        %v1808 = vpop.f32.mrb[0].mxu0
        %v1809 = vadd.f32 %v677, %v1808
        %1810 = vmatprep.mubr.bf16.mxu0 %v807
        %1811 = vmatmul.mubr.bf16.gmra.mrb[0].mxu0 %v806
        %v1812 = vpop.f32.mrb[0].mxu0
        %v1813 = vadd.f32 %v673, %v1812
        %v1814 = vpop.f32.mrb[0].mxu0
        %v1815 = vadd.f32 %v677, %v1814
        %v1816 = vpop.f32.mrb[0].mxu0
        %v1817 = vadd.f32 %v673, %v1816
        %v1818 = vpop.f32.mrb[0].mxu0
        %v1819 = vadd.f32 %v677, %v1818
        %1820 = vdwg.mxu0
        %1821 = vmatprep.subr.bf16.mxu0 %v1293
        %1822 = vmatpush1.bf16.msra.mxu0 %v1292
        %1823 = vmatprep.subr.bf16.mxu0 %v1297
        %1824 = vmatpush1.bf16.msra.mxu0 %v1296
        %1825 = vmatprep.subr.bf16.mxu0 %v1301
        %1826 = vmatpush1.bf16.msra.mxu0 %v1300
        %1827 = vmatprep.subr.bf16.mxu0 %v1305
        %1828 = vmatpush1.bf16.msra.mxu0 %v1304
        %1829 = vmatprep.subr.bf16.mxu0 %v1309
        %1830 = vmatpush1.bf16.msra.mxu0 %v1308
        %1831 = vmatprep.subr.bf16.mxu0 %v1313
        %1832 = vmatpush1.bf16.msra.mxu0 %v1312
        %1833 = vmatprep.subr.bf16.mxu0 %v1317
        %1834 = vmatpush1.bf16.msra.mxu0 %v1316
        %1835 = vmatprep.subr.bf16.mxu0 %v1321
        %1836 = vmatpush1.bf16.msra.mxu0 %v1320
        %1837 = vmatprep.subr.bf16.mxu0 %v1325
        %1838 = vmatpush1.bf16.msra.mxu0 %v1324
        %1839 = vmatprep.subr.bf16.mxu0 %v1329
        %1840 = vmatpush1.bf16.msra.mxu0 %v1328
        %1841 = vmatprep.subr.bf16.mxu0 %v1333
        %1842 = vmatpush1.bf16.msra.mxu0 %v1332
        %1843 = vmatprep.subr.bf16.mxu0 %v1337
        %1844 = vmatpush1.bf16.msra.mxu0 %v1336
        %1845 = vmatprep.subr.bf16.mxu0 %v1341
        %1846 = vmatpush1.bf16.msra.mxu0 %v1340
        %1847 = vmatprep.subr.bf16.mxu0 %v1345
        %1848 = vmatpush1.bf16.msra.mxu0 %v1344
        %1849 = vmatprep.subr.bf16.mxu0 %v1349
        %1850 = vmatpush1.bf16.msra.mxu0 %v1348
        %1851 = vmatprep.subr.bf16.mxu0 %v1353
        %1852 = vmatpush1.bf16.msra.mxu0 %v1352
        %1853 = vmatprep.mubr.bf16.mxu0 %v781
        %1854 = vmatmul.mubr.bf16.gmra.mrb[0].mxu0 %v780
        %v1855 = vpop.f32.mrb[0].mxu0
        %v1856 = vadd.f32 %v1743, %v1855
        %v1857 = vpop.f32.mrb[0].mxu0
        %v1858 = vadd.f32 %v1745, %v1857
        %v1859 = vpop.f32.mrb[0].mxu0
        %v1860 = vadd.f32 %v1747, %v1859
        %v1861 = vpop.f32.mrb[0].mxu0
        %v1862 = vadd.f32 %v1749, %v1861
        %1863 = vmatprep.mubr.bf16.mxu0 %v785
        %1864 = vmatmul.mubr.bf16.gmra.mrb[0].mxu0 %v784
        %v1865 = vpop.f32.mrb[0].mxu0
        %v1866 = vadd.f32 %v1753, %v1865
        %v1867 = vpop.f32.mrb[0].mxu0
        %v1868 = vadd.f32 %v1755, %v1867
        %v1869 = vpop.f32.mrb[0].mxu0
        %v1870 = vadd.f32 %v1757, %v1869
        %v1871 = vpop.f32.mrb[0].mxu0
        %v1872 = vadd.f32 %v1759, %v1871
        %1873 = vmatprep.mubr.bf16.mxu0 %v789
        %1874 = vmatmul.mubr.bf16.gmra.mrb[0].mxu0 %v788
        %v1875 = vpop.f32.mrb[0].mxu0
        %v1876 = vadd.f32 %v1763, %v1875
        %v1877 = vpop.f32.mrb[0].mxu0
        %v1878 = vadd.f32 %v1765, %v1877
        %v1879 = vpop.f32.mrb[0].mxu0
        %v1880 = vadd.f32 %v1767, %v1879
        %v1881 = vpop.f32.mrb[0].mxu0
        %v1882 = vadd.f32 %v1769, %v1881
        %1883 = vmatprep.mubr.bf16.mxu0 %v793
        %1884 = vmatmul.mubr.bf16.gmra.mrb[0].mxu0 %v792
        %v1885 = vpop.f32.mrb[0].mxu0
        %v1886 = vadd.f32 %v1773, %v1885
        %v1887 = vpop.f32.mrb[0].mxu0
        %v1888 = vadd.f32 %v1775, %v1887
        %v1889 = vpop.f32.mrb[0].mxu0
        %v1890 = vadd.f32 %v1777, %v1889
        %v1891 = vpop.f32.mrb[0].mxu0
        %v1892 = vadd.f32 %v1779, %v1891
        %1893 = vmatprep.mubr.bf16.mxu0 %v797
        %1894 = vmatmul.mubr.bf16.gmra.mrb[0].mxu0 %v796
        %v1895 = vpop.f32.mrb[0].mxu0
        %v1896 = vadd.f32 %v1783, %v1895
        %v1897 = vpop.f32.mrb[0].mxu0
        %v1898 = vadd.f32 %v1785, %v1897
        %v1899 = vpop.f32.mrb[0].mxu0
        %v1900 = vadd.f32 %v1787, %v1899
        %v1901 = vpop.f32.mrb[0].mxu0
        %v1902 = vadd.f32 %v1789, %v1901
        %1903 = vmatprep.mubr.bf16.mxu0 %v801
        %1904 = vmatmul.mubr.bf16.gmra.mrb[0].mxu0 %v800
        %v1905 = vpop.f32.mrb[0].mxu0
        %v1906 = vadd.f32 %v1793, %v1905
        %v1907 = vpop.f32.mrb[0].mxu0
        %v1908 = vadd.f32 %v1795, %v1907
        %v1909 = vpop.f32.mrb[0].mxu0
        %v1910 = vadd.f32 %v1797, %v1909
        %v1911 = vpop.f32.mrb[0].mxu0
        %v1912 = vadd.f32 %v1799, %v1911
        %1913 = vmatprep.mubr.bf16.mxu0 %v805
        %1914 = vmatmul.mubr.bf16.gmra.mrb[0].mxu0 %v804
        %v1915 = vpop.f32.mrb[0].mxu0
        %v1916 = vadd.f32 %v1803, %v1915
        %v1917 = vpop.f32.mrb[0].mxu0
        %v1918 = vadd.f32 %v1805, %v1917
        %v1919 = vpop.f32.mrb[0].mxu0
        %v1920 = vadd.f32 %v1807, %v1919
        %v1921 = vpop.f32.mrb[0].mxu0
        %v1922 = vadd.f32 %v1809, %v1921
        %1923 = vmatprep.mubr.bf16.mxu0 %v809
        %1924 = vmatmul.mubr.bf16.gmra.mrb[0].mxu0 %v808
        %v1925 = vpop.f32.mrb[0].mxu0
        %v1926 = vadd.f32 %v1813, %v1925
        %v1927 = vpop.f32.mrb[0].mxu0
        %v1928 = vadd.f32 %v1815, %v1927
        %v1929 = vpop.f32.mrb[0].mxu0
        %v1930 = vadd.f32 %v1817, %v1929
        %v1931 = vpop.f32.mrb[0].mxu0
        %v1932 = vadd.f32 %v1819, %v1931
        %1933 = vdwg.mxu0
        %v1934 = vmax.f32 %v1630, 0.0
        %v1935 = vmax.f32 %v1632, 0.0
        %v1936 = vmax.f32 %v1856, 0.0
        %v1937 = vmax.f32 %v1858, 0.0
        %v1938 = vmax.f32 %v1634, 0.0
        %v1939 = vmax.f32 %v1636, 0.0
        %v1940 = vmax.f32 %v1860, 0.0
        %v1941 = vmax.f32 %v1862, 0.0
        %v1942 = vmax.f32 %v1640, 0.0
        %v1943 = vmax.f32 %v1642, 0.0
        %v1944 = vmax.f32 %v1866, 0.0
        %v1945 = vmax.f32 %v1868, 0.0
        %v1946 = vmax.f32 %v1644, 0.0
        %v1947 = vmax.f32 %v1646, 0.0
        %v1948 = vmax.f32 %v1870, 0.0
        %v1949 = vmax.f32 %v1872, 0.0
        %v1950 = vmax.f32 %v1650, 0.0
        %v1951 = vmax.f32 %v1652, 0.0
        %v1952 = vmax.f32 %v1876, 0.0
        %v1953 = vmax.f32 %v1878, 0.0
        %v1954 = vmax.f32 %v1654, 0.0
        %v1955 = vmax.f32 %v1656, 0.0
        %v1956 = vmax.f32 %v1880, 0.0
        %v1957 = vmax.f32 %v1882, 0.0
        %v1958 = vmax.f32 %v1660, 0.0
        %v1959 = vmax.f32 %v1662, 0.0
        %v1960 = vmax.f32 %v1886, 0.0
        %v1961 = vmax.f32 %v1888, 0.0
        %v1962 = vmax.f32 %v1664, 0.0
        %v1963 = vmax.f32 %v1666, 0.0
        %v1964 = vmax.f32 %v1890, 0.0
        %v1965 = vmax.f32 %v1892, 0.0
        %v1966 = vmax.f32 %v1670, 0.0
        %v1967 = vmax.f32 %v1672, 0.0
        %v1968 = vmax.f32 %v1896, 0.0
        %v1969 = vmax.f32 %v1898, 0.0
        %v1970 = vmax.f32 %v1674, 0.0
        %v1971 = vmax.f32 %v1676, 0.0
        %v1972 = vmax.f32 %v1900, 0.0
        %v1973 = vmax.f32 %v1902, 0.0
        %v1974 = vmax.f32 %v1680, 0.0
        %v1975 = vmax.f32 %v1682, 0.0
        %v1976 = vmax.f32 %v1906, 0.0
        %v1977 = vmax.f32 %v1908, 0.0
        %v1978 = vmax.f32 %v1684, 0.0
        %v1979 = vmax.f32 %v1686, 0.0
        %v1980 = vmax.f32 %v1910, 0.0
        %v1981 = vmax.f32 %v1912, 0.0
        %v1982 = vmax.f32 %v1690, 0.0
        %v1983 = vmax.f32 %v1692, 0.0
        %v1984 = vmax.f32 %v1916, 0.0
        %v1985 = vmax.f32 %v1918, 0.0
        %v1986 = vmax.f32 %v1694, 0.0
        %v1987 = vmax.f32 %v1696, 0.0
        %v1988 = vmax.f32 %v1920, 0.0
        %v1989 = vmax.f32 %v1922, 0.0
        %v1990 = vmax.f32 %v1700, 0.0
        %v1991 = vmax.f32 %v1702, 0.0
        %v1992 = vmax.f32 %v1926, 0.0
        %v1993 = vmax.f32 %v1928, 0.0
        %v1994 = vmax.f32 %v1704, 0.0
        %v1995 = vmax.f32 %v1706, 0.0
        %v1996 = vmax.f32 %v1930, 0.0
        %v1997 = vmax.f32 %v1932, 0.0
        %v1998 = vpack.c.bf16 %v1938, %v1934
        %v1999 = vpack.c.bf16 %v1939, %v1935
        %v2000 = vpack.c.bf16 %v1940, %v1936
        %v2001 = vpack.c.bf16 %v1941, %v1937
        %v2002 = vpack.c.bf16 %v1946, %v1942
        %v2003 = vpack.c.bf16 %v1947, %v1943
        %v2004 = vpack.c.bf16 %v1948, %v1944
        %v2005 = vpack.c.bf16 %v1949, %v1945
        %v2006 = vpack.c.bf16 %v1954, %v1950
        %v2007 = vpack.c.bf16 %v1955, %v1951
        %v2008 = vpack.c.bf16 %v1956, %v1952
        %v2009 = vpack.c.bf16 %v1957, %v1953
        %v2010 = vpack.c.bf16 %v1962, %v1958
        %v2011 = vpack.c.bf16 %v1963, %v1959
        %v2012 = vpack.c.bf16 %v1964, %v1960
        %v2013 = vpack.c.bf16 %v1965, %v1961
        %v2014 = vpack.c.bf16 %v1970, %v1966
        %v2015 = vpack.c.bf16 %v1971, %v1967
        %v2016 = vpack.c.bf16 %v1972, %v1968
        %v2017 = vpack.c.bf16 %v1973, %v1969
        %v2018 = vpack.c.bf16 %v1978, %v1974
        %v2019 = vpack.c.bf16 %v1979, %v1975
        %v2020 = vpack.c.bf16 %v1980, %v1976
        %v2021 = vpack.c.bf16 %v1981, %v1977
        %v2022 = vpack.c.bf16 %v1986, %v1982
        %v2023 = vpack.c.bf16 %v1987, %v1983
        %v2024 = vpack.c.bf16 %v1988, %v1984
        %v2025 = vpack.c.bf16 %v1989, %v1985
        %v2026 = vpack.c.bf16 %v1994, %v1990
        %v2027 = vpack.c.bf16 %v1995, %v1991
        %v2028 = vpack.c.bf16 %v1996, %v1992
        %v2029 = vpack.c.bf16 %v1997, %v1993
        %v2062 = vunpack.c.l.b16 %v1998
        %v2063 = vunpack.c.l.b16 %v1999
        %v2064 = vunpack.c.l.b16 %v2000
        %v2065 = vunpack.c.l.b16 %v2001
        %v2066 = vunpack.c.h.b16 %v1998
        %v2067 = vunpack.c.h.b16 %v1999
        %v2068 = vunpack.c.h.b16 %v2000
        %v2069 = vunpack.c.h.b16 %v2001
        %v2070 = vunpack.c.l.b16 %v2002
        %v2071 = vunpack.c.l.b16 %v2003
        %v2072 = vunpack.c.l.b16 %v2004
        %v2073 = vunpack.c.l.b16 %v2005
        %v2074 = vunpack.c.h.b16 %v2002
        %v2075 = vunpack.c.h.b16 %v2003
        %v2076 = vunpack.c.h.b16 %v2004
        %v2077 = vunpack.c.h.b16 %v2005
        %v2078 = vunpack.c.l.b16 %v2006
        %v2079 = vunpack.c.l.b16 %v2007
        %v2080 = vunpack.c.l.b16 %v2008
        %v2081 = vunpack.c.l.b16 %v2009
        %v2082 = vunpack.c.h.b16 %v2006
        %v2083 = vunpack.c.h.b16 %v2007
        %v2084 = vunpack.c.h.b16 %v2008
        %v2085 = vunpack.c.h.b16 %v2009
        %v2086 = vunpack.c.l.b16 %v2010
        %v2087 = vunpack.c.l.b16 %v2011
        %v2088 = vunpack.c.l.b16 %v2012
        %v2089 = vunpack.c.l.b16 %v2013
        %v2090 = vunpack.c.h.b16 %v2010
        %v2091 = vunpack.c.h.b16 %v2011
        %v2092 = vunpack.c.h.b16 %v2012
        %v2093 = vunpack.c.h.b16 %v2013
        %v2094 = vunpack.c.l.b16 %v2014
        %v2095 = vunpack.c.l.b16 %v2015
        %v2096 = vunpack.c.l.b16 %v2016
        %v2097 = vunpack.c.l.b16 %v2017
        %v2098 = vunpack.c.h.b16 %v2014
        %v2099 = vunpack.c.h.b16 %v2015
        %v2100 = vunpack.c.h.b16 %v2016
        %v2101 = vunpack.c.h.b16 %v2017
        %v2102 = vunpack.c.l.b16 %v2018
        %v2103 = vunpack.c.l.b16 %v2019
        %v2104 = vunpack.c.l.b16 %v2020
        %v2105 = vunpack.c.l.b16 %v2021
        %v2106 = vunpack.c.h.b16 %v2018
        %v2107 = vunpack.c.h.b16 %v2019
        %v2108 = vunpack.c.h.b16 %v2020
        %v2109 = vunpack.c.h.b16 %v2021
        %v2110 = vunpack.c.l.b16 %v2022
        %v2111 = vunpack.c.l.b16 %v2023
        %v2112 = vunpack.c.l.b16 %v2024
        %v2113 = vunpack.c.l.b16 %v2025
        %v2114 = vunpack.c.h.b16 %v2022
        %v2115 = vunpack.c.h.b16 %v2023
        %v2116 = vunpack.c.h.b16 %v2024
        %v2117 = vunpack.c.h.b16 %v2025
        %v2118 = vunpack.c.l.b16 %v2026
        %v2119 = vunpack.c.l.b16 %v2027
        %v2120 = vunpack.c.l.b16 %v2028
        %v2121 = vunpack.c.l.b16 %v2029
        %v2122 = vunpack.c.h.b16 %v2026
        %v2123 = vunpack.c.h.b16 %v2027
        %v2124 = vunpack.c.h.b16 %v2028
        %v2125 = vunpack.c.h.b16 %v2029
        %v2126 = vpack.c.b16 %v2063, %v2062
        %v2127 = vpack.c.b16 %v2065, %v2064
        %v2128 = vpack.c.b16 %v2067, %v2066
        %v2129 = vpack.c.b16 %v2069, %v2068
        %v2130 = vpack.c.b16 %v2071, %v2070
        %v2131 = vpack.c.b16 %v2073, %v2072
        %v2132 = vpack.c.b16 %v2075, %v2074
        %v2133 = vpack.c.b16 %v2077, %v2076
        %v2134 = vpack.c.b16 %v2079, %v2078
        %v2135 = vpack.c.b16 %v2081, %v2080
        %v2136 = vpack.c.b16 %v2083, %v2082
        %v2137 = vpack.c.b16 %v2085, %v2084
        %v2138 = vpack.c.b16 %v2087, %v2086
        %v2139 = vpack.c.b16 %v2089, %v2088
        %v2140 = vpack.c.b16 %v2091, %v2090
        %v2141 = vpack.c.b16 %v2093, %v2092
        %v2142 = vpack.c.b16 %v2095, %v2094
        %v2143 = vpack.c.b16 %v2097, %v2096
        %v2144 = vpack.c.b16 %v2099, %v2098
        %v2145 = vpack.c.b16 %v2101, %v2100
        %v2146 = vpack.c.b16 %v2103, %v2102
        %v2147 = vpack.c.b16 %v2105, %v2104
        %v2148 = vpack.c.b16 %v2107, %v2106
        %v2149 = vpack.c.b16 %v2109, %v2108
        %v2150 = vpack.c.b16 %v2111, %v2110
        %v2151 = vpack.c.b16 %v2113, %v2112
        %v2152 = vpack.c.b16 %v2115, %v2114
        %v2153 = vpack.c.b16 %v2117, %v2116
        %v2154 = vpack.c.b16 %v2119, %v2118
        %v2155 = vpack.c.b16 %v2121, %v2120
        %v2156 = vpack.c.b16 %v2123, %v2122
        %v2157 = vpack.c.b16 %v2125, %v2124
        %2190 = vst [vmem:[%s484] sm:$0xff] %v2126
        %2191 = vst [vmem:[%s484 + $0x8] sm:$0xff] %v2127
        %2192 = vst [vmem:[%s484 + $0x10] sm:$0xff] %v2128
        %2193 = vst [vmem:[%s484 + $0x18] sm:$0xff] %v2129
        %2194 = vst [vmem:[%s484 + $0x20] sm:$0xff] %v2130
        %2195 = vst [vmem:[%s484 + $0x28] sm:$0xff] %v2131
        %2196 = vst [vmem:[%s484 + $0x30] sm:$0xff] %v2132
        %2197 = vst [vmem:[%s484 + $0x38] sm:$0xff] %v2133
        %2198 = vst [vmem:[%s484 + $0x40] sm:$0xff] %v2134
        %2199 = vst [vmem:[%s484 + $0x48] sm:$0xff] %v2135
        %2200 = vst [vmem:[%s484 + $0x50] sm:$0xff] %v2136
        %2201 = vst [vmem:[%s484 + $0x58] sm:$0xff] %v2137
        %2202 = vst [vmem:[%s484 + $0x60] sm:$0xff] %v2138
        %2203 = vst [vmem:[%s484 + $0x68] sm:$0xff] %v2139
        %2204 = vst [vmem:[%s484 + $0x70] sm:$0xff] %v2140
        %2205 = vst [vmem:[%s484 + $0x78] sm:$0xff] %v2141
        %2206 = vst [vmem:[%s484 + $0x80] sm:$0xff] %v2142
        %2207 = vst [vmem:[%s484 + $0x88] sm:$0xff] %v2143
        %2208 = vst [vmem:[%s484 + $0x90] sm:$0xff] %v2144
        %2209 = vst [vmem:[%s484 + $0x98] sm:$0xff] %v2145
        %2210 = vst [vmem:[%s484 + $0xa0] sm:$0xff] %v2146
        %2211 = vst [vmem:[%s484 + $0xa8] sm:$0xff] %v2147
        %2212 = vst [vmem:[%s484 + $0xb0] sm:$0xff] %v2148
        %2213 = vst [vmem:[%s484 + $0xb8] sm:$0xff] %v2149
        %2214 = vst [vmem:[%s484 + $0xc0] sm:$0xff] %v2150
        %2215 = vst [vmem:[%s484 + $0xc8] sm:$0xff] %v2151
        %2216 = vst [vmem:[%s484 + $0xd0] sm:$0xff] %v2152
        %2217 = vst [vmem:[%s484 + $0xd8] sm:$0xff] %v2153
        %2218 = vst [vmem:[%s484 + $0xe0] sm:$0xff] %v2154
        %2219 = vst [vmem:[%s484 + $0xe8] sm:$0xff] %v2155
        %2220 = vst [vmem:[%s484 + $0xf0] sm:$0xff] %v2156
        %2221 = vst [vmem:[%s484 + $0xf8] sm:$0xff] %v2157
        %s2222 = sand.u32 %s114, 1
        %s2223 = sand.u32 %s114, 1
        %s2224 = smul.addr %s2223, 256
        %s2225 = scalar_lea.vmem [#allocation3], %s2224
        // Predicated region
        $region56: #{_lambda_.5} parent=50 // pred_check
          %p2226 = pneg %p124
        $region57: #{_lambda_.5} parent=50 // pred_check_branch
          %2228 = sbr.rel (%p2226) target = $region59
        $region58: #{_lambda_.5} parent=50 // pred_region
          %s2229 = smul.u32 16, %s18
          %s2230 = smul.u32 4, %s19
          %s2231 = smul.addr %s2229, 8
          %s2232 = sadd.s32 %s2230, %s2231
          %s2233 = smul.addr %s2232, 4
          %s2234 = scalar_lea.vmem %s3, %s2233
          // Predicated region
          $region60: #{_lambda_.5} parent=58 // pred_check
            _
          $region61: #{_lambda_.5} parent=58 // pred_check_branch
            %2236 = sbr.rel (0) target = $region63
          $region62: #{_lambda_.5} parent=58 // pred_region
            // Predicated region
            $region64: #{_lambda_.5} parent=62 // pred_check
              _
            $region65: #{_lambda_.5} parent=62 // pred_check_branch
              %2238 = sbr.rel (0) target = $region67
            $region66: #{_lambda_.5} parent=62 // pred_region
              loop: start=0, step=1, limit=1
              $region68: #{_lambda_.5} parent=66 // loop_pre_header
                _
              $region69: #{_lambda_.5} parent=66 // loop_header
                %s2240 = sphi 0, %s2244
                %p2241 = scmp.ge.s32.totalorder %s2240, 1
                %s2245 = sphi %s2225, %s2225
                %s2246 = sphi %s2234, %s2234
              $region70: #{_lambda_.5} parent=66 // loop_header_branch
                %2243 = sbr.rel (%p2241) target = $region74
              $region71: #{_lambda_.5} parent=66 // loop_body
                %v2247 = vld [vmem:[%s2245] sm:$0xff]
                %2248 = vst [vmem:[%s2246] sm:$0xff] %v2247
                %v2249 = vld [vmem:[%s2245 + $0x8] sm:$0xff]
                %2250 = vst [vmem:[%s2246 + $0x8] sm:$0xff] %v2249
                %v2251 = vld [vmem:[%s2245 + $0x10] sm:$0xff]
                %2252 = vst [vmem:[%s2246 + $0x20] sm:$0xff] %v2251
                %v2253 = vld [vmem:[%s2245 + $0x18] sm:$0xff]
                %2254 = vst [vmem:[%s2246 + $0x28] sm:$0xff] %v2253
                %v2255 = vld [vmem:[%s2245 + $0x20] sm:$0xff]
                %2256 = vst [vmem:[%s2246 + $0x40] sm:$0xff] %v2255
                %v2257 = vld [vmem:[%s2245 + $0x28] sm:$0xff]
                %2258 = vst [vmem:[%s2246 + $0x48] sm:$0xff] %v2257
                %v2259 = vld [vmem:[%s2245 + $0x30] sm:$0xff]
                %2260 = vst [vmem:[%s2246 + $0x60] sm:$0xff] %v2259
                %v2261 = vld [vmem:[%s2245 + $0x38] sm:$0xff]
                %2262 = vst [vmem:[%s2246 + $0x68] sm:$0xff] %v2261
                %v2263 = vld [vmem:[%s2245 + $0x40] sm:$0xff]
                %2264 = vst [vmem:[%s2246 + $0x80] sm:$0xff] %v2263
                %v2265 = vld [vmem:[%s2245 + $0x48] sm:$0xff]
                %2266 = vst [vmem:[%s2246 + $0x88] sm:$0xff] %v2265
                %v2267 = vld [vmem:[%s2245 + $0x50] sm:$0xff]
                %2268 = vst [vmem:[%s2246 + $0xa0] sm:$0xff] %v2267
                %v2269 = vld [vmem:[%s2245 + $0x58] sm:$0xff]
                %2270 = vst [vmem:[%s2246 + $0xa8] sm:$0xff] %v2269
                %v2271 = vld [vmem:[%s2245 + $0x60] sm:$0xff]
                %2272 = vst [vmem:[%s2246 + $0xc0] sm:$0xff] %v2271
                %v2273 = vld [vmem:[%s2245 + $0x68] sm:$0xff]
                %2274 = vst [vmem:[%s2246 + $0xc8] sm:$0xff] %v2273
                %v2275 = vld [vmem:[%s2245 + $0x70] sm:$0xff]
                %2276 = vst [vmem:[%s2246 + $0xe0] sm:$0xff] %v2275
                %v2277 = vld [vmem:[%s2245 + $0x78] sm:$0xff]
                %2278 = vst [vmem:[%s2246 + $0xe8] sm:$0xff] %v2277
                %v2279 = vld [vmem:[%s2245 + $0x80] sm:$0xff]
                %2280 = vst [vmem:[%s2246 + $0x100] sm:$0xff] %v2279
                %v2281 = vld [vmem:[%s2245 + $0x88] sm:$0xff]
                %2282 = vst [vmem:[%s2246 + $0x108] sm:$0xff] %v2281
                %v2283 = vld [vmem:[%s2245 + $0x90] sm:$0xff]
                %2284 = vst [vmem:[%s2246 + $0x120] sm:$0xff] %v2283
                %v2285 = vld [vmem:[%s2245 + $0x98] sm:$0xff]
                %2286 = vst [vmem:[%s2246 + $0x128] sm:$0xff] %v2285
                %v2287 = vld [vmem:[%s2245 + $0xa0] sm:$0xff]
                %2288 = vst [vmem:[%s2246 + $0x140] sm:$0xff] %v2287
                %v2289 = vld [vmem:[%s2245 + $0xa8] sm:$0xff]
                %2290 = vst [vmem:[%s2246 + $0x148] sm:$0xff] %v2289
                %v2291 = vld [vmem:[%s2245 + $0xb0] sm:$0xff]
                %2292 = vst [vmem:[%s2246 + $0x160] sm:$0xff] %v2291
                %v2293 = vld [vmem:[%s2245 + $0xb8] sm:$0xff]
                %2294 = vst [vmem:[%s2246 + $0x168] sm:$0xff] %v2293
                %v2295 = vld [vmem:[%s2245 + $0xc0] sm:$0xff]
                %2296 = vst [vmem:[%s2246 + $0x180] sm:$0xff] %v2295
                %v2297 = vld [vmem:[%s2245 + $0xc8] sm:$0xff]
                %2298 = vst [vmem:[%s2246 + $0x188] sm:$0xff] %v2297
                %v2299 = vld [vmem:[%s2245 + $0xd0] sm:$0xff]
                %2300 = vst [vmem:[%s2246 + $0x1a0] sm:$0xff] %v2299
                %v2301 = vld [vmem:[%s2245 + $0xd8] sm:$0xff]
                %2302 = vst [vmem:[%s2246 + $0x1a8] sm:$0xff] %v2301
                %v2303 = vld [vmem:[%s2245 + $0xe0] sm:$0xff]
                %2304 = vst [vmem:[%s2246 + $0x1c0] sm:$0xff] %v2303
                %v2305 = vld [vmem:[%s2245 + $0xe8] sm:$0xff]
                %2306 = vst [vmem:[%s2246 + $0x1c8] sm:$0xff] %v2305
                %v2307 = vld [vmem:[%s2245 + $0xf0] sm:$0xff]
                %2308 = vst [vmem:[%s2246 + $0x1e0] sm:$0xff] %v2307
                %v2309 = vld [vmem:[%s2245 + $0xf8] sm:$0xff]
                %2310 = vst [vmem:[%s2246 + $0x1e8] sm:$0xff] %v2309
              $region72: #{_lambda_.5} parent=66 // loop_footer
                %s2244 = sadd.s32 1, %s2240
              $region73: #{_lambda_.5} parent=66 // loop_footer_branch
                %2239 = sbr.rel target = $region69
              $region74: #{_lambda_.5} parent=66 // loop_exit
                _
            $region67: #{_lambda_.5} parent=62 // pred_fallthru
              _
            // Predicated region
            $region75: #{_lambda_.5} parent=62 // pred_check
              _
            $region76: #{_lambda_.5} parent=62 // pred_check_branch
              %2312 = sbr.rel target = $region78
            $region77: #{_lambda_.5} parent=62 // pred_region
              _
            $region78: #{_lambda_.5} parent=62 // pred_fallthru
              _
          $region63: #{_lambda_.5} parent=58 // pred_fallthru
            _
          %2313 = vnop
        $region59: #{_lambda_.5} parent=50 // pred_fallthru
          _
      $region51: #{_lambda_.5} parent=5 // pred_fallthru
        _
      %p2314 = scmp.le.s32.totalorder 2, %s9
      // Predicated region
      $region79: #{_lambda_.5} parent=5 // pred_check
        %p2315 = pneg %p2314
      $region80: #{_lambda_.5} parent=5 // pred_check_branch
        %2317 = sbr.rel (%p2315) target = $region82
      $region81: #{_lambda_.5} parent=5 // pred_region
        %s2318 = ssub.s32 %s9, 2
        // Predicated region
        $region83: #{_lambda_.5} parent=81 // pred_check
          %p2319 = pneg %p130
        $region84: #{_lambda_.5} parent=81 // pred_check_branch
          %2321 = sbr.rel (%p2319) target = $region86
        $region85: #{_lambda_.5} parent=81 // pred_region
          %s2322 = sand.u32 %s115, 1
          %s2323 = sand.u32 %s115, 1
          %s2324 = smul.addr %s2323, 256
          %s2325 = scalar_lea.vmem [#allocation3], %s2324
        $region86: #{_lambda_.5} parent=81 // pred_fallthru
          _
      $region82: #{_lambda_.5} parent=5 // pred_fallthru
        _
    $region6: #{_lambda_.5} parent=1 // loop_footer
      %s13 = sadd.s32 1, %s9
    $region7: #{_lambda_.5} parent=1 // loop_footer_branch
      %8 = sbr.rel target = $region3
    $region8: #{_lambda_.5} parent=1 // loop_exit
      _

// kernel: _lambda_.6
$region0: #{_lambda_.6}
  #allocation0 [shape = 'u32[]', space=smem, size = 0x4, offset = 0x4, fixed_abs, tag = 'smem constant byte address 0x4 - core index']
  #allocation1 [shape = 'u32[144,128]{1,0:T(1,128)}', space=vmem, size = 0x12000, scoped, tag = 'internal scratch']
  #allocation2 [shape = 'f32[128,512]{1,0:T(8,128)}', space=vmem, size = 0x40000, scoped, tag = 'scratch operand']
  %s0 = inlined_call_operand.vmem [shape: bf16[128,1024], index: 0, kind: input, shape index: {}]
  %s1 = inlined_call_operand.vmem [shape: bf16[1024,512], index: 1, kind: input, shape index: {}]
  %s2 = inlined_call_operand.vmem [shape: f32[1,512], index: 2, kind: input, shape index: {}]
  %s3 = inlined_call_operand.vmem [shape: bf16[128,512], index: 3, kind: output, shape index: {}]
  %s4 = sld [smem:[#allocation0]]
  $region76: #{_lambda_.6} parent=0
    _
  %s6 = ssub.s32 1, %s4
  %s7 = scalar_select 0, %s6, %s4
  $region1: #{_lambda_.6} parent=0
    #allocation3 [shape = 'u8[262144]{0}', space=vmem, size = 0x40000, scoped, tag = 'input window, operand 0']
    loop: start=0, step=1, limit=4
    $region2: #{_lambda_.6} parent=1 // loop_pre_header
      _
    $region3: #{_lambda_.6} parent=1 // loop_header
      %s9 = sphi 0, %s13
      %p10 = scmp.ge.s32.totalorder %s9, 4
      %s16 = sphi 0, %s35
      %s17 = sphi 0, %s31
      %s18 = sphi 0, %s27
      %s19 = sphi 0, %s16
      %s20 = sphi 0, %s17
      %s21 = sphi 0, %s18
      %s22 = sphi 0, %s19
      %s23 = sphi 0, %s20
      %s24 = sphi 0, %s21
      %s40 = sphi 0, %s42
      %s43 = sphi 0, %s40
      %s44 = sphi 0, %s43
      %s60 = sphi 0, %s44
      %s68 = sphi 0, %s70
      %s71 = sphi 0, %s68
      %s72 = sphi 0, %s71
      %s88 = sphi 0, %s72
      %s94 = sphi 0, %s96
      %s97 = sphi 0, %s94
      %s98 = sphi 0, %s97
      %s114 = sphi 0, %s98
      %s122 = sphi 0, %s124
      %s125 = sphi 0, %s122
      %s126 = sphi 0, %s125
      %s142 = sphi 0, %s126
    $region4: #{_lambda_.6} parent=1 // loop_header_branch
      %12 = sbr.rel (%p10) target = $region8
    $region5: #{_lambda_.6} parent=1 // loop_body
      %s14 = ssub.s32 %s9, 1
      %s15 = ssub.s32 %s9, 2
      %s25 = sadd.s32 1, %s18
      %p26 = scmp.ge.s32.totalorder %s25, 2
      %s27 = scalar_select %p26, 0, %s25
      %s28 = sadd.s32 1, %s17
      %s29 = scalar_select %p26, %s28, %s17
      %p30 = scmp.ge.s32.totalorder %s29, 1
      %s31 = scalar_select %p30, 0, %s29
      %s32 = sadd.s32 1, %s16
      %s33 = scalar_select %p30, %s32, %s16
      %p34 = scmp.ge.s32.totalorder %s33, 1
      %s35 = scalar_select %p34, 0, %s33
      %s36 = ssub.s32 %s16, %s35
      %s37 = ssub.s32 %s18, %s27
      %s38 = sor.u32 %s36, %s37
      %p39 = scmp.eq.s32.totalorder %s38, 0
      %s41 = sadd.s32 %s40, 1
      %s42 = scalar_select %p39, %s40, %s41
      %p45 = pneg %p39
      %p46 = scmp.eq.s32.totalorder %s9, 1
      %p47 = por %p45, %p46
      %p48 = scmp.ne.s32.totalorder %s40, %s43
      %p49 = scmp.eq.s32.totalorder %s9, 0
      %p50 = por %p48, %p49
      %p51 = scmp.ne.s32.totalorder %s40, %s43
      %p52 = scmp.eq.s32.totalorder %s14, 1
      %p53 = por %p51, %p52
      %p54 = scmp.ne.s32.totalorder %s43, %s44
      %p55 = scmp.eq.s32.totalorder %s14, 0
      %p56 = por %p54, %p55
      %p57 = scmp.ne.s32.totalorder %s43, %s44
      %p58 = scmp.eq.s32.totalorder %s15, 1
      %p59 = por %p57, %p58
      %p61 = scmp.ne.s32.totalorder %s44, %s60
      %p62 = scmp.eq.s32.totalorder %s15, 0
      %p63 = por %p61, %p62
      %s64 = ssub.s32 %s18, %s27
      %s65 = ssub.s32 %s17, %s31
      %s66 = sor.u32 %s64, %s65
      %p67 = scmp.eq.s32.totalorder %s66, 0
      %s69 = sadd.s32 %s68, 1
      %s70 = scalar_select %p67, %s68, %s69
      %p73 = pneg %p67
      %p74 = scmp.eq.s32.totalorder %s9, 1
      %p75 = por %p73, %p74
      %p76 = scmp.ne.s32.totalorder %s68, %s71
      %p77 = scmp.eq.s32.totalorder %s9, 0
      %p78 = por %p76, %p77
      %p79 = scmp.ne.s32.totalorder %s68, %s71
      %p80 = scmp.eq.s32.totalorder %s14, 1
      %p81 = por %p79, %p80
      %p82 = scmp.ne.s32.totalorder %s71, %s72
      %p83 = scmp.eq.s32.totalorder %s14, 0
      %p84 = por %p82, %p83
      %p85 = scmp.ne.s32.totalorder %s71, %s72
      %p86 = scmp.eq.s32.totalorder %s15, 1
      %p87 = por %p85, %p86
      %p89 = scmp.ne.s32.totalorder %s72, %s88
      %p90 = scmp.eq.s32.totalorder %s15, 0
      %p91 = por %p89, %p90
      %s92 = ssub.s32 %s17, %s31
      %p93 = scmp.eq.s32.totalorder %s92, 0
      %s95 = sadd.s32 %s94, 1
      %s96 = scalar_select %p93, %s94, %s95
      %p99 = pneg %p93
      %p100 = scmp.eq.s32.totalorder %s9, 1
      %p101 = por %p99, %p100
      %p102 = scmp.ne.s32.totalorder %s94, %s97
      %p103 = scmp.eq.s32.totalorder %s9, 0
      %p104 = por %p102, %p103
      %p105 = scmp.ne.s32.totalorder %s94, %s97
      %p106 = scmp.eq.s32.totalorder %s14, 1
      %p107 = por %p105, %p106
      %p108 = scmp.ne.s32.totalorder %s97, %s98
      %p109 = scmp.eq.s32.totalorder %s14, 0
      %p110 = por %p108, %p109
      %p111 = scmp.ne.s32.totalorder %s97, %s98
      %p112 = scmp.eq.s32.totalorder %s15, 1
      %p113 = por %p111, %p112
      %p115 = scmp.ne.s32.totalorder %s98, %s114
      %p116 = scmp.eq.s32.totalorder %s15, 0
      %p117 = por %p115, %p116
      %s118 = ssub.s32 %s16, %s35
      %s119 = ssub.s32 %s17, %s31
      %s120 = sor.u32 %s118, %s119
      %p121 = scmp.eq.s32.totalorder %s120, 0
      %s123 = sadd.s32 %s122, 1
      %s124 = scalar_select %p121, %s122, %s123
      %p127 = pneg %p121
      %p128 = scmp.eq.s32.totalorder %s9, 1
      %p129 = por %p127, %p128
      %p130 = scmp.ne.s32.totalorder %s122, %s125
      %p131 = scmp.eq.s32.totalorder %s9, 0
      %p132 = por %p130, %p131
      %p133 = scmp.ne.s32.totalorder %s122, %s125
      %p134 = scmp.eq.s32.totalorder %s14, 1
      %p135 = por %p133, %p134
      %p136 = scmp.ne.s32.totalorder %s125, %s126
      %p137 = scmp.eq.s32.totalorder %s14, 0
      %p138 = por %p136, %p137
      %p139 = scmp.ne.s32.totalorder %s125, %s126
      %p140 = scmp.eq.s32.totalorder %s15, 1
      %p141 = por %p139, %p140
      %p143 = scmp.ne.s32.totalorder %s126, %s142
      %p144 = scmp.eq.s32.totalorder %s15, 0
      %p145 = por %p143, %p144
      %p146 = scmp.le.s32.totalorder 1, %s9
      %p147 = scmp.lt.s32.totalorder %s9, 3
      %p148 = pnand %p146, %p147
      %p149 = pneg %p148
      // Predicated region
      $region9: #{_lambda_.6} parent=5 // pred_check
        _
      $region10: #{_lambda_.6} parent=5 // pred_check_branch
        %151 = sbr.rel (%p148) target = $region12
      $region11: #{_lambda_.6} parent=5 // pred_region
        %s152 = ssub.s32 %s9, 1
        // Predicated region
        $region13: #{_lambda_.6} parent=11 // pred_check
          %p153 = pneg %p110
        $region14: #{_lambda_.6} parent=11 // pred_check_branch
          %155 = sbr.rel (%p153) target = $region16
        $region15: #{_lambda_.6} parent=11 // pred_region
          %s156 = smul.u32 4, %s20
          %p157 = scmp.lt.s32.totalorder %s156, 3
          %s158 = scalar_select %p157, %s156, 3
          %s159 = scalar_lea.vmem %s2, %s158
          %s160 = smul.u32 4, %s20
        $region16: #{_lambda_.6} parent=11 // pred_fallthru
          _
      $region12: #{_lambda_.6} parent=5 // pred_fallthru
        _
      %p161 = scmp.lt.s32.totalorder %s9, 2
      // Predicated region
      $region17: #{_lambda_.6} parent=5 // pred_check
        %p162 = pneg %p161
      $region18: #{_lambda_.6} parent=5 // pred_check_branch
        %164 = sbr.rel (%p162) target = $region20
      $region19: #{_lambda_.6} parent=5 // pred_region
        // Predicated region
        $region21: #{_lambda_.6} parent=19 // pred_check
          %p165 = pneg %p50
        $region22: #{_lambda_.6} parent=19 // pred_check_branch
          %167 = sbr.rel (%p165) target = $region24
        $region23: #{_lambda_.6} parent=19 // pred_region
          %s168 = sand.u32 %s40, 1
          %s169 = sand.u32 %s40, 1
          %s170 = smul.addr %s169, 256
          %s171 = scalar_lea.vmem [#allocation3], %s170
          %s172 = smul.u32 16, %s16
          %s173 = smul.u32 4, %s18
          %s174 = smul.addr %s172, 8
          %s175 = sadd.s32 %s173, %s174
          %s176 = smul.addr %s175, 4
          %s177 = scalar_lea.vmem %s0, %s176
          // Predicated region
          $region25: #{_lambda_.6} parent=23 // pred_check
            _
          $region26: #{_lambda_.6} parent=23 // pred_check_branch
            %179 = sbr.rel (0) target = $region28
          $region27: #{_lambda_.6} parent=23 // pred_region
            // Predicated region
            $region29: #{_lambda_.6} parent=27 // pred_check
              _
            $region30: #{_lambda_.6} parent=27 // pred_check_branch
              %181 = sbr.rel (0) target = $region32
            $region31: #{_lambda_.6} parent=27 // pred_region
              loop: start=0, step=1, limit=1
              $region33: #{_lambda_.6} parent=31 // loop_pre_header
                _
              $region34: #{_lambda_.6} parent=31 // loop_header
                %s183 = sphi 0, %s187
                %p184 = scmp.ge.s32.totalorder %s183, 1
                %s188 = sphi %s177, %s177
                %s189 = sphi %s171, %s171
              $region35: #{_lambda_.6} parent=31 // loop_header_branch
                %186 = sbr.rel (%p184) target = $region39
              $region36: #{_lambda_.6} parent=31 // loop_body
                %v190 = vld [vmem:[%s188] sm:$0xff]
                %191 = vst [vmem:[%s189] sm:$0xff] %v190
                %v192 = vld [vmem:[%s188 + $0x8] sm:$0xff]
                %193 = vst [vmem:[%s189 + $0x8] sm:$0xff] %v192
                %v194 = vld [vmem:[%s188 + $0x20] sm:$0xff]
                %195 = vst [vmem:[%s189 + $0x10] sm:$0xff] %v194
                %v196 = vld [vmem:[%s188 + $0x28] sm:$0xff]
                %197 = vst [vmem:[%s189 + $0x18] sm:$0xff] %v196
                %v198 = vld [vmem:[%s188 + $0x40] sm:$0xff]
                %199 = vst [vmem:[%s189 + $0x20] sm:$0xff] %v198
                %v200 = vld [vmem:[%s188 + $0x48] sm:$0xff]
                %201 = vst [vmem:[%s189 + $0x28] sm:$0xff] %v200
                %v202 = vld [vmem:[%s188 + $0x60] sm:$0xff]
                %203 = vst [vmem:[%s189 + $0x30] sm:$0xff] %v202
                %v204 = vld [vmem:[%s188 + $0x68] sm:$0xff]
                %205 = vst [vmem:[%s189 + $0x38] sm:$0xff] %v204
                %v206 = vld [vmem:[%s188 + $0x80] sm:$0xff]
                %207 = vst [vmem:[%s189 + $0x40] sm:$0xff] %v206
                %v208 = vld [vmem:[%s188 + $0x88] sm:$0xff]
                %209 = vst [vmem:[%s189 + $0x48] sm:$0xff] %v208
                %v210 = vld [vmem:[%s188 + $0xa0] sm:$0xff]
                %211 = vst [vmem:[%s189 + $0x50] sm:$0xff] %v210
                %v212 = vld [vmem:[%s188 + $0xa8] sm:$0xff]
                %213 = vst [vmem:[%s189 + $0x58] sm:$0xff] %v212
                %v214 = vld [vmem:[%s188 + $0xc0] sm:$0xff]
                %215 = vst [vmem:[%s189 + $0x60] sm:$0xff] %v214
                %v216 = vld [vmem:[%s188 + $0xc8] sm:$0xff]
                %217 = vst [vmem:[%s189 + $0x68] sm:$0xff] %v216
                %v218 = vld [vmem:[%s188 + $0xe0] sm:$0xff]
                %219 = vst [vmem:[%s189 + $0x70] sm:$0xff] %v218
                %v220 = vld [vmem:[%s188 + $0xe8] sm:$0xff]
                %221 = vst [vmem:[%s189 + $0x78] sm:$0xff] %v220
                %v222 = vld [vmem:[%s188 + $0x100] sm:$0xff]
                %223 = vst [vmem:[%s189 + $0x80] sm:$0xff] %v222
                %v224 = vld [vmem:[%s188 + $0x108] sm:$0xff]
                %225 = vst [vmem:[%s189 + $0x88] sm:$0xff] %v224
                %v226 = vld [vmem:[%s188 + $0x120] sm:$0xff]
                %227 = vst [vmem:[%s189 + $0x90] sm:$0xff] %v226
                %v228 = vld [vmem:[%s188 + $0x128] sm:$0xff]
                %229 = vst [vmem:[%s189 + $0x98] sm:$0xff] %v228
                %v230 = vld [vmem:[%s188 + $0x140] sm:$0xff]
                %231 = vst [vmem:[%s189 + $0xa0] sm:$0xff] %v230
                %v232 = vld [vmem:[%s188 + $0x148] sm:$0xff]
                %233 = vst [vmem:[%s189 + $0xa8] sm:$0xff] %v232
                %v234 = vld [vmem:[%s188 + $0x160] sm:$0xff]
                %235 = vst [vmem:[%s189 + $0xb0] sm:$0xff] %v234
                %v236 = vld [vmem:[%s188 + $0x168] sm:$0xff]
                %237 = vst [vmem:[%s189 + $0xb8] sm:$0xff] %v236
                %v238 = vld [vmem:[%s188 + $0x180] sm:$0xff]
                %239 = vst [vmem:[%s189 + $0xc0] sm:$0xff] %v238
                %v240 = vld [vmem:[%s188 + $0x188] sm:$0xff]
                %241 = vst [vmem:[%s189 + $0xc8] sm:$0xff] %v240
                %v242 = vld [vmem:[%s188 + $0x1a0] sm:$0xff]
                %243 = vst [vmem:[%s189 + $0xd0] sm:$0xff] %v242
                %v244 = vld [vmem:[%s188 + $0x1a8] sm:$0xff]
                %245 = vst [vmem:[%s189 + $0xd8] sm:$0xff] %v244
                %v246 = vld [vmem:[%s188 + $0x1c0] sm:$0xff]
                %247 = vst [vmem:[%s189 + $0xe0] sm:$0xff] %v246
                %v248 = vld [vmem:[%s188 + $0x1c8] sm:$0xff]
                %249 = vst [vmem:[%s189 + $0xe8] sm:$0xff] %v248
                %v250 = vld [vmem:[%s188 + $0x1e0] sm:$0xff]
                %251 = vst [vmem:[%s189 + $0xf0] sm:$0xff] %v250
                %v252 = vld [vmem:[%s188 + $0x1e8] sm:$0xff]
                %253 = vst [vmem:[%s189 + $0xf8] sm:$0xff] %v252
              $region37: #{_lambda_.6} parent=31 // loop_footer
                %s187 = sadd.s32 1, %s183
              $region38: #{_lambda_.6} parent=31 // loop_footer_branch
                %182 = sbr.rel target = $region34
              $region39: #{_lambda_.6} parent=31 // loop_exit
                _
            $region32: #{_lambda_.6} parent=27 // pred_fallthru
              _
            // Predicated region
            $region40: #{_lambda_.6} parent=27 // pred_check
              _
            $region41: #{_lambda_.6} parent=27 // pred_check_branch
              %255 = sbr.rel target = $region43
            $region42: #{_lambda_.6} parent=27 // pred_region
              _
            $region43: #{_lambda_.6} parent=27 // pred_fallthru
              _
          $region28: #{_lambda_.6} parent=23 // pred_fallthru
            _
          %256 = vnop
        $region24: #{_lambda_.6} parent=19 // pred_fallthru
          _
        // Predicated region
        $region44: #{_lambda_.6} parent=19 // pred_check
          %p257 = pneg %p78
        $region45: #{_lambda_.6} parent=19 // pred_check_branch
          %259 = sbr.rel (%p257) target = $region47
        $region46: #{_lambda_.6} parent=19 // pred_region
          %s260 = smul.u32 64, %s18
          %s261 = smul.u32 4, %s17
          %p262 = scmp.lt.s32.totalorder %s260, 127
          %s263 = scalar_select %p262, %s260, 127
          %p264 = scmp.lt.s32.totalorder %s261, 3
          %s265 = scalar_select %p264, %s261, 3
          %s266 = smul.addr %s263, 4
          %s267 = sadd.s32 %s265, %s266
          %s268 = smul.addr %s267, 4
          %s269 = scalar_lea.vmem %s1, %s268
          %s270 = smul.u32 64, %s18
          %s271 = smul.u32 4, %s17
        $region47: #{_lambda_.6} parent=19 // pred_fallthru
          _
      $region20: #{_lambda_.6} parent=5 // pred_fallthru
        _
      %p272 = scmp.le.s32.totalorder 1, %s9
      %p273 = scmp.lt.s32.totalorder %s9, 3
      %p274 = pnand %p272, %p273
      %p275 = pneg %p274
      // Predicated region
      $region48: #{_lambda_.6} parent=5 // pred_check
        _
      $region49: #{_lambda_.6} parent=5 // pred_check_branch
        %277 = sbr.rel (%p274) target = $region51
      $region50: #{_lambda_.6} parent=5 // pred_region
        %s278 = ssub.s32 %s9, 1
        %s279 = sand.u32 %s43, 1
        %s280 = sand.u32 %s43, 1
        %s281 = smul.addr %s280, 256
        %s282 = scalar_lea.vmem [#allocation3], %s281
        // Predicated region
        $region52: #{_lambda_.6} parent=50 // pred_check
          %p283 = pneg %p56
        $region53: #{_lambda_.6} parent=50 // pred_check_branch
          %285 = sbr.rel (%p283) target = $region55
        $region54: #{_lambda_.6} parent=50 // pred_region
          _
        $region55: #{_lambda_.6} parent=50 // pred_fallthru
          _
        %s286 = sand.u32 %s43, 1
        %s287 = sand.u32 %s43, 1
        %s288 = smul.addr %s287, 256
        %s289 = scalar_lea.vmem [#allocation3], %s288
        %p290 = pneg %p56
        %p291 = pneg %p53
        %s292 = smul.u32 64, %s21
        %s293 = smul.u32 4, %s20
        %p294 = scmp.lt.s32.totalorder %s292, 127
        %s295 = scalar_select %p294, %s292, 127
        %p296 = scmp.lt.s32.totalorder %s293, 3
        %s297 = scalar_select %p296, %s293, 3
        %s298 = smul.addr %s295, 4
        %s299 = sadd.s32 %s297, %s298
        %s300 = smul.addr %s299, 4
        %s301 = scalar_lea.vmem %s1, %s300
        %p302 = pneg %p84
        %p303 = pneg %p81
        %s304 = smul.u32 4, %s20
        %p305 = scmp.lt.s32.totalorder %s304, 3
        %s306 = scalar_select %p305, %s304, 3
        %s307 = scalar_lea.vmem %s2, %s306
        %p308 = pneg %p110
        %p309 = pneg %p107
        %p310 = pneg %p138
        %p311 = pneg %p135
        %s312 = smul.u32 16, %s19
        %s313 = smul.u32 4, %s20
        %p314 = scmp.lt.s32.totalorder %s312, 15
        %s315 = scalar_select %p314, %s312, 15
        %p316 = scmp.lt.s32.totalorder %s313, 3
        %s317 = scalar_select %p316, %s313, 3
        %s318 = smul.addr %s315, 4
        %s319 = sadd.s32 %s317, %s318
        %s320 = smul.addr %s319, 4
        %s321 = scalar_lea.vmem %s3, %s320
        %s322 = smul.u32 16, %s19
        %s323 = smul.u32 4, %s21
        %s324 = smul.u32 64, %s21
        %s325 = smul.u32 4, %s20
        %p326 = scmp.lt.s32.totalorder %s324, 127
        %s327 = scalar_select %p326, %s324, 127
        %p328 = scmp.lt.s32.totalorder %s325, 3
        %s329 = scalar_select %p328, %s325, 3
        %s330 = smul.addr %s327, 4
        %s331 = sadd.s32 %s329, %s330
        %s332 = smul.addr %s331, 4
        %s333 = scalar_lea.vmem %s1, %s332
        %s334 = smul.u32 64, %s21
        %s335 = smul.u32 4, %s20
        %s336 = smul.u32 4, %s20
        %p337 = scmp.lt.s32.totalorder %s336, 3
        %s338 = scalar_select %p337, %s336, 3
        %s339 = scalar_lea.vmem %s2, %s338
        %s340 = smul.u32 4, %s20
        %s341 = smul.u32 16, %s19
        %s342 = smul.u32 4, %s20
        %p343 = scmp.lt.s32.totalorder %s341, 15
        %s344 = scalar_select %p343, %s341, 15
        %p345 = scmp.lt.s32.totalorder %s342, 3
        %s346 = scalar_select %p345, %s342, 3
        %s347 = smul.addr %s344, 4
        %s348 = sadd.s32 %s346, %s347
        %s349 = smul.addr %s348, 4
        %s350 = scalar_lea.vmem %s3, %s349
        %s351 = smul.u32 16, %s19
        %s352 = smul.u32 4, %s20
        %p353 = scmp.eq.s32.totalorder %s21, 0
        // Predicated region
        $region56: #{_lambda_.6} parent=50 // pred_check
          %p354 = pneg %p353
        $region57: #{_lambda_.6} parent=50 // pred_check_branch
          %356 = sbr.rel (%p354) target = $region59
        $region58: #{_lambda_.6} parent=50 // pred_region
          %357 = vst [vmem:[#allocation2] sm:$0xff] 0.0
          %358 = vst [vmem:[#allocation2 + $0x8] sm:$0xff] 0.0
          %359 = vst [vmem:[#allocation2 + $0x10] sm:$0xff] 0.0
          %360 = vst [vmem:[#allocation2 + $0x18] sm:$0xff] 0.0
          %361 = vst [vmem:[#allocation2 + $0x20] sm:$0xff] 0.0
          %362 = vst [vmem:[#allocation2 + $0x28] sm:$0xff] 0.0
          %363 = vst [vmem:[#allocation2 + $0x30] sm:$0xff] 0.0
          %364 = vst [vmem:[#allocation2 + $0x38] sm:$0xff] 0.0
          %365 = vst [vmem:[#allocation2 + $0x40] sm:$0xff] 0.0
          %366 = vst [vmem:[#allocation2 + $0x48] sm:$0xff] 0.0
          %367 = vst [vmem:[#allocation2 + $0x50] sm:$0xff] 0.0
          %368 = vst [vmem:[#allocation2 + $0x58] sm:$0xff] 0.0
          %369 = vst [vmem:[#allocation2 + $0x60] sm:$0xff] 0.0
          %370 = vst [vmem:[#allocation2 + $0x68] sm:$0xff] 0.0
          %371 = vst [vmem:[#allocation2 + $0x70] sm:$0xff] 0.0
          %372 = vst [vmem:[#allocation2 + $0x78] sm:$0xff] 0.0
          %373 = vst [vmem:[#allocation2 + $0x80] sm:$0xff] 0.0
          %374 = vst [vmem:[#allocation2 + $0x88] sm:$0xff] 0.0
          %375 = vst [vmem:[#allocation2 + $0x90] sm:$0xff] 0.0
          %376 = vst [vmem:[#allocation2 + $0x98] sm:$0xff] 0.0
          %377 = vst [vmem:[#allocation2 + $0xa0] sm:$0xff] 0.0
          %378 = vst [vmem:[#allocation2 + $0xa8] sm:$0xff] 0.0
          %379 = vst [vmem:[#allocation2 + $0xb0] sm:$0xff] 0.0
          %380 = vst [vmem:[#allocation2 + $0xb8] sm:$0xff] 0.0
          %381 = vst [vmem:[#allocation2 + $0xc0] sm:$0xff] 0.0
          %382 = vst [vmem:[#allocation2 + $0xc8] sm:$0xff] 0.0
          %383 = vst [vmem:[#allocation2 + $0xd0] sm:$0xff] 0.0
          %384 = vst [vmem:[#allocation2 + $0xd8] sm:$0xff] 0.0
          %385 = vst [vmem:[#allocation2 + $0xe0] sm:$0xff] 0.0
          %386 = vst [vmem:[#allocation2 + $0xe8] sm:$0xff] 0.0
          %387 = vst [vmem:[#allocation2 + $0xf0] sm:$0xff] 0.0
          %388 = vst [vmem:[#allocation2 + $0xf8] sm:$0xff] 0.0
          %389 = vst [vmem:[#allocation2 + $0x100] sm:$0xff] 0.0
          %390 = vst [vmem:[#allocation2 + $0x108] sm:$0xff] 0.0
          %391 = vst [vmem:[#allocation2 + $0x110] sm:$0xff] 0.0
          %392 = vst [vmem:[#allocation2 + $0x118] sm:$0xff] 0.0
          %393 = vst [vmem:[#allocation2 + $0x120] sm:$0xff] 0.0
          %394 = vst [vmem:[#allocation2 + $0x128] sm:$0xff] 0.0
          %395 = vst [vmem:[#allocation2 + $0x130] sm:$0xff] 0.0
          %396 = vst [vmem:[#allocation2 + $0x138] sm:$0xff] 0.0
          %397 = vst [vmem:[#allocation2 + $0x140] sm:$0xff] 0.0
          %398 = vst [vmem:[#allocation2 + $0x148] sm:$0xff] 0.0
          %399 = vst [vmem:[#allocation2 + $0x150] sm:$0xff] 0.0
          %400 = vst [vmem:[#allocation2 + $0x158] sm:$0xff] 0.0
          %401 = vst [vmem:[#allocation2 + $0x160] sm:$0xff] 0.0
          %402 = vst [vmem:[#allocation2 + $0x168] sm:$0xff] 0.0
          %403 = vst [vmem:[#allocation2 + $0x170] sm:$0xff] 0.0
          %404 = vst [vmem:[#allocation2 + $0x178] sm:$0xff] 0.0
          %405 = vst [vmem:[#allocation2 + $0x180] sm:$0xff] 0.0
          %406 = vst [vmem:[#allocation2 + $0x188] sm:$0xff] 0.0
          %407 = vst [vmem:[#allocation2 + $0x190] sm:$0xff] 0.0
          %408 = vst [vmem:[#allocation2 + $0x198] sm:$0xff] 0.0
          %409 = vst [vmem:[#allocation2 + $0x1a0] sm:$0xff] 0.0
          %410 = vst [vmem:[#allocation2 + $0x1a8] sm:$0xff] 0.0
          %411 = vst [vmem:[#allocation2 + $0x1b0] sm:$0xff] 0.0
          %412 = vst [vmem:[#allocation2 + $0x1b8] sm:$0xff] 0.0
          %413 = vst [vmem:[#allocation2 + $0x1c0] sm:$0xff] 0.0
          %414 = vst [vmem:[#allocation2 + $0x1c8] sm:$0xff] 0.0
          %415 = vst [vmem:[#allocation2 + $0x1d0] sm:$0xff] 0.0
          %416 = vst [vmem:[#allocation2 + $0x1d8] sm:$0xff] 0.0
          %417 = vst [vmem:[#allocation2 + $0x1e0] sm:$0xff] 0.0
          %418 = vst [vmem:[#allocation2 + $0x1e8] sm:$0xff] 0.0
          %419 = vst [vmem:[#allocation2 + $0x1f0] sm:$0xff] 0.0
          %420 = vst [vmem:[#allocation2 + $0x1f8] sm:$0xff] 0.0
        $region59: #{_lambda_.6} parent=50 // pred_fallthru
          _
        %v421 = vld [vmem:[#allocation2] sm:$0xff]
        %v422 = vld [vmem:[#allocation2 + $0x8] sm:$0xff]
        %v423 = vld [vmem:[#allocation2 + $0x10] sm:$0xff]
        %v424 = vld [vmem:[#allocation2 + $0x18] sm:$0xff]
        %v425 = vld [vmem:[#allocation2 + $0x20] sm:$0xff]
        %v426 = vld [vmem:[#allocation2 + $0x28] sm:$0xff]
        %v427 = vld [vmem:[#allocation2 + $0x30] sm:$0xff]
        %v428 = vld [vmem:[#allocation2 + $0x38] sm:$0xff]
        %v429 = vld [vmem:[#allocation2 + $0x40] sm:$0xff]
        %v430 = vld [vmem:[#allocation2 + $0x48] sm:$0xff]
        %v431 = vld [vmem:[#allocation2 + $0x50] sm:$0xff]
        %v432 = vld [vmem:[#allocation2 + $0x58] sm:$0xff]
        %v433 = vld [vmem:[#allocation2 + $0x60] sm:$0xff]
        %v434 = vld [vmem:[#allocation2 + $0x68] sm:$0xff]
        %v435 = vld [vmem:[#allocation2 + $0x70] sm:$0xff]
        %v436 = vld [vmem:[#allocation2 + $0x78] sm:$0xff]
        %v437 = vld [vmem:[#allocation2 + $0x80] sm:$0xff]
        %v438 = vld [vmem:[#allocation2 + $0x88] sm:$0xff]
        %v439 = vld [vmem:[#allocation2 + $0x90] sm:$0xff]
        %v440 = vld [vmem:[#allocation2 + $0x98] sm:$0xff]
        %v441 = vld [vmem:[#allocation2 + $0xa0] sm:$0xff]
        %v442 = vld [vmem:[#allocation2 + $0xa8] sm:$0xff]
        %v443 = vld [vmem:[#allocation2 + $0xb0] sm:$0xff]
        %v444 = vld [vmem:[#allocation2 + $0xb8] sm:$0xff]
        %v445 = vld [vmem:[#allocation2 + $0xc0] sm:$0xff]
        %v446 = vld [vmem:[#allocation2 + $0xc8] sm:$0xff]
        %v447 = vld [vmem:[#allocation2 + $0xd0] sm:$0xff]
        %v448 = vld [vmem:[#allocation2 + $0xd8] sm:$0xff]
        %v449 = vld [vmem:[#allocation2 + $0xe0] sm:$0xff]
        %v450 = vld [vmem:[#allocation2 + $0xe8] sm:$0xff]
        %v451 = vld [vmem:[#allocation2 + $0xf0] sm:$0xff]
        %v452 = vld [vmem:[#allocation2 + $0xf8] sm:$0xff]
        %v453 = vld [vmem:[#allocation2 + $0x100] sm:$0xff]
        %v454 = vld [vmem:[#allocation2 + $0x108] sm:$0xff]
        %v455 = vld [vmem:[#allocation2 + $0x110] sm:$0xff]
        %v456 = vld [vmem:[#allocation2 + $0x118] sm:$0xff]
        %v457 = vld [vmem:[#allocation2 + $0x120] sm:$0xff]
        %v458 = vld [vmem:[#allocation2 + $0x128] sm:$0xff]
        %v459 = vld [vmem:[#allocation2 + $0x130] sm:$0xff]
        %v460 = vld [vmem:[#allocation2 + $0x138] sm:$0xff]
        %v461 = vld [vmem:[#allocation2 + $0x140] sm:$0xff]
        %v462 = vld [vmem:[#allocation2 + $0x148] sm:$0xff]
        %v463 = vld [vmem:[#allocation2 + $0x150] sm:$0xff]
        %v464 = vld [vmem:[#allocation2 + $0x158] sm:$0xff]
        %v465 = vld [vmem:[#allocation2 + $0x160] sm:$0xff]
        %v466 = vld [vmem:[#allocation2 + $0x168] sm:$0xff]
        %v467 = vld [vmem:[#allocation2 + $0x170] sm:$0xff]
        %v468 = vld [vmem:[#allocation2 + $0x178] sm:$0xff]
        %v469 = vld [vmem:[#allocation2 + $0x180] sm:$0xff]
        %v470 = vld [vmem:[#allocation2 + $0x188] sm:$0xff]
        %v471 = vld [vmem:[#allocation2 + $0x190] sm:$0xff]
        %v472 = vld [vmem:[#allocation2 + $0x198] sm:$0xff]
        %v473 = vld [vmem:[#allocation2 + $0x1a0] sm:$0xff]
        %v474 = vld [vmem:[#allocation2 + $0x1a8] sm:$0xff]
        %v475 = vld [vmem:[#allocation2 + $0x1b0] sm:$0xff]
        %v476 = vld [vmem:[#allocation2 + $0x1b8] sm:$0xff]
        %v477 = vld [vmem:[#allocation2 + $0x1c0] sm:$0xff]
        %v478 = vld [vmem:[#allocation2 + $0x1c8] sm:$0xff]
        %v479 = vld [vmem:[#allocation2 + $0x1d0] sm:$0xff]
        %v480 = vld [vmem:[#allocation2 + $0x1d8] sm:$0xff]
        %v481 = vld [vmem:[#allocation2 + $0x1e0] sm:$0xff]
        %v482 = vld [vmem:[#allocation2 + $0x1e8] sm:$0xff]
        %v483 = vld [vmem:[#allocation2 + $0x1f0] sm:$0xff]
        %v484 = vld [vmem:[#allocation2 + $0x1f8] sm:$0xff]
        %v485 = vld [vmem:[%s282] sm:$0xff]
        %v486 = vld [vmem:[%s282 + $0x8] sm:$0xff]
        %v487 = vld [vmem:[%s282 + $0x10] sm:$0xff]
        %v488 = vld [vmem:[%s282 + $0x18] sm:$0xff]
        %v489 = vld [vmem:[%s282 + $0x20] sm:$0xff]
        %v490 = vld [vmem:[%s282 + $0x28] sm:$0xff]
        %v491 = vld [vmem:[%s282 + $0x30] sm:$0xff]
        %v492 = vld [vmem:[%s282 + $0x38] sm:$0xff]
        %v493 = vld [vmem:[%s282 + $0x40] sm:$0xff]
        %v494 = vld [vmem:[%s282 + $0x48] sm:$0xff]
        %v495 = vld [vmem:[%s282 + $0x50] sm:$0xff]
        %v496 = vld [vmem:[%s282 + $0x58] sm:$0xff]
        %v497 = vld [vmem:[%s282 + $0x60] sm:$0xff]
        %v498 = vld [vmem:[%s282 + $0x68] sm:$0xff]
        %v499 = vld [vmem:[%s282 + $0x70] sm:$0xff]
        %v500 = vld [vmem:[%s282 + $0x78] sm:$0xff]
        %v501 = vld [vmem:[%s282 + $0x80] sm:$0xff]
        %v502 = vld [vmem:[%s282 + $0x88] sm:$0xff]
        %v503 = vld [vmem:[%s282 + $0x90] sm:$0xff]
        %v504 = vld [vmem:[%s282 + $0x98] sm:$0xff]
        %v505 = vld [vmem:[%s282 + $0xa0] sm:$0xff]
        %v506 = vld [vmem:[%s282 + $0xa8] sm:$0xff]
        %v507 = vld [vmem:[%s282 + $0xb0] sm:$0xff]
        %v508 = vld [vmem:[%s282 + $0xb8] sm:$0xff]
        %v509 = vld [vmem:[%s282 + $0xc0] sm:$0xff]
        %v510 = vld [vmem:[%s282 + $0xc8] sm:$0xff]
        %v511 = vld [vmem:[%s282 + $0xd0] sm:$0xff]
        %v512 = vld [vmem:[%s282 + $0xd8] sm:$0xff]
        %v513 = vld [vmem:[%s282 + $0xe0] sm:$0xff]
        %v514 = vld [vmem:[%s282 + $0xe8] sm:$0xff]
        %v515 = vld [vmem:[%s282 + $0xf0] sm:$0xff]
        %v516 = vld [vmem:[%s282 + $0xf8] sm:$0xff]
        %v517 = vld [vmem:[%s333] sm:$0xff]
        %v518 = vld [vmem:[%s333 + $0x8] sm:$0xff]
        %v519 = vld [vmem:[%s333 + $0x10] sm:$0xff]
        %v520 = vld [vmem:[%s333 + $0x18] sm:$0xff]
        %v521 = vld [vmem:[%s333 + $0x20] sm:$0xff]
        %v522 = vld [vmem:[%s333 + $0x28] sm:$0xff]
        %v523 = vld [vmem:[%s333 + $0x30] sm:$0xff]
        %v524 = vld [vmem:[%s333 + $0x38] sm:$0xff]
        %v525 = vld [vmem:[%s333 + $0x40] sm:$0xff]
        %v526 = vld [vmem:[%s333 + $0x48] sm:$0xff]
        %v527 = vld [vmem:[%s333 + $0x50] sm:$0xff]
        %v528 = vld [vmem:[%s333 + $0x58] sm:$0xff]
        %v529 = vld [vmem:[%s333 + $0x60] sm:$0xff]
        %v530 = vld [vmem:[%s333 + $0x68] sm:$0xff]
        %v531 = vld [vmem:[%s333 + $0x70] sm:$0xff]
        %v532 = vld [vmem:[%s333 + $0x78] sm:$0xff]
        %v533 = vld [vmem:[%s333 + $0x80] sm:$0xff]
        %v534 = vld [vmem:[%s333 + $0x88] sm:$0xff]
        %v535 = vld [vmem:[%s333 + $0x90] sm:$0xff]
        %v536 = vld [vmem:[%s333 + $0x98] sm:$0xff]
        %v537 = vld [vmem:[%s333 + $0xa0] sm:$0xff]
        %v538 = vld [vmem:[%s333 + $0xa8] sm:$0xff]
        %v539 = vld [vmem:[%s333 + $0xb0] sm:$0xff]
        %v540 = vld [vmem:[%s333 + $0xb8] sm:$0xff]
        %v541 = vld [vmem:[%s333 + $0xc0] sm:$0xff]
        %v542 = vld [vmem:[%s333 + $0xc8] sm:$0xff]
        %v543 = vld [vmem:[%s333 + $0xd0] sm:$0xff]
        %v544 = vld [vmem:[%s333 + $0xd8] sm:$0xff]
        %v545 = vld [vmem:[%s333 + $0xe0] sm:$0xff]
        %v546 = vld [vmem:[%s333 + $0xe8] sm:$0xff]
        %v547 = vld [vmem:[%s333 + $0xf0] sm:$0xff]
        %v548 = vld [vmem:[%s333 + $0xf8] sm:$0xff]
        %v549 = vld [vmem:[%s333 + $0x100] sm:$0xff]
        %v550 = vld [vmem:[%s333 + $0x108] sm:$0xff]
        %v551 = vld [vmem:[%s333 + $0x110] sm:$0xff]
        %v552 = vld [vmem:[%s333 + $0x118] sm:$0xff]
        %v553 = vld [vmem:[%s333 + $0x120] sm:$0xff]
        %v554 = vld [vmem:[%s333 + $0x128] sm:$0xff]
        %v555 = vld [vmem:[%s333 + $0x130] sm:$0xff]
        %v556 = vld [vmem:[%s333 + $0x138] sm:$0xff]
        %v557 = vld [vmem:[%s333 + $0x140] sm:$0xff]
        %v558 = vld [vmem:[%s333 + $0x148] sm:$0xff]
        %v559 = vld [vmem:[%s333 + $0x150] sm:$0xff]
        %v560 = vld [vmem:[%s333 + $0x158] sm:$0xff]
        %v561 = vld [vmem:[%s333 + $0x160] sm:$0xff]
        %v562 = vld [vmem:[%s333 + $0x168] sm:$0xff]
        %v563 = vld [vmem:[%s333 + $0x170] sm:$0xff]
        %v564 = vld [vmem:[%s333 + $0x178] sm:$0xff]
        %v565 = vld [vmem:[%s333 + $0x180] sm:$0xff]
        %v566 = vld [vmem:[%s333 + $0x188] sm:$0xff]
        %v567 = vld [vmem:[%s333 + $0x190] sm:$0xff]
        %v568 = vld [vmem:[%s333 + $0x198] sm:$0xff]
        %v569 = vld [vmem:[%s333 + $0x1a0] sm:$0xff]
        %v570 = vld [vmem:[%s333 + $0x1a8] sm:$0xff]
        %v571 = vld [vmem:[%s333 + $0x1b0] sm:$0xff]
        %v572 = vld [vmem:[%s333 + $0x1b8] sm:$0xff]
        %v573 = vld [vmem:[%s333 + $0x1c0] sm:$0xff]
        %v574 = vld [vmem:[%s333 + $0x1c8] sm:$0xff]
        %v575 = vld [vmem:[%s333 + $0x1d0] sm:$0xff]
        %v576 = vld [vmem:[%s333 + $0x1d8] sm:$0xff]
        %v577 = vld [vmem:[%s333 + $0x1e0] sm:$0xff]
        %v578 = vld [vmem:[%s333 + $0x1e8] sm:$0xff]
        %v579 = vld [vmem:[%s333 + $0x1f0] sm:$0xff]
        %v580 = vld [vmem:[%s333 + $0x1f8] sm:$0xff]
        %v581 = vld [vmem:[%s333 + $0x200] sm:$0xff]
        %v582 = vld [vmem:[%s333 + $0x208] sm:$0xff]
        %v583 = vld [vmem:[%s333 + $0x210] sm:$0xff]
        %v584 = vld [vmem:[%s333 + $0x218] sm:$0xff]
        %v585 = vld [vmem:[%s333 + $0x220] sm:$0xff]
        %v586 = vld [vmem:[%s333 + $0x228] sm:$0xff]
        %v587 = vld [vmem:[%s333 + $0x230] sm:$0xff]
        %v588 = vld [vmem:[%s333 + $0x238] sm:$0xff]
        %v589 = vld [vmem:[%s333 + $0x240] sm:$0xff]
        %v590 = vld [vmem:[%s333 + $0x248] sm:$0xff]
        %v591 = vld [vmem:[%s333 + $0x250] sm:$0xff]
        %v592 = vld [vmem:[%s333 + $0x258] sm:$0xff]
        %v593 = vld [vmem:[%s333 + $0x260] sm:$0xff]
        %v594 = vld [vmem:[%s333 + $0x268] sm:$0xff]
        %v595 = vld [vmem:[%s333 + $0x270] sm:$0xff]
        %v596 = vld [vmem:[%s333 + $0x278] sm:$0xff]
        %v597 = vld [vmem:[%s333 + $0x280] sm:$0xff]
        %v598 = vld [vmem:[%s333 + $0x288] sm:$0xff]
        %v599 = vld [vmem:[%s333 + $0x290] sm:$0xff]
        %v600 = vld [vmem:[%s333 + $0x298] sm:$0xff]
        %v601 = vld [vmem:[%s333 + $0x2a0] sm:$0xff]
        %v602 = vld [vmem:[%s333 + $0x2a8] sm:$0xff]
        %v603 = vld [vmem:[%s333 + $0x2b0] sm:$0xff]
        %v604 = vld [vmem:[%s333 + $0x2b8] sm:$0xff]
        %v605 = vld [vmem:[%s333 + $0x2c0] sm:$0xff]
        %v606 = vld [vmem:[%s333 + $0x2c8] sm:$0xff]
        %v607 = vld [vmem:[%s333 + $0x2d0] sm:$0xff]
        %v608 = vld [vmem:[%s333 + $0x2d8] sm:$0xff]
        %v609 = vld [vmem:[%s333 + $0x2e0] sm:$0xff]
        %v610 = vld [vmem:[%s333 + $0x2e8] sm:$0xff]
        %v611 = vld [vmem:[%s333 + $0x2f0] sm:$0xff]
        %v612 = vld [vmem:[%s333 + $0x2f8] sm:$0xff]
        %v613 = vld [vmem:[%s333 + $0x300] sm:$0xff]
        %v614 = vld [vmem:[%s333 + $0x308] sm:$0xff]
        %v615 = vld [vmem:[%s333 + $0x310] sm:$0xff]
        %v616 = vld [vmem:[%s333 + $0x318] sm:$0xff]
        %v617 = vld [vmem:[%s333 + $0x320] sm:$0xff]
        %v618 = vld [vmem:[%s333 + $0x328] sm:$0xff]
        %v619 = vld [vmem:[%s333 + $0x330] sm:$0xff]
        %v620 = vld [vmem:[%s333 + $0x338] sm:$0xff]
        %v621 = vld [vmem:[%s333 + $0x340] sm:$0xff]
        %v622 = vld [vmem:[%s333 + $0x348] sm:$0xff]
        %v623 = vld [vmem:[%s333 + $0x350] sm:$0xff]
        %v624 = vld [vmem:[%s333 + $0x358] sm:$0xff]
        %v625 = vld [vmem:[%s333 + $0x360] sm:$0xff]
        %v626 = vld [vmem:[%s333 + $0x368] sm:$0xff]
        %v627 = vld [vmem:[%s333 + $0x370] sm:$0xff]
        %v628 = vld [vmem:[%s333 + $0x378] sm:$0xff]
        %v629 = vld [vmem:[%s333 + $0x380] sm:$0xff]
        %v630 = vld [vmem:[%s333 + $0x388] sm:$0xff]
        %v631 = vld [vmem:[%s333 + $0x390] sm:$0xff]
        %v632 = vld [vmem:[%s333 + $0x398] sm:$0xff]
        %v633 = vld [vmem:[%s333 + $0x3a0] sm:$0xff]
        %v634 = vld [vmem:[%s333 + $0x3a8] sm:$0xff]
        %v635 = vld [vmem:[%s333 + $0x3b0] sm:$0xff]
        %v636 = vld [vmem:[%s333 + $0x3b8] sm:$0xff]
        %v637 = vld [vmem:[%s333 + $0x3c0] sm:$0xff]
        %v638 = vld [vmem:[%s333 + $0x3c8] sm:$0xff]
        %v639 = vld [vmem:[%s333 + $0x3d0] sm:$0xff]
        %v640 = vld [vmem:[%s333 + $0x3d8] sm:$0xff]
        %v641 = vld [vmem:[%s333 + $0x3e0] sm:$0xff]
        %v642 = vld [vmem:[%s333 + $0x3e8] sm:$0xff]
        %v643 = vld [vmem:[%s333 + $0x3f0] sm:$0xff]
        %v644 = vld [vmem:[%s333 + $0x3f8] sm:$0xff]
        %v677 = vunpack.c.l.b16 %v485
        %v678 = vunpack.c.h.b16 %v485
        %v679 = vunpack.c.l.b16 %v486
        %v680 = vunpack.c.h.b16 %v486
        %v681 = vunpack.c.l.b16 %v487
        %v682 = vunpack.c.h.b16 %v487
        %v683 = vunpack.c.l.b16 %v488
        %v684 = vunpack.c.h.b16 %v488
        %v685 = vunpack.c.l.b16 %v489
        %v686 = vunpack.c.h.b16 %v489
        %v687 = vunpack.c.l.b16 %v490
        %v688 = vunpack.c.h.b16 %v490
        %v689 = vunpack.c.l.b16 %v491
        %v690 = vunpack.c.h.b16 %v491
        %v691 = vunpack.c.l.b16 %v492
        %v692 = vunpack.c.h.b16 %v492
        %v693 = vunpack.c.l.b16 %v493
        %v694 = vunpack.c.h.b16 %v493
        %v695 = vunpack.c.l.b16 %v494
        %v696 = vunpack.c.h.b16 %v494
        %v697 = vunpack.c.l.b16 %v495
        %v698 = vunpack.c.h.b16 %v495
        %v699 = vunpack.c.l.b16 %v496
        %v700 = vunpack.c.h.b16 %v496
        %v701 = vunpack.c.l.b16 %v497
        %v702 = vunpack.c.h.b16 %v497
        %v703 = vunpack.c.l.b16 %v498
        %v704 = vunpack.c.h.b16 %v498
        %v705 = vunpack.c.l.b16 %v499
        %v706 = vunpack.c.h.b16 %v499
        %v707 = vunpack.c.l.b16 %v500
        %v708 = vunpack.c.h.b16 %v500
        %v709 = vunpack.c.l.b16 %v501
        %v710 = vunpack.c.h.b16 %v501
        %v711 = vunpack.c.l.b16 %v502
        %v712 = vunpack.c.h.b16 %v502
        %v713 = vunpack.c.l.b16 %v503
        %v714 = vunpack.c.h.b16 %v503
        %v715 = vunpack.c.l.b16 %v504
        %v716 = vunpack.c.h.b16 %v504
        %v717 = vunpack.c.l.b16 %v505
        %v718 = vunpack.c.h.b16 %v505
        %v719 = vunpack.c.l.b16 %v506
        %v720 = vunpack.c.h.b16 %v506
        %v721 = vunpack.c.l.b16 %v507
        %v722 = vunpack.c.h.b16 %v507
        %v723 = vunpack.c.l.b16 %v508
        %v724 = vunpack.c.h.b16 %v508
        %v725 = vunpack.c.l.b16 %v509
        %v726 = vunpack.c.h.b16 %v509
        %v727 = vunpack.c.l.b16 %v510
        %v728 = vunpack.c.h.b16 %v510
        %v729 = vunpack.c.l.b16 %v511
        %v730 = vunpack.c.h.b16 %v511
        %v731 = vunpack.c.l.b16 %v512
        %v732 = vunpack.c.h.b16 %v512
        %v733 = vunpack.c.l.b16 %v513
        %v734 = vunpack.c.h.b16 %v513
        %v735 = vunpack.c.l.b16 %v514
        %v736 = vunpack.c.h.b16 %v514
        %v737 = vunpack.c.l.b16 %v515
        %v738 = vunpack.c.h.b16 %v515
        %v739 = vunpack.c.l.b16 %v516
        %v740 = vunpack.c.h.b16 %v516
        %v741 = vpack.c.b16 %v681, %v677
        %v742 = vpack.c.b16 %v682, %v678
        %v743 = vpack.c.b16 %v683, %v679
        %v744 = vpack.c.b16 %v684, %v680
        %v745 = vpack.c.b16 %v689, %v685
        %v746 = vpack.c.b16 %v690, %v686
        %v747 = vpack.c.b16 %v691, %v687
        %v748 = vpack.c.b16 %v692, %v688
        %v749 = vpack.c.b16 %v697, %v693
        %v750 = vpack.c.b16 %v698, %v694
        %v751 = vpack.c.b16 %v699, %v695
        %v752 = vpack.c.b16 %v700, %v696
        %v753 = vpack.c.b16 %v705, %v701
        %v754 = vpack.c.b16 %v706, %v702
        %v755 = vpack.c.b16 %v707, %v703
        %v756 = vpack.c.b16 %v708, %v704
        %v757 = vpack.c.b16 %v713, %v709
        %v758 = vpack.c.b16 %v714, %v710
        %v759 = vpack.c.b16 %v715, %v711
        %v760 = vpack.c.b16 %v716, %v712
        %v761 = vpack.c.b16 %v721, %v717
        %v762 = vpack.c.b16 %v722, %v718
        %v763 = vpack.c.b16 %v723, %v719
        %v764 = vpack.c.b16 %v724, %v720
        %v765 = vpack.c.b16 %v729, %v725
        %v766 = vpack.c.b16 %v730, %v726
        %v767 = vpack.c.b16 %v731, %v727
        %v768 = vpack.c.b16 %v732, %v728
        %v769 = vpack.c.b16 %v737, %v733
        %v770 = vpack.c.b16 %v738, %v734
        %v771 = vpack.c.b16 %v739, %v735
        %v772 = vpack.c.b16 %v740, %v736
        %v933 = vunpack.c.l.b16 %v517
        %v934 = vunpack.c.h.b16 %v517
        %v935 = vunpack.c.l.b16 %v518
        %v936 = vunpack.c.h.b16 %v518
        %v937 = vunpack.c.l.b16 %v519
        %v938 = vunpack.c.h.b16 %v519
        %v939 = vunpack.c.l.b16 %v520
        %v940 = vunpack.c.h.b16 %v520
        %v941 = vunpack.c.l.b16 %v521
        %v942 = vunpack.c.h.b16 %v521
        %v943 = vunpack.c.l.b16 %v522
        %v944 = vunpack.c.h.b16 %v522
        %v945 = vunpack.c.l.b16 %v523
        %v946 = vunpack.c.h.b16 %v523
        %v947 = vunpack.c.l.b16 %v524
        %v948 = vunpack.c.h.b16 %v524
        %v949 = vunpack.c.l.b16 %v525
        %v950 = vunpack.c.h.b16 %v525
        %v951 = vunpack.c.l.b16 %v526
        %v952 = vunpack.c.h.b16 %v526
        %v953 = vunpack.c.l.b16 %v527
        %v954 = vunpack.c.h.b16 %v527
        %v955 = vunpack.c.l.b16 %v528
        %v956 = vunpack.c.h.b16 %v528
        %v957 = vunpack.c.l.b16 %v529
        %v958 = vunpack.c.h.b16 %v529
        %v959 = vunpack.c.l.b16 %v530
        %v960 = vunpack.c.h.b16 %v530
        %v961 = vunpack.c.l.b16 %v531
        %v962 = vunpack.c.h.b16 %v531
        %v963 = vunpack.c.l.b16 %v532
        %v964 = vunpack.c.h.b16 %v532
        %v965 = vunpack.c.l.b16 %v533
        %v966 = vunpack.c.h.b16 %v533
        %v967 = vunpack.c.l.b16 %v534
        %v968 = vunpack.c.h.b16 %v534
        %v969 = vunpack.c.l.b16 %v535
        %v970 = vunpack.c.h.b16 %v535
        %v971 = vunpack.c.l.b16 %v536
        %v972 = vunpack.c.h.b16 %v536
        %v973 = vunpack.c.l.b16 %v537
        %v974 = vunpack.c.h.b16 %v537
        %v975 = vunpack.c.l.b16 %v538
        %v976 = vunpack.c.h.b16 %v538
        %v977 = vunpack.c.l.b16 %v539
        %v978 = vunpack.c.h.b16 %v539
        %v979 = vunpack.c.l.b16 %v540
        %v980 = vunpack.c.h.b16 %v540
        %v981 = vunpack.c.l.b16 %v541
        %v982 = vunpack.c.h.b16 %v541
        %v983 = vunpack.c.l.b16 %v542
        %v984 = vunpack.c.h.b16 %v542
        %v985 = vunpack.c.l.b16 %v543
        %v986 = vunpack.c.h.b16 %v543
        %v987 = vunpack.c.l.b16 %v544
        %v988 = vunpack.c.h.b16 %v544
        %v989 = vunpack.c.l.b16 %v545
        %v990 = vunpack.c.h.b16 %v545
        %v991 = vunpack.c.l.b16 %v546
        %v992 = vunpack.c.h.b16 %v546
        %v993 = vunpack.c.l.b16 %v547
        %v994 = vunpack.c.h.b16 %v547
        %v995 = vunpack.c.l.b16 %v548
        %v996 = vunpack.c.h.b16 %v548
        %v997 = vunpack.c.l.b16 %v549
        %v998 = vunpack.c.h.b16 %v549
        %v999 = vunpack.c.l.b16 %v550
        %v1000 = vunpack.c.h.b16 %v550
        %v1001 = vunpack.c.l.b16 %v551
        %v1002 = vunpack.c.h.b16 %v551
        %v1003 = vunpack.c.l.b16 %v552
        %v1004 = vunpack.c.h.b16 %v552
        %v1005 = vunpack.c.l.b16 %v553
        %v1006 = vunpack.c.h.b16 %v553
        %v1007 = vunpack.c.l.b16 %v554
        %v1008 = vunpack.c.h.b16 %v554
        %v1009 = vunpack.c.l.b16 %v555
        %v1010 = vunpack.c.h.b16 %v555
        %v1011 = vunpack.c.l.b16 %v556
        %v1012 = vunpack.c.h.b16 %v556
        %v1013 = vunpack.c.l.b16 %v557
        %v1014 = vunpack.c.h.b16 %v557
        %v1015 = vunpack.c.l.b16 %v558
        %v1016 = vunpack.c.h.b16 %v558
        %v1017 = vunpack.c.l.b16 %v559
        %v1018 = vunpack.c.h.b16 %v559
        %v1019 = vunpack.c.l.b16 %v560
        %v1020 = vunpack.c.h.b16 %v560
        %v1021 = vunpack.c.l.b16 %v561
        %v1022 = vunpack.c.h.b16 %v561
        %v1023 = vunpack.c.l.b16 %v562
        %v1024 = vunpack.c.h.b16 %v562
        %v1025 = vunpack.c.l.b16 %v563
        %v1026 = vunpack.c.h.b16 %v563
        %v1027 = vunpack.c.l.b16 %v564
        %v1028 = vunpack.c.h.b16 %v564
        %v1029 = vunpack.c.l.b16 %v565
        %v1030 = vunpack.c.h.b16 %v565
        %v1031 = vunpack.c.l.b16 %v566
        %v1032 = vunpack.c.h.b16 %v566
        %v1033 = vunpack.c.l.b16 %v567
        %v1034 = vunpack.c.h.b16 %v567
        %v1035 = vunpack.c.l.b16 %v568
        %v1036 = vunpack.c.h.b16 %v568
        %v1037 = vunpack.c.l.b16 %v569
        %v1038 = vunpack.c.h.b16 %v569
        %v1039 = vunpack.c.l.b16 %v570
        %v1040 = vunpack.c.h.b16 %v570
        %v1041 = vunpack.c.l.b16 %v571
        %v1042 = vunpack.c.h.b16 %v571
        %v1043 = vunpack.c.l.b16 %v572
        %v1044 = vunpack.c.h.b16 %v572
        %v1045 = vunpack.c.l.b16 %v573
        %v1046 = vunpack.c.h.b16 %v573
        %v1047 = vunpack.c.l.b16 %v574
        %v1048 = vunpack.c.h.b16 %v574
        %v1049 = vunpack.c.l.b16 %v575
        %v1050 = vunpack.c.h.b16 %v575
        %v1051 = vunpack.c.l.b16 %v576
        %v1052 = vunpack.c.h.b16 %v576
        %v1053 = vunpack.c.l.b16 %v577
        %v1054 = vunpack.c.h.b16 %v577
        %v1055 = vunpack.c.l.b16 %v578
        %v1056 = vunpack.c.h.b16 %v578
        %v1057 = vunpack.c.l.b16 %v579
        %v1058 = vunpack.c.h.b16 %v579
        %v1059 = vunpack.c.l.b16 %v580
        %v1060 = vunpack.c.h.b16 %v580
        %v1061 = vunpack.c.l.b16 %v581
        %v1062 = vunpack.c.h.b16 %v581
        %v1063 = vunpack.c.l.b16 %v582
        %v1064 = vunpack.c.h.b16 %v582
        %v1065 = vunpack.c.l.b16 %v583
        %v1066 = vunpack.c.h.b16 %v583
        %v1067 = vunpack.c.l.b16 %v584
        %v1068 = vunpack.c.h.b16 %v584
        %v1069 = vunpack.c.l.b16 %v585
        %v1070 = vunpack.c.h.b16 %v585
        %v1071 = vunpack.c.l.b16 %v586
        %v1072 = vunpack.c.h.b16 %v586
        %v1073 = vunpack.c.l.b16 %v587
        %v1074 = vunpack.c.h.b16 %v587
        %v1075 = vunpack.c.l.b16 %v588
        %v1076 = vunpack.c.h.b16 %v588
        %v1077 = vunpack.c.l.b16 %v589
        %v1078 = vunpack.c.h.b16 %v589
        %v1079 = vunpack.c.l.b16 %v590
        %v1080 = vunpack.c.h.b16 %v590
        %v1081 = vunpack.c.l.b16 %v591
        %v1082 = vunpack.c.h.b16 %v591
        %v1083 = vunpack.c.l.b16 %v592
        %v1084 = vunpack.c.h.b16 %v592
        %v1085 = vunpack.c.l.b16 %v593
        %v1086 = vunpack.c.h.b16 %v593
        %v1087 = vunpack.c.l.b16 %v594
        %v1088 = vunpack.c.h.b16 %v594
        %v1089 = vunpack.c.l.b16 %v595
        %v1090 = vunpack.c.h.b16 %v595
        %v1091 = vunpack.c.l.b16 %v596
        %v1092 = vunpack.c.h.b16 %v596
        %v1093 = vunpack.c.l.b16 %v597
        %v1094 = vunpack.c.h.b16 %v597
        %v1095 = vunpack.c.l.b16 %v598
        %v1096 = vunpack.c.h.b16 %v598
        %v1097 = vunpack.c.l.b16 %v599
        %v1098 = vunpack.c.h.b16 %v599
        %v1099 = vunpack.c.l.b16 %v600
        %v1100 = vunpack.c.h.b16 %v600
        %v1101 = vunpack.c.l.b16 %v601
        %v1102 = vunpack.c.h.b16 %v601
        %v1103 = vunpack.c.l.b16 %v602
        %v1104 = vunpack.c.h.b16 %v602
        %v1105 = vunpack.c.l.b16 %v603
        %v1106 = vunpack.c.h.b16 %v603
        %v1107 = vunpack.c.l.b16 %v604
        %v1108 = vunpack.c.h.b16 %v604
        %v1109 = vunpack.c.l.b16 %v605
        %v1110 = vunpack.c.h.b16 %v605
        %v1111 = vunpack.c.l.b16 %v606
        %v1112 = vunpack.c.h.b16 %v606
        %v1113 = vunpack.c.l.b16 %v607
        %v1114 = vunpack.c.h.b16 %v607
        %v1115 = vunpack.c.l.b16 %v608
        %v1116 = vunpack.c.h.b16 %v608
        %v1117 = vunpack.c.l.b16 %v609
        %v1118 = vunpack.c.h.b16 %v609
        %v1119 = vunpack.c.l.b16 %v610
        %v1120 = vunpack.c.h.b16 %v610
        %v1121 = vunpack.c.l.b16 %v611
        %v1122 = vunpack.c.h.b16 %v611
        %v1123 = vunpack.c.l.b16 %v612
        %v1124 = vunpack.c.h.b16 %v612
        %v1125 = vunpack.c.l.b16 %v613
        %v1126 = vunpack.c.h.b16 %v613
        %v1127 = vunpack.c.l.b16 %v614
        %v1128 = vunpack.c.h.b16 %v614
        %v1129 = vunpack.c.l.b16 %v615
        %v1130 = vunpack.c.h.b16 %v615
        %v1131 = vunpack.c.l.b16 %v616
        %v1132 = vunpack.c.h.b16 %v616
        %v1133 = vunpack.c.l.b16 %v617
        %v1134 = vunpack.c.h.b16 %v617
        %v1135 = vunpack.c.l.b16 %v618
        %v1136 = vunpack.c.h.b16 %v618
        %v1137 = vunpack.c.l.b16 %v619
        %v1138 = vunpack.c.h.b16 %v619
        %v1139 = vunpack.c.l.b16 %v620
        %v1140 = vunpack.c.h.b16 %v620
        %v1141 = vunpack.c.l.b16 %v621
        %v1142 = vunpack.c.h.b16 %v621
        %v1143 = vunpack.c.l.b16 %v622
        %v1144 = vunpack.c.h.b16 %v622
        %v1145 = vunpack.c.l.b16 %v623
        %v1146 = vunpack.c.h.b16 %v623
        %v1147 = vunpack.c.l.b16 %v624
        %v1148 = vunpack.c.h.b16 %v624
        %v1149 = vunpack.c.l.b16 %v625
        %v1150 = vunpack.c.h.b16 %v625
        %v1151 = vunpack.c.l.b16 %v626
        %v1152 = vunpack.c.h.b16 %v626
        %v1153 = vunpack.c.l.b16 %v627
        %v1154 = vunpack.c.h.b16 %v627
        %v1155 = vunpack.c.l.b16 %v628
        %v1156 = vunpack.c.h.b16 %v628
        %v1157 = vunpack.c.l.b16 %v629
        %v1158 = vunpack.c.h.b16 %v629
        %v1159 = vunpack.c.l.b16 %v630
        %v1160 = vunpack.c.h.b16 %v630
        %v1161 = vunpack.c.l.b16 %v631
        %v1162 = vunpack.c.h.b16 %v631
        %v1163 = vunpack.c.l.b16 %v632
        %v1164 = vunpack.c.h.b16 %v632
        %v1165 = vunpack.c.l.b16 %v633
        %v1166 = vunpack.c.h.b16 %v633
        %v1167 = vunpack.c.l.b16 %v634
        %v1168 = vunpack.c.h.b16 %v634
        %v1169 = vunpack.c.l.b16 %v635
        %v1170 = vunpack.c.h.b16 %v635
        %v1171 = vunpack.c.l.b16 %v636
        %v1172 = vunpack.c.h.b16 %v636
        %v1173 = vunpack.c.l.b16 %v637
        %v1174 = vunpack.c.h.b16 %v637
        %v1175 = vunpack.c.l.b16 %v638
        %v1176 = vunpack.c.h.b16 %v638
        %v1177 = vunpack.c.l.b16 %v639
        %v1178 = vunpack.c.h.b16 %v639
        %v1179 = vunpack.c.l.b16 %v640
        %v1180 = vunpack.c.h.b16 %v640
        %v1181 = vunpack.c.l.b16 %v641
        %v1182 = vunpack.c.h.b16 %v641
        %v1183 = vunpack.c.l.b16 %v642
        %v1184 = vunpack.c.h.b16 %v642
        %v1185 = vunpack.c.l.b16 %v643
        %v1186 = vunpack.c.h.b16 %v643
        %v1187 = vunpack.c.l.b16 %v644
        %v1188 = vunpack.c.h.b16 %v644
        %v1189 = vpack.c.b16 %v937, %v933
        %v1190 = vpack.c.b16 %v938, %v934
        %v1191 = vpack.c.b16 %v939, %v935
        %v1192 = vpack.c.b16 %v940, %v936
        %v1193 = vpack.c.b16 %v945, %v941
        %v1194 = vpack.c.b16 %v946, %v942
        %v1195 = vpack.c.b16 %v947, %v943
        %v1196 = vpack.c.b16 %v948, %v944
        %v1197 = vpack.c.b16 %v953, %v949
        %v1198 = vpack.c.b16 %v954, %v950
        %v1199 = vpack.c.b16 %v955, %v951
        %v1200 = vpack.c.b16 %v956, %v952
        %v1201 = vpack.c.b16 %v961, %v957
        %v1202 = vpack.c.b16 %v962, %v958
        %v1203 = vpack.c.b16 %v963, %v959
        %v1204 = vpack.c.b16 %v964, %v960
        %v1205 = vpack.c.b16 %v969, %v965
        %v1206 = vpack.c.b16 %v970, %v966
        %v1207 = vpack.c.b16 %v971, %v967
        %v1208 = vpack.c.b16 %v972, %v968
        %v1209 = vpack.c.b16 %v977, %v973
        %v1210 = vpack.c.b16 %v978, %v974
        %v1211 = vpack.c.b16 %v979, %v975
        %v1212 = vpack.c.b16 %v980, %v976
        %v1213 = vpack.c.b16 %v985, %v981
        %v1214 = vpack.c.b16 %v986, %v982
        %v1215 = vpack.c.b16 %v987, %v983
        %v1216 = vpack.c.b16 %v988, %v984
        %v1217 = vpack.c.b16 %v993, %v989
        %v1218 = vpack.c.b16 %v994, %v990
        %v1219 = vpack.c.b16 %v995, %v991
        %v1220 = vpack.c.b16 %v996, %v992
        %v1221 = vpack.c.b16 %v1001, %v997
        %v1222 = vpack.c.b16 %v1002, %v998
        %v1223 = vpack.c.b16 %v1003, %v999
        %v1224 = vpack.c.b16 %v1004, %v1000
        %v1225 = vpack.c.b16 %v1009, %v1005
        %v1226 = vpack.c.b16 %v1010, %v1006
        %v1227 = vpack.c.b16 %v1011, %v1007
        %v1228 = vpack.c.b16 %v1012, %v1008
        %v1229 = vpack.c.b16 %v1017, %v1013
        %v1230 = vpack.c.b16 %v1018, %v1014
        %v1231 = vpack.c.b16 %v1019, %v1015
        %v1232 = vpack.c.b16 %v1020, %v1016
        %v1233 = vpack.c.b16 %v1025, %v1021
        %v1234 = vpack.c.b16 %v1026, %v1022
        %v1235 = vpack.c.b16 %v1027, %v1023
        %v1236 = vpack.c.b16 %v1028, %v1024
        %v1237 = vpack.c.b16 %v1033, %v1029
        %v1238 = vpack.c.b16 %v1034, %v1030
        %v1239 = vpack.c.b16 %v1035, %v1031
        %v1240 = vpack.c.b16 %v1036, %v1032
        %v1241 = vpack.c.b16 %v1041, %v1037
        %v1242 = vpack.c.b16 %v1042, %v1038
        %v1243 = vpack.c.b16 %v1043, %v1039
        %v1244 = vpack.c.b16 %v1044, %v1040
        %v1245 = vpack.c.b16 %v1049, %v1045
        %v1246 = vpack.c.b16 %v1050, %v1046
        %v1247 = vpack.c.b16 %v1051, %v1047
        %v1248 = vpack.c.b16 %v1052, %v1048
        %v1249 = vpack.c.b16 %v1057, %v1053
        %v1250 = vpack.c.b16 %v1058, %v1054
        %v1251 = vpack.c.b16 %v1059, %v1055
        %v1252 = vpack.c.b16 %v1060, %v1056
        %v1253 = vpack.c.b16 %v1065, %v1061
        %v1254 = vpack.c.b16 %v1066, %v1062
        %v1255 = vpack.c.b16 %v1067, %v1063
        %v1256 = vpack.c.b16 %v1068, %v1064
        %v1257 = vpack.c.b16 %v1073, %v1069
        %v1258 = vpack.c.b16 %v1074, %v1070
        %v1259 = vpack.c.b16 %v1075, %v1071
        %v1260 = vpack.c.b16 %v1076, %v1072
        %v1261 = vpack.c.b16 %v1081, %v1077
        %v1262 = vpack.c.b16 %v1082, %v1078
        %v1263 = vpack.c.b16 %v1083, %v1079
        %v1264 = vpack.c.b16 %v1084, %v1080
        %v1265 = vpack.c.b16 %v1089, %v1085
        %v1266 = vpack.c.b16 %v1090, %v1086
        %v1267 = vpack.c.b16 %v1091, %v1087
        %v1268 = vpack.c.b16 %v1092, %v1088
        %v1269 = vpack.c.b16 %v1097, %v1093
        %v1270 = vpack.c.b16 %v1098, %v1094
        %v1271 = vpack.c.b16 %v1099, %v1095
        %v1272 = vpack.c.b16 %v1100, %v1096
        %v1273 = vpack.c.b16 %v1105, %v1101
        %v1274 = vpack.c.b16 %v1106, %v1102
        %v1275 = vpack.c.b16 %v1107, %v1103
        %v1276 = vpack.c.b16 %v1108, %v1104
        %v1277 = vpack.c.b16 %v1113, %v1109
        %v1278 = vpack.c.b16 %v1114, %v1110
        %v1279 = vpack.c.b16 %v1115, %v1111
        %v1280 = vpack.c.b16 %v1116, %v1112
        %v1281 = vpack.c.b16 %v1121, %v1117
        %v1282 = vpack.c.b16 %v1122, %v1118
        %v1283 = vpack.c.b16 %v1123, %v1119
        %v1284 = vpack.c.b16 %v1124, %v1120
        %v1285 = vpack.c.b16 %v1129, %v1125
        %v1286 = vpack.c.b16 %v1130, %v1126
        %v1287 = vpack.c.b16 %v1131, %v1127
        %v1288 = vpack.c.b16 %v1132, %v1128
        %v1289 = vpack.c.b16 %v1137, %v1133
        %v1290 = vpack.c.b16 %v1138, %v1134
        %v1291 = vpack.c.b16 %v1139, %v1135
        %v1292 = vpack.c.b16 %v1140, %v1136
        %v1293 = vpack.c.b16 %v1145, %v1141
        %v1294 = vpack.c.b16 %v1146, %v1142
        %v1295 = vpack.c.b16 %v1147, %v1143
        %v1296 = vpack.c.b16 %v1148, %v1144
        %v1297 = vpack.c.b16 %v1153, %v1149
        %v1298 = vpack.c.b16 %v1154, %v1150
        %v1299 = vpack.c.b16 %v1155, %v1151
        %v1300 = vpack.c.b16 %v1156, %v1152
        %v1301 = vpack.c.b16 %v1161, %v1157
        %v1302 = vpack.c.b16 %v1162, %v1158
        %v1303 = vpack.c.b16 %v1163, %v1159
        %v1304 = vpack.c.b16 %v1164, %v1160
        %v1305 = vpack.c.b16 %v1169, %v1165
        %v1306 = vpack.c.b16 %v1170, %v1166
        %v1307 = vpack.c.b16 %v1171, %v1167
        %v1308 = vpack.c.b16 %v1172, %v1168
        %v1309 = vpack.c.b16 %v1177, %v1173
        %v1310 = vpack.c.b16 %v1178, %v1174
        %v1311 = vpack.c.b16 %v1179, %v1175
        %v1312 = vpack.c.b16 %v1180, %v1176
        %v1313 = vpack.c.b16 %v1185, %v1181
        %v1314 = vpack.c.b16 %v1186, %v1182
        %v1315 = vpack.c.b16 %v1187, %v1183
        %v1316 = vpack.c.b16 %v1188, %v1184
        %1445 = vmatprep.subr.bf16.mxu0 %v1190
        %1446 = vmatpush1.bf16.msra.mxu0 %v1189
        %1447 = vmatprep.subr.bf16.mxu0 %v1194
        %1448 = vmatpush1.bf16.msra.mxu0 %v1193
        %1449 = vmatprep.subr.bf16.mxu0 %v1198
        %1450 = vmatpush1.bf16.msra.mxu0 %v1197
        %1451 = vmatprep.subr.bf16.mxu0 %v1202
        %1452 = vmatpush1.bf16.msra.mxu0 %v1201
        %1453 = vmatprep.subr.bf16.mxu0 %v1206
        %1454 = vmatpush1.bf16.msra.mxu0 %v1205
        %1455 = vmatprep.subr.bf16.mxu0 %v1210
        %1456 = vmatpush1.bf16.msra.mxu0 %v1209
        %1457 = vmatprep.subr.bf16.mxu0 %v1214
        %1458 = vmatpush1.bf16.msra.mxu0 %v1213
        %1459 = vmatprep.subr.bf16.mxu0 %v1218
        %1460 = vmatpush1.bf16.msra.mxu0 %v1217
        %1461 = vmatprep.subr.bf16.mxu0 %v1222
        %1462 = vmatpush1.bf16.msra.mxu0 %v1221
        %1463 = vmatprep.subr.bf16.mxu0 %v1226
        %1464 = vmatpush1.bf16.msra.mxu0 %v1225
        %1465 = vmatprep.subr.bf16.mxu0 %v1230
        %1466 = vmatpush1.bf16.msra.mxu0 %v1229
        %1467 = vmatprep.subr.bf16.mxu0 %v1234
        %1468 = vmatpush1.bf16.msra.mxu0 %v1233
        %1469 = vmatprep.subr.bf16.mxu0 %v1238
        %1470 = vmatpush1.bf16.msra.mxu0 %v1237
        %1471 = vmatprep.subr.bf16.mxu0 %v1242
        %1472 = vmatpush1.bf16.msra.mxu0 %v1241
        %1473 = vmatprep.subr.bf16.mxu0 %v1246
        %1474 = vmatpush1.bf16.msra.mxu0 %v1245
        %1475 = vmatprep.subr.bf16.mxu0 %v1250
        %1476 = vmatpush1.bf16.msra.mxu0 %v1249
        %1477 = vmatprep.mubr.bf16.mxu0 %v742
        %1478 = vmatmul.mubr.bf16.gmra.mrb[0].mxu0 %v741
        %v1479 = vpop.f32.mrb[0].mxu0
        %v1480 = vadd.f32 0.0, %v1479
        %v1481 = vpop.f32.mrb[0].mxu0
        %v1482 = vadd.f32 0.0, %v1481
        %v1483 = vpop.f32.mrb[0].mxu0
        %v1484 = vadd.f32 0.0, %v1483
        %v1485 = vpop.f32.mrb[0].mxu0
        %v1486 = vadd.f32 0.0, %v1485
        %1487 = vmatprep.mubr.bf16.mxu0 %v746
        %1488 = vmatmul.mubr.bf16.gmra.mrb[0].mxu0 %v745
        %v1489 = vpop.f32.mrb[0].mxu0
        %v1490 = vadd.f32 0.0, %v1489
        %v1491 = vpop.f32.mrb[0].mxu0
        %v1492 = vadd.f32 0.0, %v1491
        %v1493 = vpop.f32.mrb[0].mxu0
        %v1494 = vadd.f32 0.0, %v1493
        %v1495 = vpop.f32.mrb[0].mxu0
        %v1496 = vadd.f32 0.0, %v1495
        %1497 = vmatprep.mubr.bf16.mxu0 %v750
        %1498 = vmatmul.mubr.bf16.gmra.mrb[0].mxu0 %v749
        %v1499 = vpop.f32.mrb[0].mxu0
        %v1500 = vadd.f32 0.0, %v1499
        %v1501 = vpop.f32.mrb[0].mxu0
        %v1502 = vadd.f32 0.0, %v1501
        %v1503 = vpop.f32.mrb[0].mxu0
        %v1504 = vadd.f32 0.0, %v1503
        %v1505 = vpop.f32.mrb[0].mxu0
        %v1506 = vadd.f32 0.0, %v1505
        %1507 = vmatprep.mubr.bf16.mxu0 %v754
        %1508 = vmatmul.mubr.bf16.gmra.mrb[0].mxu0 %v753
        %v1509 = vpop.f32.mrb[0].mxu0
        %v1510 = vadd.f32 0.0, %v1509
        %v1511 = vpop.f32.mrb[0].mxu0
        %v1512 = vadd.f32 0.0, %v1511
        %v1513 = vpop.f32.mrb[0].mxu0
        %v1514 = vadd.f32 0.0, %v1513
        %v1515 = vpop.f32.mrb[0].mxu0
        %v1516 = vadd.f32 0.0, %v1515
        %1517 = vmatprep.mubr.bf16.mxu0 %v758
        %1518 = vmatmul.mubr.bf16.gmra.mrb[0].mxu0 %v757
        %v1519 = vpop.f32.mrb[0].mxu0
        %v1520 = vadd.f32 0.0, %v1519
        %v1521 = vpop.f32.mrb[0].mxu0
        %v1522 = vadd.f32 0.0, %v1521
        %v1523 = vpop.f32.mrb[0].mxu0
        %v1524 = vadd.f32 0.0, %v1523
        %v1525 = vpop.f32.mrb[0].mxu0
        %v1526 = vadd.f32 0.0, %v1525
        %1527 = vmatprep.mubr.bf16.mxu0 %v762
        %1528 = vmatmul.mubr.bf16.gmra.mrb[0].mxu0 %v761
        %v1529 = vpop.f32.mrb[0].mxu0
        %v1530 = vadd.f32 0.0, %v1529
        %v1531 = vpop.f32.mrb[0].mxu0
        %v1532 = vadd.f32 0.0, %v1531
        %v1533 = vpop.f32.mrb[0].mxu0
        %v1534 = vadd.f32 0.0, %v1533
        %v1535 = vpop.f32.mrb[0].mxu0
        %v1536 = vadd.f32 0.0, %v1535
        %1537 = vmatprep.mubr.bf16.mxu0 %v766
        %1538 = vmatmul.mubr.bf16.gmra.mrb[0].mxu0 %v765
        %v1539 = vpop.f32.mrb[0].mxu0
        %v1540 = vadd.f32 0.0, %v1539
        %v1541 = vpop.f32.mrb[0].mxu0
        %v1542 = vadd.f32 0.0, %v1541
        %v1543 = vpop.f32.mrb[0].mxu0
        %v1544 = vadd.f32 0.0, %v1543
        %v1545 = vpop.f32.mrb[0].mxu0
        %v1546 = vadd.f32 0.0, %v1545
        %1547 = vmatprep.mubr.bf16.mxu0 %v770
        %1548 = vmatmul.mubr.bf16.gmra.mrb[0].mxu0 %v769
        %v1549 = vpop.f32.mrb[0].mxu0
        %v1550 = vadd.f32 0.0, %v1549
        %v1551 = vpop.f32.mrb[0].mxu0
        %v1552 = vadd.f32 0.0, %v1551
        %v1553 = vpop.f32.mrb[0].mxu0
        %v1554 = vadd.f32 0.0, %v1553
        %v1555 = vpop.f32.mrb[0].mxu0
        %v1556 = vadd.f32 0.0, %v1555
        %1557 = vdwg.mxu0
        %1558 = vmatprep.subr.bf16.mxu0 %v1254
        %1559 = vmatpush1.bf16.msra.mxu0 %v1253
        %1560 = vmatprep.subr.bf16.mxu0 %v1258
        %1561 = vmatpush1.bf16.msra.mxu0 %v1257
        %1562 = vmatprep.subr.bf16.mxu0 %v1262
        %1563 = vmatpush1.bf16.msra.mxu0 %v1261
        %1564 = vmatprep.subr.bf16.mxu0 %v1266
        %1565 = vmatpush1.bf16.msra.mxu0 %v1265
        %1566 = vmatprep.subr.bf16.mxu0 %v1270
        %1567 = vmatpush1.bf16.msra.mxu0 %v1269
        %1568 = vmatprep.subr.bf16.mxu0 %v1274
        %1569 = vmatpush1.bf16.msra.mxu0 %v1273
        %1570 = vmatprep.subr.bf16.mxu0 %v1278
        %1571 = vmatpush1.bf16.msra.mxu0 %v1277
        %1572 = vmatprep.subr.bf16.mxu0 %v1282
        %1573 = vmatpush1.bf16.msra.mxu0 %v1281
        %1574 = vmatprep.subr.bf16.mxu0 %v1286
        %1575 = vmatpush1.bf16.msra.mxu0 %v1285
        %1576 = vmatprep.subr.bf16.mxu0 %v1290
        %1577 = vmatpush1.bf16.msra.mxu0 %v1289
        %1578 = vmatprep.subr.bf16.mxu0 %v1294
        %1579 = vmatpush1.bf16.msra.mxu0 %v1293
        %1580 = vmatprep.subr.bf16.mxu0 %v1298
        %1581 = vmatpush1.bf16.msra.mxu0 %v1297
        %1582 = vmatprep.subr.bf16.mxu0 %v1302
        %1583 = vmatpush1.bf16.msra.mxu0 %v1301
        %1584 = vmatprep.subr.bf16.mxu0 %v1306
        %1585 = vmatpush1.bf16.msra.mxu0 %v1305
        %1586 = vmatprep.subr.bf16.mxu0 %v1310
        %1587 = vmatpush1.bf16.msra.mxu0 %v1309
        %1588 = vmatprep.subr.bf16.mxu0 %v1314
        %1589 = vmatpush1.bf16.msra.mxu0 %v1313
        %1590 = vmatprep.mubr.bf16.mxu0 %v744
        %1591 = vmatmul.mubr.bf16.gmra.mrb[0].mxu0 %v743
        %v1592 = vpop.f32.mrb[0].mxu0
        %v1593 = vadd.f32 %v1480, %v1592
        %v1594 = vpop.f32.mrb[0].mxu0
        %v1595 = vadd.f32 %v1482, %v1594
        %v1596 = vpop.f32.mrb[0].mxu0
        %v1597 = vadd.f32 %v1484, %v1596
        %v1598 = vpop.f32.mrb[0].mxu0
        %v1599 = vadd.f32 %v1486, %v1598
        %1600 = vmatprep.mubr.bf16.mxu0 %v748
        %1601 = vmatmul.mubr.bf16.gmra.mrb[0].mxu0 %v747
        %v1602 = vpop.f32.mrb[0].mxu0
        %v1603 = vadd.f32 %v1490, %v1602
        %v1604 = vpop.f32.mrb[0].mxu0
        %v1605 = vadd.f32 %v1492, %v1604
        %v1606 = vpop.f32.mrb[0].mxu0
        %v1607 = vadd.f32 %v1494, %v1606
        %v1608 = vpop.f32.mrb[0].mxu0
        %v1609 = vadd.f32 %v1496, %v1608
        %1610 = vmatprep.mubr.bf16.mxu0 %v752
        %1611 = vmatmul.mubr.bf16.gmra.mrb[0].mxu0 %v751
        %v1612 = vpop.f32.mrb[0].mxu0
        %v1613 = vadd.f32 %v1500, %v1612
        %v1614 = vpop.f32.mrb[0].mxu0
        %v1615 = vadd.f32 %v1502, %v1614
        %v1616 = vpop.f32.mrb[0].mxu0
        %v1617 = vadd.f32 %v1504, %v1616
        %v1618 = vpop.f32.mrb[0].mxu0
        %v1619 = vadd.f32 %v1506, %v1618
        %1620 = vmatprep.mubr.bf16.mxu0 %v756
        %1621 = vmatmul.mubr.bf16.gmra.mrb[0].mxu0 %v755
        %v1622 = vpop.f32.mrb[0].mxu0
        %v1623 = vadd.f32 %v1510, %v1622
        %v1624 = vpop.f32.mrb[0].mxu0
        %v1625 = vadd.f32 %v1512, %v1624
        %v1626 = vpop.f32.mrb[0].mxu0
        %v1627 = vadd.f32 %v1514, %v1626
        %v1628 = vpop.f32.mrb[0].mxu0
        %v1629 = vadd.f32 %v1516, %v1628
        %1630 = vmatprep.mubr.bf16.mxu0 %v760
        %1631 = vmatmul.mubr.bf16.gmra.mrb[0].mxu0 %v759
        %v1632 = vpop.f32.mrb[0].mxu0
        %v1633 = vadd.f32 %v1520, %v1632
        %v1634 = vpop.f32.mrb[0].mxu0
        %v1635 = vadd.f32 %v1522, %v1634
        %v1636 = vpop.f32.mrb[0].mxu0
        %v1637 = vadd.f32 %v1524, %v1636
        %v1638 = vpop.f32.mrb[0].mxu0
        %v1639 = vadd.f32 %v1526, %v1638
        %1640 = vmatprep.mubr.bf16.mxu0 %v764
        %1641 = vmatmul.mubr.bf16.gmra.mrb[0].mxu0 %v763
        %v1642 = vpop.f32.mrb[0].mxu0
        %v1643 = vadd.f32 %v1530, %v1642
        %v1644 = vpop.f32.mrb[0].mxu0
        %v1645 = vadd.f32 %v1532, %v1644
        %v1646 = vpop.f32.mrb[0].mxu0
        %v1647 = vadd.f32 %v1534, %v1646
        %v1648 = vpop.f32.mrb[0].mxu0
        %v1649 = vadd.f32 %v1536, %v1648
        %1650 = vmatprep.mubr.bf16.mxu0 %v768
        %1651 = vmatmul.mubr.bf16.gmra.mrb[0].mxu0 %v767
        %v1652 = vpop.f32.mrb[0].mxu0
        %v1653 = vadd.f32 %v1540, %v1652
        %v1654 = vpop.f32.mrb[0].mxu0
        %v1655 = vadd.f32 %v1542, %v1654
        %v1656 = vpop.f32.mrb[0].mxu0
        %v1657 = vadd.f32 %v1544, %v1656
        %v1658 = vpop.f32.mrb[0].mxu0
        %v1659 = vadd.f32 %v1546, %v1658
        %1660 = vmatprep.mubr.bf16.mxu0 %v772
        %1661 = vmatmul.mubr.bf16.gmra.mrb[0].mxu0 %v771
        %v1662 = vpop.f32.mrb[0].mxu0
        %v1663 = vadd.f32 %v1550, %v1662
        %v1664 = vpop.f32.mrb[0].mxu0
        %v1665 = vadd.f32 %v1552, %v1664
        %v1666 = vpop.f32.mrb[0].mxu0
        %v1667 = vadd.f32 %v1554, %v1666
        %v1668 = vpop.f32.mrb[0].mxu0
        %v1669 = vadd.f32 %v1556, %v1668
        %1670 = vdwg.mxu0
        %1671 = vmatprep.subr.bf16.mxu0 %v1192
        %1672 = vmatpush1.bf16.msra.mxu0 %v1191
        %1673 = vmatprep.subr.bf16.mxu0 %v1196
        %1674 = vmatpush1.bf16.msra.mxu0 %v1195
        %1675 = vmatprep.subr.bf16.mxu0 %v1200
        %1676 = vmatpush1.bf16.msra.mxu0 %v1199
        %1677 = vmatprep.subr.bf16.mxu0 %v1204
        %1678 = vmatpush1.bf16.msra.mxu0 %v1203
        %1679 = vmatprep.subr.bf16.mxu0 %v1208
        %1680 = vmatpush1.bf16.msra.mxu0 %v1207
        %1681 = vmatprep.subr.bf16.mxu0 %v1212
        %1682 = vmatpush1.bf16.msra.mxu0 %v1211
        %1683 = vmatprep.subr.bf16.mxu0 %v1216
        %1684 = vmatpush1.bf16.msra.mxu0 %v1215
        %1685 = vmatprep.subr.bf16.mxu0 %v1220
        %1686 = vmatpush1.bf16.msra.mxu0 %v1219
        %1687 = vmatprep.subr.bf16.mxu0 %v1224
        %1688 = vmatpush1.bf16.msra.mxu0 %v1223
        %1689 = vmatprep.subr.bf16.mxu0 %v1228
        %1690 = vmatpush1.bf16.msra.mxu0 %v1227
        %1691 = vmatprep.subr.bf16.mxu0 %v1232
        %1692 = vmatpush1.bf16.msra.mxu0 %v1231
        %1693 = vmatprep.subr.bf16.mxu0 %v1236
        %1694 = vmatpush1.bf16.msra.mxu0 %v1235
        %1695 = vmatprep.subr.bf16.mxu0 %v1240
        %1696 = vmatpush1.bf16.msra.mxu0 %v1239
        %1697 = vmatprep.subr.bf16.mxu0 %v1244
        %1698 = vmatpush1.bf16.msra.mxu0 %v1243
        %1699 = vmatprep.subr.bf16.mxu0 %v1248
        %1700 = vmatpush1.bf16.msra.mxu0 %v1247
        %1701 = vmatprep.subr.bf16.mxu0 %v1252
        %1702 = vmatpush1.bf16.msra.mxu0 %v1251
        %1703 = vmatprep.mubr.bf16.mxu0 %v742
        %1704 = vmatmul.mubr.bf16.gmra.mrb[0].mxu0 %v741
        %v1705 = vpop.f32.mrb[0].mxu0
        %v1706 = vadd.f32 0.0, %v1705
        %v1707 = vpop.f32.mrb[0].mxu0
        %v1708 = vadd.f32 0.0, %v1707
        %v1709 = vpop.f32.mrb[0].mxu0
        %v1710 = vadd.f32 0.0, %v1709
        %v1711 = vpop.f32.mrb[0].mxu0
        %v1712 = vadd.f32 0.0, %v1711
        %1713 = vmatprep.mubr.bf16.mxu0 %v746
        %1714 = vmatmul.mubr.bf16.gmra.mrb[0].mxu0 %v745
        %v1715 = vpop.f32.mrb[0].mxu0
        %v1716 = vadd.f32 0.0, %v1715
        %v1717 = vpop.f32.mrb[0].mxu0
        %v1718 = vadd.f32 0.0, %v1717
        %v1719 = vpop.f32.mrb[0].mxu0
        %v1720 = vadd.f32 0.0, %v1719
        %v1721 = vpop.f32.mrb[0].mxu0
        %v1722 = vadd.f32 0.0, %v1721
        %1723 = vmatprep.mubr.bf16.mxu0 %v750
        %1724 = vmatmul.mubr.bf16.gmra.mrb[0].mxu0 %v749
        %v1725 = vpop.f32.mrb[0].mxu0
        %v1726 = vadd.f32 0.0, %v1725
        %v1727 = vpop.f32.mrb[0].mxu0
        %v1728 = vadd.f32 0.0, %v1727
        %v1729 = vpop.f32.mrb[0].mxu0
        %v1730 = vadd.f32 0.0, %v1729
        %v1731 = vpop.f32.mrb[0].mxu0
        %v1732 = vadd.f32 0.0, %v1731
        %1733 = vmatprep.mubr.bf16.mxu0 %v754
        %1734 = vmatmul.mubr.bf16.gmra.mrb[0].mxu0 %v753
        %v1735 = vpop.f32.mrb[0].mxu0
        %v1736 = vadd.f32 0.0, %v1735
        %v1737 = vpop.f32.mrb[0].mxu0
        %v1738 = vadd.f32 0.0, %v1737
        %v1739 = vpop.f32.mrb[0].mxu0
        %v1740 = vadd.f32 0.0, %v1739
        %v1741 = vpop.f32.mrb[0].mxu0
        %v1742 = vadd.f32 0.0, %v1741
        %1743 = vmatprep.mubr.bf16.mxu0 %v758
        %1744 = vmatmul.mubr.bf16.gmra.mrb[0].mxu0 %v757
        %v1745 = vpop.f32.mrb[0].mxu0
        %v1746 = vadd.f32 0.0, %v1745
        %v1747 = vpop.f32.mrb[0].mxu0
        %v1748 = vadd.f32 0.0, %v1747
        %v1749 = vpop.f32.mrb[0].mxu0
        %v1750 = vadd.f32 0.0, %v1749
        %v1751 = vpop.f32.mrb[0].mxu0
        %v1752 = vadd.f32 0.0, %v1751
        %1753 = vmatprep.mubr.bf16.mxu0 %v762
        %1754 = vmatmul.mubr.bf16.gmra.mrb[0].mxu0 %v761
        %v1755 = vpop.f32.mrb[0].mxu0
        %v1756 = vadd.f32 0.0, %v1755
        %v1757 = vpop.f32.mrb[0].mxu0
        %v1758 = vadd.f32 0.0, %v1757
        %v1759 = vpop.f32.mrb[0].mxu0
        %v1760 = vadd.f32 0.0, %v1759
        %v1761 = vpop.f32.mrb[0].mxu0
        %v1762 = vadd.f32 0.0, %v1761
        %1763 = vmatprep.mubr.bf16.mxu0 %v766
        %1764 = vmatmul.mubr.bf16.gmra.mrb[0].mxu0 %v765
        %v1765 = vpop.f32.mrb[0].mxu0
        %v1766 = vadd.f32 0.0, %v1765
        %v1767 = vpop.f32.mrb[0].mxu0
        %v1768 = vadd.f32 0.0, %v1767
        %v1769 = vpop.f32.mrb[0].mxu0
        %v1770 = vadd.f32 0.0, %v1769
        %v1771 = vpop.f32.mrb[0].mxu0
        %v1772 = vadd.f32 0.0, %v1771
        %1773 = vmatprep.mubr.bf16.mxu0 %v770
        %1774 = vmatmul.mubr.bf16.gmra.mrb[0].mxu0 %v769
        %v1775 = vpop.f32.mrb[0].mxu0
        %v1776 = vadd.f32 0.0, %v1775
        %v1777 = vpop.f32.mrb[0].mxu0
        %v1778 = vadd.f32 0.0, %v1777
        %v1779 = vpop.f32.mrb[0].mxu0
        %v1780 = vadd.f32 0.0, %v1779
        %v1781 = vpop.f32.mrb[0].mxu0
        %v1782 = vadd.f32 0.0, %v1781
        %1783 = vdwg.mxu0
        %1784 = vmatprep.subr.bf16.mxu0 %v1256
        %1785 = vmatpush1.bf16.msra.mxu0 %v1255
        %1786 = vmatprep.subr.bf16.mxu0 %v1260
        %1787 = vmatpush1.bf16.msra.mxu0 %v1259
        %1788 = vmatprep.subr.bf16.mxu0 %v1264
        %1789 = vmatpush1.bf16.msra.mxu0 %v1263
        %1790 = vmatprep.subr.bf16.mxu0 %v1268
        %1791 = vmatpush1.bf16.msra.mxu0 %v1267
        %1792 = vmatprep.subr.bf16.mxu0 %v1272
        %1793 = vmatpush1.bf16.msra.mxu0 %v1271
        %1794 = vmatprep.subr.bf16.mxu0 %v1276
        %1795 = vmatpush1.bf16.msra.mxu0 %v1275
        %1796 = vmatprep.subr.bf16.mxu0 %v1280
        %1797 = vmatpush1.bf16.msra.mxu0 %v1279
        %1798 = vmatprep.subr.bf16.mxu0 %v1284
        %1799 = vmatpush1.bf16.msra.mxu0 %v1283
        %1800 = vmatprep.subr.bf16.mxu0 %v1288
        %1801 = vmatpush1.bf16.msra.mxu0 %v1287
        %1802 = vmatprep.subr.bf16.mxu0 %v1292
        %1803 = vmatpush1.bf16.msra.mxu0 %v1291
        %1804 = vmatprep.subr.bf16.mxu0 %v1296
        %1805 = vmatpush1.bf16.msra.mxu0 %v1295
        %1806 = vmatprep.subr.bf16.mxu0 %v1300
        %1807 = vmatpush1.bf16.msra.mxu0 %v1299
        %1808 = vmatprep.subr.bf16.mxu0 %v1304
        %1809 = vmatpush1.bf16.msra.mxu0 %v1303
        %1810 = vmatprep.subr.bf16.mxu0 %v1308
        %1811 = vmatpush1.bf16.msra.mxu0 %v1307
        %1812 = vmatprep.subr.bf16.mxu0 %v1312
        %1813 = vmatpush1.bf16.msra.mxu0 %v1311
        %1814 = vmatprep.subr.bf16.mxu0 %v1316
        %1815 = vmatpush1.bf16.msra.mxu0 %v1315
        %1816 = vmatprep.mubr.bf16.mxu0 %v744
        %1817 = vmatmul.mubr.bf16.gmra.mrb[0].mxu0 %v743
        %v1818 = vpop.f32.mrb[0].mxu0
        %v1819 = vadd.f32 %v1706, %v1818
        %v1820 = vpop.f32.mrb[0].mxu0
        %v1821 = vadd.f32 %v1708, %v1820
        %v1822 = vpop.f32.mrb[0].mxu0
        %v1823 = vadd.f32 %v1710, %v1822
        %v1824 = vpop.f32.mrb[0].mxu0
        %v1825 = vadd.f32 %v1712, %v1824
        %1826 = vmatprep.mubr.bf16.mxu0 %v748
        %1827 = vmatmul.mubr.bf16.gmra.mrb[0].mxu0 %v747
        %v1828 = vpop.f32.mrb[0].mxu0
        %v1829 = vadd.f32 %v1716, %v1828
        %v1830 = vpop.f32.mrb[0].mxu0
        %v1831 = vadd.f32 %v1718, %v1830
        %v1832 = vpop.f32.mrb[0].mxu0
        %v1833 = vadd.f32 %v1720, %v1832
        %v1834 = vpop.f32.mrb[0].mxu0
        %v1835 = vadd.f32 %v1722, %v1834
        %1836 = vmatprep.mubr.bf16.mxu0 %v752
        %1837 = vmatmul.mubr.bf16.gmra.mrb[0].mxu0 %v751
        %v1838 = vpop.f32.mrb[0].mxu0
        %v1839 = vadd.f32 %v1726, %v1838
        %v1840 = vpop.f32.mrb[0].mxu0
        %v1841 = vadd.f32 %v1728, %v1840
        %v1842 = vpop.f32.mrb[0].mxu0
        %v1843 = vadd.f32 %v1730, %v1842
        %v1844 = vpop.f32.mrb[0].mxu0
        %v1845 = vadd.f32 %v1732, %v1844
        %1846 = vmatprep.mubr.bf16.mxu0 %v756
        %1847 = vmatmul.mubr.bf16.gmra.mrb[0].mxu0 %v755
        %v1848 = vpop.f32.mrb[0].mxu0
        %v1849 = vadd.f32 %v1736, %v1848
        %v1850 = vpop.f32.mrb[0].mxu0
        %v1851 = vadd.f32 %v1738, %v1850
        %v1852 = vpop.f32.mrb[0].mxu0
        %v1853 = vadd.f32 %v1740, %v1852
        %v1854 = vpop.f32.mrb[0].mxu0
        %v1855 = vadd.f32 %v1742, %v1854
        %1856 = vmatprep.mubr.bf16.mxu0 %v760
        %1857 = vmatmul.mubr.bf16.gmra.mrb[0].mxu0 %v759
        %v1858 = vpop.f32.mrb[0].mxu0
        %v1859 = vadd.f32 %v1746, %v1858
        %v1860 = vpop.f32.mrb[0].mxu0
        %v1861 = vadd.f32 %v1748, %v1860
        %v1862 = vpop.f32.mrb[0].mxu0
        %v1863 = vadd.f32 %v1750, %v1862
        %v1864 = vpop.f32.mrb[0].mxu0
        %v1865 = vadd.f32 %v1752, %v1864
        %1866 = vmatprep.mubr.bf16.mxu0 %v764
        %1867 = vmatmul.mubr.bf16.gmra.mrb[0].mxu0 %v763
        %v1868 = vpop.f32.mrb[0].mxu0
        %v1869 = vadd.f32 %v1756, %v1868
        %v1870 = vpop.f32.mrb[0].mxu0
        %v1871 = vadd.f32 %v1758, %v1870
        %v1872 = vpop.f32.mrb[0].mxu0
        %v1873 = vadd.f32 %v1760, %v1872
        %v1874 = vpop.f32.mrb[0].mxu0
        %v1875 = vadd.f32 %v1762, %v1874
        %1876 = vmatprep.mubr.bf16.mxu0 %v768
        %1877 = vmatmul.mubr.bf16.gmra.mrb[0].mxu0 %v767
        %v1878 = vpop.f32.mrb[0].mxu0
        %v1879 = vadd.f32 %v1766, %v1878
        %v1880 = vpop.f32.mrb[0].mxu0
        %v1881 = vadd.f32 %v1768, %v1880
        %v1882 = vpop.f32.mrb[0].mxu0
        %v1883 = vadd.f32 %v1770, %v1882
        %v1884 = vpop.f32.mrb[0].mxu0
        %v1885 = vadd.f32 %v1772, %v1884
        %1886 = vmatprep.mubr.bf16.mxu0 %v772
        %1887 = vmatmul.mubr.bf16.gmra.mrb[0].mxu0 %v771
        %v1888 = vpop.f32.mrb[0].mxu0
        %v1889 = vadd.f32 %v1776, %v1888
        %v1890 = vpop.f32.mrb[0].mxu0
        %v1891 = vadd.f32 %v1778, %v1890
        %v1892 = vpop.f32.mrb[0].mxu0
        %v1893 = vadd.f32 %v1780, %v1892
        %v1894 = vpop.f32.mrb[0].mxu0
        %v1895 = vadd.f32 %v1782, %v1894
        %1896 = vdwg.mxu0
        %v1897 = vadd.f32 %v421, %v1593
        %v1898 = vadd.f32 %v422, %v1595
        %v1899 = vadd.f32 %v423, %v1819
        %v1900 = vadd.f32 %v424, %v1821
        %v1901 = vadd.f32 %v425, %v1597
        %v1902 = vadd.f32 %v426, %v1599
        %v1903 = vadd.f32 %v427, %v1823
        %v1904 = vadd.f32 %v428, %v1825
        %v1905 = vadd.f32 %v429, %v1603
        %v1906 = vadd.f32 %v430, %v1605
        %v1907 = vadd.f32 %v431, %v1829
        %v1908 = vadd.f32 %v432, %v1831
        %v1909 = vadd.f32 %v433, %v1607
        %v1910 = vadd.f32 %v434, %v1609
        %v1911 = vadd.f32 %v435, %v1833
        %v1912 = vadd.f32 %v436, %v1835
        %v1913 = vadd.f32 %v437, %v1613
        %v1914 = vadd.f32 %v438, %v1615
        %v1915 = vadd.f32 %v439, %v1839
        %v1916 = vadd.f32 %v440, %v1841
        %v1917 = vadd.f32 %v441, %v1617
        %v1918 = vadd.f32 %v442, %v1619
        %v1919 = vadd.f32 %v443, %v1843
        %v1920 = vadd.f32 %v444, %v1845
        %v1921 = vadd.f32 %v445, %v1623
        %v1922 = vadd.f32 %v446, %v1625
        %v1923 = vadd.f32 %v447, %v1849
        %v1924 = vadd.f32 %v448, %v1851
        %v1925 = vadd.f32 %v449, %v1627
        %v1926 = vadd.f32 %v450, %v1629
        %v1927 = vadd.f32 %v451, %v1853
        %v1928 = vadd.f32 %v452, %v1855
        %v1929 = vadd.f32 %v453, %v1633
        %v1930 = vadd.f32 %v454, %v1635
        %v1931 = vadd.f32 %v455, %v1859
        %v1932 = vadd.f32 %v456, %v1861
        %v1933 = vadd.f32 %v457, %v1637
        %v1934 = vadd.f32 %v458, %v1639
        %v1935 = vadd.f32 %v459, %v1863
        %v1936 = vadd.f32 %v460, %v1865
        %v1937 = vadd.f32 %v461, %v1643
        %v1938 = vadd.f32 %v462, %v1645
        %v1939 = vadd.f32 %v463, %v1869
        %v1940 = vadd.f32 %v464, %v1871
        %v1941 = vadd.f32 %v465, %v1647
        %v1942 = vadd.f32 %v466, %v1649
        %v1943 = vadd.f32 %v467, %v1873
        %v1944 = vadd.f32 %v468, %v1875
        %v1945 = vadd.f32 %v469, %v1653
        %v1946 = vadd.f32 %v470, %v1655
        %v1947 = vadd.f32 %v471, %v1879
        %v1948 = vadd.f32 %v472, %v1881
        %v1949 = vadd.f32 %v473, %v1657
        %v1950 = vadd.f32 %v474, %v1659
        %v1951 = vadd.f32 %v475, %v1883
        %v1952 = vadd.f32 %v476, %v1885
        %v1953 = vadd.f32 %v477, %v1663
        %v1954 = vadd.f32 %v478, %v1665
        %v1955 = vadd.f32 %v479, %v1889
        %v1956 = vadd.f32 %v480, %v1891
        %v1957 = vadd.f32 %v481, %v1667
        %v1958 = vadd.f32 %v482, %v1669
        %v1959 = vadd.f32 %v483, %v1893
        %v1960 = vadd.f32 %v484, %v1895
        %1961 = vst [vmem:[#allocation2] sm:$0xff] %v1897
        %1962 = vst [vmem:[#allocation2 + $0x8] sm:$0xff] %v1898
        %1963 = vst [vmem:[#allocation2 + $0x10] sm:$0xff] %v1899
        %1964 = vst [vmem:[#allocation2 + $0x18] sm:$0xff] %v1900
        %1965 = vst [vmem:[#allocation2 + $0x20] sm:$0xff] %v1901
        %1966 = vst [vmem:[#allocation2 + $0x28] sm:$0xff] %v1902
        %1967 = vst [vmem:[#allocation2 + $0x30] sm:$0xff] %v1903
        %1968 = vst [vmem:[#allocation2 + $0x38] sm:$0xff] %v1904
        %1969 = vst [vmem:[#allocation2 + $0x40] sm:$0xff] %v1905
        %1970 = vst [vmem:[#allocation2 + $0x48] sm:$0xff] %v1906
        %1971 = vst [vmem:[#allocation2 + $0x50] sm:$0xff] %v1907
        %1972 = vst [vmem:[#allocation2 + $0x58] sm:$0xff] %v1908
        %1973 = vst [vmem:[#allocation2 + $0x60] sm:$0xff] %v1909
        %1974 = vst [vmem:[#allocation2 + $0x68] sm:$0xff] %v1910
        %1975 = vst [vmem:[#allocation2 + $0x70] sm:$0xff] %v1911
        %1976 = vst [vmem:[#allocation2 + $0x78] sm:$0xff] %v1912
        %1977 = vst [vmem:[#allocation2 + $0x80] sm:$0xff] %v1913
        %1978 = vst [vmem:[#allocation2 + $0x88] sm:$0xff] %v1914
        %1979 = vst [vmem:[#allocation2 + $0x90] sm:$0xff] %v1915
        %1980 = vst [vmem:[#allocation2 + $0x98] sm:$0xff] %v1916
        %1981 = vst [vmem:[#allocation2 + $0xa0] sm:$0xff] %v1917
        %1982 = vst [vmem:[#allocation2 + $0xa8] sm:$0xff] %v1918
        %1983 = vst [vmem:[#allocation2 + $0xb0] sm:$0xff] %v1919
        %1984 = vst [vmem:[#allocation2 + $0xb8] sm:$0xff] %v1920
        %1985 = vst [vmem:[#allocation2 + $0xc0] sm:$0xff] %v1921
        %1986 = vst [vmem:[#allocation2 + $0xc8] sm:$0xff] %v1922
        %1987 = vst [vmem:[#allocation2 + $0xd0] sm:$0xff] %v1923
        %1988 = vst [vmem:[#allocation2 + $0xd8] sm:$0xff] %v1924
        %1989 = vst [vmem:[#allocation2 + $0xe0] sm:$0xff] %v1925
        %1990 = vst [vmem:[#allocation2 + $0xe8] sm:$0xff] %v1926
        %1991 = vst [vmem:[#allocation2 + $0xf0] sm:$0xff] %v1927
        %1992 = vst [vmem:[#allocation2 + $0xf8] sm:$0xff] %v1928
        %1993 = vst [vmem:[#allocation2 + $0x100] sm:$0xff] %v1929
        %1994 = vst [vmem:[#allocation2 + $0x108] sm:$0xff] %v1930
        %1995 = vst [vmem:[#allocation2 + $0x110] sm:$0xff] %v1931
        %1996 = vst [vmem:[#allocation2 + $0x118] sm:$0xff] %v1932
        %1997 = vst [vmem:[#allocation2 + $0x120] sm:$0xff] %v1933
        %1998 = vst [vmem:[#allocation2 + $0x128] sm:$0xff] %v1934
        %1999 = vst [vmem:[#allocation2 + $0x130] sm:$0xff] %v1935
        %2000 = vst [vmem:[#allocation2 + $0x138] sm:$0xff] %v1936
        %2001 = vst [vmem:[#allocation2 + $0x140] sm:$0xff] %v1937
        %2002 = vst [vmem:[#allocation2 + $0x148] sm:$0xff] %v1938
        %2003 = vst [vmem:[#allocation2 + $0x150] sm:$0xff] %v1939
        %2004 = vst [vmem:[#allocation2 + $0x158] sm:$0xff] %v1940
        %2005 = vst [vmem:[#allocation2 + $0x160] sm:$0xff] %v1941
        %2006 = vst [vmem:[#allocation2 + $0x168] sm:$0xff] %v1942
        %2007 = vst [vmem:[#allocation2 + $0x170] sm:$0xff] %v1943
        %2008 = vst [vmem:[#allocation2 + $0x178] sm:$0xff] %v1944
        %2009 = vst [vmem:[#allocation2 + $0x180] sm:$0xff] %v1945
        %2010 = vst [vmem:[#allocation2 + $0x188] sm:$0xff] %v1946
        %2011 = vst [vmem:[#allocation2 + $0x190] sm:$0xff] %v1947
        %2012 = vst [vmem:[#allocation2 + $0x198] sm:$0xff] %v1948
        %2013 = vst [vmem:[#allocation2 + $0x1a0] sm:$0xff] %v1949
        %2014 = vst [vmem:[#allocation2 + $0x1a8] sm:$0xff] %v1950
        %2015 = vst [vmem:[#allocation2 + $0x1b0] sm:$0xff] %v1951
        %2016 = vst [vmem:[#allocation2 + $0x1b8] sm:$0xff] %v1952
        %2017 = vst [vmem:[#allocation2 + $0x1c0] sm:$0xff] %v1953
        %2018 = vst [vmem:[#allocation2 + $0x1c8] sm:$0xff] %v1954
        %2019 = vst [vmem:[#allocation2 + $0x1d0] sm:$0xff] %v1955
        %2020 = vst [vmem:[#allocation2 + $0x1d8] sm:$0xff] %v1956
        %2021 = vst [vmem:[#allocation2 + $0x1e0] sm:$0xff] %v1957
        %2022 = vst [vmem:[#allocation2 + $0x1e8] sm:$0xff] %v1958
        %2023 = vst [vmem:[#allocation2 + $0x1f0] sm:$0xff] %v1959
        %2024 = vst [vmem:[#allocation2 + $0x1f8] sm:$0xff] %v1960
        %p2025 = scmp.eq.s32.totalorder %s21, 1
        // Predicated region
        $region60: #{_lambda_.6} parent=50 // pred_check
          %p2026 = pneg %p2025
        $region61: #{_lambda_.6} parent=50 // pred_check_branch
          %2028 = sbr.rel (%p2026) target = $region63
        $region62: #{_lambda_.6} parent=50 // pred_region
          %v2029 = vld [vmem:[#allocation2] sm:$0xff]
          %v2030 = vld [vmem:[#allocation2 + $0x8] sm:$0xff]
          %v2031 = vld [vmem:[#allocation2 + $0x10] sm:$0xff]
          %v2032 = vld [vmem:[#allocation2 + $0x18] sm:$0xff]
          %v2033 = vld [vmem:[#allocation2 + $0x20] sm:$0xff]
          %v2034 = vld [vmem:[#allocation2 + $0x28] sm:$0xff]
          %v2035 = vld [vmem:[#allocation2 + $0x30] sm:$0xff]
          %v2036 = vld [vmem:[#allocation2 + $0x38] sm:$0xff]
          %v2037 = vld [vmem:[#allocation2 + $0x40] sm:$0xff]
          %v2038 = vld [vmem:[#allocation2 + $0x48] sm:$0xff]
          %v2039 = vld [vmem:[#allocation2 + $0x50] sm:$0xff]
          %v2040 = vld [vmem:[#allocation2 + $0x58] sm:$0xff]
          %v2041 = vld [vmem:[#allocation2 + $0x60] sm:$0xff]
          %v2042 = vld [vmem:[#allocation2 + $0x68] sm:$0xff]
          %v2043 = vld [vmem:[#allocation2 + $0x70] sm:$0xff]
          %v2044 = vld [vmem:[#allocation2 + $0x78] sm:$0xff]
          %v2045 = vld [vmem:[#allocation2 + $0x80] sm:$0xff]
          %v2046 = vld [vmem:[#allocation2 + $0x88] sm:$0xff]
          %v2047 = vld [vmem:[#allocation2 + $0x90] sm:$0xff]
          %v2048 = vld [vmem:[#allocation2 + $0x98] sm:$0xff]
          %v2049 = vld [vmem:[#allocation2 + $0xa0] sm:$0xff]
          %v2050 = vld [vmem:[#allocation2 + $0xa8] sm:$0xff]
          %v2051 = vld [vmem:[#allocation2 + $0xb0] sm:$0xff]
          %v2052 = vld [vmem:[#allocation2 + $0xb8] sm:$0xff]
          %v2053 = vld [vmem:[#allocation2 + $0xc0] sm:$0xff]
          %v2054 = vld [vmem:[#allocation2 + $0xc8] sm:$0xff]
          %v2055 = vld [vmem:[#allocation2 + $0xd0] sm:$0xff]
          %v2056 = vld [vmem:[#allocation2 + $0xd8] sm:$0xff]
          %v2057 = vld [vmem:[#allocation2 + $0xe0] sm:$0xff]
          %v2058 = vld [vmem:[#allocation2 + $0xe8] sm:$0xff]
          %v2059 = vld [vmem:[#allocation2 + $0xf0] sm:$0xff]
          %v2060 = vld [vmem:[#allocation2 + $0xf8] sm:$0xff]
          %v2061 = vld [vmem:[#allocation2 + $0x100] sm:$0xff]
          %v2062 = vld [vmem:[#allocation2 + $0x108] sm:$0xff]
          %v2063 = vld [vmem:[#allocation2 + $0x110] sm:$0xff]
          %v2064 = vld [vmem:[#allocation2 + $0x118] sm:$0xff]
          %v2065 = vld [vmem:[#allocation2 + $0x120] sm:$0xff]
          %v2066 = vld [vmem:[#allocation2 + $0x128] sm:$0xff]
          %v2067 = vld [vmem:[#allocation2 + $0x130] sm:$0xff]
          %v2068 = vld [vmem:[#allocation2 + $0x138] sm:$0xff]
          %v2069 = vld [vmem:[#allocation2 + $0x140] sm:$0xff]
          %v2070 = vld [vmem:[#allocation2 + $0x148] sm:$0xff]
          %v2071 = vld [vmem:[#allocation2 + $0x150] sm:$0xff]
          %v2072 = vld [vmem:[#allocation2 + $0x158] sm:$0xff]
          %v2073 = vld [vmem:[#allocation2 + $0x160] sm:$0xff]
          %v2074 = vld [vmem:[#allocation2 + $0x168] sm:$0xff]
          %v2075 = vld [vmem:[#allocation2 + $0x170] sm:$0xff]
          %v2076 = vld [vmem:[#allocation2 + $0x178] sm:$0xff]
          %v2077 = vld [vmem:[#allocation2 + $0x180] sm:$0xff]
          %v2078 = vld [vmem:[#allocation2 + $0x188] sm:$0xff]
          %v2079 = vld [vmem:[#allocation2 + $0x190] sm:$0xff]
          %v2080 = vld [vmem:[#allocation2 + $0x198] sm:$0xff]
          %v2081 = vld [vmem:[#allocation2 + $0x1a0] sm:$0xff]
          %v2082 = vld [vmem:[#allocation2 + $0x1a8] sm:$0xff]
          %v2083 = vld [vmem:[#allocation2 + $0x1b0] sm:$0xff]
          %v2084 = vld [vmem:[#allocation2 + $0x1b8] sm:$0xff]
          %v2085 = vld [vmem:[#allocation2 + $0x1c0] sm:$0xff]
          %v2086 = vld [vmem:[#allocation2 + $0x1c8] sm:$0xff]
          %v2087 = vld [vmem:[#allocation2 + $0x1d0] sm:$0xff]
          %v2088 = vld [vmem:[#allocation2 + $0x1d8] sm:$0xff]
          %v2089 = vld [vmem:[#allocation2 + $0x1e0] sm:$0xff]
          %v2090 = vld [vmem:[#allocation2 + $0x1e8] sm:$0xff]
          %v2091 = vld [vmem:[#allocation2 + $0x1f0] sm:$0xff]
          %v2092 = vld [vmem:[#allocation2 + $0x1f8] sm:$0xff]
          %v2093 = vld [vmem:[%s339] sm:$0xf]
          %v2095 = vlaneseq
          %v2096 = vshrl.u32 %v2095, 7
          %v2097 = vsub.s32 0, %v2096
          %v2098 = vrot.slane %v2093, %v2097
          %v2099 = vlaneseq
          %v2100 = vshrl.u32 %v2099, 7
          %v2101 = vsub.s32 1, %v2100
          %v2102 = vrot.slane %v2093, %v2101
          %v2103 = vlaneseq
          %v2104 = vshrl.u32 %v2103, 7
          %v2105 = vsub.s32 2, %v2104
          %v2106 = vrot.slane %v2093, %v2105
          %v2107 = vlaneseq
          %v2108 = vshrl.u32 %v2107, 7
          %v2109 = vsub.s32 3, %v2108
          %v2110 = vrot.slane %v2093, %v2109
          %v2115 = vadd.f32 %v2029, %v2098
          %v2116 = vadd.f32 %v2030, %v2102
          %v2117 = vadd.f32 %v2031, %v2106
          %v2118 = vadd.f32 %v2032, %v2110
          %v2119 = vadd.f32 %v2033, %v2098
          %v2120 = vadd.f32 %v2034, %v2102
          %v2121 = vadd.f32 %v2035, %v2106
          %v2122 = vadd.f32 %v2036, %v2110
          %v2123 = vadd.f32 %v2037, %v2098
          %v2124 = vadd.f32 %v2038, %v2102
          %v2125 = vadd.f32 %v2039, %v2106
          %v2126 = vadd.f32 %v2040, %v2110
          %v2127 = vadd.f32 %v2041, %v2098
          %v2128 = vadd.f32 %v2042, %v2102
          %v2129 = vadd.f32 %v2043, %v2106
          %v2130 = vadd.f32 %v2044, %v2110
          %v2131 = vadd.f32 %v2045, %v2098
          %v2132 = vadd.f32 %v2046, %v2102
          %v2133 = vadd.f32 %v2047, %v2106
          %v2134 = vadd.f32 %v2048, %v2110
          %v2135 = vadd.f32 %v2049, %v2098
          %v2136 = vadd.f32 %v2050, %v2102
          %v2137 = vadd.f32 %v2051, %v2106
          %v2138 = vadd.f32 %v2052, %v2110
          %v2139 = vadd.f32 %v2053, %v2098
          %v2140 = vadd.f32 %v2054, %v2102
          %v2141 = vadd.f32 %v2055, %v2106
          %v2142 = vadd.f32 %v2056, %v2110
          %v2143 = vadd.f32 %v2057, %v2098
          %v2144 = vadd.f32 %v2058, %v2102
          %v2145 = vadd.f32 %v2059, %v2106
          %v2146 = vadd.f32 %v2060, %v2110
          %v2147 = vadd.f32 %v2061, %v2098
          %v2148 = vadd.f32 %v2062, %v2102
          %v2149 = vadd.f32 %v2063, %v2106
          %v2150 = vadd.f32 %v2064, %v2110
          %v2151 = vadd.f32 %v2065, %v2098
          %v2152 = vadd.f32 %v2066, %v2102
          %v2153 = vadd.f32 %v2067, %v2106
          %v2154 = vadd.f32 %v2068, %v2110
          %v2155 = vadd.f32 %v2069, %v2098
          %v2156 = vadd.f32 %v2070, %v2102
          %v2157 = vadd.f32 %v2071, %v2106
          %v2158 = vadd.f32 %v2072, %v2110
          %v2159 = vadd.f32 %v2073, %v2098
          %v2160 = vadd.f32 %v2074, %v2102
          %v2161 = vadd.f32 %v2075, %v2106
          %v2162 = vadd.f32 %v2076, %v2110
          %v2163 = vadd.f32 %v2077, %v2098
          %v2164 = vadd.f32 %v2078, %v2102
          %v2165 = vadd.f32 %v2079, %v2106
          %v2166 = vadd.f32 %v2080, %v2110
          %v2167 = vadd.f32 %v2081, %v2098
          %v2168 = vadd.f32 %v2082, %v2102
          %v2169 = vadd.f32 %v2083, %v2106
          %v2170 = vadd.f32 %v2084, %v2110
          %v2171 = vadd.f32 %v2085, %v2098
          %v2172 = vadd.f32 %v2086, %v2102
          %v2173 = vadd.f32 %v2087, %v2106
          %v2174 = vadd.f32 %v2088, %v2110
          %v2175 = vadd.f32 %v2089, %v2098
          %v2176 = vadd.f32 %v2090, %v2102
          %v2177 = vadd.f32 %v2091, %v2106
          %v2178 = vadd.f32 %v2092, %v2110
          %v2179 = vmax.f32 %v2115, 0.0
          %v2180 = vmax.f32 %v2116, 0.0
          %v2181 = vmax.f32 %v2117, 0.0
          %v2182 = vmax.f32 %v2118, 0.0
          %v2183 = vmax.f32 %v2119, 0.0
          %v2184 = vmax.f32 %v2120, 0.0
          %v2185 = vmax.f32 %v2121, 0.0
          %v2186 = vmax.f32 %v2122, 0.0
          %v2187 = vmax.f32 %v2123, 0.0
          %v2188 = vmax.f32 %v2124, 0.0
          %v2189 = vmax.f32 %v2125, 0.0
          %v2190 = vmax.f32 %v2126, 0.0
          %v2191 = vmax.f32 %v2127, 0.0
          %v2192 = vmax.f32 %v2128, 0.0
          %v2193 = vmax.f32 %v2129, 0.0
          %v2194 = vmax.f32 %v2130, 0.0
          %v2195 = vmax.f32 %v2131, 0.0
          %v2196 = vmax.f32 %v2132, 0.0
          %v2197 = vmax.f32 %v2133, 0.0
          %v2198 = vmax.f32 %v2134, 0.0
          %v2199 = vmax.f32 %v2135, 0.0
          %v2200 = vmax.f32 %v2136, 0.0
          %v2201 = vmax.f32 %v2137, 0.0
          %v2202 = vmax.f32 %v2138, 0.0
          %v2203 = vmax.f32 %v2139, 0.0
          %v2204 = vmax.f32 %v2140, 0.0
          %v2205 = vmax.f32 %v2141, 0.0
          %v2206 = vmax.f32 %v2142, 0.0
          %v2207 = vmax.f32 %v2143, 0.0
          %v2208 = vmax.f32 %v2144, 0.0
          %v2209 = vmax.f32 %v2145, 0.0
          %v2210 = vmax.f32 %v2146, 0.0
          %v2211 = vmax.f32 %v2147, 0.0
          %v2212 = vmax.f32 %v2148, 0.0
          %v2213 = vmax.f32 %v2149, 0.0
          %v2214 = vmax.f32 %v2150, 0.0
          %v2215 = vmax.f32 %v2151, 0.0
          %v2216 = vmax.f32 %v2152, 0.0
          %v2217 = vmax.f32 %v2153, 0.0
          %v2218 = vmax.f32 %v2154, 0.0
          %v2219 = vmax.f32 %v2155, 0.0
          %v2220 = vmax.f32 %v2156, 0.0
          %v2221 = vmax.f32 %v2157, 0.0
          %v2222 = vmax.f32 %v2158, 0.0
          %v2223 = vmax.f32 %v2159, 0.0
          %v2224 = vmax.f32 %v2160, 0.0
          %v2225 = vmax.f32 %v2161, 0.0
          %v2226 = vmax.f32 %v2162, 0.0
          %v2227 = vmax.f32 %v2163, 0.0
          %v2228 = vmax.f32 %v2164, 0.0
          %v2229 = vmax.f32 %v2165, 0.0
          %v2230 = vmax.f32 %v2166, 0.0
          %v2231 = vmax.f32 %v2167, 0.0
          %v2232 = vmax.f32 %v2168, 0.0
          %v2233 = vmax.f32 %v2169, 0.0
          %v2234 = vmax.f32 %v2170, 0.0
          %v2235 = vmax.f32 %v2171, 0.0
          %v2236 = vmax.f32 %v2172, 0.0
          %v2237 = vmax.f32 %v2173, 0.0
          %v2238 = vmax.f32 %v2174, 0.0
          %v2239 = vmax.f32 %v2175, 0.0
          %v2240 = vmax.f32 %v2176, 0.0
          %v2241 = vmax.f32 %v2177, 0.0
          %v2242 = vmax.f32 %v2178, 0.0
          %v2243 = vpack.c.bf16 %v2183, %v2179
          %v2244 = vpack.c.bf16 %v2184, %v2180
          %v2245 = vpack.c.bf16 %v2185, %v2181
          %v2246 = vpack.c.bf16 %v2186, %v2182
          %v2247 = vpack.c.bf16 %v2191, %v2187
          %v2248 = vpack.c.bf16 %v2192, %v2188
          %v2249 = vpack.c.bf16 %v2193, %v2189
          %v2250 = vpack.c.bf16 %v2194, %v2190
          %v2251 = vpack.c.bf16 %v2199, %v2195
          %v2252 = vpack.c.bf16 %v2200, %v2196
          %v2253 = vpack.c.bf16 %v2201, %v2197
          %v2254 = vpack.c.bf16 %v2202, %v2198
          %v2255 = vpack.c.bf16 %v2207, %v2203
          %v2256 = vpack.c.bf16 %v2208, %v2204
          %v2257 = vpack.c.bf16 %v2209, %v2205
          %v2258 = vpack.c.bf16 %v2210, %v2206
          %v2259 = vpack.c.bf16 %v2215, %v2211
          %v2260 = vpack.c.bf16 %v2216, %v2212
          %v2261 = vpack.c.bf16 %v2217, %v2213
          %v2262 = vpack.c.bf16 %v2218, %v2214
          %v2263 = vpack.c.bf16 %v2223, %v2219
          %v2264 = vpack.c.bf16 %v2224, %v2220
          %v2265 = vpack.c.bf16 %v2225, %v2221
          %v2266 = vpack.c.bf16 %v2226, %v2222
          %v2267 = vpack.c.bf16 %v2231, %v2227
          %v2268 = vpack.c.bf16 %v2232, %v2228
          %v2269 = vpack.c.bf16 %v2233, %v2229
          %v2270 = vpack.c.bf16 %v2234, %v2230
          %v2271 = vpack.c.bf16 %v2239, %v2235
          %v2272 = vpack.c.bf16 %v2240, %v2236
          %v2273 = vpack.c.bf16 %v2241, %v2237
          %v2274 = vpack.c.bf16 %v2242, %v2238
          %v2307 = vunpack.c.l.b16 %v2243
          %v2308 = vunpack.c.l.b16 %v2244
          %v2309 = vunpack.c.l.b16 %v2245
          %v2310 = vunpack.c.l.b16 %v2246
          %v2311 = vunpack.c.h.b16 %v2243
          %v2312 = vunpack.c.h.b16 %v2244
          %v2313 = vunpack.c.h.b16 %v2245
          %v2314 = vunpack.c.h.b16 %v2246
          %v2315 = vunpack.c.l.b16 %v2247
          %v2316 = vunpack.c.l.b16 %v2248
          %v2317 = vunpack.c.l.b16 %v2249
          %v2318 = vunpack.c.l.b16 %v2250
          %v2319 = vunpack.c.h.b16 %v2247
          %v2320 = vunpack.c.h.b16 %v2248
          %v2321 = vunpack.c.h.b16 %v2249
          %v2322 = vunpack.c.h.b16 %v2250
          %v2323 = vunpack.c.l.b16 %v2251
          %v2324 = vunpack.c.l.b16 %v2252
          %v2325 = vunpack.c.l.b16 %v2253
          %v2326 = vunpack.c.l.b16 %v2254
          %v2327 = vunpack.c.h.b16 %v2251
          %v2328 = vunpack.c.h.b16 %v2252
          %v2329 = vunpack.c.h.b16 %v2253
          %v2330 = vunpack.c.h.b16 %v2254
          %v2331 = vunpack.c.l.b16 %v2255
          %v2332 = vunpack.c.l.b16 %v2256
          %v2333 = vunpack.c.l.b16 %v2257
          %v2334 = vunpack.c.l.b16 %v2258
          %v2335 = vunpack.c.h.b16 %v2255
          %v2336 = vunpack.c.h.b16 %v2256
          %v2337 = vunpack.c.h.b16 %v2257
          %v2338 = vunpack.c.h.b16 %v2258
          %v2339 = vunpack.c.l.b16 %v2259
          %v2340 = vunpack.c.l.b16 %v2260
          %v2341 = vunpack.c.l.b16 %v2261
          %v2342 = vunpack.c.l.b16 %v2262
          %v2343 = vunpack.c.h.b16 %v2259
          %v2344 = vunpack.c.h.b16 %v2260
          %v2345 = vunpack.c.h.b16 %v2261
          %v2346 = vunpack.c.h.b16 %v2262
          %v2347 = vunpack.c.l.b16 %v2263
          %v2348 = vunpack.c.l.b16 %v2264
          %v2349 = vunpack.c.l.b16 %v2265
          %v2350 = vunpack.c.l.b16 %v2266
          %v2351 = vunpack.c.h.b16 %v2263
          %v2352 = vunpack.c.h.b16 %v2264
          %v2353 = vunpack.c.h.b16 %v2265
          %v2354 = vunpack.c.h.b16 %v2266
          %v2355 = vunpack.c.l.b16 %v2267
          %v2356 = vunpack.c.l.b16 %v2268
          %v2357 = vunpack.c.l.b16 %v2269
          %v2358 = vunpack.c.l.b16 %v2270
          %v2359 = vunpack.c.h.b16 %v2267
          %v2360 = vunpack.c.h.b16 %v2268
          %v2361 = vunpack.c.h.b16 %v2269
          %v2362 = vunpack.c.h.b16 %v2270
          %v2363 = vunpack.c.l.b16 %v2271
          %v2364 = vunpack.c.l.b16 %v2272
          %v2365 = vunpack.c.l.b16 %v2273
          %v2366 = vunpack.c.l.b16 %v2274
          %v2367 = vunpack.c.h.b16 %v2271
          %v2368 = vunpack.c.h.b16 %v2272
          %v2369 = vunpack.c.h.b16 %v2273
          %v2370 = vunpack.c.h.b16 %v2274
          %v2371 = vpack.c.b16 %v2308, %v2307
          %v2372 = vpack.c.b16 %v2310, %v2309
          %v2373 = vpack.c.b16 %v2312, %v2311
          %v2374 = vpack.c.b16 %v2314, %v2313
          %v2375 = vpack.c.b16 %v2316, %v2315
          %v2376 = vpack.c.b16 %v2318, %v2317
          %v2377 = vpack.c.b16 %v2320, %v2319
          %v2378 = vpack.c.b16 %v2322, %v2321
          %v2379 = vpack.c.b16 %v2324, %v2323
          %v2380 = vpack.c.b16 %v2326, %v2325
          %v2381 = vpack.c.b16 %v2328, %v2327
          %v2382 = vpack.c.b16 %v2330, %v2329
          %v2383 = vpack.c.b16 %v2332, %v2331
          %v2384 = vpack.c.b16 %v2334, %v2333
          %v2385 = vpack.c.b16 %v2336, %v2335
          %v2386 = vpack.c.b16 %v2338, %v2337
          %v2387 = vpack.c.b16 %v2340, %v2339
          %v2388 = vpack.c.b16 %v2342, %v2341
          %v2389 = vpack.c.b16 %v2344, %v2343
          %v2390 = vpack.c.b16 %v2346, %v2345
          %v2391 = vpack.c.b16 %v2348, %v2347
          %v2392 = vpack.c.b16 %v2350, %v2349
          %v2393 = vpack.c.b16 %v2352, %v2351
          %v2394 = vpack.c.b16 %v2354, %v2353
          %v2395 = vpack.c.b16 %v2356, %v2355
          %v2396 = vpack.c.b16 %v2358, %v2357
          %v2397 = vpack.c.b16 %v2360, %v2359
          %v2398 = vpack.c.b16 %v2362, %v2361
          %v2399 = vpack.c.b16 %v2364, %v2363
          %v2400 = vpack.c.b16 %v2366, %v2365
          %v2401 = vpack.c.b16 %v2368, %v2367
          %v2402 = vpack.c.b16 %v2370, %v2369
          %2435 = vst [vmem:[%s350] sm:$0xff] %v2371
          %2436 = vst [vmem:[%s350 + $0x8] sm:$0xff] %v2372
          %2437 = vst [vmem:[%s350 + $0x10] sm:$0xff] %v2373
          %2438 = vst [vmem:[%s350 + $0x18] sm:$0xff] %v2374
          %2439 = vst [vmem:[%s350 + $0x20] sm:$0xff] %v2375
          %2440 = vst [vmem:[%s350 + $0x28] sm:$0xff] %v2376
          %2441 = vst [vmem:[%s350 + $0x30] sm:$0xff] %v2377
          %2442 = vst [vmem:[%s350 + $0x38] sm:$0xff] %v2378
          %2443 = vst [vmem:[%s350 + $0x40] sm:$0xff] %v2379
          %2444 = vst [vmem:[%s350 + $0x48] sm:$0xff] %v2380
          %2445 = vst [vmem:[%s350 + $0x50] sm:$0xff] %v2381
          %2446 = vst [vmem:[%s350 + $0x58] sm:$0xff] %v2382
          %2447 = vst [vmem:[%s350 + $0x60] sm:$0xff] %v2383
          %2448 = vst [vmem:[%s350 + $0x68] sm:$0xff] %v2384
          %2449 = vst [vmem:[%s350 + $0x70] sm:$0xff] %v2385
          %2450 = vst [vmem:[%s350 + $0x78] sm:$0xff] %v2386
          %2451 = vst [vmem:[%s350 + $0x80] sm:$0xff] %v2387
          %2452 = vst [vmem:[%s350 + $0x88] sm:$0xff] %v2388
          %2453 = vst [vmem:[%s350 + $0x90] sm:$0xff] %v2389
          %2454 = vst [vmem:[%s350 + $0x98] sm:$0xff] %v2390
          %2455 = vst [vmem:[%s350 + $0xa0] sm:$0xff] %v2391
          %2456 = vst [vmem:[%s350 + $0xa8] sm:$0xff] %v2392
          %2457 = vst [vmem:[%s350 + $0xb0] sm:$0xff] %v2393
          %2458 = vst [vmem:[%s350 + $0xb8] sm:$0xff] %v2394
          %2459 = vst [vmem:[%s350 + $0xc0] sm:$0xff] %v2395
          %2460 = vst [vmem:[%s350 + $0xc8] sm:$0xff] %v2396
          %2461 = vst [vmem:[%s350 + $0xd0] sm:$0xff] %v2397
          %2462 = vst [vmem:[%s350 + $0xd8] sm:$0xff] %v2398
          %2463 = vst [vmem:[%s350 + $0xe0] sm:$0xff] %v2399
          %2464 = vst [vmem:[%s350 + $0xe8] sm:$0xff] %v2400
          %2465 = vst [vmem:[%s350 + $0xf0] sm:$0xff] %v2401
          %2466 = vst [vmem:[%s350 + $0xf8] sm:$0xff] %v2402
        $region63: #{_lambda_.6} parent=50 // pred_fallthru
          _
        %s2467 = smul.u32 16, %s19
        %s2468 = smul.u32 4, %s20
        %p2469 = scmp.lt.s32.totalorder %s2467, 15
        %s2470 = scalar_select %p2469, %s2467, 15
        %p2471 = scmp.lt.s32.totalorder %s2468, 3
        %s2472 = scalar_select %p2471, %s2468, 3
        %s2473 = smul.addr %s2470, 4
        %s2474 = sadd.s32 %s2472, %s2473
        %s2475 = smul.addr %s2474, 4
        %s2476 = scalar_lea.vmem %s3, %s2475
        // Predicated region
        $region64: #{_lambda_.6} parent=50 // pred_check
          %p2477 = pneg %p135
        $region65: #{_lambda_.6} parent=50 // pred_check_branch
          %2479 = sbr.rel (%p2477) target = $region67
        $region66: #{_lambda_.6} parent=50 // pred_region
          %s2480 = smul.u32 16, %s19
          %s2481 = smul.u32 4, %s20
        $region67: #{_lambda_.6} parent=50 // pred_fallthru
          _
        // Predicated region
        $region68: #{_lambda_.6} parent=50 // pred_check
          %p2482 = pneg %p135
        $region69: #{_lambda_.6} parent=50 // pred_check_branch
          %2484 = sbr.rel (%p2482) target = $region71
        $region70: #{_lambda_.6} parent=50 // pred_region
          %s2485 = smul.u32 16, %s19
          %s2486 = smul.u32 4, %s20
          %p2487 = scmp.lt.s32.totalorder %s2485, 15
          %s2488 = scalar_select %p2487, %s2485, 15
          %p2489 = scmp.lt.s32.totalorder %s2486, 3
          %s2490 = scalar_select %p2489, %s2486, 3
          %s2491 = smul.addr %s2488, 4
          %s2492 = sadd.s32 %s2490, %s2491
          %s2493 = smul.addr %s2492, 4
          %s2494 = scalar_lea.vmem %s3, %s2493
        $region71: #{_lambda_.6} parent=50 // pred_fallthru
          _
      $region51: #{_lambda_.6} parent=5 // pred_fallthru
        _
      %p2495 = scmp.le.s32.totalorder 2, %s9
      // Predicated region
      $region72: #{_lambda_.6} parent=5 // pred_check
        %p2496 = pneg %p2495
      $region73: #{_lambda_.6} parent=5 // pred_check_branch
        %2498 = sbr.rel (%p2496) target = $region75
      $region74: #{_lambda_.6} parent=5 // pred_region
        %s2499 = ssub.s32 %s9, 2
      $region75: #{_lambda_.6} parent=5 // pred_fallthru
        _
    $region6: #{_lambda_.6} parent=1 // loop_footer
      %s13 = sadd.s32 1, %s9
    $region7: #{_lambda_.6} parent=1 // loop_footer_branch
      %8 = sbr.rel target = $region3
    $region8: #{_lambda_.6} parent=1 // loop_exit
      _

// kernel: _lambda_.7
$region0: #{_lambda_.7}
  #allocation0 [shape = 'u32[]', space=smem, size = 0x4, offset = 0x4, fixed_abs, tag = 'smem constant byte address 0x4 - core index']
  #allocation1 [shape = 'u32[144,128]{1,0:T(1,128)}', space=vmem, size = 0x12000, scoped, tag = 'internal scratch']
  %s0 = inlined_call_operand.vmem [shape: bf16[128,512], index: 0, kind: input, shape index: {}]
  %s1 = inlined_call_operand.vmem [shape: bf16[512,512], index: 1, kind: input, shape index: {}]
  %s2 = inlined_call_operand.vmem [shape: f32[1,512], index: 2, kind: input, shape index: {}]
  %s3 = inlined_call_operand.vmem [shape: f32[128,512], index: 3, kind: output, shape index: {}]
  %s4 = sld [smem:[#allocation0]]
  $region22: #{_lambda_.7} parent=0
    _
  %s6 = ssub.s32 1, %s4
  %s7 = scalar_select 0, %s6, %s4
  // Predicated region
  $region2: #{_lambda_.7} parent=0 // pred_check
    _
  $region3: #{_lambda_.7} parent=0 // pred_check_branch
    %9 = sbr.rel (0) target = $region5
  $region4: #{_lambda_.7} parent=0 // pred_region
    _
  $region5: #{_lambda_.7} parent=0 // pred_fallthru
    _
  // Predicated region
  $region6: #{_lambda_.7} parent=0 // pred_check
    _
  $region7: #{_lambda_.7} parent=0 // pred_check_branch
    %11 = sbr.rel (0) target = $region9
  $region8: #{_lambda_.7} parent=0 // pred_region
    _
  $region9: #{_lambda_.7} parent=0 // pred_fallthru
    _
  // Predicated region
  $region10: #{_lambda_.7} parent=0 // pred_check
    _
  $region11: #{_lambda_.7} parent=0 // pred_check_branch
    %13 = sbr.rel (0) target = $region13
  $region12: #{_lambda_.7} parent=0 // pred_region
    _
  $region13: #{_lambda_.7} parent=0 // pred_fallthru
    _
  %v14 = vld [vmem:[%s0] sm:$0xff]
  %v15 = vld [vmem:[%s0 + $0x8] sm:$0xff]
  %v16 = vld [vmem:[%s0 + $0x10] sm:$0xff]
  %v17 = vld [vmem:[%s0 + $0x18] sm:$0xff]
  %v18 = vld [vmem:[%s0 + $0x20] sm:$0xff]
  %v19 = vld [vmem:[%s0 + $0x28] sm:$0xff]
  %v20 = vld [vmem:[%s0 + $0x30] sm:$0xff]
  %v21 = vld [vmem:[%s0 + $0x38] sm:$0xff]
  %v22 = vld [vmem:[%s0 + $0x40] sm:$0xff]
  %v23 = vld [vmem:[%s0 + $0x48] sm:$0xff]
  %v24 = vld [vmem:[%s0 + $0x50] sm:$0xff]
  %v25 = vld [vmem:[%s0 + $0x58] sm:$0xff]
  %v26 = vld [vmem:[%s0 + $0x60] sm:$0xff]
  %v27 = vld [vmem:[%s0 + $0x68] sm:$0xff]
  %v28 = vld [vmem:[%s0 + $0x70] sm:$0xff]
  %v29 = vld [vmem:[%s0 + $0x78] sm:$0xff]
  %v30 = vld [vmem:[%s0 + $0x80] sm:$0xff]
  %v31 = vld [vmem:[%s0 + $0x88] sm:$0xff]
  %v32 = vld [vmem:[%s0 + $0x90] sm:$0xff]
  %v33 = vld [vmem:[%s0 + $0x98] sm:$0xff]
  %v34 = vld [vmem:[%s0 + $0xa0] sm:$0xff]
  %v35 = vld [vmem:[%s0 + $0xa8] sm:$0xff]
  %v36 = vld [vmem:[%s0 + $0xb0] sm:$0xff]
  %v37 = vld [vmem:[%s0 + $0xb8] sm:$0xff]
  %v38 = vld [vmem:[%s0 + $0xc0] sm:$0xff]
  %v39 = vld [vmem:[%s0 + $0xc8] sm:$0xff]
  %v40 = vld [vmem:[%s0 + $0xd0] sm:$0xff]
  %v41 = vld [vmem:[%s0 + $0xd8] sm:$0xff]
  %v42 = vld [vmem:[%s0 + $0xe0] sm:$0xff]
  %v43 = vld [vmem:[%s0 + $0xe8] sm:$0xff]
  %v44 = vld [vmem:[%s0 + $0xf0] sm:$0xff]
  %v45 = vld [vmem:[%s0 + $0xf8] sm:$0xff]
  %v46 = vld [vmem:[%s1] sm:$0xff]
  %v47 = vld [vmem:[%s1 + $0x8] sm:$0xff]
  %v48 = vld [vmem:[%s1 + $0x10] sm:$0xff]
  %v49 = vld [vmem:[%s1 + $0x18] sm:$0xff]
  %v50 = vld [vmem:[%s1 + $0x20] sm:$0xff]
  %v51 = vld [vmem:[%s1 + $0x28] sm:$0xff]
  %v52 = vld [vmem:[%s1 + $0x30] sm:$0xff]
  %v53 = vld [vmem:[%s1 + $0x38] sm:$0xff]
  %v54 = vld [vmem:[%s1 + $0x40] sm:$0xff]
  %v55 = vld [vmem:[%s1 + $0x48] sm:$0xff]
  %v56 = vld [vmem:[%s1 + $0x50] sm:$0xff]
  %v57 = vld [vmem:[%s1 + $0x58] sm:$0xff]
  %v58 = vld [vmem:[%s1 + $0x60] sm:$0xff]
  %v59 = vld [vmem:[%s1 + $0x68] sm:$0xff]
  %v60 = vld [vmem:[%s1 + $0x70] sm:$0xff]
  %v61 = vld [vmem:[%s1 + $0x78] sm:$0xff]
  %v62 = vld [vmem:[%s1 + $0x80] sm:$0xff]
  %v63 = vld [vmem:[%s1 + $0x88] sm:$0xff]
  %v64 = vld [vmem:[%s1 + $0x90] sm:$0xff]
  %v65 = vld [vmem:[%s1 + $0x98] sm:$0xff]
  %v66 = vld [vmem:[%s1 + $0xa0] sm:$0xff]
  %v67 = vld [vmem:[%s1 + $0xa8] sm:$0xff]
  %v68 = vld [vmem:[%s1 + $0xb0] sm:$0xff]
  %v69 = vld [vmem:[%s1 + $0xb8] sm:$0xff]
  %v70 = vld [vmem:[%s1 + $0xc0] sm:$0xff]
  %v71 = vld [vmem:[%s1 + $0xc8] sm:$0xff]
  %v72 = vld [vmem:[%s1 + $0xd0] sm:$0xff]
  %v73 = vld [vmem:[%s1 + $0xd8] sm:$0xff]
  %v74 = vld [vmem:[%s1 + $0xe0] sm:$0xff]
  %v75 = vld [vmem:[%s1 + $0xe8] sm:$0xff]
  %v76 = vld [vmem:[%s1 + $0xf0] sm:$0xff]
  %v77 = vld [vmem:[%s1 + $0xf8] sm:$0xff]
  %v78 = vld [vmem:[%s1 + $0x100] sm:$0xff]
  %v79 = vld [vmem:[%s1 + $0x108] sm:$0xff]
  %v80 = vld [vmem:[%s1 + $0x110] sm:$0xff]
  %v81 = vld [vmem:[%s1 + $0x118] sm:$0xff]
  %v82 = vld [vmem:[%s1 + $0x120] sm:$0xff]
  %v83 = vld [vmem:[%s1 + $0x128] sm:$0xff]
  %v84 = vld [vmem:[%s1 + $0x130] sm:$0xff]
  %v85 = vld [vmem:[%s1 + $0x138] sm:$0xff]
  %v86 = vld [vmem:[%s1 + $0x140] sm:$0xff]
  %v87 = vld [vmem:[%s1 + $0x148] sm:$0xff]
  %v88 = vld [vmem:[%s1 + $0x150] sm:$0xff]
  %v89 = vld [vmem:[%s1 + $0x158] sm:$0xff]
  %v90 = vld [vmem:[%s1 + $0x160] sm:$0xff]
  %v91 = vld [vmem:[%s1 + $0x168] sm:$0xff]
  %v92 = vld [vmem:[%s1 + $0x170] sm:$0xff]
  %v93 = vld [vmem:[%s1 + $0x178] sm:$0xff]
  %v94 = vld [vmem:[%s1 + $0x180] sm:$0xff]
  %v95 = vld [vmem:[%s1 + $0x188] sm:$0xff]
  %v96 = vld [vmem:[%s1 + $0x190] sm:$0xff]
  %v97 = vld [vmem:[%s1 + $0x198] sm:$0xff]
  %v98 = vld [vmem:[%s1 + $0x1a0] sm:$0xff]
  %v99 = vld [vmem:[%s1 + $0x1a8] sm:$0xff]
  %v100 = vld [vmem:[%s1 + $0x1b0] sm:$0xff]
  %v101 = vld [vmem:[%s1 + $0x1b8] sm:$0xff]
  %v102 = vld [vmem:[%s1 + $0x1c0] sm:$0xff]
  %v103 = vld [vmem:[%s1 + $0x1c8] sm:$0xff]
  %v104 = vld [vmem:[%s1 + $0x1d0] sm:$0xff]
  %v105 = vld [vmem:[%s1 + $0x1d8] sm:$0xff]
  %v106 = vld [vmem:[%s1 + $0x1e0] sm:$0xff]
  %v107 = vld [vmem:[%s1 + $0x1e8] sm:$0xff]
  %v108 = vld [vmem:[%s1 + $0x1f0] sm:$0xff]
  %v109 = vld [vmem:[%s1 + $0x1f8] sm:$0xff]
  %v110 = vld [vmem:[%s1 + $0x200] sm:$0xff]
  %v111 = vld [vmem:[%s1 + $0x208] sm:$0xff]
  %v112 = vld [vmem:[%s1 + $0x210] sm:$0xff]
  %v113 = vld [vmem:[%s1 + $0x218] sm:$0xff]
  %v114 = vld [vmem:[%s1 + $0x220] sm:$0xff]
  %v115 = vld [vmem:[%s1 + $0x228] sm:$0xff]
  %v116 = vld [vmem:[%s1 + $0x230] sm:$0xff]
  %v117 = vld [vmem:[%s1 + $0x238] sm:$0xff]
  %v118 = vld [vmem:[%s1 + $0x240] sm:$0xff]
  %v119 = vld [vmem:[%s1 + $0x248] sm:$0xff]
  %v120 = vld [vmem:[%s1 + $0x250] sm:$0xff]
  %v121 = vld [vmem:[%s1 + $0x258] sm:$0xff]
  %v122 = vld [vmem:[%s1 + $0x260] sm:$0xff]
  %v123 = vld [vmem:[%s1 + $0x268] sm:$0xff]
  %v124 = vld [vmem:[%s1 + $0x270] sm:$0xff]
  %v125 = vld [vmem:[%s1 + $0x278] sm:$0xff]
  %v126 = vld [vmem:[%s1 + $0x280] sm:$0xff]
  %v127 = vld [vmem:[%s1 + $0x288] sm:$0xff]
  %v128 = vld [vmem:[%s1 + $0x290] sm:$0xff]
  %v129 = vld [vmem:[%s1 + $0x298] sm:$0xff]
  %v130 = vld [vmem:[%s1 + $0x2a0] sm:$0xff]
  %v131 = vld [vmem:[%s1 + $0x2a8] sm:$0xff]
  %v132 = vld [vmem:[%s1 + $0x2b0] sm:$0xff]
  %v133 = vld [vmem:[%s1 + $0x2b8] sm:$0xff]
  %v134 = vld [vmem:[%s1 + $0x2c0] sm:$0xff]
  %v135 = vld [vmem:[%s1 + $0x2c8] sm:$0xff]
  %v136 = vld [vmem:[%s1 + $0x2d0] sm:$0xff]
  %v137 = vld [vmem:[%s1 + $0x2d8] sm:$0xff]
  %v138 = vld [vmem:[%s1 + $0x2e0] sm:$0xff]
  %v139 = vld [vmem:[%s1 + $0x2e8] sm:$0xff]
  %v140 = vld [vmem:[%s1 + $0x2f0] sm:$0xff]
  %v141 = vld [vmem:[%s1 + $0x2f8] sm:$0xff]
  %v142 = vld [vmem:[%s1 + $0x300] sm:$0xff]
  %v143 = vld [vmem:[%s1 + $0x308] sm:$0xff]
  %v144 = vld [vmem:[%s1 + $0x310] sm:$0xff]
  %v145 = vld [vmem:[%s1 + $0x318] sm:$0xff]
  %v146 = vld [vmem:[%s1 + $0x320] sm:$0xff]
  %v147 = vld [vmem:[%s1 + $0x328] sm:$0xff]
  %v148 = vld [vmem:[%s1 + $0x330] sm:$0xff]
  %v149 = vld [vmem:[%s1 + $0x338] sm:$0xff]
  %v150 = vld [vmem:[%s1 + $0x340] sm:$0xff]
  %v151 = vld [vmem:[%s1 + $0x348] sm:$0xff]
  %v152 = vld [vmem:[%s1 + $0x350] sm:$0xff]
  %v153 = vld [vmem:[%s1 + $0x358] sm:$0xff]
  %v154 = vld [vmem:[%s1 + $0x360] sm:$0xff]
  %v155 = vld [vmem:[%s1 + $0x368] sm:$0xff]
  %v156 = vld [vmem:[%s1 + $0x370] sm:$0xff]
  %v157 = vld [vmem:[%s1 + $0x378] sm:$0xff]
  %v158 = vld [vmem:[%s1 + $0x380] sm:$0xff]
  %v159 = vld [vmem:[%s1 + $0x388] sm:$0xff]
  %v160 = vld [vmem:[%s1 + $0x390] sm:$0xff]
  %v161 = vld [vmem:[%s1 + $0x398] sm:$0xff]
  %v162 = vld [vmem:[%s1 + $0x3a0] sm:$0xff]
  %v163 = vld [vmem:[%s1 + $0x3a8] sm:$0xff]
  %v164 = vld [vmem:[%s1 + $0x3b0] sm:$0xff]
  %v165 = vld [vmem:[%s1 + $0x3b8] sm:$0xff]
  %v166 = vld [vmem:[%s1 + $0x3c0] sm:$0xff]
  %v167 = vld [vmem:[%s1 + $0x3c8] sm:$0xff]
  %v168 = vld [vmem:[%s1 + $0x3d0] sm:$0xff]
  %v169 = vld [vmem:[%s1 + $0x3d8] sm:$0xff]
  %v170 = vld [vmem:[%s1 + $0x3e0] sm:$0xff]
  %v171 = vld [vmem:[%s1 + $0x3e8] sm:$0xff]
  %v172 = vld [vmem:[%s1 + $0x3f0] sm:$0xff]
  %v173 = vld [vmem:[%s1 + $0x3f8] sm:$0xff]
  %v174 = vld [vmem:[%s2] sm:$0xf]
  %v176 = vlaneseq
  %v177 = vshrl.u32 %v176, 7
  %v178 = vsub.s32 0, %v177
  %v179 = vrot.slane %v174, %v178
  %v180 = vlaneseq
  %v181 = vshrl.u32 %v180, 7
  %v182 = vsub.s32 1, %v181
  %v183 = vrot.slane %v174, %v182
  %v184 = vlaneseq
  %v185 = vshrl.u32 %v184, 7
  %v186 = vsub.s32 2, %v185
  %v187 = vrot.slane %v174, %v186
  %v188 = vlaneseq
  %v189 = vshrl.u32 %v188, 7
  %v190 = vsub.s32 3, %v189
  %v191 = vrot.slane %v174, %v190
  %v228 = vunpack.c.l.b16 %v14
  %v229 = vunpack.c.h.b16 %v14
  %v230 = vunpack.c.l.b16 %v15
  %v231 = vunpack.c.h.b16 %v15
  %v232 = vunpack.c.l.b16 %v16
  %v233 = vunpack.c.h.b16 %v16
  %v234 = vunpack.c.l.b16 %v17
  %v235 = vunpack.c.h.b16 %v17
  %v236 = vunpack.c.l.b16 %v18
  %v237 = vunpack.c.h.b16 %v18
  %v238 = vunpack.c.l.b16 %v19
  %v239 = vunpack.c.h.b16 %v19
  %v240 = vunpack.c.l.b16 %v20
  %v241 = vunpack.c.h.b16 %v20
  %v242 = vunpack.c.l.b16 %v21
  %v243 = vunpack.c.h.b16 %v21
  %v244 = vunpack.c.l.b16 %v22
  %v245 = vunpack.c.h.b16 %v22
  %v246 = vunpack.c.l.b16 %v23
  %v247 = vunpack.c.h.b16 %v23
  %v248 = vunpack.c.l.b16 %v24
  %v249 = vunpack.c.h.b16 %v24
  %v250 = vunpack.c.l.b16 %v25
  %v251 = vunpack.c.h.b16 %v25
  %v252 = vunpack.c.l.b16 %v26
  %v253 = vunpack.c.h.b16 %v26
  %v254 = vunpack.c.l.b16 %v27
  %v255 = vunpack.c.h.b16 %v27
  %v256 = vunpack.c.l.b16 %v28
  %v257 = vunpack.c.h.b16 %v28
  %v258 = vunpack.c.l.b16 %v29
  %v259 = vunpack.c.h.b16 %v29
  %v260 = vunpack.c.l.b16 %v30
  %v261 = vunpack.c.h.b16 %v30
  %v262 = vunpack.c.l.b16 %v31
  %v263 = vunpack.c.h.b16 %v31
  %v264 = vunpack.c.l.b16 %v32
  %v265 = vunpack.c.h.b16 %v32
  %v266 = vunpack.c.l.b16 %v33
  %v267 = vunpack.c.h.b16 %v33
  %v268 = vunpack.c.l.b16 %v34
  %v269 = vunpack.c.h.b16 %v34
  %v270 = vunpack.c.l.b16 %v35
  %v271 = vunpack.c.h.b16 %v35
  %v272 = vunpack.c.l.b16 %v36
  %v273 = vunpack.c.h.b16 %v36
  %v274 = vunpack.c.l.b16 %v37
  %v275 = vunpack.c.h.b16 %v37
  %v276 = vunpack.c.l.b16 %v38
  %v277 = vunpack.c.h.b16 %v38
  %v278 = vunpack.c.l.b16 %v39
  %v279 = vunpack.c.h.b16 %v39
  %v280 = vunpack.c.l.b16 %v40
  %v281 = vunpack.c.h.b16 %v40
  %v282 = vunpack.c.l.b16 %v41
  %v283 = vunpack.c.h.b16 %v41
  %v284 = vunpack.c.l.b16 %v42
  %v285 = vunpack.c.h.b16 %v42
  %v286 = vunpack.c.l.b16 %v43
  %v287 = vunpack.c.h.b16 %v43
  %v288 = vunpack.c.l.b16 %v44
  %v289 = vunpack.c.h.b16 %v44
  %v290 = vunpack.c.l.b16 %v45
  %v291 = vunpack.c.h.b16 %v45
  %v292 = vpack.c.b16 %v232, %v228
  %v293 = vpack.c.b16 %v233, %v229
  %v294 = vpack.c.b16 %v234, %v230
  %v295 = vpack.c.b16 %v235, %v231
  %v296 = vpack.c.b16 %v240, %v236
  %v297 = vpack.c.b16 %v241, %v237
  %v298 = vpack.c.b16 %v242, %v238
  %v299 = vpack.c.b16 %v243, %v239
  %v300 = vpack.c.b16 %v248, %v244
  %v301 = vpack.c.b16 %v249, %v245
  %v302 = vpack.c.b16 %v250, %v246
  %v303 = vpack.c.b16 %v251, %v247
  %v304 = vpack.c.b16 %v256, %v252
  %v305 = vpack.c.b16 %v257, %v253
  %v306 = vpack.c.b16 %v258, %v254
  %v307 = vpack.c.b16 %v259, %v255
  %v308 = vpack.c.b16 %v264, %v260
  %v309 = vpack.c.b16 %v265, %v261
  %v310 = vpack.c.b16 %v266, %v262
  %v311 = vpack.c.b16 %v267, %v263
  %v312 = vpack.c.b16 %v272, %v268
  %v313 = vpack.c.b16 %v273, %v269
  %v314 = vpack.c.b16 %v274, %v270
  %v315 = vpack.c.b16 %v275, %v271
  %v316 = vpack.c.b16 %v280, %v276
  %v317 = vpack.c.b16 %v281, %v277
  %v318 = vpack.c.b16 %v282, %v278
  %v319 = vpack.c.b16 %v283, %v279
  %v320 = vpack.c.b16 %v288, %v284
  %v321 = vpack.c.b16 %v289, %v285
  %v322 = vpack.c.b16 %v290, %v286
  %v323 = vpack.c.b16 %v291, %v287
  %v484 = vunpack.c.l.b16 %v46
  %v485 = vunpack.c.h.b16 %v46
  %v486 = vunpack.c.l.b16 %v47
  %v487 = vunpack.c.h.b16 %v47
  %v488 = vunpack.c.l.b16 %v48
  %v489 = vunpack.c.h.b16 %v48
  %v490 = vunpack.c.l.b16 %v49
  %v491 = vunpack.c.h.b16 %v49
  %v492 = vunpack.c.l.b16 %v50
  %v493 = vunpack.c.h.b16 %v50
  %v494 = vunpack.c.l.b16 %v51
  %v495 = vunpack.c.h.b16 %v51
  %v496 = vunpack.c.l.b16 %v52
  %v497 = vunpack.c.h.b16 %v52
  %v498 = vunpack.c.l.b16 %v53
  %v499 = vunpack.c.h.b16 %v53
  %v500 = vunpack.c.l.b16 %v54
  %v501 = vunpack.c.h.b16 %v54
  %v502 = vunpack.c.l.b16 %v55
  %v503 = vunpack.c.h.b16 %v55
  %v504 = vunpack.c.l.b16 %v56
  %v505 = vunpack.c.h.b16 %v56
  %v506 = vunpack.c.l.b16 %v57
  %v507 = vunpack.c.h.b16 %v57
  %v508 = vunpack.c.l.b16 %v58
  %v509 = vunpack.c.h.b16 %v58
  %v510 = vunpack.c.l.b16 %v59
  %v511 = vunpack.c.h.b16 %v59
  %v512 = vunpack.c.l.b16 %v60
  %v513 = vunpack.c.h.b16 %v60
  %v514 = vunpack.c.l.b16 %v61
  %v515 = vunpack.c.h.b16 %v61
  %v516 = vunpack.c.l.b16 %v62
  %v517 = vunpack.c.h.b16 %v62
  %v518 = vunpack.c.l.b16 %v63
  %v519 = vunpack.c.h.b16 %v63
  %v520 = vunpack.c.l.b16 %v64
  %v521 = vunpack.c.h.b16 %v64
  %v522 = vunpack.c.l.b16 %v65
  %v523 = vunpack.c.h.b16 %v65
  %v524 = vunpack.c.l.b16 %v66
  %v525 = vunpack.c.h.b16 %v66
  %v526 = vunpack.c.l.b16 %v67
  %v527 = vunpack.c.h.b16 %v67
  %v528 = vunpack.c.l.b16 %v68
  %v529 = vunpack.c.h.b16 %v68
  %v530 = vunpack.c.l.b16 %v69
  %v531 = vunpack.c.h.b16 %v69
  %v532 = vunpack.c.l.b16 %v70
  %v533 = vunpack.c.h.b16 %v70
  %v534 = vunpack.c.l.b16 %v71
  %v535 = vunpack.c.h.b16 %v71
  %v536 = vunpack.c.l.b16 %v72
  %v537 = vunpack.c.h.b16 %v72
  %v538 = vunpack.c.l.b16 %v73
  %v539 = vunpack.c.h.b16 %v73
  %v540 = vunpack.c.l.b16 %v74
  %v541 = vunpack.c.h.b16 %v74
  %v542 = vunpack.c.l.b16 %v75
  %v543 = vunpack.c.h.b16 %v75
  %v544 = vunpack.c.l.b16 %v76
  %v545 = vunpack.c.h.b16 %v76
  %v546 = vunpack.c.l.b16 %v77
  %v547 = vunpack.c.h.b16 %v77
  %v548 = vunpack.c.l.b16 %v78
  %v549 = vunpack.c.h.b16 %v78
  %v550 = vunpack.c.l.b16 %v79
  %v551 = vunpack.c.h.b16 %v79
  %v552 = vunpack.c.l.b16 %v80
  %v553 = vunpack.c.h.b16 %v80
  %v554 = vunpack.c.l.b16 %v81
  %v555 = vunpack.c.h.b16 %v81
  %v556 = vunpack.c.l.b16 %v82
  %v557 = vunpack.c.h.b16 %v82
  %v558 = vunpack.c.l.b16 %v83
  %v559 = vunpack.c.h.b16 %v83
  %v560 = vunpack.c.l.b16 %v84
  %v561 = vunpack.c.h.b16 %v84
  %v562 = vunpack.c.l.b16 %v85
  %v563 = vunpack.c.h.b16 %v85
  %v564 = vunpack.c.l.b16 %v86
  %v565 = vunpack.c.h.b16 %v86
  %v566 = vunpack.c.l.b16 %v87
  %v567 = vunpack.c.h.b16 %v87
  %v568 = vunpack.c.l.b16 %v88
  %v569 = vunpack.c.h.b16 %v88
  %v570 = vunpack.c.l.b16 %v89
  %v571 = vunpack.c.h.b16 %v89
  %v572 = vunpack.c.l.b16 %v90
  %v573 = vunpack.c.h.b16 %v90
  %v574 = vunpack.c.l.b16 %v91
  %v575 = vunpack.c.h.b16 %v91
  %v576 = vunpack.c.l.b16 %v92
  %v577 = vunpack.c.h.b16 %v92
  %v578 = vunpack.c.l.b16 %v93
  %v579 = vunpack.c.h.b16 %v93
  %v580 = vunpack.c.l.b16 %v94
  %v581 = vunpack.c.h.b16 %v94
  %v582 = vunpack.c.l.b16 %v95
  %v583 = vunpack.c.h.b16 %v95
  %v584 = vunpack.c.l.b16 %v96
  %v585 = vunpack.c.h.b16 %v96
  %v586 = vunpack.c.l.b16 %v97
  %v587 = vunpack.c.h.b16 %v97
  %v588 = vunpack.c.l.b16 %v98
  %v589 = vunpack.c.h.b16 %v98
  %v590 = vunpack.c.l.b16 %v99
  %v591 = vunpack.c.h.b16 %v99
  %v592 = vunpack.c.l.b16 %v100
  %v593 = vunpack.c.h.b16 %v100
  %v594 = vunpack.c.l.b16 %v101
  %v595 = vunpack.c.h.b16 %v101
  %v596 = vunpack.c.l.b16 %v102
  %v597 = vunpack.c.h.b16 %v102
  %v598 = vunpack.c.l.b16 %v103
  %v599 = vunpack.c.h.b16 %v103
  %v600 = vunpack.c.l.b16 %v104
  %v601 = vunpack.c.h.b16 %v104
  %v602 = vunpack.c.l.b16 %v105
  %v603 = vunpack.c.h.b16 %v105
  %v604 = vunpack.c.l.b16 %v106
  %v605 = vunpack.c.h.b16 %v106
  %v606 = vunpack.c.l.b16 %v107
  %v607 = vunpack.c.h.b16 %v107
  %v608 = vunpack.c.l.b16 %v108
  %v609 = vunpack.c.h.b16 %v108
  %v610 = vunpack.c.l.b16 %v109
  %v611 = vunpack.c.h.b16 %v109
  %v612 = vunpack.c.l.b16 %v110
  %v613 = vunpack.c.h.b16 %v110
  %v614 = vunpack.c.l.b16 %v111
  %v615 = vunpack.c.h.b16 %v111
  %v616 = vunpack.c.l.b16 %v112
  %v617 = vunpack.c.h.b16 %v112
  %v618 = vunpack.c.l.b16 %v113
  %v619 = vunpack.c.h.b16 %v113
  %v620 = vunpack.c.l.b16 %v114
  %v621 = vunpack.c.h.b16 %v114
  %v622 = vunpack.c.l.b16 %v115
  %v623 = vunpack.c.h.b16 %v115
  %v624 = vunpack.c.l.b16 %v116
  %v625 = vunpack.c.h.b16 %v116
  %v626 = vunpack.c.l.b16 %v117
  %v627 = vunpack.c.h.b16 %v117
  %v628 = vunpack.c.l.b16 %v118
  %v629 = vunpack.c.h.b16 %v118
  %v630 = vunpack.c.l.b16 %v119
  %v631 = vunpack.c.h.b16 %v119
  %v632 = vunpack.c.l.b16 %v120
  %v633 = vunpack.c.h.b16 %v120
  %v634 = vunpack.c.l.b16 %v121
  %v635 = vunpack.c.h.b16 %v121
  %v636 = vunpack.c.l.b16 %v122
  %v637 = vunpack.c.h.b16 %v122
  %v638 = vunpack.c.l.b16 %v123
  %v639 = vunpack.c.h.b16 %v123
  %v640 = vunpack.c.l.b16 %v124
  %v641 = vunpack.c.h.b16 %v124
  %v642 = vunpack.c.l.b16 %v125
  %v643 = vunpack.c.h.b16 %v125
  %v644 = vunpack.c.l.b16 %v126
  %v645 = vunpack.c.h.b16 %v126
  %v646 = vunpack.c.l.b16 %v127
  %v647 = vunpack.c.h.b16 %v127
  %v648 = vunpack.c.l.b16 %v128
  %v649 = vunpack.c.h.b16 %v128
  %v650 = vunpack.c.l.b16 %v129
  %v651 = vunpack.c.h.b16 %v129
  %v652 = vunpack.c.l.b16 %v130
  %v653 = vunpack.c.h.b16 %v130
  %v654 = vunpack.c.l.b16 %v131
  %v655 = vunpack.c.h.b16 %v131
  %v656 = vunpack.c.l.b16 %v132
  %v657 = vunpack.c.h.b16 %v132
  %v658 = vunpack.c.l.b16 %v133
  %v659 = vunpack.c.h.b16 %v133
  %v660 = vunpack.c.l.b16 %v134
  %v661 = vunpack.c.h.b16 %v134
  %v662 = vunpack.c.l.b16 %v135
  %v663 = vunpack.c.h.b16 %v135
  %v664 = vunpack.c.l.b16 %v136
  %v665 = vunpack.c.h.b16 %v136
  %v666 = vunpack.c.l.b16 %v137
  %v667 = vunpack.c.h.b16 %v137
  %v668 = vunpack.c.l.b16 %v138
  %v669 = vunpack.c.h.b16 %v138
  %v670 = vunpack.c.l.b16 %v139
  %v671 = vunpack.c.h.b16 %v139
  %v672 = vunpack.c.l.b16 %v140
  %v673 = vunpack.c.h.b16 %v140
  %v674 = vunpack.c.l.b16 %v141
  %v675 = vunpack.c.h.b16 %v141
  %v676 = vunpack.c.l.b16 %v142
  %v677 = vunpack.c.h.b16 %v142
  %v678 = vunpack.c.l.b16 %v143
  %v679 = vunpack.c.h.b16 %v143
  %v680 = vunpack.c.l.b16 %v144
  %v681 = vunpack.c.h.b16 %v144
  %v682 = vunpack.c.l.b16 %v145
  %v683 = vunpack.c.h.b16 %v145
  %v684 = vunpack.c.l.b16 %v146
  %v685 = vunpack.c.h.b16 %v146
  %v686 = vunpack.c.l.b16 %v147
  %v687 = vunpack.c.h.b16 %v147
  %v688 = vunpack.c.l.b16 %v148
  %v689 = vunpack.c.h.b16 %v148
  %v690 = vunpack.c.l.b16 %v149
  %v691 = vunpack.c.h.b16 %v149
  %v692 = vunpack.c.l.b16 %v150
  %v693 = vunpack.c.h.b16 %v150
  %v694 = vunpack.c.l.b16 %v151
  %v695 = vunpack.c.h.b16 %v151
  %v696 = vunpack.c.l.b16 %v152
  %v697 = vunpack.c.h.b16 %v152
  %v698 = vunpack.c.l.b16 %v153
  %v699 = vunpack.c.h.b16 %v153
  %v700 = vunpack.c.l.b16 %v154
  %v701 = vunpack.c.h.b16 %v154
  %v702 = vunpack.c.l.b16 %v155
  %v703 = vunpack.c.h.b16 %v155
  %v704 = vunpack.c.l.b16 %v156
  %v705 = vunpack.c.h.b16 %v156
  %v706 = vunpack.c.l.b16 %v157
  %v707 = vunpack.c.h.b16 %v157
  %v708 = vunpack.c.l.b16 %v158
  %v709 = vunpack.c.h.b16 %v158
  %v710 = vunpack.c.l.b16 %v159
  %v711 = vunpack.c.h.b16 %v159
  %v712 = vunpack.c.l.b16 %v160
  %v713 = vunpack.c.h.b16 %v160
  %v714 = vunpack.c.l.b16 %v161
  %v715 = vunpack.c.h.b16 %v161
  %v716 = vunpack.c.l.b16 %v162
  %v717 = vunpack.c.h.b16 %v162
  %v718 = vunpack.c.l.b16 %v163
  %v719 = vunpack.c.h.b16 %v163
  %v720 = vunpack.c.l.b16 %v164
  %v721 = vunpack.c.h.b16 %v164
  %v722 = vunpack.c.l.b16 %v165
  %v723 = vunpack.c.h.b16 %v165
  %v724 = vunpack.c.l.b16 %v166
  %v725 = vunpack.c.h.b16 %v166
  %v726 = vunpack.c.l.b16 %v167
  %v727 = vunpack.c.h.b16 %v167
  %v728 = vunpack.c.l.b16 %v168
  %v729 = vunpack.c.h.b16 %v168
  %v730 = vunpack.c.l.b16 %v169
  %v731 = vunpack.c.h.b16 %v169
  %v732 = vunpack.c.l.b16 %v170
  %v733 = vunpack.c.h.b16 %v170
  %v734 = vunpack.c.l.b16 %v171
  %v735 = vunpack.c.h.b16 %v171
  %v736 = vunpack.c.l.b16 %v172
  %v737 = vunpack.c.h.b16 %v172
  %v738 = vunpack.c.l.b16 %v173
  %v739 = vunpack.c.h.b16 %v173
  %v740 = vpack.c.b16 %v488, %v484
  %v741 = vpack.c.b16 %v489, %v485
  %v742 = vpack.c.b16 %v490, %v486
  %v743 = vpack.c.b16 %v491, %v487
  %v744 = vpack.c.b16 %v496, %v492
  %v745 = vpack.c.b16 %v497, %v493
  %v746 = vpack.c.b16 %v498, %v494
  %v747 = vpack.c.b16 %v499, %v495
  %v748 = vpack.c.b16 %v504, %v500
  %v749 = vpack.c.b16 %v505, %v501
  %v750 = vpack.c.b16 %v506, %v502
  %v751 = vpack.c.b16 %v507, %v503
  %v752 = vpack.c.b16 %v512, %v508
  %v753 = vpack.c.b16 %v513, %v509
  %v754 = vpack.c.b16 %v514, %v510
  %v755 = vpack.c.b16 %v515, %v511
  %v756 = vpack.c.b16 %v520, %v516
  %v757 = vpack.c.b16 %v521, %v517
  %v758 = vpack.c.b16 %v522, %v518
  %v759 = vpack.c.b16 %v523, %v519
  %v760 = vpack.c.b16 %v528, %v524
  %v761 = vpack.c.b16 %v529, %v525
  %v762 = vpack.c.b16 %v530, %v526
  %v763 = vpack.c.b16 %v531, %v527
  %v764 = vpack.c.b16 %v536, %v532
  %v765 = vpack.c.b16 %v537, %v533
  %v766 = vpack.c.b16 %v538, %v534
  %v767 = vpack.c.b16 %v539, %v535
  %v768 = vpack.c.b16 %v544, %v540
  %v769 = vpack.c.b16 %v545, %v541
  %v770 = vpack.c.b16 %v546, %v542
  %v771 = vpack.c.b16 %v547, %v543
  %v772 = vpack.c.b16 %v552, %v548
  %v773 = vpack.c.b16 %v553, %v549
  %v774 = vpack.c.b16 %v554, %v550
  %v775 = vpack.c.b16 %v555, %v551
  %v776 = vpack.c.b16 %v560, %v556
  %v777 = vpack.c.b16 %v561, %v557
  %v778 = vpack.c.b16 %v562, %v558
  %v779 = vpack.c.b16 %v563, %v559
  %v780 = vpack.c.b16 %v568, %v564
  %v781 = vpack.c.b16 %v569, %v565
  %v782 = vpack.c.b16 %v570, %v566
  %v783 = vpack.c.b16 %v571, %v567
  %v784 = vpack.c.b16 %v576, %v572
  %v785 = vpack.c.b16 %v577, %v573
  %v786 = vpack.c.b16 %v578, %v574
  %v787 = vpack.c.b16 %v579, %v575
  %v788 = vpack.c.b16 %v584, %v580
  %v789 = vpack.c.b16 %v585, %v581
  %v790 = vpack.c.b16 %v586, %v582
  %v791 = vpack.c.b16 %v587, %v583
  %v792 = vpack.c.b16 %v592, %v588
  %v793 = vpack.c.b16 %v593, %v589
  %v794 = vpack.c.b16 %v594, %v590
  %v795 = vpack.c.b16 %v595, %v591
  %v796 = vpack.c.b16 %v600, %v596
  %v797 = vpack.c.b16 %v601, %v597
  %v798 = vpack.c.b16 %v602, %v598
  %v799 = vpack.c.b16 %v603, %v599
  %v800 = vpack.c.b16 %v608, %v604
  %v801 = vpack.c.b16 %v609, %v605
  %v802 = vpack.c.b16 %v610, %v606
  %v803 = vpack.c.b16 %v611, %v607
  %v804 = vpack.c.b16 %v616, %v612
  %v805 = vpack.c.b16 %v617, %v613
  %v806 = vpack.c.b16 %v618, %v614
  %v807 = vpack.c.b16 %v619, %v615
  %v808 = vpack.c.b16 %v624, %v620
  %v809 = vpack.c.b16 %v625, %v621
  %v810 = vpack.c.b16 %v626, %v622
  %v811 = vpack.c.b16 %v627, %v623
  %v812 = vpack.c.b16 %v632, %v628
  %v813 = vpack.c.b16 %v633, %v629
  %v814 = vpack.c.b16 %v634, %v630
  %v815 = vpack.c.b16 %v635, %v631
  %v816 = vpack.c.b16 %v640, %v636
  %v817 = vpack.c.b16 %v641, %v637
  %v818 = vpack.c.b16 %v642, %v638
  %v819 = vpack.c.b16 %v643, %v639
  %v820 = vpack.c.b16 %v648, %v644
  %v821 = vpack.c.b16 %v649, %v645
  %v822 = vpack.c.b16 %v650, %v646
  %v823 = vpack.c.b16 %v651, %v647
  %v824 = vpack.c.b16 %v656, %v652
  %v825 = vpack.c.b16 %v657, %v653
  %v826 = vpack.c.b16 %v658, %v654
  %v827 = vpack.c.b16 %v659, %v655
  %v828 = vpack.c.b16 %v664, %v660
  %v829 = vpack.c.b16 %v665, %v661
  %v830 = vpack.c.b16 %v666, %v662
  %v831 = vpack.c.b16 %v667, %v663
  %v832 = vpack.c.b16 %v672, %v668
  %v833 = vpack.c.b16 %v673, %v669
  %v834 = vpack.c.b16 %v674, %v670
  %v835 = vpack.c.b16 %v675, %v671
  %v836 = vpack.c.b16 %v680, %v676
  %v837 = vpack.c.b16 %v681, %v677
  %v838 = vpack.c.b16 %v682, %v678
  %v839 = vpack.c.b16 %v683, %v679
  %v840 = vpack.c.b16 %v688, %v684
  %v841 = vpack.c.b16 %v689, %v685
  %v842 = vpack.c.b16 %v690, %v686
  %v843 = vpack.c.b16 %v691, %v687
  %v844 = vpack.c.b16 %v696, %v692
  %v845 = vpack.c.b16 %v697, %v693
  %v846 = vpack.c.b16 %v698, %v694
  %v847 = vpack.c.b16 %v699, %v695
  %v848 = vpack.c.b16 %v704, %v700
  %v849 = vpack.c.b16 %v705, %v701
  %v850 = vpack.c.b16 %v706, %v702
  %v851 = vpack.c.b16 %v707, %v703
  %v852 = vpack.c.b16 %v712, %v708
  %v853 = vpack.c.b16 %v713, %v709
  %v854 = vpack.c.b16 %v714, %v710
  %v855 = vpack.c.b16 %v715, %v711
  %v856 = vpack.c.b16 %v720, %v716
  %v857 = vpack.c.b16 %v721, %v717
  %v858 = vpack.c.b16 %v722, %v718
  %v859 = vpack.c.b16 %v723, %v719
  %v860 = vpack.c.b16 %v728, %v724
  %v861 = vpack.c.b16 %v729, %v725
  %v862 = vpack.c.b16 %v730, %v726
  %v863 = vpack.c.b16 %v731, %v727
  %v864 = vpack.c.b16 %v736, %v732
  %v865 = vpack.c.b16 %v737, %v733
  %v866 = vpack.c.b16 %v738, %v734
  %v867 = vpack.c.b16 %v739, %v735
  %996 = vmatprep.subr.bf16.mxu0 %v741
  %997 = vmatpush1.bf16.msra.mxu0 %v740
  %998 = vmatprep.subr.bf16.mxu0 %v745
  %999 = vmatpush1.bf16.msra.mxu0 %v744
  %1000 = vmatprep.subr.bf16.mxu0 %v749
  %1001 = vmatpush1.bf16.msra.mxu0 %v748
  %1002 = vmatprep.subr.bf16.mxu0 %v753
  %1003 = vmatpush1.bf16.msra.mxu0 %v752
  %1004 = vmatprep.subr.bf16.mxu0 %v757
  %1005 = vmatpush1.bf16.msra.mxu0 %v756
  %1006 = vmatprep.subr.bf16.mxu0 %v761
  %1007 = vmatpush1.bf16.msra.mxu0 %v760
  %1008 = vmatprep.subr.bf16.mxu0 %v765
  %1009 = vmatpush1.bf16.msra.mxu0 %v764
  %1010 = vmatprep.subr.bf16.mxu0 %v769
  %1011 = vmatpush1.bf16.msra.mxu0 %v768
  %1012 = vmatprep.subr.bf16.mxu0 %v773
  %1013 = vmatpush1.bf16.msra.mxu0 %v772
  %1014 = vmatprep.subr.bf16.mxu0 %v777
  %1015 = vmatpush1.bf16.msra.mxu0 %v776
  %1016 = vmatprep.subr.bf16.mxu0 %v781
  %1017 = vmatpush1.bf16.msra.mxu0 %v780
  %1018 = vmatprep.subr.bf16.mxu0 %v785
  %1019 = vmatpush1.bf16.msra.mxu0 %v784
  %1020 = vmatprep.subr.bf16.mxu0 %v789
  %1021 = vmatpush1.bf16.msra.mxu0 %v788
  %1022 = vmatprep.subr.bf16.mxu0 %v793
  %1023 = vmatpush1.bf16.msra.mxu0 %v792
  %1024 = vmatprep.subr.bf16.mxu0 %v797
  %1025 = vmatpush1.bf16.msra.mxu0 %v796
  %1026 = vmatprep.subr.bf16.mxu0 %v801
  %1027 = vmatpush1.bf16.msra.mxu0 %v800
  %1028 = vmatprep.mubr.bf16.mxu0 %v293
  %1029 = vmatmul.mubr.bf16.gmra.mrb[0].mxu0 %v292
  %v1030 = vpop.f32.mrb[0].mxu0
  %v1031 = vadd.f32 %v179, %v1030
  %v1032 = vpop.f32.mrb[0].mxu0
  %v1033 = vadd.f32 %v183, %v1032
  %v1034 = vpop.f32.mrb[0].mxu0
  %v1035 = vadd.f32 %v179, %v1034
  %v1036 = vpop.f32.mrb[0].mxu0
  %v1037 = vadd.f32 %v183, %v1036
  %1038 = vmatprep.mubr.bf16.mxu0 %v297
  %1039 = vmatmul.mubr.bf16.gmra.mrb[0].mxu0 %v296
  %v1040 = vpop.f32.mrb[0].mxu0
  %v1041 = vadd.f32 %v179, %v1040
  %v1042 = vpop.f32.mrb[0].mxu0
  %v1043 = vadd.f32 %v183, %v1042
  %v1044 = vpop.f32.mrb[0].mxu0
  %v1045 = vadd.f32 %v179, %v1044
  %v1046 = vpop.f32.mrb[0].mxu0
  %v1047 = vadd.f32 %v183, %v1046
  %1048 = vmatprep.mubr.bf16.mxu0 %v301
  %1049 = vmatmul.mubr.bf16.gmra.mrb[0].mxu0 %v300
  %v1050 = vpop.f32.mrb[0].mxu0
  %v1051 = vadd.f32 %v179, %v1050
  %v1052 = vpop.f32.mrb[0].mxu0
  %v1053 = vadd.f32 %v183, %v1052
  %v1054 = vpop.f32.mrb[0].mxu0
  %v1055 = vadd.f32 %v179, %v1054
  %v1056 = vpop.f32.mrb[0].mxu0
  %v1057 = vadd.f32 %v183, %v1056
  %1058 = vmatprep.mubr.bf16.mxu0 %v305
  %1059 = vmatmul.mubr.bf16.gmra.mrb[0].mxu0 %v304
  %v1060 = vpop.f32.mrb[0].mxu0
  %v1061 = vadd.f32 %v179, %v1060
  %v1062 = vpop.f32.mrb[0].mxu0
  %v1063 = vadd.f32 %v183, %v1062
  %v1064 = vpop.f32.mrb[0].mxu0
  %v1065 = vadd.f32 %v179, %v1064
  %v1066 = vpop.f32.mrb[0].mxu0
  %v1067 = vadd.f32 %v183, %v1066
  %1068 = vmatprep.mubr.bf16.mxu0 %v309
  %1069 = vmatmul.mubr.bf16.gmra.mrb[0].mxu0 %v308
  %v1070 = vpop.f32.mrb[0].mxu0
  %v1071 = vadd.f32 %v179, %v1070
  %v1072 = vpop.f32.mrb[0].mxu0
  %v1073 = vadd.f32 %v183, %v1072
  %v1074 = vpop.f32.mrb[0].mxu0
  %v1075 = vadd.f32 %v179, %v1074
  %v1076 = vpop.f32.mrb[0].mxu0
  %v1077 = vadd.f32 %v183, %v1076
  %1078 = vmatprep.mubr.bf16.mxu0 %v313
  %1079 = vmatmul.mubr.bf16.gmra.mrb[0].mxu0 %v312
  %v1080 = vpop.f32.mrb[0].mxu0
  %v1081 = vadd.f32 %v179, %v1080
  %v1082 = vpop.f32.mrb[0].mxu0
  %v1083 = vadd.f32 %v183, %v1082
  %v1084 = vpop.f32.mrb[0].mxu0
  %v1085 = vadd.f32 %v179, %v1084
  %v1086 = vpop.f32.mrb[0].mxu0
  %v1087 = vadd.f32 %v183, %v1086
  %1088 = vmatprep.mubr.bf16.mxu0 %v317
  %1089 = vmatmul.mubr.bf16.gmra.mrb[0].mxu0 %v316
  %v1090 = vpop.f32.mrb[0].mxu0
  %v1091 = vadd.f32 %v179, %v1090
  %v1092 = vpop.f32.mrb[0].mxu0
  %v1093 = vadd.f32 %v183, %v1092
  %v1094 = vpop.f32.mrb[0].mxu0
  %v1095 = vadd.f32 %v179, %v1094
  %v1096 = vpop.f32.mrb[0].mxu0
  %v1097 = vadd.f32 %v183, %v1096
  %1098 = vmatprep.mubr.bf16.mxu0 %v321
  %1099 = vmatmul.mubr.bf16.gmra.mrb[0].mxu0 %v320
  %v1100 = vpop.f32.mrb[0].mxu0
  %v1101 = vadd.f32 %v179, %v1100
  %v1102 = vpop.f32.mrb[0].mxu0
  %v1103 = vadd.f32 %v183, %v1102
  %v1104 = vpop.f32.mrb[0].mxu0
  %v1105 = vadd.f32 %v179, %v1104
  %v1106 = vpop.f32.mrb[0].mxu0
  %v1107 = vadd.f32 %v183, %v1106
  %1108 = vdwg.mxu0
  %1109 = vmatprep.subr.bf16.mxu0 %v805
  %1110 = vmatpush1.bf16.msra.mxu0 %v804
  %1111 = vmatprep.subr.bf16.mxu0 %v809
  %1112 = vmatpush1.bf16.msra.mxu0 %v808
  %1113 = vmatprep.subr.bf16.mxu0 %v813
  %1114 = vmatpush1.bf16.msra.mxu0 %v812
  %1115 = vmatprep.subr.bf16.mxu0 %v817
  %1116 = vmatpush1.bf16.msra.mxu0 %v816
  %1117 = vmatprep.subr.bf16.mxu0 %v821
  %1118 = vmatpush1.bf16.msra.mxu0 %v820
  %1119 = vmatprep.subr.bf16.mxu0 %v825
  %1120 = vmatpush1.bf16.msra.mxu0 %v824
  %1121 = vmatprep.subr.bf16.mxu0 %v829
  %1122 = vmatpush1.bf16.msra.mxu0 %v828
  %1123 = vmatprep.subr.bf16.mxu0 %v833
  %1124 = vmatpush1.bf16.msra.mxu0 %v832
  %1125 = vmatprep.subr.bf16.mxu0 %v837
  %1126 = vmatpush1.bf16.msra.mxu0 %v836
  %1127 = vmatprep.subr.bf16.mxu0 %v841
  %1128 = vmatpush1.bf16.msra.mxu0 %v840
  %1129 = vmatprep.subr.bf16.mxu0 %v845
  %1130 = vmatpush1.bf16.msra.mxu0 %v844
  %1131 = vmatprep.subr.bf16.mxu0 %v849
  %1132 = vmatpush1.bf16.msra.mxu0 %v848
  %1133 = vmatprep.subr.bf16.mxu0 %v853
  %1134 = vmatpush1.bf16.msra.mxu0 %v852
  %1135 = vmatprep.subr.bf16.mxu0 %v857
  %1136 = vmatpush1.bf16.msra.mxu0 %v856
  %1137 = vmatprep.subr.bf16.mxu0 %v861
  %1138 = vmatpush1.bf16.msra.mxu0 %v860
  %1139 = vmatprep.subr.bf16.mxu0 %v865
  %1140 = vmatpush1.bf16.msra.mxu0 %v864
  %1141 = vmatprep.mubr.bf16.mxu0 %v295
  %1142 = vmatmul.mubr.bf16.gmra.mrb[0].mxu0 %v294
  %v1143 = vpop.f32.mrb[0].mxu0
  %v1144 = vadd.f32 %v1031, %v1143
  %v1145 = vpop.f32.mrb[0].mxu0
  %v1146 = vadd.f32 %v1033, %v1145
  %v1147 = vpop.f32.mrb[0].mxu0
  %v1148 = vadd.f32 %v1035, %v1147
  %v1149 = vpop.f32.mrb[0].mxu0
  %v1150 = vadd.f32 %v1037, %v1149
  %1151 = vmatprep.mubr.bf16.mxu0 %v299
  %1152 = vmatmul.mubr.bf16.gmra.mrb[0].mxu0 %v298
  %v1153 = vpop.f32.mrb[0].mxu0
  %v1154 = vadd.f32 %v1041, %v1153
  %v1155 = vpop.f32.mrb[0].mxu0
  %v1156 = vadd.f32 %v1043, %v1155
  %v1157 = vpop.f32.mrb[0].mxu0
  %v1158 = vadd.f32 %v1045, %v1157
  %v1159 = vpop.f32.mrb[0].mxu0
  %v1160 = vadd.f32 %v1047, %v1159
  %1161 = vmatprep.mubr.bf16.mxu0 %v303
  %1162 = vmatmul.mubr.bf16.gmra.mrb[0].mxu0 %v302
  %v1163 = vpop.f32.mrb[0].mxu0
  %v1164 = vadd.f32 %v1051, %v1163
  %v1165 = vpop.f32.mrb[0].mxu0
  %v1166 = vadd.f32 %v1053, %v1165
  %v1167 = vpop.f32.mrb[0].mxu0
  %v1168 = vadd.f32 %v1055, %v1167
  %v1169 = vpop.f32.mrb[0].mxu0
  %v1170 = vadd.f32 %v1057, %v1169
  %1171 = vmatprep.mubr.bf16.mxu0 %v307
  %1172 = vmatmul.mubr.bf16.gmra.mrb[0].mxu0 %v306
  %v1173 = vpop.f32.mrb[0].mxu0
  %v1174 = vadd.f32 %v1061, %v1173
  %v1175 = vpop.f32.mrb[0].mxu0
  %v1176 = vadd.f32 %v1063, %v1175
  %v1177 = vpop.f32.mrb[0].mxu0
  %v1178 = vadd.f32 %v1065, %v1177
  %v1179 = vpop.f32.mrb[0].mxu0
  %v1180 = vadd.f32 %v1067, %v1179
  %1181 = vmatprep.mubr.bf16.mxu0 %v311
  %1182 = vmatmul.mubr.bf16.gmra.mrb[0].mxu0 %v310
  %v1183 = vpop.f32.mrb[0].mxu0
  %v1184 = vadd.f32 %v1071, %v1183
  %v1185 = vpop.f32.mrb[0].mxu0
  %v1186 = vadd.f32 %v1073, %v1185
  %v1187 = vpop.f32.mrb[0].mxu0
  %v1188 = vadd.f32 %v1075, %v1187
  %v1189 = vpop.f32.mrb[0].mxu0
  %v1190 = vadd.f32 %v1077, %v1189
  %1191 = vmatprep.mubr.bf16.mxu0 %v315
  %1192 = vmatmul.mubr.bf16.gmra.mrb[0].mxu0 %v314
  %v1193 = vpop.f32.mrb[0].mxu0
  %v1194 = vadd.f32 %v1081, %v1193
  %v1195 = vpop.f32.mrb[0].mxu0
  %v1196 = vadd.f32 %v1083, %v1195
  %v1197 = vpop.f32.mrb[0].mxu0
  %v1198 = vadd.f32 %v1085, %v1197
  %v1199 = vpop.f32.mrb[0].mxu0
  %v1200 = vadd.f32 %v1087, %v1199
  %1201 = vmatprep.mubr.bf16.mxu0 %v319
  %1202 = vmatmul.mubr.bf16.gmra.mrb[0].mxu0 %v318
  %v1203 = vpop.f32.mrb[0].mxu0
  %v1204 = vadd.f32 %v1091, %v1203
  %v1205 = vpop.f32.mrb[0].mxu0
  %v1206 = vadd.f32 %v1093, %v1205
  %v1207 = vpop.f32.mrb[0].mxu0
  %v1208 = vadd.f32 %v1095, %v1207
  %v1209 = vpop.f32.mrb[0].mxu0
  %v1210 = vadd.f32 %v1097, %v1209
  %1211 = vmatprep.mubr.bf16.mxu0 %v323
  %1212 = vmatmul.mubr.bf16.gmra.mrb[0].mxu0 %v322
  %v1213 = vpop.f32.mrb[0].mxu0
  %v1214 = vadd.f32 %v1101, %v1213
  %v1215 = vpop.f32.mrb[0].mxu0
  %v1216 = vadd.f32 %v1103, %v1215
  %v1217 = vpop.f32.mrb[0].mxu0
  %v1218 = vadd.f32 %v1105, %v1217
  %v1219 = vpop.f32.mrb[0].mxu0
  %v1220 = vadd.f32 %v1107, %v1219
  %1221 = vdwg.mxu0
  %1222 = vmatprep.subr.bf16.mxu0 %v743
  %1223 = vmatpush1.bf16.msra.mxu0 %v742
  %1224 = vmatprep.subr.bf16.mxu0 %v747
  %1225 = vmatpush1.bf16.msra.mxu0 %v746
  %1226 = vmatprep.subr.bf16.mxu0 %v751
  %1227 = vmatpush1.bf16.msra.mxu0 %v750
  %1228 = vmatprep.subr.bf16.mxu0 %v755
  %1229 = vmatpush1.bf16.msra.mxu0 %v754
  %1230 = vmatprep.subr.bf16.mxu0 %v759
  %1231 = vmatpush1.bf16.msra.mxu0 %v758
  %1232 = vmatprep.subr.bf16.mxu0 %v763
  %1233 = vmatpush1.bf16.msra.mxu0 %v762
  %1234 = vmatprep.subr.bf16.mxu0 %v767
  %1235 = vmatpush1.bf16.msra.mxu0 %v766
  %1236 = vmatprep.subr.bf16.mxu0 %v771
  %1237 = vmatpush1.bf16.msra.mxu0 %v770
  %1238 = vmatprep.subr.bf16.mxu0 %v775
  %1239 = vmatpush1.bf16.msra.mxu0 %v774
  %1240 = vmatprep.subr.bf16.mxu0 %v779
  %1241 = vmatpush1.bf16.msra.mxu0 %v778
  %1242 = vmatprep.subr.bf16.mxu0 %v783
  %1243 = vmatpush1.bf16.msra.mxu0 %v782
  %1244 = vmatprep.subr.bf16.mxu0 %v787
  %1245 = vmatpush1.bf16.msra.mxu0 %v786
  %1246 = vmatprep.subr.bf16.mxu0 %v791
  %1247 = vmatpush1.bf16.msra.mxu0 %v790
  %1248 = vmatprep.subr.bf16.mxu0 %v795
  %1249 = vmatpush1.bf16.msra.mxu0 %v794
  %1250 = vmatprep.subr.bf16.mxu0 %v799
  %1251 = vmatpush1.bf16.msra.mxu0 %v798
  %1252 = vmatprep.subr.bf16.mxu0 %v803
  %1253 = vmatpush1.bf16.msra.mxu0 %v802
  %1254 = vmatprep.mubr.bf16.mxu0 %v293
  %1255 = vmatmul.mubr.bf16.gmra.mrb[0].mxu0 %v292
  %v1256 = vpop.f32.mrb[0].mxu0
  %v1257 = vadd.f32 %v187, %v1256
  %v1258 = vpop.f32.mrb[0].mxu0
  %v1259 = vadd.f32 %v191, %v1258
  %v1260 = vpop.f32.mrb[0].mxu0
  %v1261 = vadd.f32 %v187, %v1260
  %v1262 = vpop.f32.mrb[0].mxu0
  %v1263 = vadd.f32 %v191, %v1262
  %1264 = vmatprep.mubr.bf16.mxu0 %v297
  %1265 = vmatmul.mubr.bf16.gmra.mrb[0].mxu0 %v296
  %v1266 = vpop.f32.mrb[0].mxu0
  %v1267 = vadd.f32 %v187, %v1266
  %v1268 = vpop.f32.mrb[0].mxu0
  %v1269 = vadd.f32 %v191, %v1268
  %v1270 = vpop.f32.mrb[0].mxu0
  %v1271 = vadd.f32 %v187, %v1270
  %v1272 = vpop.f32.mrb[0].mxu0
  %v1273 = vadd.f32 %v191, %v1272
  %1274 = vmatprep.mubr.bf16.mxu0 %v301
  %1275 = vmatmul.mubr.bf16.gmra.mrb[0].mxu0 %v300
  %v1276 = vpop.f32.mrb[0].mxu0
  %v1277 = vadd.f32 %v187, %v1276
  %v1278 = vpop.f32.mrb[0].mxu0
  %v1279 = vadd.f32 %v191, %v1278
  %v1280 = vpop.f32.mrb[0].mxu0
  %v1281 = vadd.f32 %v187, %v1280
  %v1282 = vpop.f32.mrb[0].mxu0
  %v1283 = vadd.f32 %v191, %v1282
  %1284 = vmatprep.mubr.bf16.mxu0 %v305
  %1285 = vmatmul.mubr.bf16.gmra.mrb[0].mxu0 %v304
  %v1286 = vpop.f32.mrb[0].mxu0
  %v1287 = vadd.f32 %v187, %v1286
  %v1288 = vpop.f32.mrb[0].mxu0
  %v1289 = vadd.f32 %v191, %v1288
  %v1290 = vpop.f32.mrb[0].mxu0
  %v1291 = vadd.f32 %v187, %v1290
  %v1292 = vpop.f32.mrb[0].mxu0
  %v1293 = vadd.f32 %v191, %v1292
  %1294 = vmatprep.mubr.bf16.mxu0 %v309
  %1295 = vmatmul.mubr.bf16.gmra.mrb[0].mxu0 %v308
  %v1296 = vpop.f32.mrb[0].mxu0
  %v1297 = vadd.f32 %v187, %v1296
  %v1298 = vpop.f32.mrb[0].mxu0
  %v1299 = vadd.f32 %v191, %v1298
  %v1300 = vpop.f32.mrb[0].mxu0
  %v1301 = vadd.f32 %v187, %v1300
  %v1302 = vpop.f32.mrb[0].mxu0
  %v1303 = vadd.f32 %v191, %v1302
  %1304 = vmatprep.mubr.bf16.mxu0 %v313
  %1305 = vmatmul.mubr.bf16.gmra.mrb[0].mxu0 %v312
  %v1306 = vpop.f32.mrb[0].mxu0
  %v1307 = vadd.f32 %v187, %v1306
  %v1308 = vpop.f32.mrb[0].mxu0
  %v1309 = vadd.f32 %v191, %v1308
  %v1310 = vpop.f32.mrb[0].mxu0
  %v1311 = vadd.f32 %v187, %v1310
  %v1312 = vpop.f32.mrb[0].mxu0
  %v1313 = vadd.f32 %v191, %v1312
  %1314 = vmatprep.mubr.bf16.mxu0 %v317
  %1315 = vmatmul.mubr.bf16.gmra.mrb[0].mxu0 %v316
  %v1316 = vpop.f32.mrb[0].mxu0
  %v1317 = vadd.f32 %v187, %v1316
  %v1318 = vpop.f32.mrb[0].mxu0
  %v1319 = vadd.f32 %v191, %v1318
  %v1320 = vpop.f32.mrb[0].mxu0
  %v1321 = vadd.f32 %v187, %v1320
  %v1322 = vpop.f32.mrb[0].mxu0
  %v1323 = vadd.f32 %v191, %v1322
  %1324 = vmatprep.mubr.bf16.mxu0 %v321
  %1325 = vmatmul.mubr.bf16.gmra.mrb[0].mxu0 %v320
  %v1326 = vpop.f32.mrb[0].mxu0
  %v1327 = vadd.f32 %v187, %v1326
  %v1328 = vpop.f32.mrb[0].mxu0
  %v1329 = vadd.f32 %v191, %v1328
  %v1330 = vpop.f32.mrb[0].mxu0
  %v1331 = vadd.f32 %v187, %v1330
  %v1332 = vpop.f32.mrb[0].mxu0
  %v1333 = vadd.f32 %v191, %v1332
  %1334 = vdwg.mxu0
  %1335 = vmatprep.subr.bf16.mxu0 %v807
  %1336 = vmatpush1.bf16.msra.mxu0 %v806
  %1337 = vmatprep.subr.bf16.mxu0 %v811
  %1338 = vmatpush1.bf16.msra.mxu0 %v810
  %1339 = vmatprep.subr.bf16.mxu0 %v815
  %1340 = vmatpush1.bf16.msra.mxu0 %v814
  %1341 = vmatprep.subr.bf16.mxu0 %v819
  %1342 = vmatpush1.bf16.msra.mxu0 %v818
  %1343 = vmatprep.subr.bf16.mxu0 %v823
  %1344 = vmatpush1.bf16.msra.mxu0 %v822
  %1345 = vmatprep.subr.bf16.mxu0 %v827
  %1346 = vmatpush1.bf16.msra.mxu0 %v826
  %1347 = vmatprep.subr.bf16.mxu0 %v831
  %1348 = vmatpush1.bf16.msra.mxu0 %v830
  %1349 = vmatprep.subr.bf16.mxu0 %v835
  %1350 = vmatpush1.bf16.msra.mxu0 %v834
  %1351 = vmatprep.subr.bf16.mxu0 %v839
  %1352 = vmatpush1.bf16.msra.mxu0 %v838
  %1353 = vmatprep.subr.bf16.mxu0 %v843
  %1354 = vmatpush1.bf16.msra.mxu0 %v842
  %1355 = vmatprep.subr.bf16.mxu0 %v847
  %1356 = vmatpush1.bf16.msra.mxu0 %v846
  %1357 = vmatprep.subr.bf16.mxu0 %v851
  %1358 = vmatpush1.bf16.msra.mxu0 %v850
  %1359 = vmatprep.subr.bf16.mxu0 %v855
  %1360 = vmatpush1.bf16.msra.mxu0 %v854
  %1361 = vmatprep.subr.bf16.mxu0 %v859
  %1362 = vmatpush1.bf16.msra.mxu0 %v858
  %1363 = vmatprep.subr.bf16.mxu0 %v863
  %1364 = vmatpush1.bf16.msra.mxu0 %v862
  %1365 = vmatprep.subr.bf16.mxu0 %v867
  %1366 = vmatpush1.bf16.msra.mxu0 %v866
  %1367 = vmatprep.mubr.bf16.mxu0 %v295
  %1368 = vmatmul.mubr.bf16.gmra.mrb[0].mxu0 %v294
  %v1369 = vpop.f32.mrb[0].mxu0
  %v1370 = vadd.f32 %v1257, %v1369
  %v1371 = vpop.f32.mrb[0].mxu0
  %v1372 = vadd.f32 %v1259, %v1371
  %v1373 = vpop.f32.mrb[0].mxu0
  %v1374 = vadd.f32 %v1261, %v1373
  %v1375 = vpop.f32.mrb[0].mxu0
  %v1376 = vadd.f32 %v1263, %v1375
  %1377 = vmatprep.mubr.bf16.mxu0 %v299
  %1378 = vmatmul.mubr.bf16.gmra.mrb[0].mxu0 %v298
  %v1379 = vpop.f32.mrb[0].mxu0
  %v1380 = vadd.f32 %v1267, %v1379
  %v1381 = vpop.f32.mrb[0].mxu0
  %v1382 = vadd.f32 %v1269, %v1381
  %v1383 = vpop.f32.mrb[0].mxu0
  %v1384 = vadd.f32 %v1271, %v1383
  %v1385 = vpop.f32.mrb[0].mxu0
  %v1386 = vadd.f32 %v1273, %v1385
  %1387 = vmatprep.mubr.bf16.mxu0 %v303
  %1388 = vmatmul.mubr.bf16.gmra.mrb[0].mxu0 %v302
  %v1389 = vpop.f32.mrb[0].mxu0
  %v1390 = vadd.f32 %v1277, %v1389
  %v1391 = vpop.f32.mrb[0].mxu0
  %v1392 = vadd.f32 %v1279, %v1391
  %v1393 = vpop.f32.mrb[0].mxu0
  %v1394 = vadd.f32 %v1281, %v1393
  %v1395 = vpop.f32.mrb[0].mxu0
  %v1396 = vadd.f32 %v1283, %v1395
  %1397 = vmatprep.mubr.bf16.mxu0 %v307
  %1398 = vmatmul.mubr.bf16.gmra.mrb[0].mxu0 %v306
  %v1399 = vpop.f32.mrb[0].mxu0
  %v1400 = vadd.f32 %v1287, %v1399
  %v1401 = vpop.f32.mrb[0].mxu0
  %v1402 = vadd.f32 %v1289, %v1401
  %v1403 = vpop.f32.mrb[0].mxu0
  %v1404 = vadd.f32 %v1291, %v1403
  %v1405 = vpop.f32.mrb[0].mxu0
  %v1406 = vadd.f32 %v1293, %v1405
  %1407 = vmatprep.mubr.bf16.mxu0 %v311
  %1408 = vmatmul.mubr.bf16.gmra.mrb[0].mxu0 %v310
  %v1409 = vpop.f32.mrb[0].mxu0
  %v1410 = vadd.f32 %v1297, %v1409
  %v1411 = vpop.f32.mrb[0].mxu0
  %v1412 = vadd.f32 %v1299, %v1411
  %v1413 = vpop.f32.mrb[0].mxu0
  %v1414 = vadd.f32 %v1301, %v1413
  %v1415 = vpop.f32.mrb[0].mxu0
  %v1416 = vadd.f32 %v1303, %v1415
  %1417 = vmatprep.mubr.bf16.mxu0 %v315
  %1418 = vmatmul.mubr.bf16.gmra.mrb[0].mxu0 %v314
  %v1419 = vpop.f32.mrb[0].mxu0
  %v1420 = vadd.f32 %v1307, %v1419
  %v1421 = vpop.f32.mrb[0].mxu0
  %v1422 = vadd.f32 %v1309, %v1421
  %v1423 = vpop.f32.mrb[0].mxu0
  %v1424 = vadd.f32 %v1311, %v1423
  %v1425 = vpop.f32.mrb[0].mxu0
  %v1426 = vadd.f32 %v1313, %v1425
  %1427 = vmatprep.mubr.bf16.mxu0 %v319
  %1428 = vmatmul.mubr.bf16.gmra.mrb[0].mxu0 %v318
  %v1429 = vpop.f32.mrb[0].mxu0
  %v1430 = vadd.f32 %v1317, %v1429
  %v1431 = vpop.f32.mrb[0].mxu0
  %v1432 = vadd.f32 %v1319, %v1431
  %v1433 = vpop.f32.mrb[0].mxu0
  %v1434 = vadd.f32 %v1321, %v1433
  %v1435 = vpop.f32.mrb[0].mxu0
  %v1436 = vadd.f32 %v1323, %v1435
  %1437 = vmatprep.mubr.bf16.mxu0 %v323
  %1438 = vmatmul.mubr.bf16.gmra.mrb[0].mxu0 %v322
  %v1439 = vpop.f32.mrb[0].mxu0
  %v1440 = vadd.f32 %v1327, %v1439
  %v1441 = vpop.f32.mrb[0].mxu0
  %v1442 = vadd.f32 %v1329, %v1441
  %v1443 = vpop.f32.mrb[0].mxu0
  %v1444 = vadd.f32 %v1331, %v1443
  %v1445 = vpop.f32.mrb[0].mxu0
  %v1446 = vadd.f32 %v1333, %v1445
  %1447 = vdwg.mxu0
  %1448 = vst [vmem:[%s3] sm:$0xff] %v1144
  %1449 = vst [vmem:[%s3 + $0x8] sm:$0xff] %v1146
  %1450 = vst [vmem:[%s3 + $0x10] sm:$0xff] %v1370
  %1451 = vst [vmem:[%s3 + $0x18] sm:$0xff] %v1372
  %1452 = vst [vmem:[%s3 + $0x20] sm:$0xff] %v1148
  %1453 = vst [vmem:[%s3 + $0x28] sm:$0xff] %v1150
  %1454 = vst [vmem:[%s3 + $0x30] sm:$0xff] %v1374
  %1455 = vst [vmem:[%s3 + $0x38] sm:$0xff] %v1376
  %1456 = vst [vmem:[%s3 + $0x40] sm:$0xff] %v1154
  %1457 = vst [vmem:[%s3 + $0x48] sm:$0xff] %v1156
  %1458 = vst [vmem:[%s3 + $0x50] sm:$0xff] %v1380
  %1459 = vst [vmem:[%s3 + $0x58] sm:$0xff] %v1382
  %1460 = vst [vmem:[%s3 + $0x60] sm:$0xff] %v1158
  %1461 = vst [vmem:[%s3 + $0x68] sm:$0xff] %v1160
  %1462 = vst [vmem:[%s3 + $0x70] sm:$0xff] %v1384
  %1463 = vst [vmem:[%s3 + $0x78] sm:$0xff] %v1386
  %1464 = vst [vmem:[%s3 + $0x80] sm:$0xff] %v1164
  %1465 = vst [vmem:[%s3 + $0x88] sm:$0xff] %v1166
  %1466 = vst [vmem:[%s3 + $0x90] sm:$0xff] %v1390
  %1467 = vst [vmem:[%s3 + $0x98] sm:$0xff] %v1392
  %1468 = vst [vmem:[%s3 + $0xa0] sm:$0xff] %v1168
  %1469 = vst [vmem:[%s3 + $0xa8] sm:$0xff] %v1170
  %1470 = vst [vmem:[%s3 + $0xb0] sm:$0xff] %v1394
  %1471 = vst [vmem:[%s3 + $0xb8] sm:$0xff] %v1396
  %1472 = vst [vmem:[%s3 + $0xc0] sm:$0xff] %v1174
  %1473 = vst [vmem:[%s3 + $0xc8] sm:$0xff] %v1176
  %1474 = vst [vmem:[%s3 + $0xd0] sm:$0xff] %v1400
  %1475 = vst [vmem:[%s3 + $0xd8] sm:$0xff] %v1402
  %1476 = vst [vmem:[%s3 + $0xe0] sm:$0xff] %v1178
  %1477 = vst [vmem:[%s3 + $0xe8] sm:$0xff] %v1180
  %1478 = vst [vmem:[%s3 + $0xf0] sm:$0xff] %v1404
  %1479 = vst [vmem:[%s3 + $0xf8] sm:$0xff] %v1406
  %1480 = vst [vmem:[%s3 + $0x100] sm:$0xff] %v1184
  %1481 = vst [vmem:[%s3 + $0x108] sm:$0xff] %v1186
  %1482 = vst [vmem:[%s3 + $0x110] sm:$0xff] %v1410
  %1483 = vst [vmem:[%s3 + $0x118] sm:$0xff] %v1412
  %1484 = vst [vmem:[%s3 + $0x120] sm:$0xff] %v1188
  %1485 = vst [vmem:[%s3 + $0x128] sm:$0xff] %v1190
  %1486 = vst [vmem:[%s3 + $0x130] sm:$0xff] %v1414
  %1487 = vst [vmem:[%s3 + $0x138] sm:$0xff] %v1416
  %1488 = vst [vmem:[%s3 + $0x140] sm:$0xff] %v1194
  %1489 = vst [vmem:[%s3 + $0x148] sm:$0xff] %v1196
  %1490 = vst [vmem:[%s3 + $0x150] sm:$0xff] %v1420
  %1491 = vst [vmem:[%s3 + $0x158] sm:$0xff] %v1422
  %1492 = vst [vmem:[%s3 + $0x160] sm:$0xff] %v1198
  %1493 = vst [vmem:[%s3 + $0x168] sm:$0xff] %v1200
  %1494 = vst [vmem:[%s3 + $0x170] sm:$0xff] %v1424
  %1495 = vst [vmem:[%s3 + $0x178] sm:$0xff] %v1426
  %1496 = vst [vmem:[%s3 + $0x180] sm:$0xff] %v1204
  %1497 = vst [vmem:[%s3 + $0x188] sm:$0xff] %v1206
  %1498 = vst [vmem:[%s3 + $0x190] sm:$0xff] %v1430
  %1499 = vst [vmem:[%s3 + $0x198] sm:$0xff] %v1432
  %1500 = vst [vmem:[%s3 + $0x1a0] sm:$0xff] %v1208
  %1501 = vst [vmem:[%s3 + $0x1a8] sm:$0xff] %v1210
  %1502 = vst [vmem:[%s3 + $0x1b0] sm:$0xff] %v1434
  %1503 = vst [vmem:[%s3 + $0x1b8] sm:$0xff] %v1436
  %1504 = vst [vmem:[%s3 + $0x1c0] sm:$0xff] %v1214
  %1505 = vst [vmem:[%s3 + $0x1c8] sm:$0xff] %v1216
  %1506 = vst [vmem:[%s3 + $0x1d0] sm:$0xff] %v1440
  %1507 = vst [vmem:[%s3 + $0x1d8] sm:$0xff] %v1442
  %1508 = vst [vmem:[%s3 + $0x1e0] sm:$0xff] %v1218
  %1509 = vst [vmem:[%s3 + $0x1e8] sm:$0xff] %v1220
  %1510 = vst [vmem:[%s3 + $0x1f0] sm:$0xff] %v1444
  %1511 = vst [vmem:[%s3 + $0x1f8] sm:$0xff] %v1446
  // Predicated region
  $region14: #{_lambda_.7} parent=0 // pred_check
    _
  $region15: #{_lambda_.7} parent=0 // pred_check_branch
    %1513 = sbr.rel (0) target = $region17
  $region16: #{_lambda_.7} parent=0 // pred_region
    _
  $region17: #{_lambda_.7} parent=0 // pred_fallthru
    _
  // Predicated region
  $region18: #{_lambda_.7} parent=0 // pred_check
    _
  $region19: #{_lambda_.7} parent=0 // pred_check_branch
    %1515 = sbr.rel (0) target = $region21
  $region20: #{_lambda_.7} parent=0 // pred_region
    _
  $region21: #{_lambda_.7} parent=0 // pred_fallthru
    _

</llo_original>
